<compile_context>
chip_gen: v5e
topology: v5e:2x2
jax: 0.10.0
libtpu: 0.0.40
codegen_flags: <defaults>
</compile_context>

<pallas_src>
import functools

import jax
import jax.numpy as jnp
from jax.experimental import pallas as pl
from jax.experimental.pallas import tpu as pltpu

IMG_DIM = 28 * 28   # 784
HIDDEN = 1024
OUT_DIM = 50
OUT_PAD = 128       # lane-dense padded projection width
BN_EPS = 1e-5
LRELU_SLOPE = 0.2


def _leaky_relu(x, slope):
    return jnp.where(x > 0, x, slope * x)


def _round_up(a, b):
    return (a + b - 1) // b * b


def _tpu_vmem_capacity():
    """Physical VMEM bytes per core (conservative fallback = v7x's 64 MiB)."""
    try:
        info = pltpu.get_tpu_info()
        cap = getattr(info, "vmem_capacity_bytes", None)
        if cap:
            return int(cap)
    except Exception:
        pass
    return 64 << 20


# ---------------------------------------------------------------------------
# Fused kernel: grid = (phase, batch_tile)
#   phase 0: h2 = Linear2(LReLU(Linear1(x))) -> VMEM scratch, accumulate stats
#   phase 1: BN(scale/shift) + LReLU + Linear(1024, 50) from VMEM scratch
# ---------------------------------------------------------------------------
def _fused_kernel(x_ref, w1_ref, b1_ref, w2_ref, b2_ref,
                  gamma_ref, beta_ref, w3_ref, b3_ref,
                  o_ref, h2_scr, sum_scr, sq_scr,
                  *, tm, n_valid, inv_n, need_mask):
    p = pl.program_id(0)
    i = pl.program_id(1)
    last = pl.num_programs(1) - 1

    @pl.when(p == 0)
    def _phase0():
        # Linear(784,1024) + LeakyReLU   (bf16 inputs, f32 accumulation)
        h1 = jnp.dot(x_ref[...], w1_ref[...],
                     preferred_element_type=jnp.float32) + b1_ref[...]
        h1 = _leaky_relu(h1, LRELU_SLOPE)
        # Linear(1024,1024)
        h2 = jnp.dot(h1.astype(jnp.bfloat16), w2_ref[...],
                     preferred_element_type=jnp.float32) + b2_ref[...]
        h2_scr[i] = h2.astype(jnp.bfloat16)

        @pl.when(i == 0)
        def _():
            sum_scr[...] = jnp.zeros_like(sum_scr)
            sq_scr[...] = jnp.zeros_like(sq_scr)

        def _accumulate(v):
            sum_scr[...] += jnp.sum(v, axis=0, keepdims=True)
            sq_scr[...] += jnp.sum(v * v, axis=0, keepdims=True)

        if need_mask:
            # Only the last tile contains padded rows -> mask only there.
            @pl.when(i == last)
            def _():
                rows = i * tm + jax.lax.broadcasted_iota(jnp.int32, (tm, 1), 0)
                _accumulate(h2 * (rows < n_valid).astype(jnp.float32))

            @pl.when(i != last)
            def _():
                _accumulate(h2)
        else:
            _accumulate(h2)

    @pl.when(p == 1)
    def _phase1():
        mean = sum_scr[...] * inv_n
        var = jnp.maximum(sq_scr[...] * inv_n - mean * mean, 0.0)
        scale = gamma_ref[...] * jax.lax.rsqrt(var + BN_EPS)
        shift = beta_ref[...] - mean * scale

        h2 = h2_scr[i].astype(jnp.float32)
        h2n = _leaky_relu(h2 * scale + shift, LRELU_SLOPE)
        o_ref[...] = (jnp.dot(h2n.astype(jnp.bfloat16), w3_ref[...],
                              preferred_element_type=jnp.float32) + b3_ref[...])


# ---------------------------------------------------------------------------
# Two-pass fallback (large batch): pass 1 with per-tile partial statistics
# ---------------------------------------------------------------------------
def _stats_kernel(x_ref, w1_ref, b1_ref, w2_ref, b2_ref,
                  h2_ref, stat_ref, *, tm, n_valid, need_mask):
    i = pl.program_id(0)
    last = pl.num_programs(0) - 1

    h1 = jnp.dot(x_ref[...], w1_ref[...],
                 preferred_element_type=jnp.float32) + b1_ref[...]
    h1 = _leaky_relu(h1, LRELU_SLOPE)
    h2 = jnp.dot(h1.astype(jnp.bfloat16), w2_ref[...],
                 preferred_element_type=jnp.float32) + b2_ref[...]
    h2_ref[...] = h2.astype(jnp.bfloat16)

    # Per-tile partial sums: row 0 = sum, row 1 = sum of squares (rows 2..7
    # are don't-care padding so the block stays (8, 1024)-aligned).
    def _write_stats(v):
        stat_ref[0:1, :] = jnp.sum(v, axis=0, keepdims=True)
        stat_ref[1:2, :] = jnp.sum(v * v, axis=0, keepdims=True)

    if need_mask:
        @pl.when(i == last)
        def _():
            rows = i * tm + jax.lax.broadcasted_iota(jnp.int32, (tm, 1), 0)
            _write_stats(h2 * (rows < n_valid).astype(jnp.float32))

        @pl.when(i != last)
        def _():
            _write_stats(h2)
    else:
        _write_stats(h2)


def _norm_proj_kernel(h2_ref, scale_ref, shift_ref, w3_ref, b3_ref, o_ref):
    h2 = h2_ref[...].astype(jnp.float32)
    h2n = _leaky_relu(h2 * scale_ref[...] + shift_ref[...], LRELU_SLOPE)
    o_ref[...] = (jnp.dot(h2n.astype(jnp.bfloat16), w3_ref[...],
                          preferred_element_type=jnp.float32) + b3_ref[...])


# ---------------------------------------------------------------------------
# Wrapper
# ---------------------------------------------------------------------------
def e_forward(x, params, *, two_pass=None, tile_override=None):
    n = x.shape[0]

    cap = _tpu_vmem_capacity()
    vmem_limit = min(cap * 3 // 4, 100 << 20)      # ~96 MiB v5e/v6e, ~48 MiB v7x
    max_tile = 1024 if cap >= (96 << 20) else 512  # bigger tiles on 128-MiB parts

    if tile_override is not None:
        tm = max(8, _round_up(tile_override, 8))
    else:
        tm = min(max_tile, _round_up(max(n, 8), 8))
    n_pad = _round_up(n, tm)
    n_tiles = n_pad // tm
    need_mask = (n_pad != n)

    if two_pass is None:
        # Fuse only when the full h2 (bf16) fits VMEM with generous headroom.
        fuse_budget = max(vmem_limit - (32 << 20), 8 << 20)
        two_pass = (n_pad * HIDDEN * 2) > fuse_budget

    xb = x.astype(jnp.bfloat16)
    if n_pad != n:
        xb = jnp.pad(xb, ((0, n_pad - n), (0, 0)))

    w1 = params["w1"].astype(jnp.bfloat16)
    w2 = params["w2"].astype(jnp.bfloat16)
    b1 = params["b1"].astype(jnp.float32)
    b2 = params["b2"].astype(jnp.float32)
    gamma = params["gamma"].astype(jnp.float32)
    beta = params["beta"].astype(jnp.float32)
    # Pad the 50-wide projection to a lane-dense 128 columns.
    w3p = jnp.pad(params["w3"].astype(jnp.bfloat16),
                  ((0, 0), (0, OUT_PAD - OUT_DIM)))
    b3p = jnp.pad(params["b3"].astype(jnp.float32),
                  ((0, 0), (0, OUT_PAD - OUT_DIM)))

    # ---------------------------- fused path -------------------------------
    if not two_pass:
        const2 = lambda p, i: (0, 0)             # resident weights / params
        out_pad = pl.pallas_call(
            functools.partial(_fused_kernel, tm=tm, n_valid=n,
                              inv_n=1.0 / n, need_mask=need_mask),
            out_shape=jax.ShapeDtypeStruct((n_pad, OUT_PAD), jnp.float32),
            grid_spec=pltpu.PrefetchScalarGridSpec(
                num_scalar_prefetch=0,
                grid=(2, n_tiles),               # (phase, batch tile)
                in_specs=[
                    # x only needed in phase 0; clamp to tile 0 during phase 1.
                    pl.BlockSpec((tm, IMG_DIM), lambda p, i: (i * (1 - p), 0)),
                    pl.BlockSpec((IMG_DIM, HIDDEN), const2),
                    pl.BlockSpec((1, HIDDEN), const2),
                    pl.BlockSpec((HIDDEN, HIDDEN), const2),
                    pl.BlockSpec((1, HIDDEN), const2),
                    pl.BlockSpec((1, HIDDEN), const2),      # gamma
                    pl.BlockSpec((1, HIDDEN), const2),      # beta
                    pl.BlockSpec((HIDDEN, OUT_PAD), const2),
                    pl.BlockSpec((1, OUT_PAD), const2),
                ],
                # Output written only in phase 1; stay on block 0 during
                # phase 0 so no garbage writebacks are issued.
                out_specs=pl.BlockSpec((tm, OUT_PAD), lambda p, i: (i * p, 0)),
                scratch_shapes=[
                    pltpu.VMEM((n_tiles, tm, HIDDEN), jnp.bfloat16),  # h2
                    pltpu.VMEM((1, HIDDEN), jnp.float32),             # sum
                    pltpu.VMEM((1, HIDDEN), jnp.float32),             # sum sq
                ]),
            compiler_params=pltpu.CompilerParams(
                dimension_semantics=("arbitrary", "arbitrary"),
                vmem_limit_bytes=vmem_limit),
        )(xb, w1, b1, w2, b2, gamma, beta, w3p, b3p)
        return out_pad[:n, :OUT_DIM]

    # --------------------------- two-pass path ------------------------------
    by_row = lambda i: (i, 0)
    const1 = lambda i: (0, 0)

    # Pass 1: h2 tiles + per-tile partial stats (batch axis fully parallel).
    h2, stats = pl.pallas_call(
        functools.partial(_stats_kernel, tm=tm, n_valid=n,
                          need_mask=need_mask),
        out_shape=(jax.ShapeDtypeStruct((n_pad, HIDDEN), jnp.bfloat16),
                   jax.ShapeDtypeStruct((n_tiles * 8, HIDDEN), jnp.float32)),
        grid_spec=pltpu.PrefetchScalarGridSpec(
            num_scalar_prefetch=0,
            grid=(n_tiles,),
            in_specs=[
                pl.BlockSpec((tm, IMG_DIM), by_row),
                pl.BlockSpec((IMG_DIM, HIDDEN), const1),
                pl.BlockSpec((1, HIDDEN), const1),
                pl.BlockSpec((HIDDEN, HIDDEN), const1),
                pl.BlockSpec((1, HIDDEN), const1),
            ],
            out_specs=(
                pl.BlockSpec((tm, HIDDEN), by_row),
                pl.BlockSpec((8, HIDDEN), by_row),
            )),
        compiler_params=pltpu.CompilerParams(
            dimension_semantics=("parallel",),
            vmem_limit_bytes=vmem_limit),
    )(xb, w1, b1, w2, b2)

    # Fold BN into a single scale/shift in the wrapper (tiny jnp reduction).
    ssum = jnp.sum(stats[0::8, :], axis=0, keepdims=True)
    ssq = jnp.sum(stats[1::8, :], axis=0, keepdims=True)
    mean = ssum / n
    var = jnp.maximum(ssq / n - mean * mean, 0.0)
    scale = gamma * jax.lax.rsqrt(var + BN_EPS)
    shift = beta - mean * scale

    # Pass 2: scale-shift + LeakyReLU + final projection.
    out_pad = pl.pallas_call(
        _norm_proj_kernel,
        out_shape=jax.ShapeDtypeStruct((n_pad, OUT_PAD), jnp.float32),
        grid_spec=pltpu.PrefetchScalarGridSpec(
            num_scalar_prefetch=0,
            grid=(n_tiles,),
            in_specs=[
                pl.BlockSpec((tm, HIDDEN), by_row),
                pl.BlockSpec((1, HIDDEN), const1),
                pl.BlockSpec((1, HIDDEN), const1),
                pl.BlockSpec((HIDDEN, OUT_PAD), const1),
                pl.BlockSpec((1, OUT_PAD), const1),
            ],
            out_specs=pl.BlockSpec((tm, OUT_PAD), by_row)),
        compiler_params=pltpu.CompilerParams(
            dimension_semantics=("parallel",),
            vmem_limit_bytes=vmem_limit),
    )(h2, scale, shift, w3p, b3p)
    return out_pad[:n, :OUT_DIM]


# ---------------------------------------------------------------------------
# Params / reference
# ---------------------------------------------------------------------------
def init_params(key):
    """Deterministic parameter init (shapes match the PyTorch module).

    Weights stored transposed vs. PyTorch ((in, out)) and in bf16 for HBM
    streaming; biases / BN affine kept f32.
    """
    k1, k2, k3 = jax.random.split(key, 3)

    def linear_init(k, fan_in, fan_out):
        bound = 1.0 / jnp.sqrt(jnp.float32(fan_in))
        w = jax.random.uniform(k, (fan_in, fan_out), jnp.float32, -bound, bound)
        b = jnp.zeros((1, fan_out), jnp.float32)
        return w.astype(jnp.bfloat16), b

    w1, b1 = linear_init(k1, IMG_DIM, HIDDEN)
    w2, b2 = linear_init(k2, HIDDEN, HIDDEN)
    w3, b3 = linear_init(k3, HIDDEN, OUT_DIM)
    gamma = jnp.ones((1, HIDDEN), jnp.float32)   # BatchNorm1d weight
    beta = jnp.zeros((1, HIDDEN), jnp.float32)   # BatchNorm1d bias
    return dict(w1=w1, b1=b1, w2=w2, b2=b2, gamma=gamma, beta=beta,
                w3=w3, b3=b3)


def e_reference(x, p):
    """Plain-JAX reference matching the kernel's mixed-precision choices."""
    f32 = jnp.float32
    w1 = p["w1"].astype(jnp.bfloat16).astype(f32)
    w2 = p["w2"].astype(jnp.bfloat16).astype(f32)
    w3 = p["w3"].astype(jnp.bfloat16).astype(f32)

    xb = x.astype(jnp.bfloat16).astype(f32)
    h1 = _leaky_relu(xb @ w1 + p["b1"], LRELU_SLOPE)
    h1 = h1.astype(jnp.bfloat16).astype(f32)
    h2 = h1 @ w2 + p["b2"]

    mean = jnp.mean(h2, axis=0, keepdims=True)
    var = jnp.maximum(jnp.mean(h2 * h2, axis=0, keepdims=True) - mean * mean, 0.0)
    scale = p["gamma"] * jax.lax.rsqrt(var + BN_EPS)
    shift = p["beta"] - mean * scale

    h2 = h2.astype(jnp.bfloat16).astype(f32)      # kernel stores h2 as bf16
    h2n = _leaky_relu(h2 * scale + shift, LRELU_SLOPE)
    h2n = h2n.astype(jnp.bfloat16).astype(f32)
    return h2n @ w3 + p["b3"]


if __name__ == "__main__":
    key = jax.random.PRNGKey(0)
    k_params, k_x1, k_x2 = jax.random.split(key, 3)
    params = init_params(k_params)

    def check(out, ref, name):
        err = jnp.max(jnp.abs(out - ref))
        assert jnp.allclose(out, ref, atol=1e-2, rtol=1e-2), \
            f"{name}: max abs err {err}"

    # 1) Small batch -> fused single-kernel path (single tile).
    x1 = jax.random.normal(k_x1, (8, IMG_DIM), jnp.float32)
    out1 = jax.block_until_ready(e_forward(x1, params))
    assert out1.shape == (8, OUT_DIM), out1.shape
    check(out1, e_reference(x1, params), "fused/1-tile")

    # 2) Fused path with multiple tiles and a padded last tile.
    x2 = jax.random.normal(k_x2, (20, IMG_DIM), jnp.float32)
    out2 = jax.block_until_ready(e_forward(x2, params, tile_override=8))
    ref2 = e_reference(x2, params)
    assert out2.shape == (20, OUT_DIM), out2.shape
    check(out2, ref2, "fused/multi-tile")

    # 3) Large-batch two-pass fallback (parallel per-tile partial stats).
    out3 = jax.block_until_ready(
        e_forward(x2, params, two_pass=True, tile_override=8))
    check(out3, ref2, "two-pass")

    # TODO(synk): BatchNorm running-mean/var buffer updates (a training-time
    # side effect in PyTorch) are not modeled; the forward output is identical.

    print("KERNEL_OK")
</pallas_src>

<mosaic_0001>
module attributes {stable_mosaic.version = 11 : i64} {
  func.func @_fused_kernel(%arg0: i32, %arg1: i32, %arg2: memref<8x784xbf16, #tpu.memory_space<vmem>>, %arg3: memref<784x1024xbf16, #tpu.memory_space<vmem>>, %arg4: memref<1x1024xf32, #tpu.memory_space<vmem>>, %arg5: memref<1024x1024xbf16, #tpu.memory_space<vmem>>, %arg6: memref<1x1024xf32, #tpu.memory_space<vmem>>, %arg7: memref<1x1024xf32, #tpu.memory_space<vmem>>, %arg8: memref<1x1024xf32, #tpu.memory_space<vmem>>, %arg9: memref<1024x128xbf16, #tpu.memory_space<vmem>>, %arg10: memref<1x128xf32, #tpu.memory_space<vmem>>, %arg11: memref<8x128xf32, #tpu.memory_space<vmem>>, %arg12: memref<1x8x1024xbf16, #tpu.memory_space<vmem>>, %arg13: memref<1x1024xf32, #tpu.memory_space<vmem>>, %arg14: memref<1x1024xf32, #tpu.memory_space<vmem>>) attributes {dimension_semantics = [#tpu.dimension_semantics<arbitrary>, #tpu.dimension_semantics<arbitrary>], iteration_bounds = array<i64: 2, 1>, scalar_prefetch = 0 : i64, scratch_operands = 3 : i64, tpu.core_type = #tpu.core_type<tc>, window_params = [{transform_indices = @transform_0, window_bounds = array<i64: 8, 784>}, {pipeline_mode = #tpu.pipeline_mode<synchronous>, transform_indices = @transform_1, window_bounds = array<i64: 784, 1024>}, {pipeline_mode = #tpu.pipeline_mode<synchronous>, transform_indices = @transform_2, window_bounds = array<i64: 1, 1024>}, {pipeline_mode = #tpu.pipeline_mode<synchronous>, transform_indices = @transform_3, window_bounds = array<i64: 1024, 1024>}, {pipeline_mode = #tpu.pipeline_mode<synchronous>, transform_indices = @transform_4, window_bounds = array<i64: 1, 1024>}, {pipeline_mode = #tpu.pipeline_mode<synchronous>, transform_indices = @transform_5, window_bounds = array<i64: 1, 1024>}, {pipeline_mode = #tpu.pipeline_mode<synchronous>, transform_indices = @transform_6, window_bounds = array<i64: 1, 1024>}, {pipeline_mode = #tpu.pipeline_mode<synchronous>, transform_indices = @transform_7, window_bounds = array<i64: 1024, 128>}, {pipeline_mode = #tpu.pipeline_mode<synchronous>, transform_indices = @transform_8, window_bounds = array<i64: 1, 128>}, {transform_indices = @transform_9, window_bounds = array<i64: 8, 128>}]} {
    %c0_i32 = arith.constant 0 : i32
    %0 = arith.cmpi eq, %arg0, %c0_i32 : i32
    %1 = arith.extui %0 : i1 to i32
    %c0_i32_0 = arith.constant 0 : i32
    %2 = arith.cmpi ne, %1, %c0_i32_0 : i32
    scf.if %2 {
      %c0 = arith.constant 0 : index
      %c0_2 = arith.constant 0 : index
      %6 = vector.load %arg2[%c0, %c0_2] : memref<8x784xbf16, #tpu.memory_space<vmem>>, vector<8x784xbf16>
      %c0_3 = arith.constant 0 : index
      %c0_4 = arith.constant 0 : index
      %7 = vector.load %arg3[%c0_3, %c0_4] : memref<784x1024xbf16, #tpu.memory_space<vmem>>, vector<784x1024xbf16>
      %cst = arith.constant dense<0.000000e+00> : vector<8x1024xf32>
      %8 = tpu.matmul %6, %7, %cst {dimension_numbers = #tpu.dot_dimension_numbers<[1], [0], [0], [1], [0, 0, 1, 1], [], []>} : vector<8x784xbf16>, vector<784x1024xbf16>, vector<8x1024xf32> -> vector<8x1024xf32>
      %c0_5 = arith.constant 0 : index
      %c0_6 = arith.constant 0 : index
      %9 = vector.load %arg4[%c0_5, %c0_6] : memref<1x1024xf32, #tpu.memory_space<vmem>>, vector<1x1024xf32>
      %10 = vector.broadcast %9 : vector<1x1024xf32> to vector<8x1024xf32>
      %11 = arith.addf %8, %10 : vector<8x1024xf32>
      %cst_7 = arith.constant 0.000000e+00 : f32
      %12 = vector.broadcast %cst_7 : f32 to vector<8x1024xf32>
      %13 = arith.cmpf ogt, %11, %12 : vector<8x1024xf32>
      %cst_8 = arith.constant 2.000000e-01 : f32
      %14 = vector.broadcast %cst_8 : f32 to vector<8x1024xf32>
      %15 = arith.mulf %14, %11 : vector<8x1024xf32>
      %16 = arith.select %13, %11, %15 : vector<8x1024xi1>, vector<8x1024xf32>
      %17 = arith.truncf %16 : vector<8x1024xf32> to vector<8x1024xbf16>
      %c0_9 = arith.constant 0 : index
      %c0_10 = arith.constant 0 : index
      %18 = vector.load %arg5[%c0_9, %c0_10] : memref<1024x1024xbf16, #tpu.memory_space<vmem>>, vector<1024x1024xbf16>
      %cst_11 = arith.constant dense<0.000000e+00> : vector<8x1024xf32>
      %19 = tpu.matmul %17, %18, %cst_11 {dimension_numbers = #tpu.dot_dimension_numbers<[1], [0], [0], [1], [0, 0, 1, 1], [], []>} : vector<8x1024xbf16>, vector<1024x1024xbf16>, vector<8x1024xf32> -> vector<8x1024xf32>
      %c0_12 = arith.constant 0 : index
      %c0_13 = arith.constant 0 : index
      %20 = vector.load %arg6[%c0_12, %c0_13] : memref<1x1024xf32, #tpu.memory_space<vmem>>, vector<1x1024xf32>
      %21 = vector.broadcast %20 : vector<1x1024xf32> to vector<8x1024xf32>
      %22 = arith.addf %19, %21 : vector<8x1024xf32>
      %23 = arith.truncf %22 : vector<8x1024xf32> to vector<8x1024xbf16>
      %24 = arith.index_cast %arg1 : i32 to index
      %c0_14 = arith.constant 0 : index
      %c0_15 = arith.constant 0 : index
      %25 = vector.load %arg12[%24, %c0_14, %c0_15] : memref<1x8x1024xbf16, #tpu.memory_space<vmem>>, vector<1x8x1024xbf16>
      %26 = vector.shape_cast %25 : vector<1x8x1024xbf16> to vector<8x1024xbf16>
      %27 = vector.shape_cast %23 : vector<8x1024xbf16> to vector<1x8x1024xbf16>
      tpu.vector_store %arg12[%24, %c0_14, %c0_15], %27 {strides = array<i32>} : memref<1x8x1024xbf16, #tpu.memory_space<vmem>>, vector<1x8x1024xbf16>,
      %c0_i32_16 = arith.constant 0 : i32
      %28 = arith.cmpi eq, %arg1, %c0_i32_16 : i32
      %29 = arith.extui %28 : i1 to i32
      %c0_i32_17 = arith.constant 0 : i32
      %30 = arith.cmpi ne, %29, %c0_i32_17 : i32
      scf.if %30 {
        %cst_28 = arith.constant 0.000000e+00 : f32
        %42 = vector.broadcast %cst_28 : f32 to vector<1x1024xf32>
        %c0_29 = arith.constant 0 : index
        %c0_30 = arith.constant 0 : index
        %43 = vector.load %arg13[%c0_29, %c0_30] : memref<1x1024xf32, #tpu.memory_space<vmem>>, vector<1x1024xf32>
        tpu.vector_store %arg13[%c0_29, %c0_30], %42 {strides = array<i32>} : memref<1x1024xf32, #tpu.memory_space<vmem>>, vector<1x1024xf32>,
        %cst_31 = arith.constant 0.000000e+00 : f32
        %44 = vector.broadcast %cst_31 : f32 to vector<1x1024xf32>
        %c0_32 = arith.constant 0 : index
        %c0_33 = arith.constant 0 : index
        %45 = vector.load %arg14[%c0_32, %c0_33] : memref<1x1024xf32, #tpu.memory_space<vmem>>, vector<1x1024xf32>
        tpu.vector_store %arg14[%c0_32, %c0_33], %44 {strides = array<i32>} : memref<1x1024xf32, #tpu.memory_space<vmem>>, vector<1x1024xf32>,
      } else {
      }
      %c0_18 = arith.constant 0 : index
      %c0_19 = arith.constant 0 : index
      %31 = vector.load %arg13[%c0_18, %c0_19] : memref<1x1024xf32, #tpu.memory_space<vmem>>, vector<1x1024xf32>
      %cst_20 = arith.constant dense<0.000000e+00> : vector<1024xf32>
      %32 = vector.multi_reduction <add>, %22, %cst_20 [0] : vector<8x1024xf32> to vector<1024xf32>
      %33 = vector.shape_cast %32 : vector<1024xf32> to vector<1x1024xf32>
      %34 = arith.addf %31, %33 : vector<1x1024xf32>
      %c0_21 = arith.constant 0 : index
      %c0_22 = arith.constant 0 : index
      %35 = vector.load %arg13[%c0_21, %c0_22] : memref<1x1024xf32, #tpu.memory_space<vmem>>, vector<1x1024xf32>
      tpu.vector_store %arg13[%c0_21, %c0_22], %34 {strides = array<i32>} : memref<1x1024xf32, #tpu.memory_space<vmem>>, vector<1x1024xf32>,
      %c0_23 = arith.constant 0 : index
      %c0_24 = arith.constant 0 : index
      %36 = vector.load %arg14[%c0_23, %c0_24] : memref<1x1024xf32, #tpu.memory_space<vmem>>, vector<1x1024xf32>
      %37 = arith.mulf %22, %22 : vector<8x1024xf32>
      %cst_25 = arith.constant dense<0.000000e+00> : vector<1024xf32>
      %38 = vector.multi_reduction <add>, %37, %cst_25 [0] : vector<8x1024xf32> to vector<1024xf32>
      %39 = vector.shape_cast %38 : vector<1024xf32> to vector<1x1024xf32>
      %40 = arith.addf %36, %39 : vector<1x1024xf32>
      %c0_26 = arith.constant 0 : index
      %c0_27 = arith.constant 0 : index
      %41 = vector.load %arg14[%c0_26, %c0_27] : memref<1x1024xf32, #tpu.memory_space<vmem>>, vector<1x1024xf32>
      tpu.vector_store %arg14[%c0_26, %c0_27], %40 {strides = array<i32>} : memref<1x1024xf32, #tpu.memory_space<vmem>>, vector<1x1024xf32>,
    } else {
    }
    %c1_i32 = arith.constant 1 : i32
    %3 = arith.cmpi eq, %arg0, %c1_i32 : i32
    %4 = arith.extui %3 : i1 to i32
    %c0_i32_1 = arith.constant 0 : i32
    %5 = arith.cmpi ne, %4, %c0_i32_1 : i32
    scf.if %5 {
      %c0 = arith.constant 0 : index
      %c0_2 = arith.constant 0 : index
      %6 = vector.load %arg13[%c0, %c0_2] : memref<1x1024xf32, #tpu.memory_space<vmem>>, vector<1x1024xf32>
      %cst = arith.constant 1.250000e-01 : f32
      %7 = vector.broadcast %cst : f32 to vector<1x1024xf32>
      %8 = arith.mulf %6, %7 : vector<1x1024xf32>
      %c0_3 = arith.constant 0 : index
      %c0_4 = arith.constant 0 : index
      %9 = vector.load %arg14[%c0_3, %c0_4] : memref<1x1024xf32, #tpu.memory_space<vmem>>, vector<1x1024xf32>
      %cst_5 = arith.constant 1.250000e-01 : f32
      %10 = vector.broadcast %cst_5 : f32 to vector<1x1024xf32>
      %11 = arith.mulf %9, %10 : vector<1x1024xf32>
      %12 = arith.mulf %8, %8 : vector<1x1024xf32>
      %13 = arith.subf %11, %12 : vector<1x1024xf32>
      %cst_6 = arith.constant 0.000000e+00 : f32
      %14 = vector.broadcast %cst_6 : f32 to vector<1x1024xf32>
      %15 = arith.maximumf %13, %14 : vector<1x1024xf32>
      %c0_7 = arith.constant 0 : index
      %c0_8 = arith.constant 0 : index
      %16 = vector.load %arg7[%c0_7, %c0_8] : memref<1x1024xf32, #tpu.memory_space<vmem>>, vector<1x1024xf32>
      %cst_9 = arith.constant 9.99999974E-6 : f32
      %17 = vector.broadcast %cst_9 : f32 to vector<1x1024xf32>
      %18 = arith.addf %15, %17 : vector<1x1024xf32>
      %19 = math.rsqrt %18 : vector<1x1024xf32>
      %20 = arith.mulf %16, %19 : vector<1x1024xf32>
      %c0_10 = arith.constant 0 : index
      %c0_11 = arith.constant 0 : index
      %21 = vector.load %arg8[%c0_10, %c0_11] : memref<1x1024xf32, #tpu.memory_space<vmem>>, vector<1x1024xf32>
      %22 = arith.mulf %8, %20 : vector<1x1024xf32>
      %23 = arith.subf %21, %22 : vector<1x1024xf32>
      %24 = arith.index_cast %arg1 : i32 to index
      %c0_12 = arith.constant 0 : index
      %c0_13 = arith.constant 0 : index
      %25 = vector.load %arg12[%24, %c0_12, %c0_13] : memref<1x8x1024xbf16, #tpu.memory_space<vmem>>, vector<1x8x1024xbf16>
      %26 = vector.shape_cast %25 : vector<1x8x1024xbf16> to vector<8x1024xbf16>
      %27 = arith.extf %26 : vector<8x1024xbf16> to vector<8x1024xf32>
      %28 = vector.broadcast %20 : vector<1x1024xf32> to vector<8x1024xf32>
      %29 = arith.mulf %27, %28 : vector<8x1024xf32>
      %30 = vector.broadcast %23 : vector<1x1024xf32> to vector<8x1024xf32>
      %31 = arith.addf %29, %30 : vector<8x1024xf32>
      %cst_14 = arith.constant 0.000000e+00 : f32
      %32 = vector.broadcast %cst_14 : f32 to vector<8x1024xf32>
      %33 = arith.cmpf ogt, %31, %32 : vector<8x1024xf32>
      %cst_15 = arith.constant 2.000000e-01 : f32
      %34 = vector.broadcast %cst_15 : f32 to vector<8x1024xf32>
      %35 = arith.mulf %34, %31 : vector<8x1024xf32>
      %36 = arith.select %33, %31, %35 : vector<8x1024xi1>, vector<8x1024xf32>
      %37 = arith.truncf %36 : vector<8x1024xf32> to vector<8x1024xbf16>
      %c0_16 = arith.constant 0 : index
      %c0_17 = arith.constant 0 : index
      %38 = vector.load %arg9[%c0_16, %c0_17] : memref<1024x128xbf16, #tpu.memory_space<vmem>>, vector<1024x128xbf16>
      %cst_18 = arith.constant dense<0.000000e+00> : vector<8x128xf32>
      %39 = tpu.matmul %37, %38, %cst_18 {dimension_numbers = #tpu.dot_dimension_numbers<[1], [0], [0], [1], [0, 0, 1, 1], [], []>} : vector<8x1024xbf16>, vector<1024x128xbf16>, vector<8x128xf32> -> vector<8x128xf32>
      %c0_19 = arith.constant 0 : index
      %c0_20 = arith.constant 0 : index
      %40 = vector.load %arg10[%c0_19, %c0_20] : memref<1x128xf32, #tpu.memory_space<vmem>>, vector<1x128xf32>
      %41 = vector.broadcast %40 : vector<1x128xf32> to vector<8x128xf32>
      %42 = arith.addf %39, %41 : vector<8x128xf32>
      %c0_21 = arith.constant 0 : index
      %c0_22 = arith.constant 0 : index
      %43 = vector.load %arg11[%c0_21, %c0_22] : memref<8x128xf32, #tpu.memory_space<vmem>>, vector<8x128xf32>
      tpu.vector_store %arg11[%c0_21, %c0_22], %42 {strides = array<i32>} : memref<8x128xf32, #tpu.memory_space<vmem>>, vector<8x128xf32>,
    } else {
    }
    return
  }
  func.func @transform_0(%arg0: i32, %arg1: i32) -> (i32, i32) {
    %c1_i32 = arith.constant 1 : i32
    %0 = arith.subi %c1_i32, %arg0 : i32
    %1 = arith.muli %arg1, %0 : i32
    %c0_i32 = arith.constant 0 : i32
    %c0_i32_0 = arith.constant 0 : i32
    return %1, %c0_i32 : i32, i32
  }
  func.func @transform_1(%arg0: i32, %arg1: i32) -> (i32, i32) {
    %c0_i32 = arith.constant 0 : i32
    %c0_i32_0 = arith.constant 0 : i32
    %c0_i32_1 = arith.constant 0 : i32
    return %c0_i32, %c0_i32_0 : i32, i32
  }
  func.func @transform_2(%arg0: i32, %arg1: i32) -> (i32, i32) {
    %c0_i32 = arith.constant 0 : i32
    %c0_i32_0 = arith.constant 0 : i32
    %c0_i32_1 = arith.constant 0 : i32
    return %c0_i32, %c0_i32_0 : i32, i32
  }
  func.func @transform_3(%arg0: i32, %arg1: i32) -> (i32, i32) {
    %c0_i32 = arith.constant 0 : i32
    %c0_i32_0 = arith.constant 0 : i32
    %c0_i32_1 = arith.constant 0 : i32
    return %c0_i32, %c0_i32_0 : i32, i32
  }
  func.func @transform_4(%arg0: i32, %arg1: i32) -> (i32, i32) {
    %c0_i32 = arith.constant 0 : i32
    %c0_i32_0 = arith.constant 0 : i32
    %c0_i32_1 = arith.constant 0 : i32
    return %c0_i32, %c0_i32_0 : i32, i32
  }
  func.func @transform_5(%arg0: i32, %arg1: i32) -> (i32, i32) {
    %c0_i32 = arith.constant 0 : i32
    %c0_i32_0 = arith.constant 0 : i32
    %c0_i32_1 = arith.constant 0 : i32
    return %c0_i32, %c0_i32_0 : i32, i32
  }
  func.func @transform_6(%arg0: i32, %arg1: i32) -> (i32, i32) {
    %c0_i32 = arith.constant 0 : i32
    %c0_i32_0 = arith.constant 0 : i32
    %c0_i32_1 = arith.constant 0 : i32
    return %c0_i32, %c0_i32_0 : i32, i32
  }
  func.func @transform_7(%arg0: i32, %arg1: i32) -> (i32, i32) {
    %c0_i32 = arith.constant 0 : i32
    %c0_i32_0 = arith.constant 0 : i32
    %c0_i32_1 = arith.constant 0 : i32
    return %c0_i32, %c0_i32_0 : i32, i32
  }
  func.func @transform_8(%arg0: i32, %arg1: i32) -> (i32, i32) {
    %c0_i32 = arith.constant 0 : i32
    %c0_i32_0 = arith.constant 0 : i32
    %c0_i32_1 = arith.constant 0 : i32
    return %c0_i32, %c0_i32_0 : i32, i32
  }
  func.func @transform_9(%arg0: i32, %arg1: i32) -> (i32, i32) {
    %0 = arith.muli %arg1, %arg0 : i32
    %c0_i32 = arith.constant 0 : i32
    %c0_i32_0 = arith.constant 0 : i32
    return %0, %c0_i32 : i32, i32
  }
}

</mosaic_0001>

<llo_original>
// kernel: tpu_custom_call.1
$region0: #{tpu_custom_call.1}
  #allocation0 [shape = 'u32[]', space=smem, size = 0x4, offset = 0x4, fixed_abs, tag = 'smem constant byte address 0x4 - core index']
  #allocation1 [shape = 'u32[72,128]{1,0:T(1,128)}', space=vmem, size = 0x9000, scoped, tag = 'internal scratch']
  #allocation2 [shape = 'bf16[1,8,1024]{2,1,0:T(8,128)(2,1)}', space=vmem, size = 0x4000, scoped, tag = 'scratch operand']
  #allocation3 [shape = 'f32[1,1024]{1,0:T(1,128)}', space=vmem, size = 0x1000, scoped, tag = 'scratch operand']
  #allocation4 [shape = 'f32[1,1024]{1,0:T(1,128)}', space=vmem, size = 0x1000, scoped, tag = 'scratch operand']
  %s0 = inlined_call_operand.hbm [shape: bf16[8,784], index: 0, kind: input, shape index: {}]
  %s1 = inlined_call_operand.hbm [shape: bf16[784,1024], index: 1, kind: input, shape index: {}]
  %s2 = inlined_call_operand.hbm [shape: f32[1,1024], index: 2, kind: input, shape index: {}]
  %s3 = inlined_call_operand.hbm [shape: bf16[1024,1024], index: 3, kind: input, shape index: {}]
  %s4 = inlined_call_operand.hbm [shape: f32[1,1024], index: 4, kind: input, shape index: {}]
  %s5 = inlined_call_operand.hbm [shape: f32[1,1024], index: 5, kind: input, shape index: {}]
  %s6 = inlined_call_operand.hbm [shape: f32[1,1024], index: 6, kind: input, shape index: {}]
  %s7 = inlined_call_operand.hbm [shape: bf16[1024,128], index: 7, kind: input, shape index: {}]
  %s8 = inlined_call_operand.hbm [shape: f32[1,128], index: 8, kind: input, shape index: {}]
  %s9 = inlined_call_operand.hbm [shape: f32[8,128], index: 9, kind: output, shape index: {}]
  %s10 = sld [smem:[#allocation0]]
  $region117: #{tpu_custom_call.1} parent=0
    _
  %s12 = ssub.s32 1, %s10
  %s13 = scalar_select 0, %s12, %s10
  $region1: #{tpu_custom_call.1} parent=0
    #allocation5 [shape = 'u8[28672]{0}', space=vmem, size = 0x7000, scoped, tag = 'input window, operand 0']
    #allocation6 [shape = 's32[2]{0}', space=sflag, size = 0x8, scoped, tag = 'scoped memory for tpu_custom_call.1']
    #allocation7 [shape = 's32[2]{0}', space=sflag, size = 0x8, scoped, tag = 'scoped memory for tpu_custom_call.1']
    #allocation8 [shape = 'u8[1605632]{0}', space=vmem, size = 0x188000, scoped, tag = 'input window, operand 1, single buffered']
    #allocation9 [shape = 's32[1]{0}', space=sflag, size = 0x4, scoped, tag = 'scoped memory for tpu_custom_call.1']
    #allocation10 [shape = 'u8[4096]{0}', space=vmem, size = 0x1000, scoped, tag = 'input window, operand 2, single buffered']
    #allocation11 [shape = 'u8[2097152]{0}', space=vmem, size = 0x200000, scoped, tag = 'input window, operand 3, single buffered']
    #allocation12 [shape = 's32[1]{0}', space=sflag, size = 0x4, scoped, tag = 'scoped memory for tpu_custom_call.1']
    #allocation13 [shape = 'u8[4096]{0}', space=vmem, size = 0x1000, scoped, tag = 'input window, operand 4, single buffered']
    #allocation14 [shape = 'u8[4096]{0}', space=vmem, size = 0x1000, scoped, tag = 'input window, operand 5, single buffered']
    #allocation15 [shape = 's32[1]{0}', space=sflag, size = 0x4, scoped, tag = 'scoped memory for tpu_custom_call.1']
    #allocation16 [shape = 'u8[4096]{0}', space=vmem, size = 0x1000, scoped, tag = 'input window, operand 6, single buffered']
    #allocation17 [shape = 'u8[262144]{0}', space=vmem, size = 0x40000, scoped, tag = 'input window, operand 7, single buffered']
    #allocation18 [shape = 's32[1]{0}', space=sflag, size = 0x4, scoped, tag = 'scoped memory for tpu_custom_call.1']
    #allocation19 [shape = 'u8[512]{0}', space=vmem, size = 0x400, scoped, tag = 'input window, operand 8, single buffered']
    #allocation20 [shape = 'u8[8192]{0}', space=vmem, size = 0x2000, scoped, tag = 'output window, operand 0']
    %14 = vsyncpa [#allocation6], 0
    %s15 = scalar_lea.sflag [#allocation6], 1
    %16 = vsyncpa %s15, 0
    %17 = vsyncpa [#allocation9], 0
    %18 = vsyncpa [#allocation12], 0
    %19 = vsyncpa [#allocation15], 0
    %20 = vsyncpa [#allocation18], 0
    %21 = vsyncpa [#allocation7], 0
    %s22 = scalar_lea.sflag [#allocation7], 1
    %23 = vsyncpa %s22, 0
    loop: start=0, step=1, limit=4
    $region2: #{tpu_custom_call.1} parent=1 // loop_pre_header
      _
    $region3: #{tpu_custom_call.1} parent=1 // loop_header
      %s25 = sphi 0, %s29
      %p26 = scmp.ge.s32.totalorder %s25, 4
      %s32 = sphi 0, %s44
      %s33 = sphi 0, %s40
      %s34 = sphi 0, %s32
      %s35 = sphi 0, %s33
      %s36 = sphi 0, %s34
      %s37 = sphi 0, %s35
      %s51 = sphi 0, %s53
      %s54 = sphi 0, %s51
      %s55 = sphi 0, %s54
      %s71 = sphi 0, %s55
      %s75 = sphi 0, %s75
      %s77 = sphi 0, %s75
      %s78 = sphi 0, %s77
      %s92 = sphi 0, %s78
      %s96 = sphi 0, %s96
      %s98 = sphi 0, %s96
      %s99 = sphi 0, %s98
      %s113 = sphi 0, %s99
      %s117 = sphi 0, %s117
      %s119 = sphi 0, %s117
      %s120 = sphi 0, %s119
      %s134 = sphi 0, %s120
      %s138 = sphi 0, %s138
      %s140 = sphi 0, %s138
      %s141 = sphi 0, %s140
      %s155 = sphi 0, %s141
      %s159 = sphi 0, %s159
      %s161 = sphi 0, %s159
      %s162 = sphi 0, %s161
      %s176 = sphi 0, %s162
      %s180 = sphi 0, %s180
      %s182 = sphi 0, %s180
      %s183 = sphi 0, %s182
      %s197 = sphi 0, %s183
      %s201 = sphi 0, %s201
      %s203 = sphi 0, %s201
      %s204 = sphi 0, %s203
      %s218 = sphi 0, %s204
      %s222 = sphi 0, %s222
      %s224 = sphi 0, %s222
      %s225 = sphi 0, %s224
      %s239 = sphi 0, %s225
      %s247 = sphi 0, %s249
      %s250 = sphi 0, %s247
      %s251 = sphi 0, %s250
      %s267 = sphi 0, %s251
    $region4: #{tpu_custom_call.1} parent=1 // loop_header_branch
      %28 = sbr.rel (%p26) target = $region8
    $region5: #{tpu_custom_call.1} parent=1 // loop_body
      %s30 = ssub.s32 %s25, 1
      %s31 = ssub.s32 %s25, 2
      %s38 = sadd.s32 1, %s33
      %p39 = scmp.ge.s32.totalorder %s38, 1
      %s40 = scalar_select %p39, 0, %s38
      %s41 = sadd.s32 1, %s32
      %s42 = scalar_select %p39, %s41, %s32
      %p43 = scmp.ge.s32.totalorder %s42, 2
      %s44 = scalar_select %p43, 0, %s42
      %s45 = ssub.s32 1, %s32
      %s46 = smul.u32 %s33, %s45
      %s47 = ssub.s32 1, %s44
      %s48 = smul.u32 %s40, %s47
      %s49 = ssub.s32 %s46, %s48
      %p50 = scmp.eq.s32.totalorder %s49, 0
      %s52 = sadd.s32 %s51, 1
      %s53 = scalar_select %p50, %s51, %s52
      %p56 = pneg %p50
      %p57 = scmp.eq.s32.totalorder %s25, 1
      %p58 = por %p56, %p57
      %p59 = scmp.ne.s32.totalorder %s51, %s54
      %p60 = scmp.eq.s32.totalorder %s25, 0
      %p61 = por %p59, %p60
      %p62 = scmp.ne.s32.totalorder %s51, %s54
      %p63 = scmp.eq.s32.totalorder %s30, 1
      %p64 = por %p62, %p63
      %p65 = scmp.ne.s32.totalorder %s54, %s55
      %p66 = scmp.eq.s32.totalorder %s30, 0
      %p67 = por %p65, %p66
      %p68 = scmp.ne.s32.totalorder %s54, %s55
      %p69 = scmp.eq.s32.totalorder %s31, 1
      %p70 = por %p68, %p69
      %p72 = scmp.ne.s32.totalorder %s55, %s71
      %p73 = scmp.eq.s32.totalorder %s31, 0
      %p74 = por %p72, %p73
      %s76 = sadd.s32 %s75, 1
      %p79 = scmp.eq.s32.totalorder %s25, 1
      %p80 = scmp.ne.s32.totalorder %s75, %s77
      %p81 = scmp.eq.s32.totalorder %s25, 0
      %p82 = por %p80, %p81
      %p83 = scmp.ne.s32.totalorder %s75, %s77
      %p84 = scmp.eq.s32.totalorder %s30, 1
      %p85 = por %p83, %p84
      %p86 = scmp.ne.s32.totalorder %s77, %s78
      %p87 = scmp.eq.s32.totalorder %s30, 0
      %p88 = por %p86, %p87
      %p89 = scmp.ne.s32.totalorder %s77, %s78
      %p90 = scmp.eq.s32.totalorder %s31, 1
      %p91 = por %p89, %p90
      %p93 = scmp.ne.s32.totalorder %s78, %s92
      %p94 = scmp.eq.s32.totalorder %s31, 0
      %p95 = por %p93, %p94
      %s97 = sadd.s32 %s96, 1
      %p100 = scmp.eq.s32.totalorder %s25, 1
      %p101 = scmp.ne.s32.totalorder %s96, %s98
      %p102 = scmp.eq.s32.totalorder %s25, 0
      %p103 = por %p101, %p102
      %p104 = scmp.ne.s32.totalorder %s96, %s98
      %p105 = scmp.eq.s32.totalorder %s30, 1
      %p106 = por %p104, %p105
      %p107 = scmp.ne.s32.totalorder %s98, %s99
      %p108 = scmp.eq.s32.totalorder %s30, 0
      %p109 = por %p107, %p108
      %p110 = scmp.ne.s32.totalorder %s98, %s99
      %p111 = scmp.eq.s32.totalorder %s31, 1
      %p112 = por %p110, %p111
      %p114 = scmp.ne.s32.totalorder %s99, %s113
      %p115 = scmp.eq.s32.totalorder %s31, 0
      %p116 = por %p114, %p115
      %s118 = sadd.s32 %s117, 1
      %p121 = scmp.eq.s32.totalorder %s25, 1
      %p122 = scmp.ne.s32.totalorder %s117, %s119
      %p123 = scmp.eq.s32.totalorder %s25, 0
      %p124 = por %p122, %p123
      %p125 = scmp.ne.s32.totalorder %s117, %s119
      %p126 = scmp.eq.s32.totalorder %s30, 1
      %p127 = por %p125, %p126
      %p128 = scmp.ne.s32.totalorder %s119, %s120
      %p129 = scmp.eq.s32.totalorder %s30, 0
      %p130 = por %p128, %p129
      %p131 = scmp.ne.s32.totalorder %s119, %s120
      %p132 = scmp.eq.s32.totalorder %s31, 1
      %p133 = por %p131, %p132
      %p135 = scmp.ne.s32.totalorder %s120, %s134
      %p136 = scmp.eq.s32.totalorder %s31, 0
      %p137 = por %p135, %p136
      %s139 = sadd.s32 %s138, 1
      %p142 = scmp.eq.s32.totalorder %s25, 1
      %p143 = scmp.ne.s32.totalorder %s138, %s140
      %p144 = scmp.eq.s32.totalorder %s25, 0
      %p145 = por %p143, %p144
      %p146 = scmp.ne.s32.totalorder %s138, %s140
      %p147 = scmp.eq.s32.totalorder %s30, 1
      %p148 = por %p146, %p147
      %p149 = scmp.ne.s32.totalorder %s140, %s141
      %p150 = scmp.eq.s32.totalorder %s30, 0
      %p151 = por %p149, %p150
      %p152 = scmp.ne.s32.totalorder %s140, %s141
      %p153 = scmp.eq.s32.totalorder %s31, 1
      %p154 = por %p152, %p153
      %p156 = scmp.ne.s32.totalorder %s141, %s155
      %p157 = scmp.eq.s32.totalorder %s31, 0
      %p158 = por %p156, %p157
      %s160 = sadd.s32 %s159, 1
      %p163 = scmp.eq.s32.totalorder %s25, 1
      %p164 = scmp.ne.s32.totalorder %s159, %s161
      %p165 = scmp.eq.s32.totalorder %s25, 0
      %p166 = por %p164, %p165
      %p167 = scmp.ne.s32.totalorder %s159, %s161
      %p168 = scmp.eq.s32.totalorder %s30, 1
      %p169 = por %p167, %p168
      %p170 = scmp.ne.s32.totalorder %s161, %s162
      %p171 = scmp.eq.s32.totalorder %s30, 0
      %p172 = por %p170, %p171
      %p173 = scmp.ne.s32.totalorder %s161, %s162
      %p174 = scmp.eq.s32.totalorder %s31, 1
      %p175 = por %p173, %p174
      %p177 = scmp.ne.s32.totalorder %s162, %s176
      %p178 = scmp.eq.s32.totalorder %s31, 0
      %p179 = por %p177, %p178
      %s181 = sadd.s32 %s180, 1
      %p184 = scmp.eq.s32.totalorder %s25, 1
      %p185 = scmp.ne.s32.totalorder %s180, %s182
      %p186 = scmp.eq.s32.totalorder %s25, 0
      %p187 = por %p185, %p186
      %p188 = scmp.ne.s32.totalorder %s180, %s182
      %p189 = scmp.eq.s32.totalorder %s30, 1
      %p190 = por %p188, %p189
      %p191 = scmp.ne.s32.totalorder %s182, %s183
      %p192 = scmp.eq.s32.totalorder %s30, 0
      %p193 = por %p191, %p192
      %p194 = scmp.ne.s32.totalorder %s182, %s183
      %p195 = scmp.eq.s32.totalorder %s31, 1
      %p196 = por %p194, %p195
      %p198 = scmp.ne.s32.totalorder %s183, %s197
      %p199 = scmp.eq.s32.totalorder %s31, 0
      %p200 = por %p198, %p199
      %s202 = sadd.s32 %s201, 1
      %p205 = scmp.eq.s32.totalorder %s25, 1
      %p206 = scmp.ne.s32.totalorder %s201, %s203
      %p207 = scmp.eq.s32.totalorder %s25, 0
      %p208 = por %p206, %p207
      %p209 = scmp.ne.s32.totalorder %s201, %s203
      %p210 = scmp.eq.s32.totalorder %s30, 1
      %p211 = por %p209, %p210
      %p212 = scmp.ne.s32.totalorder %s203, %s204
      %p213 = scmp.eq.s32.totalorder %s30, 0
      %p214 = por %p212, %p213
      %p215 = scmp.ne.s32.totalorder %s203, %s204
      %p216 = scmp.eq.s32.totalorder %s31, 1
      %p217 = por %p215, %p216
      %p219 = scmp.ne.s32.totalorder %s204, %s218
      %p220 = scmp.eq.s32.totalorder %s31, 0
      %p221 = por %p219, %p220
      %s223 = sadd.s32 %s222, 1
      %p226 = scmp.eq.s32.totalorder %s25, 1
      %p227 = scmp.ne.s32.totalorder %s222, %s224
      %p228 = scmp.eq.s32.totalorder %s25, 0
      %p229 = por %p227, %p228
      %p230 = scmp.ne.s32.totalorder %s222, %s224
      %p231 = scmp.eq.s32.totalorder %s30, 1
      %p232 = por %p230, %p231
      %p233 = scmp.ne.s32.totalorder %s224, %s225
      %p234 = scmp.eq.s32.totalorder %s30, 0
      %p235 = por %p233, %p234
      %p236 = scmp.ne.s32.totalorder %s224, %s225
      %p237 = scmp.eq.s32.totalorder %s31, 1
      %p238 = por %p236, %p237
      %p240 = scmp.ne.s32.totalorder %s225, %s239
      %p241 = scmp.eq.s32.totalorder %s31, 0
      %p242 = por %p240, %p241
      %s243 = smul.u32 %s33, %s32
      %s244 = smul.u32 %s40, %s44
      %s245 = ssub.s32 %s243, %s244
      %p246 = scmp.eq.s32.totalorder %s245, 0
      %s248 = sadd.s32 %s247, 1
      %s249 = scalar_select %p246, %s247, %s248
      %p252 = pneg %p246
      %p253 = scmp.eq.s32.totalorder %s25, 1
      %p254 = por %p252, %p253
      %p255 = scmp.ne.s32.totalorder %s247, %s250
      %p256 = scmp.eq.s32.totalorder %s25, 0
      %p257 = por %p255, %p256
      %p258 = scmp.ne.s32.totalorder %s247, %s250
      %p259 = scmp.eq.s32.totalorder %s30, 1
      %p260 = por %p258, %p259
      %p261 = scmp.ne.s32.totalorder %s250, %s251
      %p262 = scmp.eq.s32.totalorder %s30, 0
      %p263 = por %p261, %p262
      %p264 = scmp.ne.s32.totalorder %s250, %s251
      %p265 = scmp.eq.s32.totalorder %s31, 1
      %p266 = por %p264, %p265
      %p268 = scmp.ne.s32.totalorder %s251, %s267
      %p269 = scmp.eq.s32.totalorder %s31, 0
      %p270 = por %p268, %p269
      %p271 = scmp.le.s32.totalorder 1, %s25
      %p272 = scmp.lt.s32.totalorder %s25, 3
      %p273 = pnand %p271, %p272
      %p274 = pneg %p273
      // Predicated region
      $region9: #{tpu_custom_call.1} parent=5 // pred_check
        _
      $region10: #{tpu_custom_call.1} parent=5 // pred_check_branch
        %276 = sbr.rel (%p273) target = $region12
      $region11: #{tpu_custom_call.1} parent=5 // pred_region
        %s277 = ssub.s32 %s25, 1
        // Predicated region
        $region13: #{tpu_custom_call.1} parent=11 // pred_check
          %p278 = pneg %p88
        $region14: #{tpu_custom_call.1} parent=11 // pred_check_branch
          %280 = sbr.rel (%p278) target = $region16
        $region15: #{tpu_custom_call.1} parent=11 // pred_region
          %282 = vsyncadd [#allocation9], 0
          %s283 = sshll.u32 %s1, 4
          %s284 = int_to_ptr.hbm [resolvable:$true] %s283
          %s285 = sshll.u32 [#allocation8], 4
          %s286 = int_to_ptr.vmem [resolvable:$true] %s285
          %291 = dma.hbm_to_vmem [thread:$0]  %s284, 50176, %s286, [#allocation9], 512, 512, 32
        $region16: #{tpu_custom_call.1} parent=11 // pred_fallthru
          _
        // Predicated region
        $region17: #{tpu_custom_call.1} parent=11 // pred_check
          %p292 = pneg %p109
        $region18: #{tpu_custom_call.1} parent=11 // pred_check_branch
          %294 = sbr.rel (%p292) target = $region20
        $region19: #{tpu_custom_call.1} parent=11 // pred_region
          %296 = vsyncadd [#allocation9], 0
          %s298 = sshll.u32 %s2, 4
          %s299 = int_to_ptr.hbm [resolvable:$true] %s298
          %s300 = sshll.u32 [#allocation10], 4
          %s301 = int_to_ptr.vmem [resolvable:$true] %s300
          %303 = dma.hbm_to_vmem [thread:$0]  %s299, 128, %s301, [#allocation9]
        $region20: #{tpu_custom_call.1} parent=11 // pred_fallthru
          _
        // Predicated region
        $region21: #{tpu_custom_call.1} parent=11 // pred_check
          %p304 = pneg %p130
        $region22: #{tpu_custom_call.1} parent=11 // pred_check_branch
          %306 = sbr.rel (%p304) target = $region24
        $region23: #{tpu_custom_call.1} parent=11 // pred_region
          %308 = vsyncadd [#allocation12], 0
          %s309 = sshll.u32 %s3, 4
          %s310 = int_to_ptr.hbm [resolvable:$true] %s309
          %s311 = sshll.u32 [#allocation11], 4
          %s312 = int_to_ptr.vmem [resolvable:$true] %s311
          %317 = dma.hbm_to_vmem [thread:$0]  %s310, 65536, %s312, [#allocation12], 512, 512, 32
        $region24: #{tpu_custom_call.1} parent=11 // pred_fallthru
          _
        // Predicated region
        $region25: #{tpu_custom_call.1} parent=11 // pred_check
          %p318 = pneg %p151
        $region26: #{tpu_custom_call.1} parent=11 // pred_check_branch
          %320 = sbr.rel (%p318) target = $region28
        $region27: #{tpu_custom_call.1} parent=11 // pred_region
          %322 = vsyncadd [#allocation12], 0
          %s324 = sshll.u32 %s4, 4
          %s325 = int_to_ptr.hbm [resolvable:$true] %s324
          %s326 = sshll.u32 [#allocation13], 4
          %s327 = int_to_ptr.vmem [resolvable:$true] %s326
          %329 = dma.hbm_to_vmem [thread:$0]  %s325, 128, %s327, [#allocation12]
        $region28: #{tpu_custom_call.1} parent=11 // pred_fallthru
          _
        // Predicated region
        $region29: #{tpu_custom_call.1} parent=11 // pred_check
          %p330 = pneg %p172
        $region30: #{tpu_custom_call.1} parent=11 // pred_check_branch
          %332 = sbr.rel (%p330) target = $region32
        $region31: #{tpu_custom_call.1} parent=11 // pred_region
          %334 = vsyncadd [#allocation15], 0
          %s336 = sshll.u32 %s5, 4
          %s337 = int_to_ptr.hbm [resolvable:$true] %s336
          %s338 = sshll.u32 [#allocation14], 4
          %s339 = int_to_ptr.vmem [resolvable:$true] %s338
          %341 = dma.hbm_to_vmem [thread:$0]  %s337, 128, %s339, [#allocation15]
        $region32: #{tpu_custom_call.1} parent=11 // pred_fallthru
          _
        // Predicated region
        $region33: #{tpu_custom_call.1} parent=11 // pred_check
          %p342 = pneg %p193
        $region34: #{tpu_custom_call.1} parent=11 // pred_check_branch
          %344 = sbr.rel (%p342) target = $region36
        $region35: #{tpu_custom_call.1} parent=11 // pred_region
          %346 = vsyncadd [#allocation15], 0
          %s348 = sshll.u32 %s6, 4
          %s349 = int_to_ptr.hbm [resolvable:$true] %s348
          %s350 = sshll.u32 [#allocation16], 4
          %s351 = int_to_ptr.vmem [resolvable:$true] %s350
          %353 = dma.hbm_to_vmem [thread:$0]  %s349, 128, %s351, [#allocation15]
        $region36: #{tpu_custom_call.1} parent=11 // pred_fallthru
          _
        // Predicated region
        $region37: #{tpu_custom_call.1} parent=11 // pred_check
          %p354 = pneg %p214
        $region38: #{tpu_custom_call.1} parent=11 // pred_check_branch
          %356 = sbr.rel (%p354) target = $region40
        $region39: #{tpu_custom_call.1} parent=11 // pred_region
          %358 = vsyncadd [#allocation18], 0
          %s359 = sshll.u32 %s7, 4
          %s360 = int_to_ptr.hbm [resolvable:$true] %s359
          %s361 = sshll.u32 [#allocation17], 4
          %s362 = int_to_ptr.vmem [resolvable:$true] %s361
          %367 = dma.hbm_to_vmem [thread:$0]  %s360, 8192, %s362, [#allocation18], 64, 64, 4
        $region40: #{tpu_custom_call.1} parent=11 // pred_fallthru
          _
        // Predicated region
        $region41: #{tpu_custom_call.1} parent=11 // pred_check
          %p368 = pneg %p235
        $region42: #{tpu_custom_call.1} parent=11 // pred_check_branch
          %370 = sbr.rel (%p368) target = $region44
        $region43: #{tpu_custom_call.1} parent=11 // pred_region
          %372 = vsyncadd [#allocation18], 0
          %s374 = sshll.u32 %s8, 4
          %s375 = int_to_ptr.hbm [resolvable:$true] %s374
          %s376 = sshll.u32 [#allocation19], 4
          %s377 = int_to_ptr.vmem [resolvable:$true] %s376
          %379 = dma.hbm_to_vmem [thread:$0]  %s375, 16, %s377, [#allocation18]
        $region44: #{tpu_custom_call.1} parent=11 // pred_fallthru
          _
      $region12: #{tpu_custom_call.1} parent=5 // pred_fallthru
        _
      %p380 = scmp.lt.s32.totalorder %s25, 2
      // Predicated region
      $region45: #{tpu_custom_call.1} parent=5 // pred_check
        %p381 = pneg %p380
      $region46: #{tpu_custom_call.1} parent=5 // pred_check_branch
        %383 = sbr.rel (%p381) target = $region48
      $region47: #{tpu_custom_call.1} parent=5 // pred_region
        // Predicated region
        $region49: #{tpu_custom_call.1} parent=47 // pred_check
          %p384 = pneg %p61
        $region50: #{tpu_custom_call.1} parent=47 // pred_check_branch
          %386 = sbr.rel (%p384) target = $region52
        $region51: #{tpu_custom_call.1} parent=47 // pred_region
          %s387 = sand.u32 %s51, 1
          %s388 = scalar_lea.sflag [#allocation6], %s387
          %s389 = sand.u32 %s51, 1
          %s390 = smul.addr %s389, 28
          %s391 = scalar_lea.vmem [#allocation5], %s390
          %s392 = ssub.s32 1, %s32
          %s393 = smul.u32 %s33, %s392
          %395 = vsyncadd %s388, 0
          %s396 = smul.addr %s393, 7
          %s397 = smul.addr %s396, 4
          %s398 = scalar_lea.hbm %s0, %s397
          %s400 = sshll.u32 %s398, 4
          %s401 = int_to_ptr.hbm [resolvable:$true] %s400
          %s402 = sshll.u32 %s391, 4
          %s403 = int_to_ptr.vmem [resolvable:$true] %s402
          %405 = dma.hbm_to_vmem [thread:$0]  %s401, 448, %s403, %s388
        $region52: #{tpu_custom_call.1} parent=47 // pred_fallthru
          _
      $region48: #{tpu_custom_call.1} parent=5 // pred_fallthru
        _
      %p406 = scmp.le.s32.totalorder 1, %s25
      %p407 = scmp.lt.s32.totalorder %s25, 3
      %p408 = pnand %p406, %p407
      %p409 = pneg %p408
      // Predicated region
      $region53: #{tpu_custom_call.1} parent=5 // pred_check
        _
      $region54: #{tpu_custom_call.1} parent=5 // pred_check_branch
        %411 = sbr.rel (%p408) target = $region56
      $region55: #{tpu_custom_call.1} parent=5 // pred_region
        %s412 = ssub.s32 %s25, 1
        %s413 = sand.u32 %s54, 1
        %s414 = scalar_lea.sflag [#allocation6], %s413
        %s415 = sand.u32 %s54, 1
        %s416 = smul.addr %s415, 28
        %s417 = scalar_lea.vmem [#allocation5], %s416
        // Predicated region
        $region57: #{tpu_custom_call.1} parent=55 // pred_check
          %p418 = pneg %p67
        $region58: #{tpu_custom_call.1} parent=55 // pred_check_branch
          %420 = sbr.rel (%p418) target = $region60
        $region59: #{tpu_custom_call.1} parent=55 // pred_region
          %422 = dma.done %s414, 448
        $region60: #{tpu_custom_call.1} parent=55 // pred_fallthru
          _
        // Predicated region
        $region61: #{tpu_custom_call.1} parent=55 // pred_check
          %p423 = pneg %p88
        $region62: #{tpu_custom_call.1} parent=55 // pred_check_branch
          %425 = sbr.rel (%p423) target = $region64
        $region63: #{tpu_custom_call.1} parent=55 // pred_region
          %427 = dma.done [#allocation9], 50176
        $region64: #{tpu_custom_call.1} parent=55 // pred_fallthru
          _
        // Predicated region
        $region65: #{tpu_custom_call.1} parent=55 // pred_check
          %p428 = pneg %p109
        $region66: #{tpu_custom_call.1} parent=55 // pred_check_branch
          %430 = sbr.rel (%p428) target = $region68
        $region67: #{tpu_custom_call.1} parent=55 // pred_region
          %432 = dma.done [#allocation9], 128
        $region68: #{tpu_custom_call.1} parent=55 // pred_fallthru
          _
        // Predicated region
        $region69: #{tpu_custom_call.1} parent=55 // pred_check
          %p433 = pneg %p130
        $region70: #{tpu_custom_call.1} parent=55 // pred_check_branch
          %435 = sbr.rel (%p433) target = $region72
        $region71: #{tpu_custom_call.1} parent=55 // pred_region
          %437 = dma.done [#allocation12], 65536
        $region72: #{tpu_custom_call.1} parent=55 // pred_fallthru
          _
        // Predicated region
        $region73: #{tpu_custom_call.1} parent=55 // pred_check
          %p438 = pneg %p151
        $region74: #{tpu_custom_call.1} parent=55 // pred_check_branch
          %440 = sbr.rel (%p438) target = $region76
        $region75: #{tpu_custom_call.1} parent=55 // pred_region
          %442 = dma.done [#allocation12], 128
        $region76: #{tpu_custom_call.1} parent=55 // pred_fallthru
          _
        // Predicated region
        $region77: #{tpu_custom_call.1} parent=55 // pred_check
          %p443 = pneg %p172
        $region78: #{tpu_custom_call.1} parent=55 // pred_check_branch
          %445 = sbr.rel (%p443) target = $region80
        $region79: #{tpu_custom_call.1} parent=55 // pred_region
          %447 = dma.done [#allocation15], 128
        $region80: #{tpu_custom_call.1} parent=55 // pred_fallthru
          _
        // Predicated region
        $region81: #{tpu_custom_call.1} parent=55 // pred_check
          %p448 = pneg %p193
        $region82: #{tpu_custom_call.1} parent=55 // pred_check_branch
          %450 = sbr.rel (%p448) target = $region84
        $region83: #{tpu_custom_call.1} parent=55 // pred_region
          %452 = dma.done [#allocation15], 128
        $region84: #{tpu_custom_call.1} parent=55 // pred_fallthru
          _
        // Predicated region
        $region85: #{tpu_custom_call.1} parent=55 // pred_check
          %p453 = pneg %p214
        $region86: #{tpu_custom_call.1} parent=55 // pred_check_branch
          %455 = sbr.rel (%p453) target = $region88
        $region87: #{tpu_custom_call.1} parent=55 // pred_region
          %457 = dma.done [#allocation18], 8192
        $region88: #{tpu_custom_call.1} parent=55 // pred_fallthru
          _
        // Predicated region
        $region89: #{tpu_custom_call.1} parent=55 // pred_check
          %p458 = pneg %p235
        $region90: #{tpu_custom_call.1} parent=55 // pred_check_branch
          %460 = sbr.rel (%p458) target = $region92
        $region91: #{tpu_custom_call.1} parent=55 // pred_region
          %462 = dma.done [#allocation18], 16
        $region92: #{tpu_custom_call.1} parent=55 // pred_fallthru
          _
        %s463 = sand.u32 %s54, 1
        %s464 = scalar_lea.sflag [#allocation6], %s463
        %s465 = sand.u32 %s54, 1
        %s466 = smul.addr %s465, 28
        %s467 = scalar_lea.vmem [#allocation5], %s466
        %p468 = pneg %p67
        %p469 = pneg %p64
        %p470 = pneg %p88
        %p471 = pneg %p85
        %p472 = pneg %p109
        %p473 = pneg %p106
        %p474 = pneg %p130
        %p475 = pneg %p127
        %p476 = pneg %p151
        %p477 = pneg %p148
        %p478 = pneg %p172
        %p479 = pneg %p169
        %p480 = pneg %p193
        %p481 = pneg %p190
        %p482 = pneg %p214
        %p483 = pneg %p211
        %p484 = pneg %p235
        %p485 = pneg %p232
        %p486 = pneg %p263
        %p487 = pneg %p260
        %s488 = sand.u32 %s250, 1
        %s489 = scalar_lea.sflag [#allocation7], %s488
        %s490 = sand.u32 %s250, 1
        %s491 = smul.addr %s490, 8
        %s492 = scalar_lea.vmem [#allocation20], %s491
        %s493 = ssub.s32 1, %s34
        %s494 = smul.u32 %s35, %s493
        %s495 = smul.u32 %s35, %s34
        %p497 = scmp.eq.s32.totalorder %s34, 0
        // Predicated region
        $region93: #{tpu_custom_call.1} parent=55 // pred_check
          %p498 = pneg %p497
        $region94: #{tpu_custom_call.1} parent=55 // pred_check_branch
          %500 = sbr.rel (%p498) target = $region96
        $region95: #{tpu_custom_call.1} parent=55 // pred_region
          %v501 = vld [vmem:[%s417] sm:$0xff]
          %v502 = vld [vmem:[%s417 + $0x8] sm:$0xff]
          %v503 = vld [vmem:[%s417 + $0x10] sm:$0xff]
          %v504 = vld [vmem:[%s417 + $0x18] sm:$0xf]
          %v505 = vld [vmem:[#allocation8] sm:$0xff]
          %v506 = vld [vmem:[#allocation8 + $0x8] sm:$0xff]
          %v507 = vld [vmem:[#allocation8 + $0x10] sm:$0xff]
          %v508 = vld [vmem:[#allocation8 + $0x18] sm:$0xff]
          %v509 = vld [vmem:[#allocation8 + $0x20] sm:$0xff]
          %v510 = vld [vmem:[#allocation8 + $0x28] sm:$0xff]
          %v511 = vld [vmem:[#allocation8 + $0x30] sm:$0xff]
          %v512 = vld [vmem:[#allocation8 + $0x38] sm:$0xff]
          %v513 = vld [vmem:[#allocation8 + $0x40] sm:$0xff]
          %v514 = vld [vmem:[#allocation8 + $0x48] sm:$0xff]
          %v515 = vld [vmem:[#allocation8 + $0x50] sm:$0xff]
          %v516 = vld [vmem:[#allocation8 + $0x58] sm:$0xff]
          %v517 = vld [vmem:[#allocation8 + $0x60] sm:$0xff]
          %v518 = vld [vmem:[#allocation8 + $0x68] sm:$0xff]
          %v519 = vld [vmem:[#allocation8 + $0x70] sm:$0xff]
          %v520 = vld [vmem:[#allocation8 + $0x78] sm:$0xff]
          %v521 = vld [vmem:[#allocation8 + $0x80] sm:$0xff]
          %v522 = vld [vmem:[#allocation8 + $0x88] sm:$0xff]
          %v523 = vld [vmem:[#allocation8 + $0x90] sm:$0xff]
          %v524 = vld [vmem:[#allocation8 + $0x98] sm:$0xff]
          %v525 = vld [vmem:[#allocation8 + $0xa0] sm:$0xff]
          %v526 = vld [vmem:[#allocation8 + $0xa8] sm:$0xff]
          %v527 = vld [vmem:[#allocation8 + $0xb0] sm:$0xff]
          %v528 = vld [vmem:[#allocation8 + $0xb8] sm:$0xff]
          %v529 = vld [vmem:[#allocation8 + $0xc0] sm:$0xff]
          %v530 = vld [vmem:[#allocation8 + $0xc8] sm:$0xff]
          %v531 = vld [vmem:[#allocation8 + $0xd0] sm:$0xff]
          %v532 = vld [vmem:[#allocation8 + $0xd8] sm:$0xff]
          %v533 = vld [vmem:[#allocation8 + $0xe0] sm:$0xff]
          %v534 = vld [vmem:[#allocation8 + $0xe8] sm:$0xff]
          %v535 = vld [vmem:[#allocation8 + $0xf0] sm:$0xff]
          %v536 = vld [vmem:[#allocation8 + $0xf8] sm:$0xff]
          %v537 = vld [vmem:[#allocation8 + $0x100] sm:$0xff]
          %v538 = vld [vmem:[#allocation8 + $0x108] sm:$0xff]
          %v539 = vld [vmem:[#allocation8 + $0x110] sm:$0xff]
          %v540 = vld [vmem:[#allocation8 + $0x118] sm:$0xff]
          %v541 = vld [vmem:[#allocation8 + $0x120] sm:$0xff]
          %v542 = vld [vmem:[#allocation8 + $0x128] sm:$0xff]
          %v543 = vld [vmem:[#allocation8 + $0x130] sm:$0xff]
          %v544 = vld [vmem:[#allocation8 + $0x138] sm:$0xff]
          %v545 = vld [vmem:[#allocation8 + $0x140] sm:$0xff]
          %v546 = vld [vmem:[#allocation8 + $0x148] sm:$0xff]
          %v547 = vld [vmem:[#allocation8 + $0x150] sm:$0xff]
          %v548 = vld [vmem:[#allocation8 + $0x158] sm:$0xff]
          %v549 = vld [vmem:[#allocation8 + $0x160] sm:$0xff]
          %v550 = vld [vmem:[#allocation8 + $0x168] sm:$0xff]
          %v551 = vld [vmem:[#allocation8 + $0x170] sm:$0xff]
          %v552 = vld [vmem:[#allocation8 + $0x178] sm:$0xff]
          %v553 = vld [vmem:[#allocation8 + $0x180] sm:$0xff]
          %v554 = vld [vmem:[#allocation8 + $0x188] sm:$0xff]
          %v555 = vld [vmem:[#allocation8 + $0x190] sm:$0xff]
          %v556 = vld [vmem:[#allocation8 + $0x198] sm:$0xff]
          %v557 = vld [vmem:[#allocation8 + $0x1a0] sm:$0xff]
          %v558 = vld [vmem:[#allocation8 + $0x1a8] sm:$0xff]
          %v559 = vld [vmem:[#allocation8 + $0x1b0] sm:$0xff]
          %v560 = vld [vmem:[#allocation8 + $0x1b8] sm:$0xff]
          %v561 = vld [vmem:[#allocation8 + $0x1c0] sm:$0xff]
          %v562 = vld [vmem:[#allocation8 + $0x1c8] sm:$0xff]
          %v563 = vld [vmem:[#allocation8 + $0x1d0] sm:$0xff]
          %v564 = vld [vmem:[#allocation8 + $0x1d8] sm:$0xff]
          %v565 = vld [vmem:[#allocation8 + $0x1e0] sm:$0xff]
          %v566 = vld [vmem:[#allocation8 + $0x1e8] sm:$0xff]
          %v567 = vld [vmem:[#allocation8 + $0x1f0] sm:$0xff]
          %v568 = vld [vmem:[#allocation8 + $0x1f8] sm:$0xff]
          %v569 = vld [vmem:[#allocation8 + $0x200] sm:$0xff]
          %v570 = vld [vmem:[#allocation8 + $0x208] sm:$0xff]
          %v571 = vld [vmem:[#allocation8 + $0x210] sm:$0xff]
          %v572 = vld [vmem:[#allocation8 + $0x218] sm:$0xff]
          %v573 = vld [vmem:[#allocation8 + $0x220] sm:$0xff]
          %v574 = vld [vmem:[#allocation8 + $0x228] sm:$0xff]
          %v575 = vld [vmem:[#allocation8 + $0x230] sm:$0xff]
          %v576 = vld [vmem:[#allocation8 + $0x238] sm:$0xff]
          %v577 = vld [vmem:[#allocation8 + $0x240] sm:$0xff]
          %v578 = vld [vmem:[#allocation8 + $0x248] sm:$0xff]
          %v579 = vld [vmem:[#allocation8 + $0x250] sm:$0xff]
          %v580 = vld [vmem:[#allocation8 + $0x258] sm:$0xff]
          %v581 = vld [vmem:[#allocation8 + $0x260] sm:$0xff]
          %v582 = vld [vmem:[#allocation8 + $0x268] sm:$0xff]
          %v583 = vld [vmem:[#allocation8 + $0x270] sm:$0xff]
          %v584 = vld [vmem:[#allocation8 + $0x278] sm:$0xff]
          %v585 = vld [vmem:[#allocation8 + $0x280] sm:$0xff]
          %v586 = vld [vmem:[#allocation8 + $0x288] sm:$0xff]
          %v587 = vld [vmem:[#allocation8 + $0x290] sm:$0xff]
          %v588 = vld [vmem:[#allocation8 + $0x298] sm:$0xff]
          %v589 = vld [vmem:[#allocation8 + $0x2a0] sm:$0xff]
          %v590 = vld [vmem:[#allocation8 + $0x2a8] sm:$0xff]
          %v591 = vld [vmem:[#allocation8 + $0x2b0] sm:$0xff]
          %v592 = vld [vmem:[#allocation8 + $0x2b8] sm:$0xff]
          %v593 = vld [vmem:[#allocation8 + $0x2c0] sm:$0xff]
          %v594 = vld [vmem:[#allocation8 + $0x2c8] sm:$0xff]
          %v595 = vld [vmem:[#allocation8 + $0x2d0] sm:$0xff]
          %v596 = vld [vmem:[#allocation8 + $0x2d8] sm:$0xff]
          %v597 = vld [vmem:[#allocation8 + $0x2e0] sm:$0xff]
          %v598 = vld [vmem:[#allocation8 + $0x2e8] sm:$0xff]
          %v599 = vld [vmem:[#allocation8 + $0x2f0] sm:$0xff]
          %v600 = vld [vmem:[#allocation8 + $0x2f8] sm:$0xff]
          %v601 = vld [vmem:[#allocation8 + $0x300] sm:$0xff]
          %v602 = vld [vmem:[#allocation8 + $0x308] sm:$0xff]
          %v603 = vld [vmem:[#allocation8 + $0x310] sm:$0xff]
          %v604 = vld [vmem:[#allocation8 + $0x318] sm:$0xff]
          %v605 = vld [vmem:[#allocation8 + $0x320] sm:$0xff]
          %v606 = vld [vmem:[#allocation8 + $0x328] sm:$0xff]
          %v607 = vld [vmem:[#allocation8 + $0x330] sm:$0xff]
          %v608 = vld [vmem:[#allocation8 + $0x338] sm:$0xff]
          %v609 = vld [vmem:[#allocation8 + $0x340] sm:$0xff]
          %v610 = vld [vmem:[#allocation8 + $0x348] sm:$0xff]
          %v611 = vld [vmem:[#allocation8 + $0x350] sm:$0xff]
          %v612 = vld [vmem:[#allocation8 + $0x358] sm:$0xff]
          %v613 = vld [vmem:[#allocation8 + $0x360] sm:$0xff]
          %v614 = vld [vmem:[#allocation8 + $0x368] sm:$0xff]
          %v615 = vld [vmem:[#allocation8 + $0x370] sm:$0xff]
          %v616 = vld [vmem:[#allocation8 + $0x378] sm:$0xff]
          %v617 = vld [vmem:[#allocation8 + $0x380] sm:$0xff]
          %v618 = vld [vmem:[#allocation8 + $0x388] sm:$0xff]
          %v619 = vld [vmem:[#allocation8 + $0x390] sm:$0xff]
          %v620 = vld [vmem:[#allocation8 + $0x398] sm:$0xff]
          %v621 = vld [vmem:[#allocation8 + $0x3a0] sm:$0xff]
          %v622 = vld [vmem:[#allocation8 + $0x3a8] sm:$0xff]
          %v623 = vld [vmem:[#allocation8 + $0x3b0] sm:$0xff]
          %v624 = vld [vmem:[#allocation8 + $0x3b8] sm:$0xff]
          %v625 = vld [vmem:[#allocation8 + $0x3c0] sm:$0xff]
          %v626 = vld [vmem:[#allocation8 + $0x3c8] sm:$0xff]
          %v627 = vld [vmem:[#allocation8 + $0x3d0] sm:$0xff]
          %v628 = vld [vmem:[#allocation8 + $0x3d8] sm:$0xff]
          %v629 = vld [vmem:[#allocation8 + $0x3e0] sm:$0xff]
          %v630 = vld [vmem:[#allocation8 + $0x3e8] sm:$0xff]
          %v631 = vld [vmem:[#allocation8 + $0x3f0] sm:$0xff]
          %v632 = vld [vmem:[#allocation8 + $0x3f8] sm:$0xff]
          %v633 = vld [vmem:[#allocation8 + $0x400] sm:$0xff]
          %v634 = vld [vmem:[#allocation8 + $0x408] sm:$0xff]
          %v635 = vld [vmem:[#allocation8 + $0x410] sm:$0xff]
          %v636 = vld [vmem:[#allocation8 + $0x418] sm:$0xff]
          %v637 = vld [vmem:[#allocation8 + $0x420] sm:$0xff]
          %v638 = vld [vmem:[#allocation8 + $0x428] sm:$0xff]
          %v639 = vld [vmem:[#allocation8 + $0x430] sm:$0xff]
          %v640 = vld [vmem:[#allocation8 + $0x438] sm:$0xff]
          %v641 = vld [vmem:[#allocation8 + $0x440] sm:$0xff]
          %v642 = vld [vmem:[#allocation8 + $0x448] sm:$0xff]
          %v643 = vld [vmem:[#allocation8 + $0x450] sm:$0xff]
          %v644 = vld [vmem:[#allocation8 + $0x458] sm:$0xff]
          %v645 = vld [vmem:[#allocation8 + $0x460] sm:$0xff]
          %v646 = vld [vmem:[#allocation8 + $0x468] sm:$0xff]
          %v647 = vld [vmem:[#allocation8 + $0x470] sm:$0xff]
          %v648 = vld [vmem:[#allocation8 + $0x478] sm:$0xff]
          %v649 = vld [vmem:[#allocation8 + $0x480] sm:$0xff]
          %v650 = vld [vmem:[#allocation8 + $0x488] sm:$0xff]
          %v651 = vld [vmem:[#allocation8 + $0x490] sm:$0xff]
          %v652 = vld [vmem:[#allocation8 + $0x498] sm:$0xff]
          %v653 = vld [vmem:[#allocation8 + $0x4a0] sm:$0xff]
          %v654 = vld [vmem:[#allocation8 + $0x4a8] sm:$0xff]
          %v655 = vld [vmem:[#allocation8 + $0x4b0] sm:$0xff]
          %v656 = vld [vmem:[#allocation8 + $0x4b8] sm:$0xff]
          %v657 = vld [vmem:[#allocation8 + $0x4c0] sm:$0xff]
          %v658 = vld [vmem:[#allocation8 + $0x4c8] sm:$0xff]
          %v659 = vld [vmem:[#allocation8 + $0x4d0] sm:$0xff]
          %v660 = vld [vmem:[#allocation8 + $0x4d8] sm:$0xff]
          %v661 = vld [vmem:[#allocation8 + $0x4e0] sm:$0xff]
          %v662 = vld [vmem:[#allocation8 + $0x4e8] sm:$0xff]
          %v663 = vld [vmem:[#allocation8 + $0x4f0] sm:$0xff]
          %v664 = vld [vmem:[#allocation8 + $0x4f8] sm:$0xff]
          %v665 = vld [vmem:[#allocation8 + $0x500] sm:$0xff]
          %v666 = vld [vmem:[#allocation8 + $0x508] sm:$0xff]
          %v667 = vld [vmem:[#allocation8 + $0x510] sm:$0xff]
          %v668 = vld [vmem:[#allocation8 + $0x518] sm:$0xff]
          %v669 = vld [vmem:[#allocation8 + $0x520] sm:$0xff]
          %v670 = vld [vmem:[#allocation8 + $0x528] sm:$0xff]
          %v671 = vld [vmem:[#allocation8 + $0x530] sm:$0xff]
          %v672 = vld [vmem:[#allocation8 + $0x538] sm:$0xff]
          %v673 = vld [vmem:[#allocation8 + $0x540] sm:$0xff]
          %v674 = vld [vmem:[#allocation8 + $0x548] sm:$0xff]
          %v675 = vld [vmem:[#allocation8 + $0x550] sm:$0xff]
          %v676 = vld [vmem:[#allocation8 + $0x558] sm:$0xff]
          %v677 = vld [vmem:[#allocation8 + $0x560] sm:$0xff]
          %v678 = vld [vmem:[#allocation8 + $0x568] sm:$0xff]
          %v679 = vld [vmem:[#allocation8 + $0x570] sm:$0xff]
          %v680 = vld [vmem:[#allocation8 + $0x578] sm:$0xff]
          %v681 = vld [vmem:[#allocation8 + $0x580] sm:$0xff]
          %v682 = vld [vmem:[#allocation8 + $0x588] sm:$0xff]
          %v683 = vld [vmem:[#allocation8 + $0x590] sm:$0xff]
          %v684 = vld [vmem:[#allocation8 + $0x598] sm:$0xff]
          %v685 = vld [vmem:[#allocation8 + $0x5a0] sm:$0xff]
          %v686 = vld [vmem:[#allocation8 + $0x5a8] sm:$0xff]
          %v687 = vld [vmem:[#allocation8 + $0x5b0] sm:$0xff]
          %v688 = vld [vmem:[#allocation8 + $0x5b8] sm:$0xff]
          %v689 = vld [vmem:[#allocation8 + $0x5c0] sm:$0xff]
          %v690 = vld [vmem:[#allocation8 + $0x5c8] sm:$0xff]
          %v691 = vld [vmem:[#allocation8 + $0x5d0] sm:$0xff]
          %v692 = vld [vmem:[#allocation8 + $0x5d8] sm:$0xff]
          %v693 = vld [vmem:[#allocation8 + $0x5e0] sm:$0xff]
          %v694 = vld [vmem:[#allocation8 + $0x5e8] sm:$0xff]
          %v695 = vld [vmem:[#allocation8 + $0x5f0] sm:$0xff]
          %v696 = vld [vmem:[#allocation8 + $0x5f8] sm:$0xff]
          %v697 = vld [vmem:[#allocation8 + $0x600] sm:$0xff]
          %v698 = vld [vmem:[#allocation8 + $0x608] sm:$0xff]
          %v699 = vld [vmem:[#allocation8 + $0x610] sm:$0xff]
          %v700 = vld [vmem:[#allocation8 + $0x618] sm:$0xff]
          %v701 = vld [vmem:[#allocation8 + $0x620] sm:$0xff]
          %v702 = vld [vmem:[#allocation8 + $0x628] sm:$0xff]
          %v703 = vld [vmem:[#allocation8 + $0x630] sm:$0xff]
          %v704 = vld [vmem:[#allocation8 + $0x638] sm:$0xff]
          %v705 = vld [vmem:[#allocation8 + $0x640] sm:$0xff]
          %v706 = vld [vmem:[#allocation8 + $0x648] sm:$0xff]
          %v707 = vld [vmem:[#allocation8 + $0x650] sm:$0xff]
          %v708 = vld [vmem:[#allocation8 + $0x658] sm:$0xff]
          %v709 = vld [vmem:[#allocation8 + $0x660] sm:$0xff]
          %v710 = vld [vmem:[#allocation8 + $0x668] sm:$0xff]
          %v711 = vld [vmem:[#allocation8 + $0x670] sm:$0xff]
          %v712 = vld [vmem:[#allocation8 + $0x678] sm:$0xff]
          %v713 = vld [vmem:[#allocation8 + $0x680] sm:$0xff]
          %v714 = vld [vmem:[#allocation8 + $0x688] sm:$0xff]
          %v715 = vld [vmem:[#allocation8 + $0x690] sm:$0xff]
          %v716 = vld [vmem:[#allocation8 + $0x698] sm:$0xff]
          %v717 = vld [vmem:[#allocation8 + $0x6a0] sm:$0xff]
          %v718 = vld [vmem:[#allocation8 + $0x6a8] sm:$0xff]
          %v719 = vld [vmem:[#allocation8 + $0x6b0] sm:$0xff]
          %v720 = vld [vmem:[#allocation8 + $0x6b8] sm:$0xff]
          %v721 = vld [vmem:[#allocation8 + $0x6c0] sm:$0xff]
          %v722 = vld [vmem:[#allocation8 + $0x6c8] sm:$0xff]
          %v723 = vld [vmem:[#allocation8 + $0x6d0] sm:$0xff]
          %v724 = vld [vmem:[#allocation8 + $0x6d8] sm:$0xff]
          %v725 = vld [vmem:[#allocation8 + $0x6e0] sm:$0xff]
          %v726 = vld [vmem:[#allocation8 + $0x6e8] sm:$0xff]
          %v727 = vld [vmem:[#allocation8 + $0x6f0] sm:$0xff]
          %v728 = vld [vmem:[#allocation8 + $0x6f8] sm:$0xff]
          %v729 = vld [vmem:[#allocation8 + $0x700] sm:$0xff]
          %v730 = vld [vmem:[#allocation8 + $0x708] sm:$0xff]
          %v731 = vld [vmem:[#allocation8 + $0x710] sm:$0xff]
          %v732 = vld [vmem:[#allocation8 + $0x718] sm:$0xff]
          %v733 = vld [vmem:[#allocation8 + $0x720] sm:$0xff]
          %v734 = vld [vmem:[#allocation8 + $0x728] sm:$0xff]
          %v735 = vld [vmem:[#allocation8 + $0x730] sm:$0xff]
          %v736 = vld [vmem:[#allocation8 + $0x738] sm:$0xff]
          %v737 = vld [vmem:[#allocation8 + $0x740] sm:$0xff]
          %v738 = vld [vmem:[#allocation8 + $0x748] sm:$0xff]
          %v739 = vld [vmem:[#allocation8 + $0x750] sm:$0xff]
          %v740 = vld [vmem:[#allocation8 + $0x758] sm:$0xff]
          %v741 = vld [vmem:[#allocation8 + $0x760] sm:$0xff]
          %v742 = vld [vmem:[#allocation8 + $0x768] sm:$0xff]
          %v743 = vld [vmem:[#allocation8 + $0x770] sm:$0xff]
          %v744 = vld [vmem:[#allocation8 + $0x778] sm:$0xff]
          %v745 = vld [vmem:[#allocation8 + $0x780] sm:$0xff]
          %v746 = vld [vmem:[#allocation8 + $0x788] sm:$0xff]
          %v747 = vld [vmem:[#allocation8 + $0x790] sm:$0xff]
          %v748 = vld [vmem:[#allocation8 + $0x798] sm:$0xff]
          %v749 = vld [vmem:[#allocation8 + $0x7a0] sm:$0xff]
          %v750 = vld [vmem:[#allocation8 + $0x7a8] sm:$0xff]
          %v751 = vld [vmem:[#allocation8 + $0x7b0] sm:$0xff]
          %v752 = vld [vmem:[#allocation8 + $0x7b8] sm:$0xff]
          %v753 = vld [vmem:[#allocation8 + $0x7c0] sm:$0xff]
          %v754 = vld [vmem:[#allocation8 + $0x7c8] sm:$0xff]
          %v755 = vld [vmem:[#allocation8 + $0x7d0] sm:$0xff]
          %v756 = vld [vmem:[#allocation8 + $0x7d8] sm:$0xff]
          %v757 = vld [vmem:[#allocation8 + $0x7e0] sm:$0xff]
          %v758 = vld [vmem:[#allocation8 + $0x7e8] sm:$0xff]
          %v759 = vld [vmem:[#allocation8 + $0x7f0] sm:$0xff]
          %v760 = vld [vmem:[#allocation8 + $0x7f8] sm:$0xff]
          %v761 = vld [vmem:[#allocation8 + $0x800] sm:$0xff]
          %v762 = vld [vmem:[#allocation8 + $0x808] sm:$0xff]
          %v763 = vld [vmem:[#allocation8 + $0x810] sm:$0xff]
          %v764 = vld [vmem:[#allocation8 + $0x818] sm:$0xff]
          %v765 = vld [vmem:[#allocation8 + $0x820] sm:$0xff]
          %v766 = vld [vmem:[#allocation8 + $0x828] sm:$0xff]
          %v767 = vld [vmem:[#allocation8 + $0x830] sm:$0xff]
          %v768 = vld [vmem:[#allocation8 + $0x838] sm:$0xff]
          %v769 = vld [vmem:[#allocation8 + $0x840] sm:$0xff]
          %v770 = vld [vmem:[#allocation8 + $0x848] sm:$0xff]
          %v771 = vld [vmem:[#allocation8 + $0x850] sm:$0xff]
          %v772 = vld [vmem:[#allocation8 + $0x858] sm:$0xff]
          %v773 = vld [vmem:[#allocation8 + $0x860] sm:$0xff]
          %v774 = vld [vmem:[#allocation8 + $0x868] sm:$0xff]
          %v775 = vld [vmem:[#allocation8 + $0x870] sm:$0xff]
          %v776 = vld [vmem:[#allocation8 + $0x878] sm:$0xff]
          %v777 = vld [vmem:[#allocation8 + $0x880] sm:$0xff]
          %v778 = vld [vmem:[#allocation8 + $0x888] sm:$0xff]
          %v779 = vld [vmem:[#allocation8 + $0x890] sm:$0xff]
          %v780 = vld [vmem:[#allocation8 + $0x898] sm:$0xff]
          %v781 = vld [vmem:[#allocation8 + $0x8a0] sm:$0xff]
          %v782 = vld [vmem:[#allocation8 + $0x8a8] sm:$0xff]
          %v783 = vld [vmem:[#allocation8 + $0x8b0] sm:$0xff]
          %v784 = vld [vmem:[#allocation8 + $0x8b8] sm:$0xff]
          %v785 = vld [vmem:[#allocation8 + $0x8c0] sm:$0xff]
          %v786 = vld [vmem:[#allocation8 + $0x8c8] sm:$0xff]
          %v787 = vld [vmem:[#allocation8 + $0x8d0] sm:$0xff]
          %v788 = vld [vmem:[#allocation8 + $0x8d8] sm:$0xff]
          %v789 = vld [vmem:[#allocation8 + $0x8e0] sm:$0xff]
          %v790 = vld [vmem:[#allocation8 + $0x8e8] sm:$0xff]
          %v791 = vld [vmem:[#allocation8 + $0x8f0] sm:$0xff]
          %v792 = vld [vmem:[#allocation8 + $0x8f8] sm:$0xff]
          %v793 = vld [vmem:[#allocation8 + $0x900] sm:$0xff]
          %v794 = vld [vmem:[#allocation8 + $0x908] sm:$0xff]
          %v795 = vld [vmem:[#allocation8 + $0x910] sm:$0xff]
          %v796 = vld [vmem:[#allocation8 + $0x918] sm:$0xff]
          %v797 = vld [vmem:[#allocation8 + $0x920] sm:$0xff]
          %v798 = vld [vmem:[#allocation8 + $0x928] sm:$0xff]
          %v799 = vld [vmem:[#allocation8 + $0x930] sm:$0xff]
          %v800 = vld [vmem:[#allocation8 + $0x938] sm:$0xff]
          %v801 = vld [vmem:[#allocation8 + $0x940] sm:$0xff]
          %v802 = vld [vmem:[#allocation8 + $0x948] sm:$0xff]
          %v803 = vld [vmem:[#allocation8 + $0x950] sm:$0xff]
          %v804 = vld [vmem:[#allocation8 + $0x958] sm:$0xff]
          %v805 = vld [vmem:[#allocation8 + $0x960] sm:$0xff]
          %v806 = vld [vmem:[#allocation8 + $0x968] sm:$0xff]
          %v807 = vld [vmem:[#allocation8 + $0x970] sm:$0xff]
          %v808 = vld [vmem:[#allocation8 + $0x978] sm:$0xff]
          %v809 = vld [vmem:[#allocation8 + $0x980] sm:$0xff]
          %v810 = vld [vmem:[#allocation8 + $0x988] sm:$0xff]
          %v811 = vld [vmem:[#allocation8 + $0x990] sm:$0xff]
          %v812 = vld [vmem:[#allocation8 + $0x998] sm:$0xff]
          %v813 = vld [vmem:[#allocation8 + $0x9a0] sm:$0xff]
          %v814 = vld [vmem:[#allocation8 + $0x9a8] sm:$0xff]
          %v815 = vld [vmem:[#allocation8 + $0x9b0] sm:$0xff]
          %v816 = vld [vmem:[#allocation8 + $0x9b8] sm:$0xff]
          %v817 = vld [vmem:[#allocation8 + $0x9c0] sm:$0xff]
          %v818 = vld [vmem:[#allocation8 + $0x9c8] sm:$0xff]
          %v819 = vld [vmem:[#allocation8 + $0x9d0] sm:$0xff]
          %v820 = vld [vmem:[#allocation8 + $0x9d8] sm:$0xff]
          %v821 = vld [vmem:[#allocation8 + $0x9e0] sm:$0xff]
          %v822 = vld [vmem:[#allocation8 + $0x9e8] sm:$0xff]
          %v823 = vld [vmem:[#allocation8 + $0x9f0] sm:$0xff]
          %v824 = vld [vmem:[#allocation8 + $0x9f8] sm:$0xff]
          %v825 = vld [vmem:[#allocation8 + $0xa00] sm:$0xff]
          %v826 = vld [vmem:[#allocation8 + $0xa08] sm:$0xff]
          %v827 = vld [vmem:[#allocation8 + $0xa10] sm:$0xff]
          %v828 = vld [vmem:[#allocation8 + $0xa18] sm:$0xff]
          %v829 = vld [vmem:[#allocation8 + $0xa20] sm:$0xff]
          %v830 = vld [vmem:[#allocation8 + $0xa28] sm:$0xff]
          %v831 = vld [vmem:[#allocation8 + $0xa30] sm:$0xff]
          %v832 = vld [vmem:[#allocation8 + $0xa38] sm:$0xff]
          %v833 = vld [vmem:[#allocation8 + $0xa40] sm:$0xff]
          %v834 = vld [vmem:[#allocation8 + $0xa48] sm:$0xff]
          %v835 = vld [vmem:[#allocation8 + $0xa50] sm:$0xff]
          %v836 = vld [vmem:[#allocation8 + $0xa58] sm:$0xff]
          %v837 = vld [vmem:[#allocation8 + $0xa60] sm:$0xff]
          %v838 = vld [vmem:[#allocation8 + $0xa68] sm:$0xff]
          %v839 = vld [vmem:[#allocation8 + $0xa70] sm:$0xff]
          %v840 = vld [vmem:[#allocation8 + $0xa78] sm:$0xff]
          %v841 = vld [vmem:[#allocation8 + $0xa80] sm:$0xff]
          %v842 = vld [vmem:[#allocation8 + $0xa88] sm:$0xff]
          %v843 = vld [vmem:[#allocation8 + $0xa90] sm:$0xff]
          %v844 = vld [vmem:[#allocation8 + $0xa98] sm:$0xff]
          %v845 = vld [vmem:[#allocation8 + $0xaa0] sm:$0xff]
          %v846 = vld [vmem:[#allocation8 + $0xaa8] sm:$0xff]
          %v847 = vld [vmem:[#allocation8 + $0xab0] sm:$0xff]
          %v848 = vld [vmem:[#allocation8 + $0xab8] sm:$0xff]
          %v849 = vld [vmem:[#allocation8 + $0xac0] sm:$0xff]
          %v850 = vld [vmem:[#allocation8 + $0xac8] sm:$0xff]
          %v851 = vld [vmem:[#allocation8 + $0xad0] sm:$0xff]
          %v852 = vld [vmem:[#allocation8 + $0xad8] sm:$0xff]
          %v853 = vld [vmem:[#allocation8 + $0xae0] sm:$0xff]
          %v854 = vld [vmem:[#allocation8 + $0xae8] sm:$0xff]
          %v855 = vld [vmem:[#allocation8 + $0xaf0] sm:$0xff]
          %v856 = vld [vmem:[#allocation8 + $0xaf8] sm:$0xff]
          %v857 = vld [vmem:[#allocation8 + $0xb00] sm:$0xff]
          %v858 = vld [vmem:[#allocation8 + $0xb08] sm:$0xff]
          %v859 = vld [vmem:[#allocation8 + $0xb10] sm:$0xff]
          %v860 = vld [vmem:[#allocation8 + $0xb18] sm:$0xff]
          %v861 = vld [vmem:[#allocation8 + $0xb20] sm:$0xff]
          %v862 = vld [vmem:[#allocation8 + $0xb28] sm:$0xff]
          %v863 = vld [vmem:[#allocation8 + $0xb30] sm:$0xff]
          %v864 = vld [vmem:[#allocation8 + $0xb38] sm:$0xff]
          %v865 = vld [vmem:[#allocation8 + $0xb40] sm:$0xff]
          %v866 = vld [vmem:[#allocation8 + $0xb48] sm:$0xff]
          %v867 = vld [vmem:[#allocation8 + $0xb50] sm:$0xff]
          %v868 = vld [vmem:[#allocation8 + $0xb58] sm:$0xff]
          %v869 = vld [vmem:[#allocation8 + $0xb60] sm:$0xff]
          %v870 = vld [vmem:[#allocation8 + $0xb68] sm:$0xff]
          %v871 = vld [vmem:[#allocation8 + $0xb70] sm:$0xff]
          %v872 = vld [vmem:[#allocation8 + $0xb78] sm:$0xff]
          %v873 = vld [vmem:[#allocation8 + $0xb80] sm:$0xff]
          %v874 = vld [vmem:[#allocation8 + $0xb88] sm:$0xff]
          %v875 = vld [vmem:[#allocation8 + $0xb90] sm:$0xff]
          %v876 = vld [vmem:[#allocation8 + $0xb98] sm:$0xff]
          %v877 = vld [vmem:[#allocation8 + $0xba0] sm:$0xff]
          %v878 = vld [vmem:[#allocation8 + $0xba8] sm:$0xff]
          %v879 = vld [vmem:[#allocation8 + $0xbb0] sm:$0xff]
          %v880 = vld [vmem:[#allocation8 + $0xbb8] sm:$0xff]
          %v881 = vld [vmem:[#allocation8 + $0xbc0] sm:$0xff]
          %v882 = vld [vmem:[#allocation8 + $0xbc8] sm:$0xff]
          %v883 = vld [vmem:[#allocation8 + $0xbd0] sm:$0xff]
          %v884 = vld [vmem:[#allocation8 + $0xbd8] sm:$0xff]
          %v885 = vld [vmem:[#allocation8 + $0xbe0] sm:$0xff]
          %v886 = vld [vmem:[#allocation8 + $0xbe8] sm:$0xff]
          %v887 = vld [vmem:[#allocation8 + $0xbf0] sm:$0xff]
          %v888 = vld [vmem:[#allocation8 + $0xbf8] sm:$0xff]
          %v889 = vld [vmem:[#allocation8 + $0xc00] sm:$0xff]
          %v890 = vld [vmem:[#allocation8 + $0xc08] sm:$0xff]
          %v891 = vld [vmem:[#allocation8 + $0xc10] sm:$0xff]
          %v892 = vld [vmem:[#allocation8 + $0xc18] sm:$0xff]
          %v893 = vld [vmem:[#allocation8 + $0xc20] sm:$0xff]
          %v894 = vld [vmem:[#allocation8 + $0xc28] sm:$0xff]
          %v895 = vld [vmem:[#allocation8 + $0xc30] sm:$0xff]
          %v896 = vld [vmem:[#allocation8 + $0xc38] sm:$0xff]
          %v897 = vld [vmem:[#allocation10] sm:$0xff]
          %v899 = vperm.slane %v897, 0
          %v900 = vperm.slane %v897, 1
          %v901 = vperm.slane %v897, 2
          %v902 = vperm.slane %v897, 3
          %v903 = vperm.slane %v897, 4
          %v904 = vperm.slane %v897, 5
          %v905 = vperm.slane %v897, 6
          %v906 = vperm.slane %v897, 7
          %v919 = vunpack.c.l.b16 %v501
          %v920 = vunpack.c.h.b16 %v501
          %v921 = vunpack.c.l.b16 %v502
          %v922 = vunpack.c.h.b16 %v502
          %v923 = vunpack.c.l.b16 %v503
          %v924 = vunpack.c.h.b16 %v503
          %v925 = vunpack.c.l.b16 %v504
          %v926 = vpack.c.b16 %v919, %v919
          %v927 = vpack.c.b16 %v920, %v920
          %v928 = vpack.c.b16 %v921, %v921
          %v929 = vpack.c.b16 %v922, %v922
          %v930 = vpack.c.b16 %v923, %v923
          %v931 = vpack.c.b16 %v924, %v924
          %v932 = vpack.c.b16 %v925, %v925
          %v1331 = vunpack.c.l.b16 %v505
          %v1332 = vunpack.c.h.b16 %v505
          %v1333 = vunpack.c.l.b16 %v506
          %v1334 = vunpack.c.h.b16 %v506
          %v1335 = vunpack.c.l.b16 %v507
          %v1336 = vunpack.c.h.b16 %v507
          %v1337 = vunpack.c.l.b16 %v508
          %v1338 = vunpack.c.h.b16 %v508
          %v1339 = vunpack.c.l.b16 %v509
          %v1340 = vunpack.c.h.b16 %v509
          %v1341 = vunpack.c.l.b16 %v510
          %v1342 = vunpack.c.h.b16 %v510
          %v1343 = vunpack.c.l.b16 %v511
          %v1344 = vunpack.c.h.b16 %v511
          %v1345 = vunpack.c.l.b16 %v512
          %v1346 = vunpack.c.h.b16 %v512
          %v1347 = vunpack.c.l.b16 %v513
          %v1348 = vunpack.c.h.b16 %v513
          %v1349 = vunpack.c.l.b16 %v514
          %v1350 = vunpack.c.h.b16 %v514
          %v1351 = vunpack.c.l.b16 %v515
          %v1352 = vunpack.c.h.b16 %v515
          %v1353 = vunpack.c.l.b16 %v516
          %v1354 = vunpack.c.h.b16 %v516
          %v1355 = vunpack.c.l.b16 %v517
          %v1356 = vunpack.c.h.b16 %v517
          %v1357 = vunpack.c.l.b16 %v518
          %v1358 = vunpack.c.h.b16 %v518
          %v1359 = vunpack.c.l.b16 %v519
          %v1360 = vunpack.c.h.b16 %v519
          %v1361 = vunpack.c.l.b16 %v520
          %v1362 = vunpack.c.h.b16 %v520
          %v1363 = vunpack.c.l.b16 %v521
          %v1364 = vunpack.c.h.b16 %v521
          %v1365 = vunpack.c.l.b16 %v522
          %v1366 = vunpack.c.h.b16 %v522
          %v1367 = vunpack.c.l.b16 %v523
          %v1368 = vunpack.c.h.b16 %v523
          %v1369 = vunpack.c.l.b16 %v524
          %v1370 = vunpack.c.h.b16 %v524
          %v1371 = vunpack.c.l.b16 %v525
          %v1372 = vunpack.c.h.b16 %v525
          %v1373 = vunpack.c.l.b16 %v526
          %v1374 = vunpack.c.h.b16 %v526
          %v1375 = vunpack.c.l.b16 %v527
          %v1376 = vunpack.c.h.b16 %v527
          %v1377 = vunpack.c.l.b16 %v528
          %v1378 = vunpack.c.h.b16 %v528
          %v1379 = vunpack.c.l.b16 %v529
          %v1380 = vunpack.c.h.b16 %v529
          %v1381 = vunpack.c.l.b16 %v530
          %v1382 = vunpack.c.h.b16 %v530
          %v1383 = vunpack.c.l.b16 %v531
          %v1384 = vunpack.c.h.b16 %v531
          %v1385 = vunpack.c.l.b16 %v532
          %v1386 = vunpack.c.h.b16 %v532
          %v1387 = vunpack.c.l.b16 %v533
          %v1388 = vunpack.c.h.b16 %v533
          %v1389 = vunpack.c.l.b16 %v534
          %v1390 = vunpack.c.h.b16 %v534
          %v1391 = vunpack.c.l.b16 %v535
          %v1392 = vunpack.c.h.b16 %v535
          %v1393 = vunpack.c.l.b16 %v536
          %v1394 = vunpack.c.h.b16 %v536
          %v1395 = vunpack.c.l.b16 %v537
          %v1396 = vunpack.c.h.b16 %v537
          %v1397 = vunpack.c.l.b16 %v538
          %v1398 = vunpack.c.h.b16 %v538
          %v1399 = vunpack.c.l.b16 %v539
          %v1400 = vunpack.c.h.b16 %v539
          %v1401 = vunpack.c.l.b16 %v540
          %v1402 = vunpack.c.h.b16 %v540
          %v1403 = vunpack.c.l.b16 %v541
          %v1404 = vunpack.c.h.b16 %v541
          %v1405 = vunpack.c.l.b16 %v542
          %v1406 = vunpack.c.h.b16 %v542
          %v1407 = vunpack.c.l.b16 %v543
          %v1408 = vunpack.c.h.b16 %v543
          %v1409 = vunpack.c.l.b16 %v544
          %v1410 = vunpack.c.h.b16 %v544
          %v1411 = vunpack.c.l.b16 %v545
          %v1412 = vunpack.c.h.b16 %v545
          %v1413 = vunpack.c.l.b16 %v546
          %v1414 = vunpack.c.h.b16 %v546
          %v1415 = vunpack.c.l.b16 %v547
          %v1416 = vunpack.c.h.b16 %v547
          %v1417 = vunpack.c.l.b16 %v548
          %v1418 = vunpack.c.h.b16 %v548
          %v1419 = vunpack.c.l.b16 %v549
          %v1420 = vunpack.c.h.b16 %v549
          %v1421 = vunpack.c.l.b16 %v550
          %v1422 = vunpack.c.h.b16 %v550
          %v1423 = vunpack.c.l.b16 %v551
          %v1424 = vunpack.c.h.b16 %v551
          %v1425 = vunpack.c.l.b16 %v552
          %v1426 = vunpack.c.h.b16 %v552
          %v1427 = vunpack.c.l.b16 %v553
          %v1428 = vunpack.c.h.b16 %v553
          %v1429 = vunpack.c.l.b16 %v554
          %v1430 = vunpack.c.h.b16 %v554
          %v1431 = vunpack.c.l.b16 %v555
          %v1432 = vunpack.c.h.b16 %v555
          %v1433 = vunpack.c.l.b16 %v556
          %v1434 = vunpack.c.h.b16 %v556
          %v1435 = vunpack.c.l.b16 %v557
          %v1436 = vunpack.c.h.b16 %v557
          %v1437 = vunpack.c.l.b16 %v558
          %v1438 = vunpack.c.h.b16 %v558
          %v1439 = vunpack.c.l.b16 %v559
          %v1440 = vunpack.c.h.b16 %v559
          %v1441 = vunpack.c.l.b16 %v560
          %v1442 = vunpack.c.h.b16 %v560
          %v1443 = vunpack.c.l.b16 %v561
          %v1444 = vunpack.c.h.b16 %v561
          %v1445 = vunpack.c.l.b16 %v562
          %v1446 = vunpack.c.h.b16 %v562
          %v1447 = vunpack.c.l.b16 %v563
          %v1448 = vunpack.c.h.b16 %v563
          %v1449 = vunpack.c.l.b16 %v564
          %v1450 = vunpack.c.h.b16 %v564
          %v1451 = vunpack.c.l.b16 %v565
          %v1452 = vunpack.c.h.b16 %v565
          %v1453 = vunpack.c.l.b16 %v566
          %v1454 = vunpack.c.h.b16 %v566
          %v1455 = vunpack.c.l.b16 %v567
          %v1456 = vunpack.c.h.b16 %v567
          %v1457 = vunpack.c.l.b16 %v568
          %v1458 = vunpack.c.h.b16 %v568
          %v1459 = vunpack.c.l.b16 %v569
          %v1460 = vunpack.c.h.b16 %v569
          %v1461 = vunpack.c.l.b16 %v570
          %v1462 = vunpack.c.h.b16 %v570
          %v1463 = vunpack.c.l.b16 %v571
          %v1464 = vunpack.c.h.b16 %v571
          %v1465 = vunpack.c.l.b16 %v572
          %v1466 = vunpack.c.h.b16 %v572
          %v1467 = vunpack.c.l.b16 %v573
          %v1468 = vunpack.c.h.b16 %v573
          %v1469 = vunpack.c.l.b16 %v574
          %v1470 = vunpack.c.h.b16 %v574
          %v1471 = vunpack.c.l.b16 %v575
          %v1472 = vunpack.c.h.b16 %v575
          %v1473 = vunpack.c.l.b16 %v576
          %v1474 = vunpack.c.h.b16 %v576
          %v1475 = vunpack.c.l.b16 %v577
          %v1476 = vunpack.c.h.b16 %v577
          %v1477 = vunpack.c.l.b16 %v578
          %v1478 = vunpack.c.h.b16 %v578
          %v1479 = vunpack.c.l.b16 %v579
          %v1480 = vunpack.c.h.b16 %v579
          %v1481 = vunpack.c.l.b16 %v580
          %v1482 = vunpack.c.h.b16 %v580
          %v1483 = vunpack.c.l.b16 %v581
          %v1484 = vunpack.c.h.b16 %v581
          %v1485 = vunpack.c.l.b16 %v582
          %v1486 = vunpack.c.h.b16 %v582
          %v1487 = vunpack.c.l.b16 %v583
          %v1488 = vunpack.c.h.b16 %v583
          %v1489 = vunpack.c.l.b16 %v584
          %v1490 = vunpack.c.h.b16 %v584
          %v1491 = vunpack.c.l.b16 %v585
          %v1492 = vunpack.c.h.b16 %v585
          %v1493 = vunpack.c.l.b16 %v586
          %v1494 = vunpack.c.h.b16 %v586
          %v1495 = vunpack.c.l.b16 %v587
          %v1496 = vunpack.c.h.b16 %v587
          %v1497 = vunpack.c.l.b16 %v588
          %v1498 = vunpack.c.h.b16 %v588
          %v1499 = vunpack.c.l.b16 %v589
          %v1500 = vunpack.c.h.b16 %v589
          %v1501 = vunpack.c.l.b16 %v590
          %v1502 = vunpack.c.h.b16 %v590
          %v1503 = vunpack.c.l.b16 %v591
          %v1504 = vunpack.c.h.b16 %v591
          %v1505 = vunpack.c.l.b16 %v592
          %v1506 = vunpack.c.h.b16 %v592
          %v1507 = vunpack.c.l.b16 %v593
          %v1508 = vunpack.c.h.b16 %v593
          %v1509 = vunpack.c.l.b16 %v594
          %v1510 = vunpack.c.h.b16 %v594
          %v1511 = vunpack.c.l.b16 %v595
          %v1512 = vunpack.c.h.b16 %v595
          %v1513 = vunpack.c.l.b16 %v596
          %v1514 = vunpack.c.h.b16 %v596
          %v1515 = vunpack.c.l.b16 %v597
          %v1516 = vunpack.c.h.b16 %v597
          %v1517 = vunpack.c.l.b16 %v598
          %v1518 = vunpack.c.h.b16 %v598
          %v1519 = vunpack.c.l.b16 %v599
          %v1520 = vunpack.c.h.b16 %v599
          %v1521 = vunpack.c.l.b16 %v600
          %v1522 = vunpack.c.h.b16 %v600
          %v1523 = vunpack.c.l.b16 %v601
          %v1524 = vunpack.c.h.b16 %v601
          %v1525 = vunpack.c.l.b16 %v602
          %v1526 = vunpack.c.h.b16 %v602
          %v1527 = vunpack.c.l.b16 %v603
          %v1528 = vunpack.c.h.b16 %v603
          %v1529 = vunpack.c.l.b16 %v604
          %v1530 = vunpack.c.h.b16 %v604
          %v1531 = vunpack.c.l.b16 %v605
          %v1532 = vunpack.c.h.b16 %v605
          %v1533 = vunpack.c.l.b16 %v606
          %v1534 = vunpack.c.h.b16 %v606
          %v1535 = vunpack.c.l.b16 %v607
          %v1536 = vunpack.c.h.b16 %v607
          %v1537 = vunpack.c.l.b16 %v608
          %v1538 = vunpack.c.h.b16 %v608
          %v1539 = vunpack.c.l.b16 %v609
          %v1540 = vunpack.c.h.b16 %v609
          %v1541 = vunpack.c.l.b16 %v610
          %v1542 = vunpack.c.h.b16 %v610
          %v1543 = vunpack.c.l.b16 %v611
          %v1544 = vunpack.c.h.b16 %v611
          %v1545 = vunpack.c.l.b16 %v612
          %v1546 = vunpack.c.h.b16 %v612
          %v1547 = vunpack.c.l.b16 %v613
          %v1548 = vunpack.c.h.b16 %v613
          %v1549 = vunpack.c.l.b16 %v614
          %v1550 = vunpack.c.h.b16 %v614
          %v1551 = vunpack.c.l.b16 %v615
          %v1552 = vunpack.c.h.b16 %v615
          %v1553 = vunpack.c.l.b16 %v616
          %v1554 = vunpack.c.h.b16 %v616
          %v1555 = vunpack.c.l.b16 %v617
          %v1556 = vunpack.c.h.b16 %v617
          %v1557 = vunpack.c.l.b16 %v618
          %v1558 = vunpack.c.h.b16 %v618
          %v1559 = vunpack.c.l.b16 %v619
          %v1560 = vunpack.c.h.b16 %v619
          %v1561 = vunpack.c.l.b16 %v620
          %v1562 = vunpack.c.h.b16 %v620
          %v1563 = vunpack.c.l.b16 %v621
          %v1564 = vunpack.c.h.b16 %v621
          %v1565 = vunpack.c.l.b16 %v622
          %v1566 = vunpack.c.h.b16 %v622
          %v1567 = vunpack.c.l.b16 %v623
          %v1568 = vunpack.c.h.b16 %v623
          %v1569 = vunpack.c.l.b16 %v624
          %v1570 = vunpack.c.h.b16 %v624
          %v1571 = vunpack.c.l.b16 %v625
          %v1572 = vunpack.c.h.b16 %v625
          %v1573 = vunpack.c.l.b16 %v626
          %v1574 = vunpack.c.h.b16 %v626
          %v1575 = vunpack.c.l.b16 %v627
          %v1576 = vunpack.c.h.b16 %v627
          %v1577 = vunpack.c.l.b16 %v628
          %v1578 = vunpack.c.h.b16 %v628
          %v1579 = vunpack.c.l.b16 %v629
          %v1580 = vunpack.c.h.b16 %v629
          %v1581 = vunpack.c.l.b16 %v630
          %v1582 = vunpack.c.h.b16 %v630
          %v1583 = vunpack.c.l.b16 %v631
          %v1584 = vunpack.c.h.b16 %v631
          %v1585 = vunpack.c.l.b16 %v632
          %v1586 = vunpack.c.h.b16 %v632
          %v1587 = vunpack.c.l.b16 %v633
          %v1588 = vunpack.c.h.b16 %v633
          %v1589 = vunpack.c.l.b16 %v634
          %v1590 = vunpack.c.h.b16 %v634
          %v1591 = vunpack.c.l.b16 %v635
          %v1592 = vunpack.c.h.b16 %v635
          %v1593 = vunpack.c.l.b16 %v636
          %v1594 = vunpack.c.h.b16 %v636
          %v1595 = vunpack.c.l.b16 %v637
          %v1596 = vunpack.c.h.b16 %v637
          %v1597 = vunpack.c.l.b16 %v638
          %v1598 = vunpack.c.h.b16 %v638
          %v1599 = vunpack.c.l.b16 %v639
          %v1600 = vunpack.c.h.b16 %v639
          %v1601 = vunpack.c.l.b16 %v640
          %v1602 = vunpack.c.h.b16 %v640
          %v1603 = vunpack.c.l.b16 %v641
          %v1604 = vunpack.c.h.b16 %v641
          %v1605 = vunpack.c.l.b16 %v642
          %v1606 = vunpack.c.h.b16 %v642
          %v1607 = vunpack.c.l.b16 %v643
          %v1608 = vunpack.c.h.b16 %v643
          %v1609 = vunpack.c.l.b16 %v644
          %v1610 = vunpack.c.h.b16 %v644
          %v1611 = vunpack.c.l.b16 %v645
          %v1612 = vunpack.c.h.b16 %v645
          %v1613 = vunpack.c.l.b16 %v646
          %v1614 = vunpack.c.h.b16 %v646
          %v1615 = vunpack.c.l.b16 %v647
          %v1616 = vunpack.c.h.b16 %v647
          %v1617 = vunpack.c.l.b16 %v648
          %v1618 = vunpack.c.h.b16 %v648
          %v1619 = vunpack.c.l.b16 %v649
          %v1620 = vunpack.c.h.b16 %v649
          %v1621 = vunpack.c.l.b16 %v650
          %v1622 = vunpack.c.h.b16 %v650
          %v1623 = vunpack.c.l.b16 %v651
          %v1624 = vunpack.c.h.b16 %v651
          %v1625 = vunpack.c.l.b16 %v652
          %v1626 = vunpack.c.h.b16 %v652
          %v1627 = vunpack.c.l.b16 %v653
          %v1628 = vunpack.c.h.b16 %v653
          %v1629 = vunpack.c.l.b16 %v654
          %v1630 = vunpack.c.h.b16 %v654
          %v1631 = vunpack.c.l.b16 %v655
          %v1632 = vunpack.c.h.b16 %v655
          %v1633 = vunpack.c.l.b16 %v656
          %v1634 = vunpack.c.h.b16 %v656
          %v1635 = vunpack.c.l.b16 %v657
          %v1636 = vunpack.c.h.b16 %v657
          %v1637 = vunpack.c.l.b16 %v658
          %v1638 = vunpack.c.h.b16 %v658
          %v1639 = vunpack.c.l.b16 %v659
          %v1640 = vunpack.c.h.b16 %v659
          %v1641 = vunpack.c.l.b16 %v660
          %v1642 = vunpack.c.h.b16 %v660
          %v1643 = vunpack.c.l.b16 %v661
          %v1644 = vunpack.c.h.b16 %v661
          %v1645 = vunpack.c.l.b16 %v662
          %v1646 = vunpack.c.h.b16 %v662
          %v1647 = vunpack.c.l.b16 %v663
          %v1648 = vunpack.c.h.b16 %v663
          %v1649 = vunpack.c.l.b16 %v664
          %v1650 = vunpack.c.h.b16 %v664
          %v1651 = vunpack.c.l.b16 %v665
          %v1652 = vunpack.c.h.b16 %v665
          %v1653 = vunpack.c.l.b16 %v666
          %v1654 = vunpack.c.h.b16 %v666
          %v1655 = vunpack.c.l.b16 %v667
          %v1656 = vunpack.c.h.b16 %v667
          %v1657 = vunpack.c.l.b16 %v668
          %v1658 = vunpack.c.h.b16 %v668
          %v1659 = vunpack.c.l.b16 %v669
          %v1660 = vunpack.c.h.b16 %v669
          %v1661 = vunpack.c.l.b16 %v670
          %v1662 = vunpack.c.h.b16 %v670
          %v1663 = vunpack.c.l.b16 %v671
          %v1664 = vunpack.c.h.b16 %v671
          %v1665 = vunpack.c.l.b16 %v672
          %v1666 = vunpack.c.h.b16 %v672
          %v1667 = vunpack.c.l.b16 %v673
          %v1668 = vunpack.c.h.b16 %v673
          %v1669 = vunpack.c.l.b16 %v674
          %v1670 = vunpack.c.h.b16 %v674
          %v1671 = vunpack.c.l.b16 %v675
          %v1672 = vunpack.c.h.b16 %v675
          %v1673 = vunpack.c.l.b16 %v676
          %v1674 = vunpack.c.h.b16 %v676
          %v1675 = vunpack.c.l.b16 %v677
          %v1676 = vunpack.c.h.b16 %v677
          %v1677 = vunpack.c.l.b16 %v678
          %v1678 = vunpack.c.h.b16 %v678
          %v1679 = vunpack.c.l.b16 %v679
          %v1680 = vunpack.c.h.b16 %v679
          %v1681 = vunpack.c.l.b16 %v680
          %v1682 = vunpack.c.h.b16 %v680
          %v1683 = vunpack.c.l.b16 %v681
          %v1684 = vunpack.c.h.b16 %v681
          %v1685 = vunpack.c.l.b16 %v682
          %v1686 = vunpack.c.h.b16 %v682
          %v1687 = vunpack.c.l.b16 %v683
          %v1688 = vunpack.c.h.b16 %v683
          %v1689 = vunpack.c.l.b16 %v684
          %v1690 = vunpack.c.h.b16 %v684
          %v1691 = vunpack.c.l.b16 %v685
          %v1692 = vunpack.c.h.b16 %v685
          %v1693 = vunpack.c.l.b16 %v686
          %v1694 = vunpack.c.h.b16 %v686
          %v1695 = vunpack.c.l.b16 %v687
          %v1696 = vunpack.c.h.b16 %v687
          %v1697 = vunpack.c.l.b16 %v688
          %v1698 = vunpack.c.h.b16 %v688
          %v1699 = vunpack.c.l.b16 %v689
          %v1700 = vunpack.c.h.b16 %v689
          %v1701 = vunpack.c.l.b16 %v690
          %v1702 = vunpack.c.h.b16 %v690
          %v1703 = vunpack.c.l.b16 %v691
          %v1704 = vunpack.c.h.b16 %v691
          %v1705 = vunpack.c.l.b16 %v692
          %v1706 = vunpack.c.h.b16 %v692
          %v1707 = vunpack.c.l.b16 %v693
          %v1708 = vunpack.c.h.b16 %v693
          %v1709 = vunpack.c.l.b16 %v694
          %v1710 = vunpack.c.h.b16 %v694
          %v1711 = vunpack.c.l.b16 %v695
          %v1712 = vunpack.c.h.b16 %v695
          %v1713 = vunpack.c.l.b16 %v696
          %v1714 = vunpack.c.h.b16 %v696
          %v1715 = vunpack.c.l.b16 %v697
          %v1716 = vunpack.c.h.b16 %v697
          %v1717 = vunpack.c.l.b16 %v698
          %v1718 = vunpack.c.h.b16 %v698
          %v1719 = vunpack.c.l.b16 %v699
          %v1720 = vunpack.c.h.b16 %v699
          %v1721 = vunpack.c.l.b16 %v700
          %v1722 = vunpack.c.h.b16 %v700
          %v1723 = vunpack.c.l.b16 %v701
          %v1724 = vunpack.c.h.b16 %v701
          %v1725 = vunpack.c.l.b16 %v702
          %v1726 = vunpack.c.h.b16 %v702
          %v1727 = vunpack.c.l.b16 %v703
          %v1728 = vunpack.c.h.b16 %v703
          %v1729 = vunpack.c.l.b16 %v704
          %v1730 = vunpack.c.h.b16 %v704
          %v1731 = vunpack.c.l.b16 %v705
          %v1732 = vunpack.c.h.b16 %v705
          %v1733 = vunpack.c.l.b16 %v706
          %v1734 = vunpack.c.h.b16 %v706
          %v1735 = vunpack.c.l.b16 %v707
          %v1736 = vunpack.c.h.b16 %v707
          %v1737 = vunpack.c.l.b16 %v708
          %v1738 = vunpack.c.h.b16 %v708
          %v1739 = vunpack.c.l.b16 %v709
          %v1740 = vunpack.c.h.b16 %v709
          %v1741 = vunpack.c.l.b16 %v710
          %v1742 = vunpack.c.h.b16 %v710
          %v1743 = vunpack.c.l.b16 %v711
          %v1744 = vunpack.c.h.b16 %v711
          %v1745 = vunpack.c.l.b16 %v712
          %v1746 = vunpack.c.h.b16 %v712
          %v1747 = vunpack.c.l.b16 %v713
          %v1748 = vunpack.c.h.b16 %v713
          %v1749 = vunpack.c.l.b16 %v714
          %v1750 = vunpack.c.h.b16 %v714
          %v1751 = vunpack.c.l.b16 %v715
          %v1752 = vunpack.c.h.b16 %v715
          %v1753 = vunpack.c.l.b16 %v716
          %v1754 = vunpack.c.h.b16 %v716
          %v1755 = vunpack.c.l.b16 %v717
          %v1756 = vunpack.c.h.b16 %v717
          %v1757 = vunpack.c.l.b16 %v718
          %v1758 = vunpack.c.h.b16 %v718
          %v1759 = vunpack.c.l.b16 %v719
          %v1760 = vunpack.c.h.b16 %v719
          %v1761 = vunpack.c.l.b16 %v720
          %v1762 = vunpack.c.h.b16 %v720
          %v1763 = vunpack.c.l.b16 %v721
          %v1764 = vunpack.c.h.b16 %v721
          %v1765 = vunpack.c.l.b16 %v722
          %v1766 = vunpack.c.h.b16 %v722
          %v1767 = vunpack.c.l.b16 %v723
          %v1768 = vunpack.c.h.b16 %v723
          %v1769 = vunpack.c.l.b16 %v724
          %v1770 = vunpack.c.h.b16 %v724
          %v1771 = vunpack.c.l.b16 %v725
          %v1772 = vunpack.c.h.b16 %v725
          %v1773 = vunpack.c.l.b16 %v726
          %v1774 = vunpack.c.h.b16 %v726
          %v1775 = vunpack.c.l.b16 %v727
          %v1776 = vunpack.c.h.b16 %v727
          %v1777 = vunpack.c.l.b16 %v728
          %v1778 = vunpack.c.h.b16 %v728
          %v1779 = vunpack.c.l.b16 %v729
          %v1780 = vunpack.c.h.b16 %v729
          %v1781 = vunpack.c.l.b16 %v730
          %v1782 = vunpack.c.h.b16 %v730
          %v1783 = vunpack.c.l.b16 %v731
          %v1784 = vunpack.c.h.b16 %v731
          %v1785 = vunpack.c.l.b16 %v732
          %v1786 = vunpack.c.h.b16 %v732
          %v1787 = vunpack.c.l.b16 %v733
          %v1788 = vunpack.c.h.b16 %v733
          %v1789 = vunpack.c.l.b16 %v734
          %v1790 = vunpack.c.h.b16 %v734
          %v1791 = vunpack.c.l.b16 %v735
          %v1792 = vunpack.c.h.b16 %v735
          %v1793 = vunpack.c.l.b16 %v736
          %v1794 = vunpack.c.h.b16 %v736
          %v1795 = vunpack.c.l.b16 %v737
          %v1796 = vunpack.c.h.b16 %v737
          %v1797 = vunpack.c.l.b16 %v738
          %v1798 = vunpack.c.h.b16 %v738
          %v1799 = vunpack.c.l.b16 %v739
          %v1800 = vunpack.c.h.b16 %v739
          %v1801 = vunpack.c.l.b16 %v740
          %v1802 = vunpack.c.h.b16 %v740
          %v1803 = vunpack.c.l.b16 %v741
          %v1804 = vunpack.c.h.b16 %v741
          %v1805 = vunpack.c.l.b16 %v742
          %v1806 = vunpack.c.h.b16 %v742
          %v1807 = vunpack.c.l.b16 %v743
          %v1808 = vunpack.c.h.b16 %v743
          %v1809 = vunpack.c.l.b16 %v744
          %v1810 = vunpack.c.h.b16 %v744
          %v1811 = vunpack.c.l.b16 %v745
          %v1812 = vunpack.c.h.b16 %v745
          %v1813 = vunpack.c.l.b16 %v746
          %v1814 = vunpack.c.h.b16 %v746
          %v1815 = vunpack.c.l.b16 %v747
          %v1816 = vunpack.c.h.b16 %v747
          %v1817 = vunpack.c.l.b16 %v748
          %v1818 = vunpack.c.h.b16 %v748
          %v1819 = vunpack.c.l.b16 %v749
          %v1820 = vunpack.c.h.b16 %v749
          %v1821 = vunpack.c.l.b16 %v750
          %v1822 = vunpack.c.h.b16 %v750
          %v1823 = vunpack.c.l.b16 %v751
          %v1824 = vunpack.c.h.b16 %v751
          %v1825 = vunpack.c.l.b16 %v752
          %v1826 = vunpack.c.h.b16 %v752
          %v1827 = vunpack.c.l.b16 %v753
          %v1828 = vunpack.c.h.b16 %v753
          %v1829 = vunpack.c.l.b16 %v754
          %v1830 = vunpack.c.h.b16 %v754
          %v1831 = vunpack.c.l.b16 %v755
          %v1832 = vunpack.c.h.b16 %v755
          %v1833 = vunpack.c.l.b16 %v756
          %v1834 = vunpack.c.h.b16 %v756
          %v1835 = vunpack.c.l.b16 %v757
          %v1836 = vunpack.c.h.b16 %v757
          %v1837 = vunpack.c.l.b16 %v758
          %v1838 = vunpack.c.h.b16 %v758
          %v1839 = vunpack.c.l.b16 %v759
          %v1840 = vunpack.c.h.b16 %v759
          %v1841 = vunpack.c.l.b16 %v760
          %v1842 = vunpack.c.h.b16 %v760
          %v1843 = vunpack.c.l.b16 %v761
          %v1844 = vunpack.c.h.b16 %v761
          %v1845 = vunpack.c.l.b16 %v762
          %v1846 = vunpack.c.h.b16 %v762
          %v1847 = vunpack.c.l.b16 %v763
          %v1848 = vunpack.c.h.b16 %v763
          %v1849 = vunpack.c.l.b16 %v764
          %v1850 = vunpack.c.h.b16 %v764
          %v1851 = vunpack.c.l.b16 %v765
          %v1852 = vunpack.c.h.b16 %v765
          %v1853 = vunpack.c.l.b16 %v766
          %v1854 = vunpack.c.h.b16 %v766
          %v1855 = vunpack.c.l.b16 %v767
          %v1856 = vunpack.c.h.b16 %v767
          %v1857 = vunpack.c.l.b16 %v768
          %v1858 = vunpack.c.h.b16 %v768
          %v1859 = vunpack.c.l.b16 %v769
          %v1860 = vunpack.c.h.b16 %v769
          %v1861 = vunpack.c.l.b16 %v770
          %v1862 = vunpack.c.h.b16 %v770
          %v1863 = vunpack.c.l.b16 %v771
          %v1864 = vunpack.c.h.b16 %v771
          %v1865 = vunpack.c.l.b16 %v772
          %v1866 = vunpack.c.h.b16 %v772
          %v1867 = vunpack.c.l.b16 %v773
          %v1868 = vunpack.c.h.b16 %v773
          %v1869 = vunpack.c.l.b16 %v774
          %v1870 = vunpack.c.h.b16 %v774
          %v1871 = vunpack.c.l.b16 %v775
          %v1872 = vunpack.c.h.b16 %v775
          %v1873 = vunpack.c.l.b16 %v776
          %v1874 = vunpack.c.h.b16 %v776
          %v1875 = vunpack.c.l.b16 %v777
          %v1876 = vunpack.c.h.b16 %v777
          %v1877 = vunpack.c.l.b16 %v778
          %v1878 = vunpack.c.h.b16 %v778
          %v1879 = vunpack.c.l.b16 %v779
          %v1880 = vunpack.c.h.b16 %v779
          %v1881 = vunpack.c.l.b16 %v780
          %v1882 = vunpack.c.h.b16 %v780
          %v1883 = vunpack.c.l.b16 %v781
          %v1884 = vunpack.c.h.b16 %v781
          %v1885 = vunpack.c.l.b16 %v782
          %v1886 = vunpack.c.h.b16 %v782
          %v1887 = vunpack.c.l.b16 %v783
          %v1888 = vunpack.c.h.b16 %v783
          %v1889 = vunpack.c.l.b16 %v784
          %v1890 = vunpack.c.h.b16 %v784
          %v1891 = vunpack.c.l.b16 %v785
          %v1892 = vunpack.c.h.b16 %v785
          %v1893 = vunpack.c.l.b16 %v786
          %v1894 = vunpack.c.h.b16 %v786
          %v1895 = vunpack.c.l.b16 %v787
          %v1896 = vunpack.c.h.b16 %v787
          %v1897 = vunpack.c.l.b16 %v788
          %v1898 = vunpack.c.h.b16 %v788
          %v1899 = vunpack.c.l.b16 %v789
          %v1900 = vunpack.c.h.b16 %v789
          %v1901 = vunpack.c.l.b16 %v790
          %v1902 = vunpack.c.h.b16 %v790
          %v1903 = vunpack.c.l.b16 %v791
          %v1904 = vunpack.c.h.b16 %v791
          %v1905 = vunpack.c.l.b16 %v792
          %v1906 = vunpack.c.h.b16 %v792
          %v1907 = vunpack.c.l.b16 %v793
          %v1908 = vunpack.c.h.b16 %v793
          %v1909 = vunpack.c.l.b16 %v794
          %v1910 = vunpack.c.h.b16 %v794
          %v1911 = vunpack.c.l.b16 %v795
          %v1912 = vunpack.c.h.b16 %v795
          %v1913 = vunpack.c.l.b16 %v796
          %v1914 = vunpack.c.h.b16 %v796
          %v1915 = vunpack.c.l.b16 %v797
          %v1916 = vunpack.c.h.b16 %v797
          %v1917 = vunpack.c.l.b16 %v798
          %v1918 = vunpack.c.h.b16 %v798
          %v1919 = vunpack.c.l.b16 %v799
          %v1920 = vunpack.c.h.b16 %v799
          %v1921 = vunpack.c.l.b16 %v800
          %v1922 = vunpack.c.h.b16 %v800
          %v1923 = vunpack.c.l.b16 %v801
          %v1924 = vunpack.c.h.b16 %v801
          %v1925 = vunpack.c.l.b16 %v802
          %v1926 = vunpack.c.h.b16 %v802
          %v1927 = vunpack.c.l.b16 %v803
          %v1928 = vunpack.c.h.b16 %v803
          %v1929 = vunpack.c.l.b16 %v804
          %v1930 = vunpack.c.h.b16 %v804
          %v1931 = vunpack.c.l.b16 %v805
          %v1932 = vunpack.c.h.b16 %v805
          %v1933 = vunpack.c.l.b16 %v806
          %v1934 = vunpack.c.h.b16 %v806
          %v1935 = vunpack.c.l.b16 %v807
          %v1936 = vunpack.c.h.b16 %v807
          %v1937 = vunpack.c.l.b16 %v808
          %v1938 = vunpack.c.h.b16 %v808
          %v1939 = vunpack.c.l.b16 %v809
          %v1940 = vunpack.c.h.b16 %v809
          %v1941 = vunpack.c.l.b16 %v810
          %v1942 = vunpack.c.h.b16 %v810
          %v1943 = vunpack.c.l.b16 %v811
          %v1944 = vunpack.c.h.b16 %v811
          %v1945 = vunpack.c.l.b16 %v812
          %v1946 = vunpack.c.h.b16 %v812
          %v1947 = vunpack.c.l.b16 %v813
          %v1948 = vunpack.c.h.b16 %v813
          %v1949 = vunpack.c.l.b16 %v814
          %v1950 = vunpack.c.h.b16 %v814
          %v1951 = vunpack.c.l.b16 %v815
          %v1952 = vunpack.c.h.b16 %v815
          %v1953 = vunpack.c.l.b16 %v816
          %v1954 = vunpack.c.h.b16 %v816
          %v1955 = vunpack.c.l.b16 %v817
          %v1956 = vunpack.c.h.b16 %v817
          %v1957 = vunpack.c.l.b16 %v818
          %v1958 = vunpack.c.h.b16 %v818
          %v1959 = vunpack.c.l.b16 %v819
          %v1960 = vunpack.c.h.b16 %v819
          %v1961 = vunpack.c.l.b16 %v820
          %v1962 = vunpack.c.h.b16 %v820
          %v1963 = vunpack.c.l.b16 %v821
          %v1964 = vunpack.c.h.b16 %v821
          %v1965 = vunpack.c.l.b16 %v822
          %v1966 = vunpack.c.h.b16 %v822
          %v1967 = vunpack.c.l.b16 %v823
          %v1968 = vunpack.c.h.b16 %v823
          %v1969 = vunpack.c.l.b16 %v824
          %v1970 = vunpack.c.h.b16 %v824
          %v1971 = vunpack.c.l.b16 %v825
          %v1972 = vunpack.c.h.b16 %v825
          %v1973 = vunpack.c.l.b16 %v826
          %v1974 = vunpack.c.h.b16 %v826
          %v1975 = vunpack.c.l.b16 %v827
          %v1976 = vunpack.c.h.b16 %v827
          %v1977 = vunpack.c.l.b16 %v828
          %v1978 = vunpack.c.h.b16 %v828
          %v1979 = vunpack.c.l.b16 %v829
          %v1980 = vunpack.c.h.b16 %v829
          %v1981 = vunpack.c.l.b16 %v830
          %v1982 = vunpack.c.h.b16 %v830
          %v1983 = vunpack.c.l.b16 %v831
          %v1984 = vunpack.c.h.b16 %v831
          %v1985 = vunpack.c.l.b16 %v832
          %v1986 = vunpack.c.h.b16 %v832
          %v1987 = vunpack.c.l.b16 %v833
          %v1988 = vunpack.c.h.b16 %v833
          %v1989 = vunpack.c.l.b16 %v834
          %v1990 = vunpack.c.h.b16 %v834
          %v1991 = vunpack.c.l.b16 %v835
          %v1992 = vunpack.c.h.b16 %v835
          %v1993 = vunpack.c.l.b16 %v836
          %v1994 = vunpack.c.h.b16 %v836
          %v1995 = vunpack.c.l.b16 %v837
          %v1996 = vunpack.c.h.b16 %v837
          %v1997 = vunpack.c.l.b16 %v838
          %v1998 = vunpack.c.h.b16 %v838
          %v1999 = vunpack.c.l.b16 %v839
          %v2000 = vunpack.c.h.b16 %v839
          %v2001 = vunpack.c.l.b16 %v840
          %v2002 = vunpack.c.h.b16 %v840
          %v2003 = vunpack.c.l.b16 %v841
          %v2004 = vunpack.c.h.b16 %v841
          %v2005 = vunpack.c.l.b16 %v842
          %v2006 = vunpack.c.h.b16 %v842
          %v2007 = vunpack.c.l.b16 %v843
          %v2008 = vunpack.c.h.b16 %v843
          %v2009 = vunpack.c.l.b16 %v844
          %v2010 = vunpack.c.h.b16 %v844
          %v2011 = vunpack.c.l.b16 %v845
          %v2012 = vunpack.c.h.b16 %v845
          %v2013 = vunpack.c.l.b16 %v846
          %v2014 = vunpack.c.h.b16 %v846
          %v2015 = vunpack.c.l.b16 %v847
          %v2016 = vunpack.c.h.b16 %v847
          %v2017 = vunpack.c.l.b16 %v848
          %v2018 = vunpack.c.h.b16 %v848
          %v2019 = vunpack.c.l.b16 %v849
          %v2020 = vunpack.c.h.b16 %v849
          %v2021 = vunpack.c.l.b16 %v850
          %v2022 = vunpack.c.h.b16 %v850
          %v2023 = vunpack.c.l.b16 %v851
          %v2024 = vunpack.c.h.b16 %v851
          %v2025 = vunpack.c.l.b16 %v852
          %v2026 = vunpack.c.h.b16 %v852
          %v2027 = vunpack.c.l.b16 %v853
          %v2028 = vunpack.c.h.b16 %v853
          %v2029 = vunpack.c.l.b16 %v854
          %v2030 = vunpack.c.h.b16 %v854
          %v2031 = vunpack.c.l.b16 %v855
          %v2032 = vunpack.c.h.b16 %v855
          %v2033 = vunpack.c.l.b16 %v856
          %v2034 = vunpack.c.h.b16 %v856
          %v2035 = vunpack.c.l.b16 %v857
          %v2036 = vunpack.c.h.b16 %v857
          %v2037 = vunpack.c.l.b16 %v858
          %v2038 = vunpack.c.h.b16 %v858
          %v2039 = vunpack.c.l.b16 %v859
          %v2040 = vunpack.c.h.b16 %v859
          %v2041 = vunpack.c.l.b16 %v860
          %v2042 = vunpack.c.h.b16 %v860
          %v2043 = vunpack.c.l.b16 %v861
          %v2044 = vunpack.c.h.b16 %v861
          %v2045 = vunpack.c.l.b16 %v862
          %v2046 = vunpack.c.h.b16 %v862
          %v2047 = vunpack.c.l.b16 %v863
          %v2048 = vunpack.c.h.b16 %v863
          %v2049 = vunpack.c.l.b16 %v864
          %v2050 = vunpack.c.h.b16 %v864
          %v2051 = vunpack.c.l.b16 %v865
          %v2052 = vunpack.c.h.b16 %v865
          %v2053 = vunpack.c.l.b16 %v866
          %v2054 = vunpack.c.h.b16 %v866
          %v2055 = vunpack.c.l.b16 %v867
          %v2056 = vunpack.c.h.b16 %v867
          %v2057 = vunpack.c.l.b16 %v868
          %v2058 = vunpack.c.h.b16 %v868
          %v2059 = vunpack.c.l.b16 %v869
          %v2060 = vunpack.c.h.b16 %v869
          %v2061 = vunpack.c.l.b16 %v870
          %v2062 = vunpack.c.h.b16 %v870
          %v2063 = vunpack.c.l.b16 %v871
          %v2064 = vunpack.c.h.b16 %v871
          %v2065 = vunpack.c.l.b16 %v872
          %v2066 = vunpack.c.h.b16 %v872
          %v2067 = vunpack.c.l.b16 %v873
          %v2068 = vunpack.c.h.b16 %v873
          %v2069 = vunpack.c.l.b16 %v874
          %v2070 = vunpack.c.h.b16 %v874
          %v2071 = vunpack.c.l.b16 %v875
          %v2072 = vunpack.c.h.b16 %v875
          %v2073 = vunpack.c.l.b16 %v876
          %v2074 = vunpack.c.h.b16 %v876
          %v2075 = vunpack.c.l.b16 %v877
          %v2076 = vunpack.c.h.b16 %v877
          %v2077 = vunpack.c.l.b16 %v878
          %v2078 = vunpack.c.h.b16 %v878
          %v2079 = vunpack.c.l.b16 %v879
          %v2080 = vunpack.c.h.b16 %v879
          %v2081 = vunpack.c.l.b16 %v880
          %v2082 = vunpack.c.h.b16 %v880
          %v2083 = vunpack.c.l.b16 %v881
          %v2084 = vunpack.c.h.b16 %v881
          %v2085 = vunpack.c.l.b16 %v882
          %v2086 = vunpack.c.h.b16 %v882
          %v2087 = vunpack.c.l.b16 %v883
          %v2088 = vunpack.c.h.b16 %v883
          %v2089 = vunpack.c.l.b16 %v884
          %v2090 = vunpack.c.h.b16 %v884
          %v2091 = vunpack.c.l.b16 %v885
          %v2092 = vunpack.c.h.b16 %v885
          %v2093 = vunpack.c.l.b16 %v886
          %v2094 = vunpack.c.h.b16 %v886
          %v2095 = vunpack.c.l.b16 %v887
          %v2096 = vunpack.c.h.b16 %v887
          %v2097 = vunpack.c.l.b16 %v888
          %v2098 = vunpack.c.h.b16 %v888
          %v2099 = vunpack.c.l.b16 %v889
          %v2100 = vunpack.c.h.b16 %v889
          %v2101 = vunpack.c.l.b16 %v890
          %v2102 = vunpack.c.h.b16 %v890
          %v2103 = vunpack.c.l.b16 %v891
          %v2104 = vunpack.c.h.b16 %v891
          %v2105 = vunpack.c.l.b16 %v892
          %v2106 = vunpack.c.h.b16 %v892
          %v2107 = vunpack.c.l.b16 %v893
          %v2108 = vunpack.c.h.b16 %v893
          %v2109 = vunpack.c.l.b16 %v894
          %v2110 = vunpack.c.h.b16 %v894
          %v2111 = vunpack.c.l.b16 %v895
          %v2112 = vunpack.c.h.b16 %v895
          %v2113 = vunpack.c.l.b16 %v896
          %v2114 = vunpack.c.h.b16 %v896
          %v2115 = vpack.c.b16 %v1339, %v1331
          %v2116 = vpack.c.b16 %v1340, %v1332
          %v2117 = vpack.c.b16 %v1341, %v1333
          %v2118 = vpack.c.b16 %v1342, %v1334
          %v2119 = vpack.c.b16 %v1343, %v1335
          %v2120 = vpack.c.b16 %v1344, %v1336
          %v2121 = vpack.c.b16 %v1345, %v1337
          %v2122 = vpack.c.b16 %v1346, %v1338
          %v2123 = vpack.c.b16 %v1355, %v1347
          %v2124 = vpack.c.b16 %v1356, %v1348
          %v2125 = vpack.c.b16 %v1357, %v1349
          %v2126 = vpack.c.b16 %v1358, %v1350
          %v2127 = vpack.c.b16 %v1359, %v1351
          %v2128 = vpack.c.b16 %v1360, %v1352
          %v2129 = vpack.c.b16 %v1361, %v1353
          %v2130 = vpack.c.b16 %v1362, %v1354
          %v2131 = vpack.c.b16 %v1371, %v1363
          %v2132 = vpack.c.b16 %v1372, %v1364
          %v2133 = vpack.c.b16 %v1373, %v1365
          %v2134 = vpack.c.b16 %v1374, %v1366
          %v2135 = vpack.c.b16 %v1375, %v1367
          %v2136 = vpack.c.b16 %v1376, %v1368
          %v2137 = vpack.c.b16 %v1377, %v1369
          %v2138 = vpack.c.b16 %v1378, %v1370
          %v2139 = vpack.c.b16 %v1387, %v1379
          %v2140 = vpack.c.b16 %v1388, %v1380
          %v2141 = vpack.c.b16 %v1389, %v1381
          %v2142 = vpack.c.b16 %v1390, %v1382
          %v2143 = vpack.c.b16 %v1391, %v1383
          %v2144 = vpack.c.b16 %v1392, %v1384
          %v2145 = vpack.c.b16 %v1393, %v1385
          %v2146 = vpack.c.b16 %v1394, %v1386
          %v2147 = vpack.c.b16 %v1403, %v1395
          %v2148 = vpack.c.b16 %v1404, %v1396
          %v2149 = vpack.c.b16 %v1405, %v1397
          %v2150 = vpack.c.b16 %v1406, %v1398
          %v2151 = vpack.c.b16 %v1407, %v1399
          %v2152 = vpack.c.b16 %v1408, %v1400
          %v2153 = vpack.c.b16 %v1409, %v1401
          %v2154 = vpack.c.b16 %v1410, %v1402
          %v2155 = vpack.c.b16 %v1419, %v1411
          %v2156 = vpack.c.b16 %v1420, %v1412
          %v2157 = vpack.c.b16 %v1421, %v1413
          %v2158 = vpack.c.b16 %v1422, %v1414
          %v2159 = vpack.c.b16 %v1423, %v1415
          %v2160 = vpack.c.b16 %v1424, %v1416
          %v2161 = vpack.c.b16 %v1425, %v1417
          %v2162 = vpack.c.b16 %v1426, %v1418
          %v2163 = vpack.c.b16 %v1435, %v1427
          %v2164 = vpack.c.b16 %v1436, %v1428
          %v2165 = vpack.c.b16 %v1437, %v1429
          %v2166 = vpack.c.b16 %v1438, %v1430
          %v2167 = vpack.c.b16 %v1439, %v1431
          %v2168 = vpack.c.b16 %v1440, %v1432
          %v2169 = vpack.c.b16 %v1441, %v1433
          %v2170 = vpack.c.b16 %v1442, %v1434
          %v2171 = vpack.c.b16 %v1451, %v1443
          %v2172 = vpack.c.b16 %v1452, %v1444
          %v2173 = vpack.c.b16 %v1453, %v1445
          %v2174 = vpack.c.b16 %v1454, %v1446
          %v2175 = vpack.c.b16 %v1455, %v1447
          %v2176 = vpack.c.b16 %v1456, %v1448
          %v2177 = vpack.c.b16 %v1457, %v1449
          %v2178 = vpack.c.b16 %v1458, %v1450
          %v2179 = vpack.c.b16 %v1467, %v1459
          %v2180 = vpack.c.b16 %v1468, %v1460
          %v2181 = vpack.c.b16 %v1469, %v1461
          %v2182 = vpack.c.b16 %v1470, %v1462
          %v2183 = vpack.c.b16 %v1471, %v1463
          %v2184 = vpack.c.b16 %v1472, %v1464
          %v2185 = vpack.c.b16 %v1473, %v1465
          %v2186 = vpack.c.b16 %v1474, %v1466
          %v2187 = vpack.c.b16 %v1483, %v1475
          %v2188 = vpack.c.b16 %v1484, %v1476
          %v2189 = vpack.c.b16 %v1485, %v1477
          %v2190 = vpack.c.b16 %v1486, %v1478
          %v2191 = vpack.c.b16 %v1487, %v1479
          %v2192 = vpack.c.b16 %v1488, %v1480
          %v2193 = vpack.c.b16 %v1489, %v1481
          %v2194 = vpack.c.b16 %v1490, %v1482
          %v2195 = vpack.c.b16 %v1499, %v1491
          %v2196 = vpack.c.b16 %v1500, %v1492
          %v2197 = vpack.c.b16 %v1501, %v1493
          %v2198 = vpack.c.b16 %v1502, %v1494
          %v2199 = vpack.c.b16 %v1503, %v1495
          %v2200 = vpack.c.b16 %v1504, %v1496
          %v2201 = vpack.c.b16 %v1505, %v1497
          %v2202 = vpack.c.b16 %v1506, %v1498
          %v2203 = vpack.c.b16 %v1515, %v1507
          %v2204 = vpack.c.b16 %v1516, %v1508
          %v2205 = vpack.c.b16 %v1517, %v1509
          %v2206 = vpack.c.b16 %v1518, %v1510
          %v2207 = vpack.c.b16 %v1519, %v1511
          %v2208 = vpack.c.b16 %v1520, %v1512
          %v2209 = vpack.c.b16 %v1521, %v1513
          %v2210 = vpack.c.b16 %v1522, %v1514
          %v2211 = vpack.c.b16 %v1531, %v1523
          %v2212 = vpack.c.b16 %v1532, %v1524
          %v2213 = vpack.c.b16 %v1533, %v1525
          %v2214 = vpack.c.b16 %v1534, %v1526
          %v2215 = vpack.c.b16 %v1535, %v1527
          %v2216 = vpack.c.b16 %v1536, %v1528
          %v2217 = vpack.c.b16 %v1537, %v1529
          %v2218 = vpack.c.b16 %v1538, %v1530
          %v2219 = vpack.c.b16 %v1547, %v1539
          %v2220 = vpack.c.b16 %v1548, %v1540
          %v2221 = vpack.c.b16 %v1549, %v1541
          %v2222 = vpack.c.b16 %v1550, %v1542
          %v2223 = vpack.c.b16 %v1551, %v1543
          %v2224 = vpack.c.b16 %v1552, %v1544
          %v2225 = vpack.c.b16 %v1553, %v1545
          %v2226 = vpack.c.b16 %v1554, %v1546
          %v2227 = vpack.c.b16 %v1563, %v1555
          %v2228 = vpack.c.b16 %v1564, %v1556
          %v2229 = vpack.c.b16 %v1565, %v1557
          %v2230 = vpack.c.b16 %v1566, %v1558
          %v2231 = vpack.c.b16 %v1567, %v1559
          %v2232 = vpack.c.b16 %v1568, %v1560
          %v2233 = vpack.c.b16 %v1569, %v1561
          %v2234 = vpack.c.b16 %v1570, %v1562
          %v2235 = vpack.c.b16 %v1579, %v1571
          %v2236 = vpack.c.b16 %v1580, %v1572
          %v2237 = vpack.c.b16 %v1581, %v1573
          %v2238 = vpack.c.b16 %v1582, %v1574
          %v2239 = vpack.c.b16 %v1583, %v1575
          %v2240 = vpack.c.b16 %v1584, %v1576
          %v2241 = vpack.c.b16 %v1585, %v1577
          %v2242 = vpack.c.b16 %v1586, %v1578
          %v2243 = vpack.c.b16 %v1595, %v1587
          %v2244 = vpack.c.b16 %v1596, %v1588
          %v2245 = vpack.c.b16 %v1597, %v1589
          %v2246 = vpack.c.b16 %v1598, %v1590
          %v2247 = vpack.c.b16 %v1599, %v1591
          %v2248 = vpack.c.b16 %v1600, %v1592
          %v2249 = vpack.c.b16 %v1601, %v1593
          %v2250 = vpack.c.b16 %v1602, %v1594
          %v2251 = vpack.c.b16 %v1611, %v1603
          %v2252 = vpack.c.b16 %v1612, %v1604
          %v2253 = vpack.c.b16 %v1613, %v1605
          %v2254 = vpack.c.b16 %v1614, %v1606
          %v2255 = vpack.c.b16 %v1615, %v1607
          %v2256 = vpack.c.b16 %v1616, %v1608
          %v2257 = vpack.c.b16 %v1617, %v1609
          %v2258 = vpack.c.b16 %v1618, %v1610
          %v2259 = vpack.c.b16 %v1627, %v1619
          %v2260 = vpack.c.b16 %v1628, %v1620
          %v2261 = vpack.c.b16 %v1629, %v1621
          %v2262 = vpack.c.b16 %v1630, %v1622
          %v2263 = vpack.c.b16 %v1631, %v1623
          %v2264 = vpack.c.b16 %v1632, %v1624
          %v2265 = vpack.c.b16 %v1633, %v1625
          %v2266 = vpack.c.b16 %v1634, %v1626
          %v2267 = vpack.c.b16 %v1643, %v1635
          %v2268 = vpack.c.b16 %v1644, %v1636
          %v2269 = vpack.c.b16 %v1645, %v1637
          %v2270 = vpack.c.b16 %v1646, %v1638
          %v2271 = vpack.c.b16 %v1647, %v1639
          %v2272 = vpack.c.b16 %v1648, %v1640
          %v2273 = vpack.c.b16 %v1649, %v1641
          %v2274 = vpack.c.b16 %v1650, %v1642
          %v2275 = vpack.c.b16 %v1659, %v1651
          %v2276 = vpack.c.b16 %v1660, %v1652
          %v2277 = vpack.c.b16 %v1661, %v1653
          %v2278 = vpack.c.b16 %v1662, %v1654
          %v2279 = vpack.c.b16 %v1663, %v1655
          %v2280 = vpack.c.b16 %v1664, %v1656
          %v2281 = vpack.c.b16 %v1665, %v1657
          %v2282 = vpack.c.b16 %v1666, %v1658
          %v2283 = vpack.c.b16 %v1675, %v1667
          %v2284 = vpack.c.b16 %v1676, %v1668
          %v2285 = vpack.c.b16 %v1677, %v1669
          %v2286 = vpack.c.b16 %v1678, %v1670
          %v2287 = vpack.c.b16 %v1679, %v1671
          %v2288 = vpack.c.b16 %v1680, %v1672
          %v2289 = vpack.c.b16 %v1681, %v1673
          %v2290 = vpack.c.b16 %v1682, %v1674
          %v2291 = vpack.c.b16 %v1691, %v1683
          %v2292 = vpack.c.b16 %v1692, %v1684
          %v2293 = vpack.c.b16 %v1693, %v1685
          %v2294 = vpack.c.b16 %v1694, %v1686
          %v2295 = vpack.c.b16 %v1695, %v1687
          %v2296 = vpack.c.b16 %v1696, %v1688
          %v2297 = vpack.c.b16 %v1697, %v1689
          %v2298 = vpack.c.b16 %v1698, %v1690
          %v2299 = vpack.c.b16 %v1707, %v1699
          %v2300 = vpack.c.b16 %v1708, %v1700
          %v2301 = vpack.c.b16 %v1709, %v1701
          %v2302 = vpack.c.b16 %v1710, %v1702
          %v2303 = vpack.c.b16 %v1711, %v1703
          %v2304 = vpack.c.b16 %v1712, %v1704
          %v2305 = vpack.c.b16 %v1713, %v1705
          %v2306 = vpack.c.b16 %v1714, %v1706
          %v2307 = vpack.c.b16 %v1723, %v1715
          %v2308 = vpack.c.b16 %v1724, %v1716
          %v2309 = vpack.c.b16 %v1725, %v1717
          %v2310 = vpack.c.b16 %v1726, %v1718
          %v2311 = vpack.c.b16 %v1727, %v1719
          %v2312 = vpack.c.b16 %v1728, %v1720
          %v2313 = vpack.c.b16 %v1729, %v1721
          %v2314 = vpack.c.b16 %v1730, %v1722
          %v2315 = vpack.c.b16 %v1739, %v1731
          %v2316 = vpack.c.b16 %v1740, %v1732
          %v2317 = vpack.c.b16 %v1741, %v1733
          %v2318 = vpack.c.b16 %v1742, %v1734
          %v2319 = vpack.c.b16 %v1743, %v1735
          %v2320 = vpack.c.b16 %v1744, %v1736
          %v2321 = vpack.c.b16 %v1745, %v1737
          %v2322 = vpack.c.b16 %v1746, %v1738
          %v2323 = vpack.c.b16 %v1755, %v1747
          %v2324 = vpack.c.b16 %v1756, %v1748
          %v2325 = vpack.c.b16 %v1757, %v1749
          %v2326 = vpack.c.b16 %v1758, %v1750
          %v2327 = vpack.c.b16 %v1759, %v1751
          %v2328 = vpack.c.b16 %v1760, %v1752
          %v2329 = vpack.c.b16 %v1761, %v1753
          %v2330 = vpack.c.b16 %v1762, %v1754
          %v2331 = vpack.c.b16 %v1771, %v1763
          %v2332 = vpack.c.b16 %v1772, %v1764
          %v2333 = vpack.c.b16 %v1773, %v1765
          %v2334 = vpack.c.b16 %v1774, %v1766
          %v2335 = vpack.c.b16 %v1775, %v1767
          %v2336 = vpack.c.b16 %v1776, %v1768
          %v2337 = vpack.c.b16 %v1777, %v1769
          %v2338 = vpack.c.b16 %v1778, %v1770
          %v2339 = vpack.c.b16 %v1787, %v1779
          %v2340 = vpack.c.b16 %v1788, %v1780
          %v2341 = vpack.c.b16 %v1789, %v1781
          %v2342 = vpack.c.b16 %v1790, %v1782
          %v2343 = vpack.c.b16 %v1791, %v1783
          %v2344 = vpack.c.b16 %v1792, %v1784
          %v2345 = vpack.c.b16 %v1793, %v1785
          %v2346 = vpack.c.b16 %v1794, %v1786
          %v2347 = vpack.c.b16 %v1803, %v1795
          %v2348 = vpack.c.b16 %v1804, %v1796
          %v2349 = vpack.c.b16 %v1805, %v1797
          %v2350 = vpack.c.b16 %v1806, %v1798
          %v2351 = vpack.c.b16 %v1807, %v1799
          %v2352 = vpack.c.b16 %v1808, %v1800
          %v2353 = vpack.c.b16 %v1809, %v1801
          %v2354 = vpack.c.b16 %v1810, %v1802
          %v2355 = vpack.c.b16 %v1819, %v1811
          %v2356 = vpack.c.b16 %v1820, %v1812
          %v2357 = vpack.c.b16 %v1821, %v1813
          %v2358 = vpack.c.b16 %v1822, %v1814
          %v2359 = vpack.c.b16 %v1823, %v1815
          %v2360 = vpack.c.b16 %v1824, %v1816
          %v2361 = vpack.c.b16 %v1825, %v1817
          %v2362 = vpack.c.b16 %v1826, %v1818
          %v2363 = vpack.c.b16 %v1835, %v1827
          %v2364 = vpack.c.b16 %v1836, %v1828
          %v2365 = vpack.c.b16 %v1837, %v1829
          %v2366 = vpack.c.b16 %v1838, %v1830
          %v2367 = vpack.c.b16 %v1839, %v1831
          %v2368 = vpack.c.b16 %v1840, %v1832
          %v2369 = vpack.c.b16 %v1841, %v1833
          %v2370 = vpack.c.b16 %v1842, %v1834
          %v2371 = vpack.c.b16 %v1851, %v1843
          %v2372 = vpack.c.b16 %v1852, %v1844
          %v2373 = vpack.c.b16 %v1853, %v1845
          %v2374 = vpack.c.b16 %v1854, %v1846
          %v2375 = vpack.c.b16 %v1855, %v1847
          %v2376 = vpack.c.b16 %v1856, %v1848
          %v2377 = vpack.c.b16 %v1857, %v1849
          %v2378 = vpack.c.b16 %v1858, %v1850
          %v2379 = vpack.c.b16 %v1867, %v1859
          %v2380 = vpack.c.b16 %v1868, %v1860
          %v2381 = vpack.c.b16 %v1869, %v1861
          %v2382 = vpack.c.b16 %v1870, %v1862
          %v2383 = vpack.c.b16 %v1871, %v1863
          %v2384 = vpack.c.b16 %v1872, %v1864
          %v2385 = vpack.c.b16 %v1873, %v1865
          %v2386 = vpack.c.b16 %v1874, %v1866
          %v2387 = vpack.c.b16 %v1883, %v1875
          %v2388 = vpack.c.b16 %v1884, %v1876
          %v2389 = vpack.c.b16 %v1885, %v1877
          %v2390 = vpack.c.b16 %v1886, %v1878
          %v2391 = vpack.c.b16 %v1887, %v1879
          %v2392 = vpack.c.b16 %v1888, %v1880
          %v2393 = vpack.c.b16 %v1889, %v1881
          %v2394 = vpack.c.b16 %v1890, %v1882
          %v2395 = vpack.c.b16 %v1899, %v1891
          %v2396 = vpack.c.b16 %v1900, %v1892
          %v2397 = vpack.c.b16 %v1901, %v1893
          %v2398 = vpack.c.b16 %v1902, %v1894
          %v2399 = vpack.c.b16 %v1903, %v1895
          %v2400 = vpack.c.b16 %v1904, %v1896
          %v2401 = vpack.c.b16 %v1905, %v1897
          %v2402 = vpack.c.b16 %v1906, %v1898
          %v2403 = vpack.c.b16 %v1915, %v1907
          %v2404 = vpack.c.b16 %v1916, %v1908
          %v2405 = vpack.c.b16 %v1917, %v1909
          %v2406 = vpack.c.b16 %v1918, %v1910
          %v2407 = vpack.c.b16 %v1919, %v1911
          %v2408 = vpack.c.b16 %v1920, %v1912
          %v2409 = vpack.c.b16 %v1921, %v1913
          %v2410 = vpack.c.b16 %v1922, %v1914
          %v2411 = vpack.c.b16 %v1931, %v1923
          %v2412 = vpack.c.b16 %v1932, %v1924
          %v2413 = vpack.c.b16 %v1933, %v1925
          %v2414 = vpack.c.b16 %v1934, %v1926
          %v2415 = vpack.c.b16 %v1935, %v1927
          %v2416 = vpack.c.b16 %v1936, %v1928
          %v2417 = vpack.c.b16 %v1937, %v1929
          %v2418 = vpack.c.b16 %v1938, %v1930
          %v2419 = vpack.c.b16 %v1947, %v1939
          %v2420 = vpack.c.b16 %v1948, %v1940
          %v2421 = vpack.c.b16 %v1949, %v1941
          %v2422 = vpack.c.b16 %v1950, %v1942
          %v2423 = vpack.c.b16 %v1951, %v1943
          %v2424 = vpack.c.b16 %v1952, %v1944
          %v2425 = vpack.c.b16 %v1953, %v1945
          %v2426 = vpack.c.b16 %v1954, %v1946
          %v2427 = vpack.c.b16 %v1963, %v1955
          %v2428 = vpack.c.b16 %v1964, %v1956
          %v2429 = vpack.c.b16 %v1965, %v1957
          %v2430 = vpack.c.b16 %v1966, %v1958
          %v2431 = vpack.c.b16 %v1967, %v1959
          %v2432 = vpack.c.b16 %v1968, %v1960
          %v2433 = vpack.c.b16 %v1969, %v1961
          %v2434 = vpack.c.b16 %v1970, %v1962
          %v2435 = vpack.c.b16 %v1979, %v1971
          %v2436 = vpack.c.b16 %v1980, %v1972
          %v2437 = vpack.c.b16 %v1981, %v1973
          %v2438 = vpack.c.b16 %v1982, %v1974
          %v2439 = vpack.c.b16 %v1983, %v1975
          %v2440 = vpack.c.b16 %v1984, %v1976
          %v2441 = vpack.c.b16 %v1985, %v1977
          %v2442 = vpack.c.b16 %v1986, %v1978
          %v2443 = vpack.c.b16 %v1995, %v1987
          %v2444 = vpack.c.b16 %v1996, %v1988
          %v2445 = vpack.c.b16 %v1997, %v1989
          %v2446 = vpack.c.b16 %v1998, %v1990
          %v2447 = vpack.c.b16 %v1999, %v1991
          %v2448 = vpack.c.b16 %v2000, %v1992
          %v2449 = vpack.c.b16 %v2001, %v1993
          %v2450 = vpack.c.b16 %v2002, %v1994
          %v2451 = vpack.c.b16 %v2011, %v2003
          %v2452 = vpack.c.b16 %v2012, %v2004
          %v2453 = vpack.c.b16 %v2013, %v2005
          %v2454 = vpack.c.b16 %v2014, %v2006
          %v2455 = vpack.c.b16 %v2015, %v2007
          %v2456 = vpack.c.b16 %v2016, %v2008
          %v2457 = vpack.c.b16 %v2017, %v2009
          %v2458 = vpack.c.b16 %v2018, %v2010
          %v2459 = vpack.c.b16 %v2027, %v2019
          %v2460 = vpack.c.b16 %v2028, %v2020
          %v2461 = vpack.c.b16 %v2029, %v2021
          %v2462 = vpack.c.b16 %v2030, %v2022
          %v2463 = vpack.c.b16 %v2031, %v2023
          %v2464 = vpack.c.b16 %v2032, %v2024
          %v2465 = vpack.c.b16 %v2033, %v2025
          %v2466 = vpack.c.b16 %v2034, %v2026
          %v2467 = vpack.c.b16 %v2043, %v2035
          %v2468 = vpack.c.b16 %v2044, %v2036
          %v2469 = vpack.c.b16 %v2045, %v2037
          %v2470 = vpack.c.b16 %v2046, %v2038
          %v2471 = vpack.c.b16 %v2047, %v2039
          %v2472 = vpack.c.b16 %v2048, %v2040
          %v2473 = vpack.c.b16 %v2049, %v2041
          %v2474 = vpack.c.b16 %v2050, %v2042
          %v2475 = vpack.c.b16 %v2059, %v2051
          %v2476 = vpack.c.b16 %v2060, %v2052
          %v2477 = vpack.c.b16 %v2061, %v2053
          %v2478 = vpack.c.b16 %v2062, %v2054
          %v2479 = vpack.c.b16 %v2063, %v2055
          %v2480 = vpack.c.b16 %v2064, %v2056
          %v2481 = vpack.c.b16 %v2065, %v2057
          %v2482 = vpack.c.b16 %v2066, %v2058
          %v2483 = vpack.c.b16 %v2075, %v2067
          %v2484 = vpack.c.b16 %v2076, %v2068
          %v2485 = vpack.c.b16 %v2077, %v2069
          %v2486 = vpack.c.b16 %v2078, %v2070
          %v2487 = vpack.c.b16 %v2079, %v2071
          %v2488 = vpack.c.b16 %v2080, %v2072
          %v2489 = vpack.c.b16 %v2081, %v2073
          %v2490 = vpack.c.b16 %v2082, %v2074
          %v2491 = vpack.c.b16 %v2091, %v2083
          %v2492 = vpack.c.b16 %v2092, %v2084
          %v2493 = vpack.c.b16 %v2093, %v2085
          %v2494 = vpack.c.b16 %v2094, %v2086
          %v2495 = vpack.c.b16 %v2095, %v2087
          %v2496 = vpack.c.b16 %v2096, %v2088
          %v2497 = vpack.c.b16 %v2097, %v2089
          %v2498 = vpack.c.b16 %v2098, %v2090
          %v2499 = vpack.c.b16 %v2107, %v2099
          %v2500 = vpack.c.b16 %v2108, %v2100
          %v2501 = vpack.c.b16 %v2109, %v2101
          %v2502 = vpack.c.b16 %v2110, %v2102
          %v2503 = vpack.c.b16 %v2111, %v2103
          %v2504 = vpack.c.b16 %v2112, %v2104
          %v2505 = vpack.c.b16 %v2113, %v2105
          %v2506 = vpack.c.b16 %v2114, %v2106
          %vm2899 = vcmask 130048
          %v2901 = vsel %vm2899, %v932, 0
          %2903 = vmatpush.bf16.msra.mxu0 %v2171
          %2904 = vmatpush.bf16.msra.mxu0 %v2163
          %2905 = vmatpush.bf16.msra.mxu0 %v2155
          %2906 = vmatpush.bf16.msra.mxu0 %v2147
          %2907 = vmatpush.bf16.msra.mxu0 %v2139
          %2908 = vmatpush.bf16.msra.mxu0 %v2131
          %2909 = vmatpush.bf16.msra.mxu0 %v2123
          %2910 = vmatpush.bf16.msra.mxu0 %v2115
          %2911 = vmatmul.bf16.gmra.mxu0 %v926
          %v2912 = vpop.f32.mrf.mxu0
          %v2913 = vadd.f32 %v899, %v2912
          %v2914 = vpop.f32.mrf.mxu0
          %2915 = vdwg.mxu0
          %2916 = vmatpush.bf16.msra.mxu0 %v2235
          %2917 = vmatpush.bf16.msra.mxu0 %v2227
          %2918 = vmatpush.bf16.msra.mxu0 %v2219
          %2919 = vmatpush.bf16.msra.mxu0 %v2211
          %2920 = vmatpush.bf16.msra.mxu0 %v2203
          %2921 = vmatpush.bf16.msra.mxu0 %v2195
          %2922 = vmatpush.bf16.msra.mxu0 %v2187
          %2923 = vmatpush.bf16.msra.mxu0 %v2179
          %2924 = vmatmul.bf16.gmra.mxu0 %v927
          %v2925 = vpop.f32.mrf.mxu0
          %v2926 = vadd.f32 %v2913, %v2925
          %v2927 = vpop.f32.mrf.mxu0
          %2928 = vdwg.mxu0
          %2929 = vmatpush.bf16.msra.mxu0 %v2299
          %2930 = vmatpush.bf16.msra.mxu0 %v2291
          %2931 = vmatpush.bf16.msra.mxu0 %v2283
          %2932 = vmatpush.bf16.msra.mxu0 %v2275
          %2933 = vmatpush.bf16.msra.mxu0 %v2267
          %2934 = vmatpush.bf16.msra.mxu0 %v2259
          %2935 = vmatpush.bf16.msra.mxu0 %v2251
          %2936 = vmatpush.bf16.msra.mxu0 %v2243
          %2937 = vmatmul.bf16.gmra.mxu0 %v928
          %v2938 = vpop.f32.mrf.mxu0
          %v2939 = vadd.f32 %v2926, %v2938
          %v2940 = vpop.f32.mrf.mxu0
          %2941 = vdwg.mxu0
          %2942 = vmatpush.bf16.msra.mxu0 %v2363
          %2943 = vmatpush.bf16.msra.mxu0 %v2355
          %2944 = vmatpush.bf16.msra.mxu0 %v2347
          %2945 = vmatpush.bf16.msra.mxu0 %v2339
          %2946 = vmatpush.bf16.msra.mxu0 %v2331
          %2947 = vmatpush.bf16.msra.mxu0 %v2323
          %2948 = vmatpush.bf16.msra.mxu0 %v2315
          %2949 = vmatpush.bf16.msra.mxu0 %v2307
          %2950 = vmatmul.bf16.gmra.mxu0 %v929
          %v2951 = vpop.f32.mrf.mxu0
          %v2952 = vadd.f32 %v2939, %v2951
          %v2953 = vpop.f32.mrf.mxu0
          %2954 = vdwg.mxu0
          %2955 = vmatpush.bf16.msra.mxu0 %v2427
          %2956 = vmatpush.bf16.msra.mxu0 %v2419
          %2957 = vmatpush.bf16.msra.mxu0 %v2411
          %2958 = vmatpush.bf16.msra.mxu0 %v2403
          %2959 = vmatpush.bf16.msra.mxu0 %v2395
          %2960 = vmatpush.bf16.msra.mxu0 %v2387
          %2961 = vmatpush.bf16.msra.mxu0 %v2379
          %2962 = vmatpush.bf16.msra.mxu0 %v2371
          %2963 = vmatmul.bf16.gmra.mxu0 %v930
          %v2964 = vpop.f32.mrf.mxu0
          %v2965 = vadd.f32 %v2952, %v2964
          %v2966 = vpop.f32.mrf.mxu0
          %2967 = vdwg.mxu0
          %2968 = vmatpush.bf16.msra.mxu0 %v2491
          %2969 = vmatpush.bf16.msra.mxu0 %v2483
          %2970 = vmatpush.bf16.msra.mxu0 %v2475
          %2971 = vmatpush.bf16.msra.mxu0 %v2467
          %2972 = vmatpush.bf16.msra.mxu0 %v2459
          %2973 = vmatpush.bf16.msra.mxu0 %v2451
          %2974 = vmatpush.bf16.msra.mxu0 %v2443
          %2975 = vmatpush.bf16.msra.mxu0 %v2435
          %2976 = vmatmul.bf16.gmra.mxu0 %v931
          %v2977 = vpop.f32.mrf.mxu0
          %v2978 = vadd.f32 %v2965, %v2977
          %v2979 = vpop.f32.mrf.mxu0
          %2980 = vdwg.mxu0
          %2981 = vmatpush.bf16.msra.mxu0 0
          %2982 = vmatpush.bf16.msra.mxu0 0
          %2983 = vmatpush.bf16.msra.mxu0 0
          %2984 = vmatpush.bf16.msra.mxu0 0
          %2985 = vmatpush.bf16.msra.mxu0 0
          %2986 = vmatpush.bf16.msra.mxu0 0
          %2987 = vmatpush.bf16.msra.mxu0 0
          %2988 = vmatpush.bf16.msra.mxu0 %v2499
          %2989 = vmatmul.bf16.gmra.mxu0 %v2901
          %v2990 = vpop.f32.mrf.mxu0
          %v2991 = vadd.f32 %v2978, %v2990
          %v2992 = vpop.f32.mrf.mxu0
          %2993 = vdwg.mxu0
          %2994 = vmatpush.bf16.msra.mxu0 %v2172
          %2995 = vmatpush.bf16.msra.mxu0 %v2164
          %2996 = vmatpush.bf16.msra.mxu0 %v2156
          %2997 = vmatpush.bf16.msra.mxu0 %v2148
          %2998 = vmatpush.bf16.msra.mxu0 %v2140
          %2999 = vmatpush.bf16.msra.mxu0 %v2132
          %3000 = vmatpush.bf16.msra.mxu0 %v2124
          %3001 = vmatpush.bf16.msra.mxu0 %v2116
          %3002 = vmatmul.bf16.gmra.mxu0 %v926
          %v3003 = vpop.f32.mrf.mxu0
          %v3004 = vadd.f32 %v900, %v3003
          %v3005 = vpop.f32.mrf.mxu0
          %3006 = vdwg.mxu0
          %3007 = vmatpush.bf16.msra.mxu0 %v2236
          %3008 = vmatpush.bf16.msra.mxu0 %v2228
          %3009 = vmatpush.bf16.msra.mxu0 %v2220
          %3010 = vmatpush.bf16.msra.mxu0 %v2212
          %3011 = vmatpush.bf16.msra.mxu0 %v2204
          %3012 = vmatpush.bf16.msra.mxu0 %v2196
          %3013 = vmatpush.bf16.msra.mxu0 %v2188
          %3014 = vmatpush.bf16.msra.mxu0 %v2180
          %3015 = vmatmul.bf16.gmra.mxu0 %v927
          %v3016 = vpop.f32.mrf.mxu0
          %v3017 = vadd.f32 %v3004, %v3016
          %v3018 = vpop.f32.mrf.mxu0
          %3019 = vdwg.mxu0
          %3020 = vmatpush.bf16.msra.mxu0 %v2300
          %3021 = vmatpush.bf16.msra.mxu0 %v2292
          %3022 = vmatpush.bf16.msra.mxu0 %v2284
          %3023 = vmatpush.bf16.msra.mxu0 %v2276
          %3024 = vmatpush.bf16.msra.mxu0 %v2268
          %3025 = vmatpush.bf16.msra.mxu0 %v2260
          %3026 = vmatpush.bf16.msra.mxu0 %v2252
          %3027 = vmatpush.bf16.msra.mxu0 %v2244
          %3028 = vmatmul.bf16.gmra.mxu0 %v928
          %v3029 = vpop.f32.mrf.mxu0
          %v3030 = vadd.f32 %v3017, %v3029
          %v3031 = vpop.f32.mrf.mxu0
          %3032 = vdwg.mxu0
          %3033 = vmatpush.bf16.msra.mxu0 %v2364
          %3034 = vmatpush.bf16.msra.mxu0 %v2356
          %3035 = vmatpush.bf16.msra.mxu0 %v2348
          %3036 = vmatpush.bf16.msra.mxu0 %v2340
          %3037 = vmatpush.bf16.msra.mxu0 %v2332
          %3038 = vmatpush.bf16.msra.mxu0 %v2324
          %3039 = vmatpush.bf16.msra.mxu0 %v2316
          %3040 = vmatpush.bf16.msra.mxu0 %v2308
          %3041 = vmatmul.bf16.gmra.mxu0 %v929
          %v3042 = vpop.f32.mrf.mxu0
          %v3043 = vadd.f32 %v3030, %v3042
          %v3044 = vpop.f32.mrf.mxu0
          %3045 = vdwg.mxu0
          %3046 = vmatpush.bf16.msra.mxu0 %v2428
          %3047 = vmatpush.bf16.msra.mxu0 %v2420
          %3048 = vmatpush.bf16.msra.mxu0 %v2412
          %3049 = vmatpush.bf16.msra.mxu0 %v2404
          %3050 = vmatpush.bf16.msra.mxu0 %v2396
          %3051 = vmatpush.bf16.msra.mxu0 %v2388
          %3052 = vmatpush.bf16.msra.mxu0 %v2380
          %3053 = vmatpush.bf16.msra.mxu0 %v2372
          %3054 = vmatmul.bf16.gmra.mxu0 %v930
          %v3055 = vpop.f32.mrf.mxu0
          %v3056 = vadd.f32 %v3043, %v3055
          %v3057 = vpop.f32.mrf.mxu0
          %3058 = vdwg.mxu0
          %3059 = vmatpush.bf16.msra.mxu0 %v2492
          %3060 = vmatpush.bf16.msra.mxu0 %v2484
          %3061 = vmatpush.bf16.msra.mxu0 %v2476
          %3062 = vmatpush.bf16.msra.mxu0 %v2468
          %3063 = vmatpush.bf16.msra.mxu0 %v2460
          %3064 = vmatpush.bf16.msra.mxu0 %v2452
          %3065 = vmatpush.bf16.msra.mxu0 %v2444
          %3066 = vmatpush.bf16.msra.mxu0 %v2436
          %3067 = vmatmul.bf16.gmra.mxu0 %v931
          %v3068 = vpop.f32.mrf.mxu0
          %v3069 = vadd.f32 %v3056, %v3068
          %v3070 = vpop.f32.mrf.mxu0
          %3071 = vdwg.mxu0
          %3072 = vmatpush.bf16.msra.mxu0 0
          %3073 = vmatpush.bf16.msra.mxu0 0
          %3074 = vmatpush.bf16.msra.mxu0 0
          %3075 = vmatpush.bf16.msra.mxu0 0
          %3076 = vmatpush.bf16.msra.mxu0 0
          %3077 = vmatpush.bf16.msra.mxu0 0
          %3078 = vmatpush.bf16.msra.mxu0 0
          %3079 = vmatpush.bf16.msra.mxu0 %v2500
          %3080 = vmatmul.bf16.gmra.mxu0 %v2901
          %v3081 = vpop.f32.mrf.mxu0
          %v3082 = vadd.f32 %v3069, %v3081
          %v3083 = vpop.f32.mrf.mxu0
          %3084 = vdwg.mxu0
          %3085 = vmatpush.bf16.msra.mxu0 %v2173
          %3086 = vmatpush.bf16.msra.mxu0 %v2165
          %3087 = vmatpush.bf16.msra.mxu0 %v2157
          %3088 = vmatpush.bf16.msra.mxu0 %v2149
          %3089 = vmatpush.bf16.msra.mxu0 %v2141
          %3090 = vmatpush.bf16.msra.mxu0 %v2133
          %3091 = vmatpush.bf16.msra.mxu0 %v2125
          %3092 = vmatpush.bf16.msra.mxu0 %v2117
          %3093 = vmatmul.bf16.gmra.mxu0 %v926
          %v3094 = vpop.f32.mrf.mxu0
          %v3095 = vadd.f32 %v901, %v3094
          %v3096 = vpop.f32.mrf.mxu0
          %3097 = vdwg.mxu0
          %3098 = vmatpush.bf16.msra.mxu0 %v2237
          %3099 = vmatpush.bf16.msra.mxu0 %v2229
          %3100 = vmatpush.bf16.msra.mxu0 %v2221
          %3101 = vmatpush.bf16.msra.mxu0 %v2213
          %3102 = vmatpush.bf16.msra.mxu0 %v2205
          %3103 = vmatpush.bf16.msra.mxu0 %v2197
          %3104 = vmatpush.bf16.msra.mxu0 %v2189
          %3105 = vmatpush.bf16.msra.mxu0 %v2181
          %3106 = vmatmul.bf16.gmra.mxu0 %v927
          %v3107 = vpop.f32.mrf.mxu0
          %v3108 = vadd.f32 %v3095, %v3107
          %v3109 = vpop.f32.mrf.mxu0
          %3110 = vdwg.mxu0
          %3111 = vmatpush.bf16.msra.mxu0 %v2301
          %3112 = vmatpush.bf16.msra.mxu0 %v2293
          %3113 = vmatpush.bf16.msra.mxu0 %v2285
          %3114 = vmatpush.bf16.msra.mxu0 %v2277
          %3115 = vmatpush.bf16.msra.mxu0 %v2269
          %3116 = vmatpush.bf16.msra.mxu0 %v2261
          %3117 = vmatpush.bf16.msra.mxu0 %v2253
          %3118 = vmatpush.bf16.msra.mxu0 %v2245
          %3119 = vmatmul.bf16.gmra.mxu0 %v928
          %v3120 = vpop.f32.mrf.mxu0
          %v3121 = vadd.f32 %v3108, %v3120
          %v3122 = vpop.f32.mrf.mxu0
          %3123 = vdwg.mxu0
          %3124 = vmatpush.bf16.msra.mxu0 %v2365
          %3125 = vmatpush.bf16.msra.mxu0 %v2357
          %3126 = vmatpush.bf16.msra.mxu0 %v2349
          %3127 = vmatpush.bf16.msra.mxu0 %v2341
          %3128 = vmatpush.bf16.msra.mxu0 %v2333
          %3129 = vmatpush.bf16.msra.mxu0 %v2325
          %3130 = vmatpush.bf16.msra.mxu0 %v2317
          %3131 = vmatpush.bf16.msra.mxu0 %v2309
          %3132 = vmatmul.bf16.gmra.mxu0 %v929
          %v3133 = vpop.f32.mrf.mxu0
          %v3134 = vadd.f32 %v3121, %v3133
          %v3135 = vpop.f32.mrf.mxu0
          %3136 = vdwg.mxu0
          %3137 = vmatpush.bf16.msra.mxu0 %v2429
          %3138 = vmatpush.bf16.msra.mxu0 %v2421
          %3139 = vmatpush.bf16.msra.mxu0 %v2413
          %3140 = vmatpush.bf16.msra.mxu0 %v2405
          %3141 = vmatpush.bf16.msra.mxu0 %v2397
          %3142 = vmatpush.bf16.msra.mxu0 %v2389
          %3143 = vmatpush.bf16.msra.mxu0 %v2381
          %3144 = vmatpush.bf16.msra.mxu0 %v2373
          %3145 = vmatmul.bf16.gmra.mxu0 %v930
          %v3146 = vpop.f32.mrf.mxu0
          %v3147 = vadd.f32 %v3134, %v3146
          %v3148 = vpop.f32.mrf.mxu0
          %3149 = vdwg.mxu0
          %3150 = vmatpush.bf16.msra.mxu0 %v2493
          %3151 = vmatpush.bf16.msra.mxu0 %v2485
          %3152 = vmatpush.bf16.msra.mxu0 %v2477
          %3153 = vmatpush.bf16.msra.mxu0 %v2469
          %3154 = vmatpush.bf16.msra.mxu0 %v2461
          %3155 = vmatpush.bf16.msra.mxu0 %v2453
          %3156 = vmatpush.bf16.msra.mxu0 %v2445
          %3157 = vmatpush.bf16.msra.mxu0 %v2437
          %3158 = vmatmul.bf16.gmra.mxu0 %v931
          %v3159 = vpop.f32.mrf.mxu0
          %v3160 = vadd.f32 %v3147, %v3159
          %v3161 = vpop.f32.mrf.mxu0
          %3162 = vdwg.mxu0
          %3163 = vmatpush.bf16.msra.mxu0 0
          %3164 = vmatpush.bf16.msra.mxu0 0
          %3165 = vmatpush.bf16.msra.mxu0 0
          %3166 = vmatpush.bf16.msra.mxu0 0
          %3167 = vmatpush.bf16.msra.mxu0 0
          %3168 = vmatpush.bf16.msra.mxu0 0
          %3169 = vmatpush.bf16.msra.mxu0 0
          %3170 = vmatpush.bf16.msra.mxu0 %v2501
          %3171 = vmatmul.bf16.gmra.mxu0 %v2901
          %v3172 = vpop.f32.mrf.mxu0
          %v3173 = vadd.f32 %v3160, %v3172
          %v3174 = vpop.f32.mrf.mxu0
          %3175 = vdwg.mxu0
          %3176 = vmatpush.bf16.msra.mxu0 %v2174
          %3177 = vmatpush.bf16.msra.mxu0 %v2166
          %3178 = vmatpush.bf16.msra.mxu0 %v2158
          %3179 = vmatpush.bf16.msra.mxu0 %v2150
          %3180 = vmatpush.bf16.msra.mxu0 %v2142
          %3181 = vmatpush.bf16.msra.mxu0 %v2134
          %3182 = vmatpush.bf16.msra.mxu0 %v2126
          %3183 = vmatpush.bf16.msra.mxu0 %v2118
          %3184 = vmatmul.bf16.gmra.mxu0 %v926
          %v3185 = vpop.f32.mrf.mxu0
          %v3186 = vadd.f32 %v902, %v3185
          %v3187 = vpop.f32.mrf.mxu0
          %3188 = vdwg.mxu0
          %3189 = vmatpush.bf16.msra.mxu0 %v2238
          %3190 = vmatpush.bf16.msra.mxu0 %v2230
          %3191 = vmatpush.bf16.msra.mxu0 %v2222
          %3192 = vmatpush.bf16.msra.mxu0 %v2214
          %3193 = vmatpush.bf16.msra.mxu0 %v2206
          %3194 = vmatpush.bf16.msra.mxu0 %v2198
          %3195 = vmatpush.bf16.msra.mxu0 %v2190
          %3196 = vmatpush.bf16.msra.mxu0 %v2182
          %3197 = vmatmul.bf16.gmra.mxu0 %v927
          %v3198 = vpop.f32.mrf.mxu0
          %v3199 = vadd.f32 %v3186, %v3198
          %v3200 = vpop.f32.mrf.mxu0
          %3201 = vdwg.mxu0
          %3202 = vmatpush.bf16.msra.mxu0 %v2302
          %3203 = vmatpush.bf16.msra.mxu0 %v2294
          %3204 = vmatpush.bf16.msra.mxu0 %v2286
          %3205 = vmatpush.bf16.msra.mxu0 %v2278
          %3206 = vmatpush.bf16.msra.mxu0 %v2270
          %3207 = vmatpush.bf16.msra.mxu0 %v2262
          %3208 = vmatpush.bf16.msra.mxu0 %v2254
          %3209 = vmatpush.bf16.msra.mxu0 %v2246
          %3210 = vmatmul.bf16.gmra.mxu0 %v928
          %v3211 = vpop.f32.mrf.mxu0
          %v3212 = vadd.f32 %v3199, %v3211
          %v3213 = vpop.f32.mrf.mxu0
          %3214 = vdwg.mxu0
          %3215 = vmatpush.bf16.msra.mxu0 %v2366
          %3216 = vmatpush.bf16.msra.mxu0 %v2358
          %3217 = vmatpush.bf16.msra.mxu0 %v2350
          %3218 = vmatpush.bf16.msra.mxu0 %v2342
          %3219 = vmatpush.bf16.msra.mxu0 %v2334
          %3220 = vmatpush.bf16.msra.mxu0 %v2326
          %3221 = vmatpush.bf16.msra.mxu0 %v2318
          %3222 = vmatpush.bf16.msra.mxu0 %v2310
          %3223 = vmatmul.bf16.gmra.mxu0 %v929
          %v3224 = vpop.f32.mrf.mxu0
          %v3225 = vadd.f32 %v3212, %v3224
          %v3226 = vpop.f32.mrf.mxu0
          %3227 = vdwg.mxu0
          %3228 = vmatpush.bf16.msra.mxu0 %v2430
          %3229 = vmatpush.bf16.msra.mxu0 %v2422
          %3230 = vmatpush.bf16.msra.mxu0 %v2414
          %3231 = vmatpush.bf16.msra.mxu0 %v2406
          %3232 = vmatpush.bf16.msra.mxu0 %v2398
          %3233 = vmatpush.bf16.msra.mxu0 %v2390
          %3234 = vmatpush.bf16.msra.mxu0 %v2382
          %3235 = vmatpush.bf16.msra.mxu0 %v2374
          %3236 = vmatmul.bf16.gmra.mxu0 %v930
          %v3237 = vpop.f32.mrf.mxu0
          %v3238 = vadd.f32 %v3225, %v3237
          %v3239 = vpop.f32.mrf.mxu0
          %3240 = vdwg.mxu0
          %3241 = vmatpush.bf16.msra.mxu0 %v2494
          %3242 = vmatpush.bf16.msra.mxu0 %v2486
          %3243 = vmatpush.bf16.msra.mxu0 %v2478
          %3244 = vmatpush.bf16.msra.mxu0 %v2470
          %3245 = vmatpush.bf16.msra.mxu0 %v2462
          %3246 = vmatpush.bf16.msra.mxu0 %v2454
          %3247 = vmatpush.bf16.msra.mxu0 %v2446
          %3248 = vmatpush.bf16.msra.mxu0 %v2438
          %3249 = vmatmul.bf16.gmra.mxu0 %v931
          %v3250 = vpop.f32.mrf.mxu0
          %v3251 = vadd.f32 %v3238, %v3250
          %v3252 = vpop.f32.mrf.mxu0
          %3253 = vdwg.mxu0
          %3254 = vmatpush.bf16.msra.mxu0 0
          %3255 = vmatpush.bf16.msra.mxu0 0
          %3256 = vmatpush.bf16.msra.mxu0 0
          %3257 = vmatpush.bf16.msra.mxu0 0
          %3258 = vmatpush.bf16.msra.mxu0 0
          %3259 = vmatpush.bf16.msra.mxu0 0
          %3260 = vmatpush.bf16.msra.mxu0 0
          %3261 = vmatpush.bf16.msra.mxu0 %v2502
          %3262 = vmatmul.bf16.gmra.mxu0 %v2901
          %v3263 = vpop.f32.mrf.mxu0
          %v3264 = vadd.f32 %v3251, %v3263
          %v3265 = vpop.f32.mrf.mxu0
          %3266 = vdwg.mxu0
          %3267 = vmatpush.bf16.msra.mxu0 %v2175
          %3268 = vmatpush.bf16.msra.mxu0 %v2167
          %3269 = vmatpush.bf16.msra.mxu0 %v2159
          %3270 = vmatpush.bf16.msra.mxu0 %v2151
          %3271 = vmatpush.bf16.msra.mxu0 %v2143
          %3272 = vmatpush.bf16.msra.mxu0 %v2135
          %3273 = vmatpush.bf16.msra.mxu0 %v2127
          %3274 = vmatpush.bf16.msra.mxu0 %v2119
          %3275 = vmatmul.bf16.gmra.mxu0 %v926
          %v3276 = vpop.f32.mrf.mxu0
          %v3277 = vadd.f32 %v903, %v3276
          %v3278 = vpop.f32.mrf.mxu0
          %3279 = vdwg.mxu0
          %3280 = vmatpush.bf16.msra.mxu0 %v2239
          %3281 = vmatpush.bf16.msra.mxu0 %v2231
          %3282 = vmatpush.bf16.msra.mxu0 %v2223
          %3283 = vmatpush.bf16.msra.mxu0 %v2215
          %3284 = vmatpush.bf16.msra.mxu0 %v2207
          %3285 = vmatpush.bf16.msra.mxu0 %v2199
          %3286 = vmatpush.bf16.msra.mxu0 %v2191
          %3287 = vmatpush.bf16.msra.mxu0 %v2183
          %3288 = vmatmul.bf16.gmra.mxu0 %v927
          %v3289 = vpop.f32.mrf.mxu0
          %v3290 = vadd.f32 %v3277, %v3289
          %v3291 = vpop.f32.mrf.mxu0
          %3292 = vdwg.mxu0
          %3293 = vmatpush.bf16.msra.mxu0 %v2303
          %3294 = vmatpush.bf16.msra.mxu0 %v2295
          %3295 = vmatpush.bf16.msra.mxu0 %v2287
          %3296 = vmatpush.bf16.msra.mxu0 %v2279
          %3297 = vmatpush.bf16.msra.mxu0 %v2271
          %3298 = vmatpush.bf16.msra.mxu0 %v2263
          %3299 = vmatpush.bf16.msra.mxu0 %v2255
          %3300 = vmatpush.bf16.msra.mxu0 %v2247
          %3301 = vmatmul.bf16.gmra.mxu0 %v928
          %v3302 = vpop.f32.mrf.mxu0
          %v3303 = vadd.f32 %v3290, %v3302
          %v3304 = vpop.f32.mrf.mxu0
          %3305 = vdwg.mxu0
          %3306 = vmatpush.bf16.msra.mxu0 %v2367
          %3307 = vmatpush.bf16.msra.mxu0 %v2359
          %3308 = vmatpush.bf16.msra.mxu0 %v2351
          %3309 = vmatpush.bf16.msra.mxu0 %v2343
          %3310 = vmatpush.bf16.msra.mxu0 %v2335
          %3311 = vmatpush.bf16.msra.mxu0 %v2327
          %3312 = vmatpush.bf16.msra.mxu0 %v2319
          %3313 = vmatpush.bf16.msra.mxu0 %v2311
          %3314 = vmatmul.bf16.gmra.mxu0 %v929
          %v3315 = vpop.f32.mrf.mxu0
          %v3316 = vadd.f32 %v3303, %v3315
          %v3317 = vpop.f32.mrf.mxu0
          %3318 = vdwg.mxu0
          %3319 = vmatpush.bf16.msra.mxu0 %v2431
          %3320 = vmatpush.bf16.msra.mxu0 %v2423
          %3321 = vmatpush.bf16.msra.mxu0 %v2415
          %3322 = vmatpush.bf16.msra.mxu0 %v2407
          %3323 = vmatpush.bf16.msra.mxu0 %v2399
          %3324 = vmatpush.bf16.msra.mxu0 %v2391
          %3325 = vmatpush.bf16.msra.mxu0 %v2383
          %3326 = vmatpush.bf16.msra.mxu0 %v2375
          %3327 = vmatmul.bf16.gmra.mxu0 %v930
          %v3328 = vpop.f32.mrf.mxu0
          %v3329 = vadd.f32 %v3316, %v3328
          %v3330 = vpop.f32.mrf.mxu0
          %3331 = vdwg.mxu0
          %3332 = vmatpush.bf16.msra.mxu0 %v2495
          %3333 = vmatpush.bf16.msra.mxu0 %v2487
          %3334 = vmatpush.bf16.msra.mxu0 %v2479
          %3335 = vmatpush.bf16.msra.mxu0 %v2471
          %3336 = vmatpush.bf16.msra.mxu0 %v2463
          %3337 = vmatpush.bf16.msra.mxu0 %v2455
          %3338 = vmatpush.bf16.msra.mxu0 %v2447
          %3339 = vmatpush.bf16.msra.mxu0 %v2439
          %3340 = vmatmul.bf16.gmra.mxu0 %v931
          %v3341 = vpop.f32.mrf.mxu0
          %v3342 = vadd.f32 %v3329, %v3341
          %v3343 = vpop.f32.mrf.mxu0
          %3344 = vdwg.mxu0
          %3345 = vmatpush.bf16.msra.mxu0 0
          %3346 = vmatpush.bf16.msra.mxu0 0
          %3347 = vmatpush.bf16.msra.mxu0 0
          %3348 = vmatpush.bf16.msra.mxu0 0
          %3349 = vmatpush.bf16.msra.mxu0 0
          %3350 = vmatpush.bf16.msra.mxu0 0
          %3351 = vmatpush.bf16.msra.mxu0 0
          %3352 = vmatpush.bf16.msra.mxu0 %v2503
          %3353 = vmatmul.bf16.gmra.mxu0 %v2901
          %v3354 = vpop.f32.mrf.mxu0
          %v3355 = vadd.f32 %v3342, %v3354
          %v3356 = vpop.f32.mrf.mxu0
          %3357 = vdwg.mxu0
          %3358 = vmatpush.bf16.msra.mxu0 %v2176
          %3359 = vmatpush.bf16.msra.mxu0 %v2168
          %3360 = vmatpush.bf16.msra.mxu0 %v2160
          %3361 = vmatpush.bf16.msra.mxu0 %v2152
          %3362 = vmatpush.bf16.msra.mxu0 %v2144
          %3363 = vmatpush.bf16.msra.mxu0 %v2136
          %3364 = vmatpush.bf16.msra.mxu0 %v2128
          %3365 = vmatpush.bf16.msra.mxu0 %v2120
          %3366 = vmatmul.bf16.gmra.mxu0 %v926
          %v3367 = vpop.f32.mrf.mxu0
          %v3368 = vadd.f32 %v904, %v3367
          %v3369 = vpop.f32.mrf.mxu0
          %3370 = vdwg.mxu0
          %3371 = vmatpush.bf16.msra.mxu0 %v2240
          %3372 = vmatpush.bf16.msra.mxu0 %v2232
          %3373 = vmatpush.bf16.msra.mxu0 %v2224
          %3374 = vmatpush.bf16.msra.mxu0 %v2216
          %3375 = vmatpush.bf16.msra.mxu0 %v2208
          %3376 = vmatpush.bf16.msra.mxu0 %v2200
          %3377 = vmatpush.bf16.msra.mxu0 %v2192
          %3378 = vmatpush.bf16.msra.mxu0 %v2184
          %3379 = vmatmul.bf16.gmra.mxu0 %v927
          %v3380 = vpop.f32.mrf.mxu0
          %v3381 = vadd.f32 %v3368, %v3380
          %v3382 = vpop.f32.mrf.mxu0
          %3383 = vdwg.mxu0
          %3384 = vmatpush.bf16.msra.mxu0 %v2304
          %3385 = vmatpush.bf16.msra.mxu0 %v2296
          %3386 = vmatpush.bf16.msra.mxu0 %v2288
          %3387 = vmatpush.bf16.msra.mxu0 %v2280
          %3388 = vmatpush.bf16.msra.mxu0 %v2272
          %3389 = vmatpush.bf16.msra.mxu0 %v2264
          %3390 = vmatpush.bf16.msra.mxu0 %v2256
          %3391 = vmatpush.bf16.msra.mxu0 %v2248
          %3392 = vmatmul.bf16.gmra.mxu0 %v928
          %v3393 = vpop.f32.mrf.mxu0
          %v3394 = vadd.f32 %v3381, %v3393
          %v3395 = vpop.f32.mrf.mxu0
          %3396 = vdwg.mxu0
          %3397 = vmatpush.bf16.msra.mxu0 %v2368
          %3398 = vmatpush.bf16.msra.mxu0 %v2360
          %3399 = vmatpush.bf16.msra.mxu0 %v2352
          %3400 = vmatpush.bf16.msra.mxu0 %v2344
          %3401 = vmatpush.bf16.msra.mxu0 %v2336
          %3402 = vmatpush.bf16.msra.mxu0 %v2328
          %3403 = vmatpush.bf16.msra.mxu0 %v2320
          %3404 = vmatpush.bf16.msra.mxu0 %v2312
          %3405 = vmatmul.bf16.gmra.mxu0 %v929
          %v3406 = vpop.f32.mrf.mxu0
          %v3407 = vadd.f32 %v3394, %v3406
          %v3408 = vpop.f32.mrf.mxu0
          %3409 = vdwg.mxu0
          %3410 = vmatpush.bf16.msra.mxu0 %v2432
          %3411 = vmatpush.bf16.msra.mxu0 %v2424
          %3412 = vmatpush.bf16.msra.mxu0 %v2416
          %3413 = vmatpush.bf16.msra.mxu0 %v2408
          %3414 = vmatpush.bf16.msra.mxu0 %v2400
          %3415 = vmatpush.bf16.msra.mxu0 %v2392
          %3416 = vmatpush.bf16.msra.mxu0 %v2384
          %3417 = vmatpush.bf16.msra.mxu0 %v2376
          %3418 = vmatmul.bf16.gmra.mxu0 %v930
          %v3419 = vpop.f32.mrf.mxu0
          %v3420 = vadd.f32 %v3407, %v3419
          %v3421 = vpop.f32.mrf.mxu0
          %3422 = vdwg.mxu0
          %3423 = vmatpush.bf16.msra.mxu0 %v2496
          %3424 = vmatpush.bf16.msra.mxu0 %v2488
          %3425 = vmatpush.bf16.msra.mxu0 %v2480
          %3426 = vmatpush.bf16.msra.mxu0 %v2472
          %3427 = vmatpush.bf16.msra.mxu0 %v2464
          %3428 = vmatpush.bf16.msra.mxu0 %v2456
          %3429 = vmatpush.bf16.msra.mxu0 %v2448
          %3430 = vmatpush.bf16.msra.mxu0 %v2440
          %3431 = vmatmul.bf16.gmra.mxu0 %v931
          %v3432 = vpop.f32.mrf.mxu0
          %v3433 = vadd.f32 %v3420, %v3432
          %v3434 = vpop.f32.mrf.mxu0
          %3435 = vdwg.mxu0
          %3436 = vmatpush.bf16.msra.mxu0 0
          %3437 = vmatpush.bf16.msra.mxu0 0
          %3438 = vmatpush.bf16.msra.mxu0 0
          %3439 = vmatpush.bf16.msra.mxu0 0
          %3440 = vmatpush.bf16.msra.mxu0 0
          %3441 = vmatpush.bf16.msra.mxu0 0
          %3442 = vmatpush.bf16.msra.mxu0 0
          %3443 = vmatpush.bf16.msra.mxu0 %v2504
          %3444 = vmatmul.bf16.gmra.mxu0 %v2901
          %v3445 = vpop.f32.mrf.mxu0
          %v3446 = vadd.f32 %v3433, %v3445
          %v3447 = vpop.f32.mrf.mxu0
          %3448 = vdwg.mxu0
          %3449 = vmatpush.bf16.msra.mxu0 %v2177
          %3450 = vmatpush.bf16.msra.mxu0 %v2169
          %3451 = vmatpush.bf16.msra.mxu0 %v2161
          %3452 = vmatpush.bf16.msra.mxu0 %v2153
          %3453 = vmatpush.bf16.msra.mxu0 %v2145
          %3454 = vmatpush.bf16.msra.mxu0 %v2137
          %3455 = vmatpush.bf16.msra.mxu0 %v2129
          %3456 = vmatpush.bf16.msra.mxu0 %v2121
          %3457 = vmatmul.bf16.gmra.mxu0 %v926
          %v3458 = vpop.f32.mrf.mxu0
          %v3459 = vadd.f32 %v905, %v3458
          %v3460 = vpop.f32.mrf.mxu0
          %3461 = vdwg.mxu0
          %3462 = vmatpush.bf16.msra.mxu0 %v2241
          %3463 = vmatpush.bf16.msra.mxu0 %v2233
          %3464 = vmatpush.bf16.msra.mxu0 %v2225
          %3465 = vmatpush.bf16.msra.mxu0 %v2217
          %3466 = vmatpush.bf16.msra.mxu0 %v2209
          %3467 = vmatpush.bf16.msra.mxu0 %v2201
          %3468 = vmatpush.bf16.msra.mxu0 %v2193
          %3469 = vmatpush.bf16.msra.mxu0 %v2185
          %3470 = vmatmul.bf16.gmra.mxu0 %v927
          %v3471 = vpop.f32.mrf.mxu0
          %v3472 = vadd.f32 %v3459, %v3471
          %v3473 = vpop.f32.mrf.mxu0
          %3474 = vdwg.mxu0
          %3475 = vmatpush.bf16.msra.mxu0 %v2305
          %3476 = vmatpush.bf16.msra.mxu0 %v2297
          %3477 = vmatpush.bf16.msra.mxu0 %v2289
          %3478 = vmatpush.bf16.msra.mxu0 %v2281
          %3479 = vmatpush.bf16.msra.mxu0 %v2273
          %3480 = vmatpush.bf16.msra.mxu0 %v2265
          %3481 = vmatpush.bf16.msra.mxu0 %v2257
          %3482 = vmatpush.bf16.msra.mxu0 %v2249
          %3483 = vmatmul.bf16.gmra.mxu0 %v928
          %v3484 = vpop.f32.mrf.mxu0
          %v3485 = vadd.f32 %v3472, %v3484
          %v3486 = vpop.f32.mrf.mxu0
          %3487 = vdwg.mxu0
          %3488 = vmatpush.bf16.msra.mxu0 %v2369
          %3489 = vmatpush.bf16.msra.mxu0 %v2361
          %3490 = vmatpush.bf16.msra.mxu0 %v2353
          %3491 = vmatpush.bf16.msra.mxu0 %v2345
          %3492 = vmatpush.bf16.msra.mxu0 %v2337
          %3493 = vmatpush.bf16.msra.mxu0 %v2329
          %3494 = vmatpush.bf16.msra.mxu0 %v2321
          %3495 = vmatpush.bf16.msra.mxu0 %v2313
          %3496 = vmatmul.bf16.gmra.mxu0 %v929
          %v3497 = vpop.f32.mrf.mxu0
          %v3498 = vadd.f32 %v3485, %v3497
          %v3499 = vpop.f32.mrf.mxu0
          %3500 = vdwg.mxu0
          %3501 = vmatpush.bf16.msra.mxu0 %v2433
          %3502 = vmatpush.bf16.msra.mxu0 %v2425
          %3503 = vmatpush.bf16.msra.mxu0 %v2417
          %3504 = vmatpush.bf16.msra.mxu0 %v2409
          %3505 = vmatpush.bf16.msra.mxu0 %v2401
          %3506 = vmatpush.bf16.msra.mxu0 %v2393
          %3507 = vmatpush.bf16.msra.mxu0 %v2385
          %3508 = vmatpush.bf16.msra.mxu0 %v2377
          %3509 = vmatmul.bf16.gmra.mxu0 %v930
          %v3510 = vpop.f32.mrf.mxu0
          %v3511 = vadd.f32 %v3498, %v3510
          %v3512 = vpop.f32.mrf.mxu0
          %3513 = vdwg.mxu0
          %3514 = vmatpush.bf16.msra.mxu0 %v2497
          %3515 = vmatpush.bf16.msra.mxu0 %v2489
          %3516 = vmatpush.bf16.msra.mxu0 %v2481
          %3517 = vmatpush.bf16.msra.mxu0 %v2473
          %3518 = vmatpush.bf16.msra.mxu0 %v2465
          %3519 = vmatpush.bf16.msra.mxu0 %v2457
          %3520 = vmatpush.bf16.msra.mxu0 %v2449
          %3521 = vmatpush.bf16.msra.mxu0 %v2441
          %3522 = vmatmul.bf16.gmra.mxu0 %v931
          %v3523 = vpop.f32.mrf.mxu0
          %v3524 = vadd.f32 %v3511, %v3523
          %v3525 = vpop.f32.mrf.mxu0
          %3526 = vdwg.mxu0
          %3527 = vmatpush.bf16.msra.mxu0 0
          %3528 = vmatpush.bf16.msra.mxu0 0
          %3529 = vmatpush.bf16.msra.mxu0 0
          %3530 = vmatpush.bf16.msra.mxu0 0
          %3531 = vmatpush.bf16.msra.mxu0 0
          %3532 = vmatpush.bf16.msra.mxu0 0
          %3533 = vmatpush.bf16.msra.mxu0 0
          %3534 = vmatpush.bf16.msra.mxu0 %v2505
          %3535 = vmatmul.bf16.gmra.mxu0 %v2901
          %v3536 = vpop.f32.mrf.mxu0
          %v3537 = vadd.f32 %v3524, %v3536
          %v3538 = vpop.f32.mrf.mxu0
          %3539 = vdwg.mxu0
          %3540 = vmatpush.bf16.msra.mxu0 %v2178
          %3541 = vmatpush.bf16.msra.mxu0 %v2170
          %3542 = vmatpush.bf16.msra.mxu0 %v2162
          %3543 = vmatpush.bf16.msra.mxu0 %v2154
          %3544 = vmatpush.bf16.msra.mxu0 %v2146
          %3545 = vmatpush.bf16.msra.mxu0 %v2138
          %3546 = vmatpush.bf16.msra.mxu0 %v2130
          %3547 = vmatpush.bf16.msra.mxu0 %v2122
          %3548 = vmatmul.bf16.gmra.mxu0 %v926
          %v3549 = vpop.f32.mrf.mxu0
          %v3550 = vadd.f32 %v906, %v3549
          %v3551 = vpop.f32.mrf.mxu0
          %3552 = vdwg.mxu0
          %3553 = vmatpush.bf16.msra.mxu0 %v2242
          %3554 = vmatpush.bf16.msra.mxu0 %v2234
          %3555 = vmatpush.bf16.msra.mxu0 %v2226
          %3556 = vmatpush.bf16.msra.mxu0 %v2218
          %3557 = vmatpush.bf16.msra.mxu0 %v2210
          %3558 = vmatpush.bf16.msra.mxu0 %v2202
          %3559 = vmatpush.bf16.msra.mxu0 %v2194
          %3560 = vmatpush.bf16.msra.mxu0 %v2186
          %3561 = vmatmul.bf16.gmra.mxu0 %v927
          %v3562 = vpop.f32.mrf.mxu0
          %v3563 = vadd.f32 %v3550, %v3562
          %v3564 = vpop.f32.mrf.mxu0
          %3565 = vdwg.mxu0
          %3566 = vmatpush.bf16.msra.mxu0 %v2306
          %3567 = vmatpush.bf16.msra.mxu0 %v2298
          %3568 = vmatpush.bf16.msra.mxu0 %v2290
          %3569 = vmatpush.bf16.msra.mxu0 %v2282
          %3570 = vmatpush.bf16.msra.mxu0 %v2274
          %3571 = vmatpush.bf16.msra.mxu0 %v2266
          %3572 = vmatpush.bf16.msra.mxu0 %v2258
          %3573 = vmatpush.bf16.msra.mxu0 %v2250
          %3574 = vmatmul.bf16.gmra.mxu0 %v928
          %v3575 = vpop.f32.mrf.mxu0
          %v3576 = vadd.f32 %v3563, %v3575
          %v3577 = vpop.f32.mrf.mxu0
          %3578 = vdwg.mxu0
          %3579 = vmatpush.bf16.msra.mxu0 %v2370
          %3580 = vmatpush.bf16.msra.mxu0 %v2362
          %3581 = vmatpush.bf16.msra.mxu0 %v2354
          %3582 = vmatpush.bf16.msra.mxu0 %v2346
          %3583 = vmatpush.bf16.msra.mxu0 %v2338
          %3584 = vmatpush.bf16.msra.mxu0 %v2330
          %3585 = vmatpush.bf16.msra.mxu0 %v2322
          %3586 = vmatpush.bf16.msra.mxu0 %v2314
          %3587 = vmatmul.bf16.gmra.mxu0 %v929
          %v3588 = vpop.f32.mrf.mxu0
          %v3589 = vadd.f32 %v3576, %v3588
          %v3590 = vpop.f32.mrf.mxu0
          %3591 = vdwg.mxu0
          %3592 = vmatpush.bf16.msra.mxu0 %v2434
          %3593 = vmatpush.bf16.msra.mxu0 %v2426
          %3594 = vmatpush.bf16.msra.mxu0 %v2418
          %3595 = vmatpush.bf16.msra.mxu0 %v2410
          %3596 = vmatpush.bf16.msra.mxu0 %v2402
          %3597 = vmatpush.bf16.msra.mxu0 %v2394
          %3598 = vmatpush.bf16.msra.mxu0 %v2386
          %3599 = vmatpush.bf16.msra.mxu0 %v2378
          %3600 = vmatmul.bf16.gmra.mxu0 %v930
          %v3601 = vpop.f32.mrf.mxu0
          %v3602 = vadd.f32 %v3589, %v3601
          %v3603 = vpop.f32.mrf.mxu0
          %3604 = vdwg.mxu0
          %3605 = vmatpush.bf16.msra.mxu0 %v2498
          %3606 = vmatpush.bf16.msra.mxu0 %v2490
          %3607 = vmatpush.bf16.msra.mxu0 %v2482
          %3608 = vmatpush.bf16.msra.mxu0 %v2474
          %3609 = vmatpush.bf16.msra.mxu0 %v2466
          %3610 = vmatpush.bf16.msra.mxu0 %v2458
          %3611 = vmatpush.bf16.msra.mxu0 %v2450
          %3612 = vmatpush.bf16.msra.mxu0 %v2442
          %3613 = vmatmul.bf16.gmra.mxu0 %v931
          %v3614 = vpop.f32.mrf.mxu0
          %v3615 = vadd.f32 %v3602, %v3614
          %v3616 = vpop.f32.mrf.mxu0
          %3617 = vdwg.mxu0
          %3618 = vmatpush.bf16.msra.mxu0 0
          %3619 = vmatpush.bf16.msra.mxu0 0
          %3620 = vmatpush.bf16.msra.mxu0 0
          %3621 = vmatpush.bf16.msra.mxu0 0
          %3622 = vmatpush.bf16.msra.mxu0 0
          %3623 = vmatpush.bf16.msra.mxu0 0
          %3624 = vmatpush.bf16.msra.mxu0 0
          %3625 = vmatpush.bf16.msra.mxu0 %v2506
          %3626 = vmatmul.bf16.gmra.mxu0 %v2901
          %v3627 = vpop.f32.mrf.mxu0
          %v3628 = vadd.f32 %v3615, %v3627
          %v3629 = vpop.f32.mrf.mxu0
          %3630 = vdwg.mxu0
          %vm3631 = vcmp.gt.f32.partialorder %v2991, 0.0
          %vm3632 = vcmp.gt.f32.partialorder %v3082, 0.0
          %vm3633 = vcmp.gt.f32.partialorder %v3173, 0.0
          %vm3634 = vcmp.gt.f32.partialorder %v3264, 0.0
          %vm3635 = vcmp.gt.f32.partialorder %v3355, 0.0
          %vm3636 = vcmp.gt.f32.partialorder %v3446, 0.0
          %vm3637 = vcmp.gt.f32.partialorder %v3537, 0.0
          %vm3638 = vcmp.gt.f32.partialorder %v3628, 0.0
          %v3639 = vmul.f32 %v2991, 0.2
          %v3640 = vmul.f32 %v3082, 0.2
          %v3641 = vmul.f32 %v3173, 0.2
          %v3642 = vmul.f32 %v3264, 0.2
          %v3643 = vmul.f32 %v3355, 0.2
          %v3644 = vmul.f32 %v3446, 0.2
          %v3645 = vmul.f32 %v3537, 0.2
          %v3646 = vmul.f32 %v3628, 0.2
          %v3647 = vsel %vm3631, %v2991, %v3639
          %v3648 = vsel %vm3632, %v3082, %v3640
          %v3649 = vsel %vm3633, %v3173, %v3641
          %v3650 = vsel %vm3634, %v3264, %v3642
          %v3651 = vsel %vm3635, %v3355, %v3643
          %v3652 = vsel %vm3636, %v3446, %v3644
          %v3653 = vsel %vm3637, %v3537, %v3645
          %v3654 = vsel %vm3638, %v3628, %v3646
          %v3655 = vpack.c.bf16 %v3647, %v3647
          %v3656 = vpack.c.bf16 %v3648, %v3648
          %v3657 = vpack.c.bf16 %v3649, %v3649
          %v3658 = vpack.c.bf16 %v3650, %v3650
          %v3659 = vpack.c.bf16 %v3651, %v3651
          %v3660 = vpack.c.bf16 %v3652, %v3652
          %v3661 = vpack.c.bf16 %v3653, %v3653
          %v3662 = vpack.c.bf16 %v3654, %v3654
          %v3663 = vld [vmem:[#allocation11] sm:$0xff]
          %v3664 = vld [vmem:[#allocation11 + $0x8] sm:$0xff]
          %v3665 = vld [vmem:[#allocation11 + $0x10] sm:$0xff]
          %v3666 = vld [vmem:[#allocation11 + $0x18] sm:$0xff]
          %v3667 = vld [vmem:[#allocation11 + $0x20] sm:$0xff]
          %v3668 = vld [vmem:[#allocation11 + $0x28] sm:$0xff]
          %v3669 = vld [vmem:[#allocation11 + $0x30] sm:$0xff]
          %v3670 = vld [vmem:[#allocation11 + $0x38] sm:$0xff]
          %v3671 = vld [vmem:[#allocation11 + $0x40] sm:$0xff]
          %v3672 = vld [vmem:[#allocation11 + $0x48] sm:$0xff]
          %v3673 = vld [vmem:[#allocation11 + $0x50] sm:$0xff]
          %v3674 = vld [vmem:[#allocation11 + $0x58] sm:$0xff]
          %v3675 = vld [vmem:[#allocation11 + $0x60] sm:$0xff]
          %v3676 = vld [vmem:[#allocation11 + $0x68] sm:$0xff]
          %v3677 = vld [vmem:[#allocation11 + $0x70] sm:$0xff]
          %v3678 = vld [vmem:[#allocation11 + $0x78] sm:$0xff]
          %v3679 = vld [vmem:[#allocation11 + $0x80] sm:$0xff]
          %v3680 = vld [vmem:[#allocation11 + $0x88] sm:$0xff]
          %v3681 = vld [vmem:[#allocation11 + $0x90] sm:$0xff]
          %v3682 = vld [vmem:[#allocation11 + $0x98] sm:$0xff]
          %v3683 = vld [vmem:[#allocation11 + $0xa0] sm:$0xff]
          %v3684 = vld [vmem:[#allocation11 + $0xa8] sm:$0xff]
          %v3685 = vld [vmem:[#allocation11 + $0xb0] sm:$0xff]
          %v3686 = vld [vmem:[#allocation11 + $0xb8] sm:$0xff]
          %v3687 = vld [vmem:[#allocation11 + $0xc0] sm:$0xff]
          %v3688 = vld [vmem:[#allocation11 + $0xc8] sm:$0xff]
          %v3689 = vld [vmem:[#allocation11 + $0xd0] sm:$0xff]
          %v3690 = vld [vmem:[#allocation11 + $0xd8] sm:$0xff]
          %v3691 = vld [vmem:[#allocation11 + $0xe0] sm:$0xff]
          %v3692 = vld [vmem:[#allocation11 + $0xe8] sm:$0xff]
          %v3693 = vld [vmem:[#allocation11 + $0xf0] sm:$0xff]
          %v3694 = vld [vmem:[#allocation11 + $0xf8] sm:$0xff]
          %v3695 = vld [vmem:[#allocation11 + $0x100] sm:$0xff]
          %v3696 = vld [vmem:[#allocation11 + $0x108] sm:$0xff]
          %v3697 = vld [vmem:[#allocation11 + $0x110] sm:$0xff]
          %v3698 = vld [vmem:[#allocation11 + $0x118] sm:$0xff]
          %v3699 = vld [vmem:[#allocation11 + $0x120] sm:$0xff]
          %v3700 = vld [vmem:[#allocation11 + $0x128] sm:$0xff]
          %v3701 = vld [vmem:[#allocation11 + $0x130] sm:$0xff]
          %v3702 = vld [vmem:[#allocation11 + $0x138] sm:$0xff]
          %v3703 = vld [vmem:[#allocation11 + $0x140] sm:$0xff]
          %v3704 = vld [vmem:[#allocation11 + $0x148] sm:$0xff]
          %v3705 = vld [vmem:[#allocation11 + $0x150] sm:$0xff]
          %v3706 = vld [vmem:[#allocation11 + $0x158] sm:$0xff]
          %v3707 = vld [vmem:[#allocation11 + $0x160] sm:$0xff]
          %v3708 = vld [vmem:[#allocation11 + $0x168] sm:$0xff]
          %v3709 = vld [vmem:[#allocation11 + $0x170] sm:$0xff]
          %v3710 = vld [vmem:[#allocation11 + $0x178] sm:$0xff]
          %v3711 = vld [vmem:[#allocation11 + $0x180] sm:$0xff]
          %v3712 = vld [vmem:[#allocation11 + $0x188] sm:$0xff]
          %v3713 = vld [vmem:[#allocation11 + $0x190] sm:$0xff]
          %v3714 = vld [vmem:[#allocation11 + $0x198] sm:$0xff]
          %v3715 = vld [vmem:[#allocation11 + $0x1a0] sm:$0xff]
          %v3716 = vld [vmem:[#allocation11 + $0x1a8] sm:$0xff]
          %v3717 = vld [vmem:[#allocation11 + $0x1b0] sm:$0xff]
          %v3718 = vld [vmem:[#allocation11 + $0x1b8] sm:$0xff]
          %v3719 = vld [vmem:[#allocation11 + $0x1c0] sm:$0xff]
          %v3720 = vld [vmem:[#allocation11 + $0x1c8] sm:$0xff]
          %v3721 = vld [vmem:[#allocation11 + $0x1d0] sm:$0xff]
          %v3722 = vld [vmem:[#allocation11 + $0x1d8] sm:$0xff]
          %v3723 = vld [vmem:[#allocation11 + $0x1e0] sm:$0xff]
          %v3724 = vld [vmem:[#allocation11 + $0x1e8] sm:$0xff]
          %v3725 = vld [vmem:[#allocation11 + $0x1f0] sm:$0xff]
          %v3726 = vld [vmem:[#allocation11 + $0x1f8] sm:$0xff]
          %v3727 = vld [vmem:[#allocation11 + $0x200] sm:$0xff]
          %v3728 = vld [vmem:[#allocation11 + $0x208] sm:$0xff]
          %v3729 = vld [vmem:[#allocation11 + $0x210] sm:$0xff]
          %v3730 = vld [vmem:[#allocation11 + $0x218] sm:$0xff]
          %v3731 = vld [vmem:[#allocation11 + $0x220] sm:$0xff]
          %v3732 = vld [vmem:[#allocation11 + $0x228] sm:$0xff]
          %v3733 = vld [vmem:[#allocation11 + $0x230] sm:$0xff]
          %v3734 = vld [vmem:[#allocation11 + $0x238] sm:$0xff]
          %v3735 = vld [vmem:[#allocation11 + $0x240] sm:$0xff]
          %v3736 = vld [vmem:[#allocation11 + $0x248] sm:$0xff]
          %v3737 = vld [vmem:[#allocation11 + $0x250] sm:$0xff]
          %v3738 = vld [vmem:[#allocation11 + $0x258] sm:$0xff]
          %v3739 = vld [vmem:[#allocation11 + $0x260] sm:$0xff]
          %v3740 = vld [vmem:[#allocation11 + $0x268] sm:$0xff]
          %v3741 = vld [vmem:[#allocation11 + $0x270] sm:$0xff]
          %v3742 = vld [vmem:[#allocation11 + $0x278] sm:$0xff]
          %v3743 = vld [vmem:[#allocation11 + $0x280] sm:$0xff]
          %v3744 = vld [vmem:[#allocation11 + $0x288] sm:$0xff]
          %v3745 = vld [vmem:[#allocation11 + $0x290] sm:$0xff]
          %v3746 = vld [vmem:[#allocation11 + $0x298] sm:$0xff]
          %v3747 = vld [vmem:[#allocation11 + $0x2a0] sm:$0xff]
          %v3748 = vld [vmem:[#allocation11 + $0x2a8] sm:$0xff]
          %v3749 = vld [vmem:[#allocation11 + $0x2b0] sm:$0xff]
          %v3750 = vld [vmem:[#allocation11 + $0x2b8] sm:$0xff]
          %v3751 = vld [vmem:[#allocation11 + $0x2c0] sm:$0xff]
          %v3752 = vld [vmem:[#allocation11 + $0x2c8] sm:$0xff]
          %v3753 = vld [vmem:[#allocation11 + $0x2d0] sm:$0xff]
          %v3754 = vld [vmem:[#allocation11 + $0x2d8] sm:$0xff]
          %v3755 = vld [vmem:[#allocation11 + $0x2e0] sm:$0xff]
          %v3756 = vld [vmem:[#allocation11 + $0x2e8] sm:$0xff]
          %v3757 = vld [vmem:[#allocation11 + $0x2f0] sm:$0xff]
          %v3758 = vld [vmem:[#allocation11 + $0x2f8] sm:$0xff]
          %v3759 = vld [vmem:[#allocation11 + $0x300] sm:$0xff]
          %v3760 = vld [vmem:[#allocation11 + $0x308] sm:$0xff]
          %v3761 = vld [vmem:[#allocation11 + $0x310] sm:$0xff]
          %v3762 = vld [vmem:[#allocation11 + $0x318] sm:$0xff]
          %v3763 = vld [vmem:[#allocation11 + $0x320] sm:$0xff]
          %v3764 = vld [vmem:[#allocation11 + $0x328] sm:$0xff]
          %v3765 = vld [vmem:[#allocation11 + $0x330] sm:$0xff]
          %v3766 = vld [vmem:[#allocation11 + $0x338] sm:$0xff]
          %v3767 = vld [vmem:[#allocation11 + $0x340] sm:$0xff]
          %v3768 = vld [vmem:[#allocation11 + $0x348] sm:$0xff]
          %v3769 = vld [vmem:[#allocation11 + $0x350] sm:$0xff]
          %v3770 = vld [vmem:[#allocation11 + $0x358] sm:$0xff]
          %v3771 = vld [vmem:[#allocation11 + $0x360] sm:$0xff]
          %v3772 = vld [vmem:[#allocation11 + $0x368] sm:$0xff]
          %v3773 = vld [vmem:[#allocation11 + $0x370] sm:$0xff]
          %v3774 = vld [vmem:[#allocation11 + $0x378] sm:$0xff]
          %v3775 = vld [vmem:[#allocation11 + $0x380] sm:$0xff]
          %v3776 = vld [vmem:[#allocation11 + $0x388] sm:$0xff]
          %v3777 = vld [vmem:[#allocation11 + $0x390] sm:$0xff]
          %v3778 = vld [vmem:[#allocation11 + $0x398] sm:$0xff]
          %v3779 = vld [vmem:[#allocation11 + $0x3a0] sm:$0xff]
          %v3780 = vld [vmem:[#allocation11 + $0x3a8] sm:$0xff]
          %v3781 = vld [vmem:[#allocation11 + $0x3b0] sm:$0xff]
          %v3782 = vld [vmem:[#allocation11 + $0x3b8] sm:$0xff]
          %v3783 = vld [vmem:[#allocation11 + $0x3c0] sm:$0xff]
          %v3784 = vld [vmem:[#allocation11 + $0x3c8] sm:$0xff]
          %v3785 = vld [vmem:[#allocation11 + $0x3d0] sm:$0xff]
          %v3786 = vld [vmem:[#allocation11 + $0x3d8] sm:$0xff]
          %v3787 = vld [vmem:[#allocation11 + $0x3e0] sm:$0xff]
          %v3788 = vld [vmem:[#allocation11 + $0x3e8] sm:$0xff]
          %v3789 = vld [vmem:[#allocation11 + $0x3f0] sm:$0xff]
          %v3790 = vld [vmem:[#allocation11 + $0x3f8] sm:$0xff]
          %v3791 = vld [vmem:[#allocation11 + $0x400] sm:$0xff]
          %v3792 = vld [vmem:[#allocation11 + $0x408] sm:$0xff]
          %v3793 = vld [vmem:[#allocation11 + $0x410] sm:$0xff]
          %v3794 = vld [vmem:[#allocation11 + $0x418] sm:$0xff]
          %v3795 = vld [vmem:[#allocation11 + $0x420] sm:$0xff]
          %v3796 = vld [vmem:[#allocation11 + $0x428] sm:$0xff]
          %v3797 = vld [vmem:[#allocation11 + $0x430] sm:$0xff]
          %v3798 = vld [vmem:[#allocation11 + $0x438] sm:$0xff]
          %v3799 = vld [vmem:[#allocation11 + $0x440] sm:$0xff]
          %v3800 = vld [vmem:[#allocation11 + $0x448] sm:$0xff]
          %v3801 = vld [vmem:[#allocation11 + $0x450] sm:$0xff]
          %v3802 = vld [vmem:[#allocation11 + $0x458] sm:$0xff]
          %v3803 = vld [vmem:[#allocation11 + $0x460] sm:$0xff]
          %v3804 = vld [vmem:[#allocation11 + $0x468] sm:$0xff]
          %v3805 = vld [vmem:[#allocation11 + $0x470] sm:$0xff]
          %v3806 = vld [vmem:[#allocation11 + $0x478] sm:$0xff]
          %v3807 = vld [vmem:[#allocation11 + $0x480] sm:$0xff]
          %v3808 = vld [vmem:[#allocation11 + $0x488] sm:$0xff]
          %v3809 = vld [vmem:[#allocation11 + $0x490] sm:$0xff]
          %v3810 = vld [vmem:[#allocation11 + $0x498] sm:$0xff]
          %v3811 = vld [vmem:[#allocation11 + $0x4a0] sm:$0xff]
          %v3812 = vld [vmem:[#allocation11 + $0x4a8] sm:$0xff]
          %v3813 = vld [vmem:[#allocation11 + $0x4b0] sm:$0xff]
          %v3814 = vld [vmem:[#allocation11 + $0x4b8] sm:$0xff]
          %v3815 = vld [vmem:[#allocation11 + $0x4c0] sm:$0xff]
          %v3816 = vld [vmem:[#allocation11 + $0x4c8] sm:$0xff]
          %v3817 = vld [vmem:[#allocation11 + $0x4d0] sm:$0xff]
          %v3818 = vld [vmem:[#allocation11 + $0x4d8] sm:$0xff]
          %v3819 = vld [vmem:[#allocation11 + $0x4e0] sm:$0xff]
          %v3820 = vld [vmem:[#allocation11 + $0x4e8] sm:$0xff]
          %v3821 = vld [vmem:[#allocation11 + $0x4f0] sm:$0xff]
          %v3822 = vld [vmem:[#allocation11 + $0x4f8] sm:$0xff]
          %v3823 = vld [vmem:[#allocation11 + $0x500] sm:$0xff]
          %v3824 = vld [vmem:[#allocation11 + $0x508] sm:$0xff]
          %v3825 = vld [vmem:[#allocation11 + $0x510] sm:$0xff]
          %v3826 = vld [vmem:[#allocation11 + $0x518] sm:$0xff]
          %v3827 = vld [vmem:[#allocation11 + $0x520] sm:$0xff]
          %v3828 = vld [vmem:[#allocation11 + $0x528] sm:$0xff]
          %v3829 = vld [vmem:[#allocation11 + $0x530] sm:$0xff]
          %v3830 = vld [vmem:[#allocation11 + $0x538] sm:$0xff]
          %v3831 = vld [vmem:[#allocation11 + $0x540] sm:$0xff]
          %v3832 = vld [vmem:[#allocation11 + $0x548] sm:$0xff]
          %v3833 = vld [vmem:[#allocation11 + $0x550] sm:$0xff]
          %v3834 = vld [vmem:[#allocation11 + $0x558] sm:$0xff]
          %v3835 = vld [vmem:[#allocation11 + $0x560] sm:$0xff]
          %v3836 = vld [vmem:[#allocation11 + $0x568] sm:$0xff]
          %v3837 = vld [vmem:[#allocation11 + $0x570] sm:$0xff]
          %v3838 = vld [vmem:[#allocation11 + $0x578] sm:$0xff]
          %v3839 = vld [vmem:[#allocation11 + $0x580] sm:$0xff]
          %v3840 = vld [vmem:[#allocation11 + $0x588] sm:$0xff]
          %v3841 = vld [vmem:[#allocation11 + $0x590] sm:$0xff]
          %v3842 = vld [vmem:[#allocation11 + $0x598] sm:$0xff]
          %v3843 = vld [vmem:[#allocation11 + $0x5a0] sm:$0xff]
          %v3844 = vld [vmem:[#allocation11 + $0x5a8] sm:$0xff]
          %v3845 = vld [vmem:[#allocation11 + $0x5b0] sm:$0xff]
          %v3846 = vld [vmem:[#allocation11 + $0x5b8] sm:$0xff]
          %v3847 = vld [vmem:[#allocation11 + $0x5c0] sm:$0xff]
          %v3848 = vld [vmem:[#allocation11 + $0x5c8] sm:$0xff]
          %v3849 = vld [vmem:[#allocation11 + $0x5d0] sm:$0xff]
          %v3850 = vld [vmem:[#allocation11 + $0x5d8] sm:$0xff]
          %v3851 = vld [vmem:[#allocation11 + $0x5e0] sm:$0xff]
          %v3852 = vld [vmem:[#allocation11 + $0x5e8] sm:$0xff]
          %v3853 = vld [vmem:[#allocation11 + $0x5f0] sm:$0xff]
          %v3854 = vld [vmem:[#allocation11 + $0x5f8] sm:$0xff]
          %v3855 = vld [vmem:[#allocation11 + $0x600] sm:$0xff]
          %v3856 = vld [vmem:[#allocation11 + $0x608] sm:$0xff]
          %v3857 = vld [vmem:[#allocation11 + $0x610] sm:$0xff]
          %v3858 = vld [vmem:[#allocation11 + $0x618] sm:$0xff]
          %v3859 = vld [vmem:[#allocation11 + $0x620] sm:$0xff]
          %v3860 = vld [vmem:[#allocation11 + $0x628] sm:$0xff]
          %v3861 = vld [vmem:[#allocation11 + $0x630] sm:$0xff]
          %v3862 = vld [vmem:[#allocation11 + $0x638] sm:$0xff]
          %v3863 = vld [vmem:[#allocation11 + $0x640] sm:$0xff]
          %v3864 = vld [vmem:[#allocation11 + $0x648] sm:$0xff]
          %v3865 = vld [vmem:[#allocation11 + $0x650] sm:$0xff]
          %v3866 = vld [vmem:[#allocation11 + $0x658] sm:$0xff]
          %v3867 = vld [vmem:[#allocation11 + $0x660] sm:$0xff]
          %v3868 = vld [vmem:[#allocation11 + $0x668] sm:$0xff]
          %v3869 = vld [vmem:[#allocation11 + $0x670] sm:$0xff]
          %v3870 = vld [vmem:[#allocation11 + $0x678] sm:$0xff]
          %v3871 = vld [vmem:[#allocation11 + $0x680] sm:$0xff]
          %v3872 = vld [vmem:[#allocation11 + $0x688] sm:$0xff]
          %v3873 = vld [vmem:[#allocation11 + $0x690] sm:$0xff]
          %v3874 = vld [vmem:[#allocation11 + $0x698] sm:$0xff]
          %v3875 = vld [vmem:[#allocation11 + $0x6a0] sm:$0xff]
          %v3876 = vld [vmem:[#allocation11 + $0x6a8] sm:$0xff]
          %v3877 = vld [vmem:[#allocation11 + $0x6b0] sm:$0xff]
          %v3878 = vld [vmem:[#allocation11 + $0x6b8] sm:$0xff]
          %v3879 = vld [vmem:[#allocation11 + $0x6c0] sm:$0xff]
          %v3880 = vld [vmem:[#allocation11 + $0x6c8] sm:$0xff]
          %v3881 = vld [vmem:[#allocation11 + $0x6d0] sm:$0xff]
          %v3882 = vld [vmem:[#allocation11 + $0x6d8] sm:$0xff]
          %v3883 = vld [vmem:[#allocation11 + $0x6e0] sm:$0xff]
          %v3884 = vld [vmem:[#allocation11 + $0x6e8] sm:$0xff]
          %v3885 = vld [vmem:[#allocation11 + $0x6f0] sm:$0xff]
          %v3886 = vld [vmem:[#allocation11 + $0x6f8] sm:$0xff]
          %v3887 = vld [vmem:[#allocation11 + $0x700] sm:$0xff]
          %v3888 = vld [vmem:[#allocation11 + $0x708] sm:$0xff]
          %v3889 = vld [vmem:[#allocation11 + $0x710] sm:$0xff]
          %v3890 = vld [vmem:[#allocation11 + $0x718] sm:$0xff]
          %v3891 = vld [vmem:[#allocation11 + $0x720] sm:$0xff]
          %v3892 = vld [vmem:[#allocation11 + $0x728] sm:$0xff]
          %v3893 = vld [vmem:[#allocation11 + $0x730] sm:$0xff]
          %v3894 = vld [vmem:[#allocation11 + $0x738] sm:$0xff]
          %v3895 = vld [vmem:[#allocation11 + $0x740] sm:$0xff]
          %v3896 = vld [vmem:[#allocation11 + $0x748] sm:$0xff]
          %v3897 = vld [vmem:[#allocation11 + $0x750] sm:$0xff]
          %v3898 = vld [vmem:[#allocation11 + $0x758] sm:$0xff]
          %v3899 = vld [vmem:[#allocation11 + $0x760] sm:$0xff]
          %v3900 = vld [vmem:[#allocation11 + $0x768] sm:$0xff]
          %v3901 = vld [vmem:[#allocation11 + $0x770] sm:$0xff]
          %v3902 = vld [vmem:[#allocation11 + $0x778] sm:$0xff]
          %v3903 = vld [vmem:[#allocation11 + $0x780] sm:$0xff]
          %v3904 = vld [vmem:[#allocation11 + $0x788] sm:$0xff]
          %v3905 = vld [vmem:[#allocation11 + $0x790] sm:$0xff]
          %v3906 = vld [vmem:[#allocation11 + $0x798] sm:$0xff]
          %v3907 = vld [vmem:[#allocation11 + $0x7a0] sm:$0xff]
          %v3908 = vld [vmem:[#allocation11 + $0x7a8] sm:$0xff]
          %v3909 = vld [vmem:[#allocation11 + $0x7b0] sm:$0xff]
          %v3910 = vld [vmem:[#allocation11 + $0x7b8] sm:$0xff]
          %v3911 = vld [vmem:[#allocation11 + $0x7c0] sm:$0xff]
          %v3912 = vld [vmem:[#allocation11 + $0x7c8] sm:$0xff]
          %v3913 = vld [vmem:[#allocation11 + $0x7d0] sm:$0xff]
          %v3914 = vld [vmem:[#allocation11 + $0x7d8] sm:$0xff]
          %v3915 = vld [vmem:[#allocation11 + $0x7e0] sm:$0xff]
          %v3916 = vld [vmem:[#allocation11 + $0x7e8] sm:$0xff]
          %v3917 = vld [vmem:[#allocation11 + $0x7f0] sm:$0xff]
          %v3918 = vld [vmem:[#allocation11 + $0x7f8] sm:$0xff]
          %v3919 = vld [vmem:[#allocation11 + $0x800] sm:$0xff]
          %v3920 = vld [vmem:[#allocation11 + $0x808] sm:$0xff]
          %v3921 = vld [vmem:[#allocation11 + $0x810] sm:$0xff]
          %v3922 = vld [vmem:[#allocation11 + $0x818] sm:$0xff]
          %v3923 = vld [vmem:[#allocation11 + $0x820] sm:$0xff]
          %v3924 = vld [vmem:[#allocation11 + $0x828] sm:$0xff]
          %v3925 = vld [vmem:[#allocation11 + $0x830] sm:$0xff]
          %v3926 = vld [vmem:[#allocation11 + $0x838] sm:$0xff]
          %v3927 = vld [vmem:[#allocation11 + $0x840] sm:$0xff]
          %v3928 = vld [vmem:[#allocation11 + $0x848] sm:$0xff]
          %v3929 = vld [vmem:[#allocation11 + $0x850] sm:$0xff]
          %v3930 = vld [vmem:[#allocation11 + $0x858] sm:$0xff]
          %v3931 = vld [vmem:[#allocation11 + $0x860] sm:$0xff]
          %v3932 = vld [vmem:[#allocation11 + $0x868] sm:$0xff]
          %v3933 = vld [vmem:[#allocation11 + $0x870] sm:$0xff]
          %v3934 = vld [vmem:[#allocation11 + $0x878] sm:$0xff]
          %v3935 = vld [vmem:[#allocation11 + $0x880] sm:$0xff]
          %v3936 = vld [vmem:[#allocation11 + $0x888] sm:$0xff]
          %v3937 = vld [vmem:[#allocation11 + $0x890] sm:$0xff]
          %v3938 = vld [vmem:[#allocation11 + $0x898] sm:$0xff]
          %v3939 = vld [vmem:[#allocation11 + $0x8a0] sm:$0xff]
          %v3940 = vld [vmem:[#allocation11 + $0x8a8] sm:$0xff]
          %v3941 = vld [vmem:[#allocation11 + $0x8b0] sm:$0xff]
          %v3942 = vld [vmem:[#allocation11 + $0x8b8] sm:$0xff]
          %v3943 = vld [vmem:[#allocation11 + $0x8c0] sm:$0xff]
          %v3944 = vld [vmem:[#allocation11 + $0x8c8] sm:$0xff]
          %v3945 = vld [vmem:[#allocation11 + $0x8d0] sm:$0xff]
          %v3946 = vld [vmem:[#allocation11 + $0x8d8] sm:$0xff]
          %v3947 = vld [vmem:[#allocation11 + $0x8e0] sm:$0xff]
          %v3948 = vld [vmem:[#allocation11 + $0x8e8] sm:$0xff]
          %v3949 = vld [vmem:[#allocation11 + $0x8f0] sm:$0xff]
          %v3950 = vld [vmem:[#allocation11 + $0x8f8] sm:$0xff]
          %v3951 = vld [vmem:[#allocation11 + $0x900] sm:$0xff]
          %v3952 = vld [vmem:[#allocation11 + $0x908] sm:$0xff]
          %v3953 = vld [vmem:[#allocation11 + $0x910] sm:$0xff]
          %v3954 = vld [vmem:[#allocation11 + $0x918] sm:$0xff]
          %v3955 = vld [vmem:[#allocation11 + $0x920] sm:$0xff]
          %v3956 = vld [vmem:[#allocation11 + $0x928] sm:$0xff]
          %v3957 = vld [vmem:[#allocation11 + $0x930] sm:$0xff]
          %v3958 = vld [vmem:[#allocation11 + $0x938] sm:$0xff]
          %v3959 = vld [vmem:[#allocation11 + $0x940] sm:$0xff]
          %v3960 = vld [vmem:[#allocation11 + $0x948] sm:$0xff]
          %v3961 = vld [vmem:[#allocation11 + $0x950] sm:$0xff]
          %v3962 = vld [vmem:[#allocation11 + $0x958] sm:$0xff]
          %v3963 = vld [vmem:[#allocation11 + $0x960] sm:$0xff]
          %v3964 = vld [vmem:[#allocation11 + $0x968] sm:$0xff]
          %v3965 = vld [vmem:[#allocation11 + $0x970] sm:$0xff]
          %v3966 = vld [vmem:[#allocation11 + $0x978] sm:$0xff]
          %v3967 = vld [vmem:[#allocation11 + $0x980] sm:$0xff]
          %v3968 = vld [vmem:[#allocation11 + $0x988] sm:$0xff]
          %v3969 = vld [vmem:[#allocation11 + $0x990] sm:$0xff]
          %v3970 = vld [vmem:[#allocation11 + $0x998] sm:$0xff]
          %v3971 = vld [vmem:[#allocation11 + $0x9a0] sm:$0xff]
          %v3972 = vld [vmem:[#allocation11 + $0x9a8] sm:$0xff]
          %v3973 = vld [vmem:[#allocation11 + $0x9b0] sm:$0xff]
          %v3974 = vld [vmem:[#allocation11 + $0x9b8] sm:$0xff]
          %v3975 = vld [vmem:[#allocation11 + $0x9c0] sm:$0xff]
          %v3976 = vld [vmem:[#allocation11 + $0x9c8] sm:$0xff]
          %v3977 = vld [vmem:[#allocation11 + $0x9d0] sm:$0xff]
          %v3978 = vld [vmem:[#allocation11 + $0x9d8] sm:$0xff]
          %v3979 = vld [vmem:[#allocation11 + $0x9e0] sm:$0xff]
          %v3980 = vld [vmem:[#allocation11 + $0x9e8] sm:$0xff]
          %v3981 = vld [vmem:[#allocation11 + $0x9f0] sm:$0xff]
          %v3982 = vld [vmem:[#allocation11 + $0x9f8] sm:$0xff]
          %v3983 = vld [vmem:[#allocation11 + $0xa00] sm:$0xff]
          %v3984 = vld [vmem:[#allocation11 + $0xa08] sm:$0xff]
          %v3985 = vld [vmem:[#allocation11 + $0xa10] sm:$0xff]
          %v3986 = vld [vmem:[#allocation11 + $0xa18] sm:$0xff]
          %v3987 = vld [vmem:[#allocation11 + $0xa20] sm:$0xff]
          %v3988 = vld [vmem:[#allocation11 + $0xa28] sm:$0xff]
          %v3989 = vld [vmem:[#allocation11 + $0xa30] sm:$0xff]
          %v3990 = vld [vmem:[#allocation11 + $0xa38] sm:$0xff]
          %v3991 = vld [vmem:[#allocation11 + $0xa40] sm:$0xff]
          %v3992 = vld [vmem:[#allocation11 + $0xa48] sm:$0xff]
          %v3993 = vld [vmem:[#allocation11 + $0xa50] sm:$0xff]
          %v3994 = vld [vmem:[#allocation11 + $0xa58] sm:$0xff]
          %v3995 = vld [vmem:[#allocation11 + $0xa60] sm:$0xff]
          %v3996 = vld [vmem:[#allocation11 + $0xa68] sm:$0xff]
          %v3997 = vld [vmem:[#allocation11 + $0xa70] sm:$0xff]
          %v3998 = vld [vmem:[#allocation11 + $0xa78] sm:$0xff]
          %v3999 = vld [vmem:[#allocation11 + $0xa80] sm:$0xff]
          %v4000 = vld [vmem:[#allocation11 + $0xa88] sm:$0xff]
          %v4001 = vld [vmem:[#allocation11 + $0xa90] sm:$0xff]
          %v4002 = vld [vmem:[#allocation11 + $0xa98] sm:$0xff]
          %v4003 = vld [vmem:[#allocation11 + $0xaa0] sm:$0xff]
          %v4004 = vld [vmem:[#allocation11 + $0xaa8] sm:$0xff]
          %v4005 = vld [vmem:[#allocation11 + $0xab0] sm:$0xff]
          %v4006 = vld [vmem:[#allocation11 + $0xab8] sm:$0xff]
          %v4007 = vld [vmem:[#allocation11 + $0xac0] sm:$0xff]
          %v4008 = vld [vmem:[#allocation11 + $0xac8] sm:$0xff]
          %v4009 = vld [vmem:[#allocation11 + $0xad0] sm:$0xff]
          %v4010 = vld [vmem:[#allocation11 + $0xad8] sm:$0xff]
          %v4011 = vld [vmem:[#allocation11 + $0xae0] sm:$0xff]
          %v4012 = vld [vmem:[#allocation11 + $0xae8] sm:$0xff]
          %v4013 = vld [vmem:[#allocation11 + $0xaf0] sm:$0xff]
          %v4014 = vld [vmem:[#allocation11 + $0xaf8] sm:$0xff]
          %v4015 = vld [vmem:[#allocation11 + $0xb00] sm:$0xff]
          %v4016 = vld [vmem:[#allocation11 + $0xb08] sm:$0xff]
          %v4017 = vld [vmem:[#allocation11 + $0xb10] sm:$0xff]
          %v4018 = vld [vmem:[#allocation11 + $0xb18] sm:$0xff]
          %v4019 = vld [vmem:[#allocation11 + $0xb20] sm:$0xff]
          %v4020 = vld [vmem:[#allocation11 + $0xb28] sm:$0xff]
          %v4021 = vld [vmem:[#allocation11 + $0xb30] sm:$0xff]
          %v4022 = vld [vmem:[#allocation11 + $0xb38] sm:$0xff]
          %v4023 = vld [vmem:[#allocation11 + $0xb40] sm:$0xff]
          %v4024 = vld [vmem:[#allocation11 + $0xb48] sm:$0xff]
          %v4025 = vld [vmem:[#allocation11 + $0xb50] sm:$0xff]
          %v4026 = vld [vmem:[#allocation11 + $0xb58] sm:$0xff]
          %v4027 = vld [vmem:[#allocation11 + $0xb60] sm:$0xff]
          %v4028 = vld [vmem:[#allocation11 + $0xb68] sm:$0xff]
          %v4029 = vld [vmem:[#allocation11 + $0xb70] sm:$0xff]
          %v4030 = vld [vmem:[#allocation11 + $0xb78] sm:$0xff]
          %v4031 = vld [vmem:[#allocation11 + $0xb80] sm:$0xff]
          %v4032 = vld [vmem:[#allocation11 + $0xb88] sm:$0xff]
          %v4033 = vld [vmem:[#allocation11 + $0xb90] sm:$0xff]
          %v4034 = vld [vmem:[#allocation11 + $0xb98] sm:$0xff]
          %v4035 = vld [vmem:[#allocation11 + $0xba0] sm:$0xff]
          %v4036 = vld [vmem:[#allocation11 + $0xba8] sm:$0xff]
          %v4037 = vld [vmem:[#allocation11 + $0xbb0] sm:$0xff]
          %v4038 = vld [vmem:[#allocation11 + $0xbb8] sm:$0xff]
          %v4039 = vld [vmem:[#allocation11 + $0xbc0] sm:$0xff]
          %v4040 = vld [vmem:[#allocation11 + $0xbc8] sm:$0xff]
          %v4041 = vld [vmem:[#allocation11 + $0xbd0] sm:$0xff]
          %v4042 = vld [vmem:[#allocation11 + $0xbd8] sm:$0xff]
          %v4043 = vld [vmem:[#allocation11 + $0xbe0] sm:$0xff]
          %v4044 = vld [vmem:[#allocation11 + $0xbe8] sm:$0xff]
          %v4045 = vld [vmem:[#allocation11 + $0xbf0] sm:$0xff]
          %v4046 = vld [vmem:[#allocation11 + $0xbf8] sm:$0xff]
          %v4047 = vld [vmem:[#allocation11 + $0xc00] sm:$0xff]
          %v4048 = vld [vmem:[#allocation11 + $0xc08] sm:$0xff]
          %v4049 = vld [vmem:[#allocation11 + $0xc10] sm:$0xff]
          %v4050 = vld [vmem:[#allocation11 + $0xc18] sm:$0xff]
          %v4051 = vld [vmem:[#allocation11 + $0xc20] sm:$0xff]
          %v4052 = vld [vmem:[#allocation11 + $0xc28] sm:$0xff]
          %v4053 = vld [vmem:[#allocation11 + $0xc30] sm:$0xff]
          %v4054 = vld [vmem:[#allocation11 + $0xc38] sm:$0xff]
          %v4055 = vld [vmem:[#allocation11 + $0xc40] sm:$0xff]
          %v4056 = vld [vmem:[#allocation11 + $0xc48] sm:$0xff]
          %v4057 = vld [vmem:[#allocation11 + $0xc50] sm:$0xff]
          %v4058 = vld [vmem:[#allocation11 + $0xc58] sm:$0xff]
          %v4059 = vld [vmem:[#allocation11 + $0xc60] sm:$0xff]
          %v4060 = vld [vmem:[#allocation11 + $0xc68] sm:$0xff]
          %v4061 = vld [vmem:[#allocation11 + $0xc70] sm:$0xff]
          %v4062 = vld [vmem:[#allocation11 + $0xc78] sm:$0xff]
          %v4063 = vld [vmem:[#allocation11 + $0xc80] sm:$0xff]
          %v4064 = vld [vmem:[#allocation11 + $0xc88] sm:$0xff]
          %v4065 = vld [vmem:[#allocation11 + $0xc90] sm:$0xff]
          %v4066 = vld [vmem:[#allocation11 + $0xc98] sm:$0xff]
          %v4067 = vld [vmem:[#allocation11 + $0xca0] sm:$0xff]
          %v4068 = vld [vmem:[#allocation11 + $0xca8] sm:$0xff]
          %v4069 = vld [vmem:[#allocation11 + $0xcb0] sm:$0xff]
          %v4070 = vld [vmem:[#allocation11 + $0xcb8] sm:$0xff]
          %v4071 = vld [vmem:[#allocation11 + $0xcc0] sm:$0xff]
          %v4072 = vld [vmem:[#allocation11 + $0xcc8] sm:$0xff]
          %v4073 = vld [vmem:[#allocation11 + $0xcd0] sm:$0xff]
          %v4074 = vld [vmem:[#allocation11 + $0xcd8] sm:$0xff]
          %v4075 = vld [vmem:[#allocation11 + $0xce0] sm:$0xff]
          %v4076 = vld [vmem:[#allocation11 + $0xce8] sm:$0xff]
          %v4077 = vld [vmem:[#allocation11 + $0xcf0] sm:$0xff]
          %v4078 = vld [vmem:[#allocation11 + $0xcf8] sm:$0xff]
          %v4079 = vld [vmem:[#allocation11 + $0xd00] sm:$0xff]
          %v4080 = vld [vmem:[#allocation11 + $0xd08] sm:$0xff]
          %v4081 = vld [vmem:[#allocation11 + $0xd10] sm:$0xff]
          %v4082 = vld [vmem:[#allocation11 + $0xd18] sm:$0xff]
          %v4083 = vld [vmem:[#allocation11 + $0xd20] sm:$0xff]
          %v4084 = vld [vmem:[#allocation11 + $0xd28] sm:$0xff]
          %v4085 = vld [vmem:[#allocation11 + $0xd30] sm:$0xff]
          %v4086 = vld [vmem:[#allocation11 + $0xd38] sm:$0xff]
          %v4087 = vld [vmem:[#allocation11 + $0xd40] sm:$0xff]
          %v4088 = vld [vmem:[#allocation11 + $0xd48] sm:$0xff]
          %v4089 = vld [vmem:[#allocation11 + $0xd50] sm:$0xff]
          %v4090 = vld [vmem:[#allocation11 + $0xd58] sm:$0xff]
          %v4091 = vld [vmem:[#allocation11 + $0xd60] sm:$0xff]
          %v4092 = vld [vmem:[#allocation11 + $0xd68] sm:$0xff]
          %v4093 = vld [vmem:[#allocation11 + $0xd70] sm:$0xff]
          %v4094 = vld [vmem:[#allocation11 + $0xd78] sm:$0xff]
          %v4095 = vld [vmem:[#allocation11 + $0xd80] sm:$0xff]
          %v4096 = vld [vmem:[#allocation11 + $0xd88] sm:$0xff]
          %v4097 = vld [vmem:[#allocation11 + $0xd90] sm:$0xff]
          %v4098 = vld [vmem:[#allocation11 + $0xd98] sm:$0xff]
          %v4099 = vld [vmem:[#allocation11 + $0xda0] sm:$0xff]
          %v4100 = vld [vmem:[#allocation11 + $0xda8] sm:$0xff]
          %v4101 = vld [vmem:[#allocation11 + $0xdb0] sm:$0xff]
          %v4102 = vld [vmem:[#allocation11 + $0xdb8] sm:$0xff]
          %v4103 = vld [vmem:[#allocation11 + $0xdc0] sm:$0xff]
          %v4104 = vld [vmem:[#allocation11 + $0xdc8] sm:$0xff]
          %v4105 = vld [vmem:[#allocation11 + $0xdd0] sm:$0xff]
          %v4106 = vld [vmem:[#allocation11 + $0xdd8] sm:$0xff]
          %v4107 = vld [vmem:[#allocation11 + $0xde0] sm:$0xff]
          %v4108 = vld [vmem:[#allocation11 + $0xde8] sm:$0xff]
          %v4109 = vld [vmem:[#allocation11 + $0xdf0] sm:$0xff]
          %v4110 = vld [vmem:[#allocation11 + $0xdf8] sm:$0xff]
          %v4111 = vld [vmem:[#allocation11 + $0xe00] sm:$0xff]
          %v4112 = vld [vmem:[#allocation11 + $0xe08] sm:$0xff]
          %v4113 = vld [vmem:[#allocation11 + $0xe10] sm:$0xff]
          %v4114 = vld [vmem:[#allocation11 + $0xe18] sm:$0xff]
          %v4115 = vld [vmem:[#allocation11 + $0xe20] sm:$0xff]
          %v4116 = vld [vmem:[#allocation11 + $0xe28] sm:$0xff]
          %v4117 = vld [vmem:[#allocation11 + $0xe30] sm:$0xff]
          %v4118 = vld [vmem:[#allocation11 + $0xe38] sm:$0xff]
          %v4119 = vld [vmem:[#allocation11 + $0xe40] sm:$0xff]
          %v4120 = vld [vmem:[#allocation11 + $0xe48] sm:$0xff]
          %v4121 = vld [vmem:[#allocation11 + $0xe50] sm:$0xff]
          %v4122 = vld [vmem:[#allocation11 + $0xe58] sm:$0xff]
          %v4123 = vld [vmem:[#allocation11 + $0xe60] sm:$0xff]
          %v4124 = vld [vmem:[#allocation11 + $0xe68] sm:$0xff]
          %v4125 = vld [vmem:[#allocation11 + $0xe70] sm:$0xff]
          %v4126 = vld [vmem:[#allocation11 + $0xe78] sm:$0xff]
          %v4127 = vld [vmem:[#allocation11 + $0xe80] sm:$0xff]
          %v4128 = vld [vmem:[#allocation11 + $0xe88] sm:$0xff]
          %v4129 = vld [vmem:[#allocation11 + $0xe90] sm:$0xff]
          %v4130 = vld [vmem:[#allocation11 + $0xe98] sm:$0xff]
          %v4131 = vld [vmem:[#allocation11 + $0xea0] sm:$0xff]
          %v4132 = vld [vmem:[#allocation11 + $0xea8] sm:$0xff]
          %v4133 = vld [vmem:[#allocation11 + $0xeb0] sm:$0xff]
          %v4134 = vld [vmem:[#allocation11 + $0xeb8] sm:$0xff]
          %v4135 = vld [vmem:[#allocation11 + $0xec0] sm:$0xff]
          %v4136 = vld [vmem:[#allocation11 + $0xec8] sm:$0xff]
          %v4137 = vld [vmem:[#allocation11 + $0xed0] sm:$0xff]
          %v4138 = vld [vmem:[#allocation11 + $0xed8] sm:$0xff]
          %v4139 = vld [vmem:[#allocation11 + $0xee0] sm:$0xff]
          %v4140 = vld [vmem:[#allocation11 + $0xee8] sm:$0xff]
          %v4141 = vld [vmem:[#allocation11 + $0xef0] sm:$0xff]
          %v4142 = vld [vmem:[#allocation11 + $0xef8] sm:$0xff]
          %v4143 = vld [vmem:[#allocation11 + $0xf00] sm:$0xff]
          %v4144 = vld [vmem:[#allocation11 + $0xf08] sm:$0xff]
          %v4145 = vld [vmem:[#allocation11 + $0xf10] sm:$0xff]
          %v4146 = vld [vmem:[#allocation11 + $0xf18] sm:$0xff]
          %v4147 = vld [vmem:[#allocation11 + $0xf20] sm:$0xff]
          %v4148 = vld [vmem:[#allocation11 + $0xf28] sm:$0xff]
          %v4149 = vld [vmem:[#allocation11 + $0xf30] sm:$0xff]
          %v4150 = vld [vmem:[#allocation11 + $0xf38] sm:$0xff]
          %v4151 = vld [vmem:[#allocation11 + $0xf40] sm:$0xff]
          %v4152 = vld [vmem:[#allocation11 + $0xf48] sm:$0xff]
          %v4153 = vld [vmem:[#allocation11 + $0xf50] sm:$0xff]
          %v4154 = vld [vmem:[#allocation11 + $0xf58] sm:$0xff]
          %v4155 = vld [vmem:[#allocation11 + $0xf60] sm:$0xff]
          %v4156 = vld [vmem:[#allocation11 + $0xf68] sm:$0xff]
          %v4157 = vld [vmem:[#allocation11 + $0xf70] sm:$0xff]
          %v4158 = vld [vmem:[#allocation11 + $0xf78] sm:$0xff]
          %v4159 = vld [vmem:[#allocation11 + $0xf80] sm:$0xff]
          %v4160 = vld [vmem:[#allocation11 + $0xf88] sm:$0xff]
          %v4161 = vld [vmem:[#allocation11 + $0xf90] sm:$0xff]
          %v4162 = vld [vmem:[#allocation11 + $0xf98] sm:$0xff]
          %v4163 = vld [vmem:[#allocation11 + $0xfa0] sm:$0xff]
          %v4164 = vld [vmem:[#allocation11 + $0xfa8] sm:$0xff]
          %v4165 = vld [vmem:[#allocation11 + $0xfb0] sm:$0xff]
          %v4166 = vld [vmem:[#allocation11 + $0xfb8] sm:$0xff]
          %v4167 = vld [vmem:[#allocation11 + $0xfc0] sm:$0xff]
          %v4168 = vld [vmem:[#allocation11 + $0xfc8] sm:$0xff]
          %v4169 = vld [vmem:[#allocation11 + $0xfd0] sm:$0xff]
          %v4170 = vld [vmem:[#allocation11 + $0xfd8] sm:$0xff]
          %v4171 = vld [vmem:[#allocation11 + $0xfe0] sm:$0xff]
          %v4172 = vld [vmem:[#allocation11 + $0xfe8] sm:$0xff]
          %v4173 = vld [vmem:[#allocation11 + $0xff0] sm:$0xff]
          %v4174 = vld [vmem:[#allocation11 + $0xff8] sm:$0xff]
          %v4175 = vld [vmem:[#allocation13] sm:$0xff]
          %v4177 = vperm.slane %v4175, 0
          %v4178 = vperm.slane %v4175, 1
          %v4179 = vperm.slane %v4175, 2
          %v4180 = vperm.slane %v4175, 3
          %v4181 = vperm.slane %v4175, 4
          %v4182 = vperm.slane %v4175, 5
          %v4183 = vperm.slane %v4175, 6
          %v4184 = vperm.slane %v4175, 7
          %v4705 = vunpack.c.l.b16 %v3663
          %v4706 = vunpack.c.h.b16 %v3663
          %v4707 = vunpack.c.l.b16 %v3664
          %v4708 = vunpack.c.h.b16 %v3664
          %v4709 = vunpack.c.l.b16 %v3665
          %v4710 = vunpack.c.h.b16 %v3665
          %v4711 = vunpack.c.l.b16 %v3666
          %v4712 = vunpack.c.h.b16 %v3666
          %v4713 = vunpack.c.l.b16 %v3667
          %v4714 = vunpack.c.h.b16 %v3667
          %v4715 = vunpack.c.l.b16 %v3668
          %v4716 = vunpack.c.h.b16 %v3668
          %v4717 = vunpack.c.l.b16 %v3669
          %v4718 = vunpack.c.h.b16 %v3669
          %v4719 = vunpack.c.l.b16 %v3670
          %v4720 = vunpack.c.h.b16 %v3670
          %v4721 = vunpack.c.l.b16 %v3671
          %v4722 = vunpack.c.h.b16 %v3671
          %v4723 = vunpack.c.l.b16 %v3672
          %v4724 = vunpack.c.h.b16 %v3672
          %v4725 = vunpack.c.l.b16 %v3673
          %v4726 = vunpack.c.h.b16 %v3673
          %v4727 = vunpack.c.l.b16 %v3674
          %v4728 = vunpack.c.h.b16 %v3674
          %v4729 = vunpack.c.l.b16 %v3675
          %v4730 = vunpack.c.h.b16 %v3675
          %v4731 = vunpack.c.l.b16 %v3676
          %v4732 = vunpack.c.h.b16 %v3676
          %v4733 = vunpack.c.l.b16 %v3677
          %v4734 = vunpack.c.h.b16 %v3677
          %v4735 = vunpack.c.l.b16 %v3678
          %v4736 = vunpack.c.h.b16 %v3678
          %v4737 = vunpack.c.l.b16 %v3679
          %v4738 = vunpack.c.h.b16 %v3679
          %v4739 = vunpack.c.l.b16 %v3680
          %v4740 = vunpack.c.h.b16 %v3680
          %v4741 = vunpack.c.l.b16 %v3681
          %v4742 = vunpack.c.h.b16 %v3681
          %v4743 = vunpack.c.l.b16 %v3682
          %v4744 = vunpack.c.h.b16 %v3682
          %v4745 = vunpack.c.l.b16 %v3683
          %v4746 = vunpack.c.h.b16 %v3683
          %v4747 = vunpack.c.l.b16 %v3684
          %v4748 = vunpack.c.h.b16 %v3684
          %v4749 = vunpack.c.l.b16 %v3685
          %v4750 = vunpack.c.h.b16 %v3685
          %v4751 = vunpack.c.l.b16 %v3686
          %v4752 = vunpack.c.h.b16 %v3686
          %v4753 = vunpack.c.l.b16 %v3687
          %v4754 = vunpack.c.h.b16 %v3687
          %v4755 = vunpack.c.l.b16 %v3688
          %v4756 = vunpack.c.h.b16 %v3688
          %v4757 = vunpack.c.l.b16 %v3689
          %v4758 = vunpack.c.h.b16 %v3689
          %v4759 = vunpack.c.l.b16 %v3690
          %v4760 = vunpack.c.h.b16 %v3690
          %v4761 = vunpack.c.l.b16 %v3691
          %v4762 = vunpack.c.h.b16 %v3691
          %v4763 = vunpack.c.l.b16 %v3692
          %v4764 = vunpack.c.h.b16 %v3692
          %v4765 = vunpack.c.l.b16 %v3693
          %v4766 = vunpack.c.h.b16 %v3693
          %v4767 = vunpack.c.l.b16 %v3694
          %v4768 = vunpack.c.h.b16 %v3694
          %v4769 = vunpack.c.l.b16 %v3695
          %v4770 = vunpack.c.h.b16 %v3695
          %v4771 = vunpack.c.l.b16 %v3696
          %v4772 = vunpack.c.h.b16 %v3696
          %v4773 = vunpack.c.l.b16 %v3697
          %v4774 = vunpack.c.h.b16 %v3697
          %v4775 = vunpack.c.l.b16 %v3698
          %v4776 = vunpack.c.h.b16 %v3698
          %v4777 = vunpack.c.l.b16 %v3699
          %v4778 = vunpack.c.h.b16 %v3699
          %v4779 = vunpack.c.l.b16 %v3700
          %v4780 = vunpack.c.h.b16 %v3700
          %v4781 = vunpack.c.l.b16 %v3701
          %v4782 = vunpack.c.h.b16 %v3701
          %v4783 = vunpack.c.l.b16 %v3702
          %v4784 = vunpack.c.h.b16 %v3702
          %v4785 = vunpack.c.l.b16 %v3703
          %v4786 = vunpack.c.h.b16 %v3703
          %v4787 = vunpack.c.l.b16 %v3704
          %v4788 = vunpack.c.h.b16 %v3704
          %v4789 = vunpack.c.l.b16 %v3705
          %v4790 = vunpack.c.h.b16 %v3705
          %v4791 = vunpack.c.l.b16 %v3706
          %v4792 = vunpack.c.h.b16 %v3706
          %v4793 = vunpack.c.l.b16 %v3707
          %v4794 = vunpack.c.h.b16 %v3707
          %v4795 = vunpack.c.l.b16 %v3708
          %v4796 = vunpack.c.h.b16 %v3708
          %v4797 = vunpack.c.l.b16 %v3709
          %v4798 = vunpack.c.h.b16 %v3709
          %v4799 = vunpack.c.l.b16 %v3710
          %v4800 = vunpack.c.h.b16 %v3710
          %v4801 = vunpack.c.l.b16 %v3711
          %v4802 = vunpack.c.h.b16 %v3711
          %v4803 = vunpack.c.l.b16 %v3712
          %v4804 = vunpack.c.h.b16 %v3712
          %v4805 = vunpack.c.l.b16 %v3713
          %v4806 = vunpack.c.h.b16 %v3713
          %v4807 = vunpack.c.l.b16 %v3714
          %v4808 = vunpack.c.h.b16 %v3714
          %v4809 = vunpack.c.l.b16 %v3715
          %v4810 = vunpack.c.h.b16 %v3715
          %v4811 = vunpack.c.l.b16 %v3716
          %v4812 = vunpack.c.h.b16 %v3716
          %v4813 = vunpack.c.l.b16 %v3717
          %v4814 = vunpack.c.h.b16 %v3717
          %v4815 = vunpack.c.l.b16 %v3718
          %v4816 = vunpack.c.h.b16 %v3718
          %v4817 = vunpack.c.l.b16 %v3719
          %v4818 = vunpack.c.h.b16 %v3719
          %v4819 = vunpack.c.l.b16 %v3720
          %v4820 = vunpack.c.h.b16 %v3720
          %v4821 = vunpack.c.l.b16 %v3721
          %v4822 = vunpack.c.h.b16 %v3721
          %v4823 = vunpack.c.l.b16 %v3722
          %v4824 = vunpack.c.h.b16 %v3722
          %v4825 = vunpack.c.l.b16 %v3723
          %v4826 = vunpack.c.h.b16 %v3723
          %v4827 = vunpack.c.l.b16 %v3724
          %v4828 = vunpack.c.h.b16 %v3724
          %v4829 = vunpack.c.l.b16 %v3725
          %v4830 = vunpack.c.h.b16 %v3725
          %v4831 = vunpack.c.l.b16 %v3726
          %v4832 = vunpack.c.h.b16 %v3726
          %v4833 = vunpack.c.l.b16 %v3727
          %v4834 = vunpack.c.h.b16 %v3727
          %v4835 = vunpack.c.l.b16 %v3728
          %v4836 = vunpack.c.h.b16 %v3728
          %v4837 = vunpack.c.l.b16 %v3729
          %v4838 = vunpack.c.h.b16 %v3729
          %v4839 = vunpack.c.l.b16 %v3730
          %v4840 = vunpack.c.h.b16 %v3730
          %v4841 = vunpack.c.l.b16 %v3731
          %v4842 = vunpack.c.h.b16 %v3731
          %v4843 = vunpack.c.l.b16 %v3732
          %v4844 = vunpack.c.h.b16 %v3732
          %v4845 = vunpack.c.l.b16 %v3733
          %v4846 = vunpack.c.h.b16 %v3733
          %v4847 = vunpack.c.l.b16 %v3734
          %v4848 = vunpack.c.h.b16 %v3734
          %v4849 = vunpack.c.l.b16 %v3735
          %v4850 = vunpack.c.h.b16 %v3735
          %v4851 = vunpack.c.l.b16 %v3736
          %v4852 = vunpack.c.h.b16 %v3736
          %v4853 = vunpack.c.l.b16 %v3737
          %v4854 = vunpack.c.h.b16 %v3737
          %v4855 = vunpack.c.l.b16 %v3738
          %v4856 = vunpack.c.h.b16 %v3738
          %v4857 = vunpack.c.l.b16 %v3739
          %v4858 = vunpack.c.h.b16 %v3739
          %v4859 = vunpack.c.l.b16 %v3740
          %v4860 = vunpack.c.h.b16 %v3740
          %v4861 = vunpack.c.l.b16 %v3741
          %v4862 = vunpack.c.h.b16 %v3741
          %v4863 = vunpack.c.l.b16 %v3742
          %v4864 = vunpack.c.h.b16 %v3742
          %v4865 = vunpack.c.l.b16 %v3743
          %v4866 = vunpack.c.h.b16 %v3743
          %v4867 = vunpack.c.l.b16 %v3744
          %v4868 = vunpack.c.h.b16 %v3744
          %v4869 = vunpack.c.l.b16 %v3745
          %v4870 = vunpack.c.h.b16 %v3745
          %v4871 = vunpack.c.l.b16 %v3746
          %v4872 = vunpack.c.h.b16 %v3746
          %v4873 = vunpack.c.l.b16 %v3747
          %v4874 = vunpack.c.h.b16 %v3747
          %v4875 = vunpack.c.l.b16 %v3748
          %v4876 = vunpack.c.h.b16 %v3748
          %v4877 = vunpack.c.l.b16 %v3749
          %v4878 = vunpack.c.h.b16 %v3749
          %v4879 = vunpack.c.l.b16 %v3750
          %v4880 = vunpack.c.h.b16 %v3750
          %v4881 = vunpack.c.l.b16 %v3751
          %v4882 = vunpack.c.h.b16 %v3751
          %v4883 = vunpack.c.l.b16 %v3752
          %v4884 = vunpack.c.h.b16 %v3752
          %v4885 = vunpack.c.l.b16 %v3753
          %v4886 = vunpack.c.h.b16 %v3753
          %v4887 = vunpack.c.l.b16 %v3754
          %v4888 = vunpack.c.h.b16 %v3754
          %v4889 = vunpack.c.l.b16 %v3755
          %v4890 = vunpack.c.h.b16 %v3755
          %v4891 = vunpack.c.l.b16 %v3756
          %v4892 = vunpack.c.h.b16 %v3756
          %v4893 = vunpack.c.l.b16 %v3757
          %v4894 = vunpack.c.h.b16 %v3757
          %v4895 = vunpack.c.l.b16 %v3758
          %v4896 = vunpack.c.h.b16 %v3758
          %v4897 = vunpack.c.l.b16 %v3759
          %v4898 = vunpack.c.h.b16 %v3759
          %v4899 = vunpack.c.l.b16 %v3760
          %v4900 = vunpack.c.h.b16 %v3760
          %v4901 = vunpack.c.l.b16 %v3761
          %v4902 = vunpack.c.h.b16 %v3761
          %v4903 = vunpack.c.l.b16 %v3762
          %v4904 = vunpack.c.h.b16 %v3762
          %v4905 = vunpack.c.l.b16 %v3763
          %v4906 = vunpack.c.h.b16 %v3763
          %v4907 = vunpack.c.l.b16 %v3764
          %v4908 = vunpack.c.h.b16 %v3764
          %v4909 = vunpack.c.l.b16 %v3765
          %v4910 = vunpack.c.h.b16 %v3765
          %v4911 = vunpack.c.l.b16 %v3766
          %v4912 = vunpack.c.h.b16 %v3766
          %v4913 = vunpack.c.l.b16 %v3767
          %v4914 = vunpack.c.h.b16 %v3767
          %v4915 = vunpack.c.l.b16 %v3768
          %v4916 = vunpack.c.h.b16 %v3768
          %v4917 = vunpack.c.l.b16 %v3769
          %v4918 = vunpack.c.h.b16 %v3769
          %v4919 = vunpack.c.l.b16 %v3770
          %v4920 = vunpack.c.h.b16 %v3770
          %v4921 = vunpack.c.l.b16 %v3771
          %v4922 = vunpack.c.h.b16 %v3771
          %v4923 = vunpack.c.l.b16 %v3772
          %v4924 = vunpack.c.h.b16 %v3772
          %v4925 = vunpack.c.l.b16 %v3773
          %v4926 = vunpack.c.h.b16 %v3773
          %v4927 = vunpack.c.l.b16 %v3774
          %v4928 = vunpack.c.h.b16 %v3774
          %v4929 = vunpack.c.l.b16 %v3775
          %v4930 = vunpack.c.h.b16 %v3775
          %v4931 = vunpack.c.l.b16 %v3776
          %v4932 = vunpack.c.h.b16 %v3776
          %v4933 = vunpack.c.l.b16 %v3777
          %v4934 = vunpack.c.h.b16 %v3777
          %v4935 = vunpack.c.l.b16 %v3778
          %v4936 = vunpack.c.h.b16 %v3778
          %v4937 = vunpack.c.l.b16 %v3779
          %v4938 = vunpack.c.h.b16 %v3779
          %v4939 = vunpack.c.l.b16 %v3780
          %v4940 = vunpack.c.h.b16 %v3780
          %v4941 = vunpack.c.l.b16 %v3781
          %v4942 = vunpack.c.h.b16 %v3781
          %v4943 = vunpack.c.l.b16 %v3782
          %v4944 = vunpack.c.h.b16 %v3782
          %v4945 = vunpack.c.l.b16 %v3783
          %v4946 = vunpack.c.h.b16 %v3783
          %v4947 = vunpack.c.l.b16 %v3784
          %v4948 = vunpack.c.h.b16 %v3784
          %v4949 = vunpack.c.l.b16 %v3785
          %v4950 = vunpack.c.h.b16 %v3785
          %v4951 = vunpack.c.l.b16 %v3786
          %v4952 = vunpack.c.h.b16 %v3786
          %v4953 = vunpack.c.l.b16 %v3787
          %v4954 = vunpack.c.h.b16 %v3787
          %v4955 = vunpack.c.l.b16 %v3788
          %v4956 = vunpack.c.h.b16 %v3788
          %v4957 = vunpack.c.l.b16 %v3789
          %v4958 = vunpack.c.h.b16 %v3789
          %v4959 = vunpack.c.l.b16 %v3790
          %v4960 = vunpack.c.h.b16 %v3790
          %v4961 = vunpack.c.l.b16 %v3791
          %v4962 = vunpack.c.h.b16 %v3791
          %v4963 = vunpack.c.l.b16 %v3792
          %v4964 = vunpack.c.h.b16 %v3792
          %v4965 = vunpack.c.l.b16 %v3793
          %v4966 = vunpack.c.h.b16 %v3793
          %v4967 = vunpack.c.l.b16 %v3794
          %v4968 = vunpack.c.h.b16 %v3794
          %v4969 = vunpack.c.l.b16 %v3795
          %v4970 = vunpack.c.h.b16 %v3795
          %v4971 = vunpack.c.l.b16 %v3796
          %v4972 = vunpack.c.h.b16 %v3796
          %v4973 = vunpack.c.l.b16 %v3797
          %v4974 = vunpack.c.h.b16 %v3797
          %v4975 = vunpack.c.l.b16 %v3798
          %v4976 = vunpack.c.h.b16 %v3798
          %v4977 = vunpack.c.l.b16 %v3799
          %v4978 = vunpack.c.h.b16 %v3799
          %v4979 = vunpack.c.l.b16 %v3800
          %v4980 = vunpack.c.h.b16 %v3800
          %v4981 = vunpack.c.l.b16 %v3801
          %v4982 = vunpack.c.h.b16 %v3801
          %v4983 = vunpack.c.l.b16 %v3802
          %v4984 = vunpack.c.h.b16 %v3802
          %v4985 = vunpack.c.l.b16 %v3803
          %v4986 = vunpack.c.h.b16 %v3803
          %v4987 = vunpack.c.l.b16 %v3804
          %v4988 = vunpack.c.h.b16 %v3804
          %v4989 = vunpack.c.l.b16 %v3805
          %v4990 = vunpack.c.h.b16 %v3805
          %v4991 = vunpack.c.l.b16 %v3806
          %v4992 = vunpack.c.h.b16 %v3806
          %v4993 = vunpack.c.l.b16 %v3807
          %v4994 = vunpack.c.h.b16 %v3807
          %v4995 = vunpack.c.l.b16 %v3808
          %v4996 = vunpack.c.h.b16 %v3808
          %v4997 = vunpack.c.l.b16 %v3809
          %v4998 = vunpack.c.h.b16 %v3809
          %v4999 = vunpack.c.l.b16 %v3810
          %v5000 = vunpack.c.h.b16 %v3810
          %v5001 = vunpack.c.l.b16 %v3811
          %v5002 = vunpack.c.h.b16 %v3811
          %v5003 = vunpack.c.l.b16 %v3812
          %v5004 = vunpack.c.h.b16 %v3812
          %v5005 = vunpack.c.l.b16 %v3813
          %v5006 = vunpack.c.h.b16 %v3813
          %v5007 = vunpack.c.l.b16 %v3814
          %v5008 = vunpack.c.h.b16 %v3814
          %v5009 = vunpack.c.l.b16 %v3815
          %v5010 = vunpack.c.h.b16 %v3815
          %v5011 = vunpack.c.l.b16 %v3816
          %v5012 = vunpack.c.h.b16 %v3816
          %v5013 = vunpack.c.l.b16 %v3817
          %v5014 = vunpack.c.h.b16 %v3817
          %v5015 = vunpack.c.l.b16 %v3818
          %v5016 = vunpack.c.h.b16 %v3818
          %v5017 = vunpack.c.l.b16 %v3819
          %v5018 = vunpack.c.h.b16 %v3819
          %v5019 = vunpack.c.l.b16 %v3820
          %v5020 = vunpack.c.h.b16 %v3820
          %v5021 = vunpack.c.l.b16 %v3821
          %v5022 = vunpack.c.h.b16 %v3821
          %v5023 = vunpack.c.l.b16 %v3822
          %v5024 = vunpack.c.h.b16 %v3822
          %v5025 = vunpack.c.l.b16 %v3823
          %v5026 = vunpack.c.h.b16 %v3823
          %v5027 = vunpack.c.l.b16 %v3824
          %v5028 = vunpack.c.h.b16 %v3824
          %v5029 = vunpack.c.l.b16 %v3825
          %v5030 = vunpack.c.h.b16 %v3825
          %v5031 = vunpack.c.l.b16 %v3826
          %v5032 = vunpack.c.h.b16 %v3826
          %v5033 = vunpack.c.l.b16 %v3827
          %v5034 = vunpack.c.h.b16 %v3827
          %v5035 = vunpack.c.l.b16 %v3828
          %v5036 = vunpack.c.h.b16 %v3828
          %v5037 = vunpack.c.l.b16 %v3829
          %v5038 = vunpack.c.h.b16 %v3829
          %v5039 = vunpack.c.l.b16 %v3830
          %v5040 = vunpack.c.h.b16 %v3830
          %v5041 = vunpack.c.l.b16 %v3831
          %v5042 = vunpack.c.h.b16 %v3831
          %v5043 = vunpack.c.l.b16 %v3832
          %v5044 = vunpack.c.h.b16 %v3832
          %v5045 = vunpack.c.l.b16 %v3833
          %v5046 = vunpack.c.h.b16 %v3833
          %v5047 = vunpack.c.l.b16 %v3834
          %v5048 = vunpack.c.h.b16 %v3834
          %v5049 = vunpack.c.l.b16 %v3835
          %v5050 = vunpack.c.h.b16 %v3835
          %v5051 = vunpack.c.l.b16 %v3836
          %v5052 = vunpack.c.h.b16 %v3836
          %v5053 = vunpack.c.l.b16 %v3837
          %v5054 = vunpack.c.h.b16 %v3837
          %v5055 = vunpack.c.l.b16 %v3838
          %v5056 = vunpack.c.h.b16 %v3838
          %v5057 = vunpack.c.l.b16 %v3839
          %v5058 = vunpack.c.h.b16 %v3839
          %v5059 = vunpack.c.l.b16 %v3840
          %v5060 = vunpack.c.h.b16 %v3840
          %v5061 = vunpack.c.l.b16 %v3841
          %v5062 = vunpack.c.h.b16 %v3841
          %v5063 = vunpack.c.l.b16 %v3842
          %v5064 = vunpack.c.h.b16 %v3842
          %v5065 = vunpack.c.l.b16 %v3843
          %v5066 = vunpack.c.h.b16 %v3843
          %v5067 = vunpack.c.l.b16 %v3844
          %v5068 = vunpack.c.h.b16 %v3844
          %v5069 = vunpack.c.l.b16 %v3845
          %v5070 = vunpack.c.h.b16 %v3845
          %v5071 = vunpack.c.l.b16 %v3846
          %v5072 = vunpack.c.h.b16 %v3846
          %v5073 = vunpack.c.l.b16 %v3847
          %v5074 = vunpack.c.h.b16 %v3847
          %v5075 = vunpack.c.l.b16 %v3848
          %v5076 = vunpack.c.h.b16 %v3848
          %v5077 = vunpack.c.l.b16 %v3849
          %v5078 = vunpack.c.h.b16 %v3849
          %v5079 = vunpack.c.l.b16 %v3850
          %v5080 = vunpack.c.h.b16 %v3850
          %v5081 = vunpack.c.l.b16 %v3851
          %v5082 = vunpack.c.h.b16 %v3851
          %v5083 = vunpack.c.l.b16 %v3852
          %v5084 = vunpack.c.h.b16 %v3852
          %v5085 = vunpack.c.l.b16 %v3853
          %v5086 = vunpack.c.h.b16 %v3853
          %v5087 = vunpack.c.l.b16 %v3854
          %v5088 = vunpack.c.h.b16 %v3854
          %v5089 = vunpack.c.l.b16 %v3855
          %v5090 = vunpack.c.h.b16 %v3855
          %v5091 = vunpack.c.l.b16 %v3856
          %v5092 = vunpack.c.h.b16 %v3856
          %v5093 = vunpack.c.l.b16 %v3857
          %v5094 = vunpack.c.h.b16 %v3857
          %v5095 = vunpack.c.l.b16 %v3858
          %v5096 = vunpack.c.h.b16 %v3858
          %v5097 = vunpack.c.l.b16 %v3859
          %v5098 = vunpack.c.h.b16 %v3859
          %v5099 = vunpack.c.l.b16 %v3860
          %v5100 = vunpack.c.h.b16 %v3860
          %v5101 = vunpack.c.l.b16 %v3861
          %v5102 = vunpack.c.h.b16 %v3861
          %v5103 = vunpack.c.l.b16 %v3862
          %v5104 = vunpack.c.h.b16 %v3862
          %v5105 = vunpack.c.l.b16 %v3863
          %v5106 = vunpack.c.h.b16 %v3863
          %v5107 = vunpack.c.l.b16 %v3864
          %v5108 = vunpack.c.h.b16 %v3864
          %v5109 = vunpack.c.l.b16 %v3865
          %v5110 = vunpack.c.h.b16 %v3865
          %v5111 = vunpack.c.l.b16 %v3866
          %v5112 = vunpack.c.h.b16 %v3866
          %v5113 = vunpack.c.l.b16 %v3867
          %v5114 = vunpack.c.h.b16 %v3867
          %v5115 = vunpack.c.l.b16 %v3868
          %v5116 = vunpack.c.h.b16 %v3868
          %v5117 = vunpack.c.l.b16 %v3869
          %v5118 = vunpack.c.h.b16 %v3869
          %v5119 = vunpack.c.l.b16 %v3870
          %v5120 = vunpack.c.h.b16 %v3870
          %v5121 = vunpack.c.l.b16 %v3871
          %v5122 = vunpack.c.h.b16 %v3871
          %v5123 = vunpack.c.l.b16 %v3872
          %v5124 = vunpack.c.h.b16 %v3872
          %v5125 = vunpack.c.l.b16 %v3873
          %v5126 = vunpack.c.h.b16 %v3873
          %v5127 = vunpack.c.l.b16 %v3874
          %v5128 = vunpack.c.h.b16 %v3874
          %v5129 = vunpack.c.l.b16 %v3875
          %v5130 = vunpack.c.h.b16 %v3875
          %v5131 = vunpack.c.l.b16 %v3876
          %v5132 = vunpack.c.h.b16 %v3876
          %v5133 = vunpack.c.l.b16 %v3877
          %v5134 = vunpack.c.h.b16 %v3877
          %v5135 = vunpack.c.l.b16 %v3878
          %v5136 = vunpack.c.h.b16 %v3878
          %v5137 = vunpack.c.l.b16 %v3879
          %v5138 = vunpack.c.h.b16 %v3879
          %v5139 = vunpack.c.l.b16 %v3880
          %v5140 = vunpack.c.h.b16 %v3880
          %v5141 = vunpack.c.l.b16 %v3881
          %v5142 = vunpack.c.h.b16 %v3881
          %v5143 = vunpack.c.l.b16 %v3882
          %v5144 = vunpack.c.h.b16 %v3882
          %v5145 = vunpack.c.l.b16 %v3883
          %v5146 = vunpack.c.h.b16 %v3883
          %v5147 = vunpack.c.l.b16 %v3884
          %v5148 = vunpack.c.h.b16 %v3884
          %v5149 = vunpack.c.l.b16 %v3885
          %v5150 = vunpack.c.h.b16 %v3885
          %v5151 = vunpack.c.l.b16 %v3886
          %v5152 = vunpack.c.h.b16 %v3886
          %v5153 = vunpack.c.l.b16 %v3887
          %v5154 = vunpack.c.h.b16 %v3887
          %v5155 = vunpack.c.l.b16 %v3888
          %v5156 = vunpack.c.h.b16 %v3888
          %v5157 = vunpack.c.l.b16 %v3889
          %v5158 = vunpack.c.h.b16 %v3889
          %v5159 = vunpack.c.l.b16 %v3890
          %v5160 = vunpack.c.h.b16 %v3890
          %v5161 = vunpack.c.l.b16 %v3891
          %v5162 = vunpack.c.h.b16 %v3891
          %v5163 = vunpack.c.l.b16 %v3892
          %v5164 = vunpack.c.h.b16 %v3892
          %v5165 = vunpack.c.l.b16 %v3893
          %v5166 = vunpack.c.h.b16 %v3893
          %v5167 = vunpack.c.l.b16 %v3894
          %v5168 = vunpack.c.h.b16 %v3894
          %v5169 = vunpack.c.l.b16 %v3895
          %v5170 = vunpack.c.h.b16 %v3895
          %v5171 = vunpack.c.l.b16 %v3896
          %v5172 = vunpack.c.h.b16 %v3896
          %v5173 = vunpack.c.l.b16 %v3897
          %v5174 = vunpack.c.h.b16 %v3897
          %v5175 = vunpack.c.l.b16 %v3898
          %v5176 = vunpack.c.h.b16 %v3898
          %v5177 = vunpack.c.l.b16 %v3899
          %v5178 = vunpack.c.h.b16 %v3899
          %v5179 = vunpack.c.l.b16 %v3900
          %v5180 = vunpack.c.h.b16 %v3900
          %v5181 = vunpack.c.l.b16 %v3901
          %v5182 = vunpack.c.h.b16 %v3901
          %v5183 = vunpack.c.l.b16 %v3902
          %v5184 = vunpack.c.h.b16 %v3902
          %v5185 = vunpack.c.l.b16 %v3903
          %v5186 = vunpack.c.h.b16 %v3903
          %v5187 = vunpack.c.l.b16 %v3904
          %v5188 = vunpack.c.h.b16 %v3904
          %v5189 = vunpack.c.l.b16 %v3905
          %v5190 = vunpack.c.h.b16 %v3905
          %v5191 = vunpack.c.l.b16 %v3906
          %v5192 = vunpack.c.h.b16 %v3906
          %v5193 = vunpack.c.l.b16 %v3907
          %v5194 = vunpack.c.h.b16 %v3907
          %v5195 = vunpack.c.l.b16 %v3908
          %v5196 = vunpack.c.h.b16 %v3908
          %v5197 = vunpack.c.l.b16 %v3909
          %v5198 = vunpack.c.h.b16 %v3909
          %v5199 = vunpack.c.l.b16 %v3910
          %v5200 = vunpack.c.h.b16 %v3910
          %v5201 = vunpack.c.l.b16 %v3911
          %v5202 = vunpack.c.h.b16 %v3911
          %v5203 = vunpack.c.l.b16 %v3912
          %v5204 = vunpack.c.h.b16 %v3912
          %v5205 = vunpack.c.l.b16 %v3913
          %v5206 = vunpack.c.h.b16 %v3913
          %v5207 = vunpack.c.l.b16 %v3914
          %v5208 = vunpack.c.h.b16 %v3914
          %v5209 = vunpack.c.l.b16 %v3915
          %v5210 = vunpack.c.h.b16 %v3915
          %v5211 = vunpack.c.l.b16 %v3916
          %v5212 = vunpack.c.h.b16 %v3916
          %v5213 = vunpack.c.l.b16 %v3917
          %v5214 = vunpack.c.h.b16 %v3917
          %v5215 = vunpack.c.l.b16 %v3918
          %v5216 = vunpack.c.h.b16 %v3918
          %v5217 = vunpack.c.l.b16 %v3919
          %v5218 = vunpack.c.h.b16 %v3919
          %v5219 = vunpack.c.l.b16 %v3920
          %v5220 = vunpack.c.h.b16 %v3920
          %v5221 = vunpack.c.l.b16 %v3921
          %v5222 = vunpack.c.h.b16 %v3921
          %v5223 = vunpack.c.l.b16 %v3922
          %v5224 = vunpack.c.h.b16 %v3922
          %v5225 = vunpack.c.l.b16 %v3923
          %v5226 = vunpack.c.h.b16 %v3923
          %v5227 = vunpack.c.l.b16 %v3924
          %v5228 = vunpack.c.h.b16 %v3924
          %v5229 = vunpack.c.l.b16 %v3925
          %v5230 = vunpack.c.h.b16 %v3925
          %v5231 = vunpack.c.l.b16 %v3926
          %v5232 = vunpack.c.h.b16 %v3926
          %v5233 = vunpack.c.l.b16 %v3927
          %v5234 = vunpack.c.h.b16 %v3927
          %v5235 = vunpack.c.l.b16 %v3928
          %v5236 = vunpack.c.h.b16 %v3928
          %v5237 = vunpack.c.l.b16 %v3929
          %v5238 = vunpack.c.h.b16 %v3929
          %v5239 = vunpack.c.l.b16 %v3930
          %v5240 = vunpack.c.h.b16 %v3930
          %v5241 = vunpack.c.l.b16 %v3931
          %v5242 = vunpack.c.h.b16 %v3931
          %v5243 = vunpack.c.l.b16 %v3932
          %v5244 = vunpack.c.h.b16 %v3932
          %v5245 = vunpack.c.l.b16 %v3933
          %v5246 = vunpack.c.h.b16 %v3933
          %v5247 = vunpack.c.l.b16 %v3934
          %v5248 = vunpack.c.h.b16 %v3934
          %v5249 = vunpack.c.l.b16 %v3935
          %v5250 = vunpack.c.h.b16 %v3935
          %v5251 = vunpack.c.l.b16 %v3936
          %v5252 = vunpack.c.h.b16 %v3936
          %v5253 = vunpack.c.l.b16 %v3937
          %v5254 = vunpack.c.h.b16 %v3937
          %v5255 = vunpack.c.l.b16 %v3938
          %v5256 = vunpack.c.h.b16 %v3938
          %v5257 = vunpack.c.l.b16 %v3939
          %v5258 = vunpack.c.h.b16 %v3939
          %v5259 = vunpack.c.l.b16 %v3940
          %v5260 = vunpack.c.h.b16 %v3940
          %v5261 = vunpack.c.l.b16 %v3941
          %v5262 = vunpack.c.h.b16 %v3941
          %v5263 = vunpack.c.l.b16 %v3942
          %v5264 = vunpack.c.h.b16 %v3942
          %v5265 = vunpack.c.l.b16 %v3943
          %v5266 = vunpack.c.h.b16 %v3943
          %v5267 = vunpack.c.l.b16 %v3944
          %v5268 = vunpack.c.h.b16 %v3944
          %v5269 = vunpack.c.l.b16 %v3945
          %v5270 = vunpack.c.h.b16 %v3945
          %v5271 = vunpack.c.l.b16 %v3946
          %v5272 = vunpack.c.h.b16 %v3946
          %v5273 = vunpack.c.l.b16 %v3947
          %v5274 = vunpack.c.h.b16 %v3947
          %v5275 = vunpack.c.l.b16 %v3948
          %v5276 = vunpack.c.h.b16 %v3948
          %v5277 = vunpack.c.l.b16 %v3949
          %v5278 = vunpack.c.h.b16 %v3949
          %v5279 = vunpack.c.l.b16 %v3950
          %v5280 = vunpack.c.h.b16 %v3950
          %v5281 = vunpack.c.l.b16 %v3951
          %v5282 = vunpack.c.h.b16 %v3951
          %v5283 = vunpack.c.l.b16 %v3952
          %v5284 = vunpack.c.h.b16 %v3952
          %v5285 = vunpack.c.l.b16 %v3953
          %v5286 = vunpack.c.h.b16 %v3953
          %v5287 = vunpack.c.l.b16 %v3954
          %v5288 = vunpack.c.h.b16 %v3954
          %v5289 = vunpack.c.l.b16 %v3955
          %v5290 = vunpack.c.h.b16 %v3955
          %v5291 = vunpack.c.l.b16 %v3956
          %v5292 = vunpack.c.h.b16 %v3956
          %v5293 = vunpack.c.l.b16 %v3957
          %v5294 = vunpack.c.h.b16 %v3957
          %v5295 = vunpack.c.l.b16 %v3958
          %v5296 = vunpack.c.h.b16 %v3958
          %v5297 = vunpack.c.l.b16 %v3959
          %v5298 = vunpack.c.h.b16 %v3959
          %v5299 = vunpack.c.l.b16 %v3960
          %v5300 = vunpack.c.h.b16 %v3960
          %v5301 = vunpack.c.l.b16 %v3961
          %v5302 = vunpack.c.h.b16 %v3961
          %v5303 = vunpack.c.l.b16 %v3962
          %v5304 = vunpack.c.h.b16 %v3962
          %v5305 = vunpack.c.l.b16 %v3963
          %v5306 = vunpack.c.h.b16 %v3963
          %v5307 = vunpack.c.l.b16 %v3964
          %v5308 = vunpack.c.h.b16 %v3964
          %v5309 = vunpack.c.l.b16 %v3965
          %v5310 = vunpack.c.h.b16 %v3965
          %v5311 = vunpack.c.l.b16 %v3966
          %v5312 = vunpack.c.h.b16 %v3966
          %v5313 = vunpack.c.l.b16 %v3967
          %v5314 = vunpack.c.h.b16 %v3967
          %v5315 = vunpack.c.l.b16 %v3968
          %v5316 = vunpack.c.h.b16 %v3968
          %v5317 = vunpack.c.l.b16 %v3969
          %v5318 = vunpack.c.h.b16 %v3969
          %v5319 = vunpack.c.l.b16 %v3970
          %v5320 = vunpack.c.h.b16 %v3970
          %v5321 = vunpack.c.l.b16 %v3971
          %v5322 = vunpack.c.h.b16 %v3971
          %v5323 = vunpack.c.l.b16 %v3972
          %v5324 = vunpack.c.h.b16 %v3972
          %v5325 = vunpack.c.l.b16 %v3973
          %v5326 = vunpack.c.h.b16 %v3973
          %v5327 = vunpack.c.l.b16 %v3974
          %v5328 = vunpack.c.h.b16 %v3974
          %v5329 = vunpack.c.l.b16 %v3975
          %v5330 = vunpack.c.h.b16 %v3975
          %v5331 = vunpack.c.l.b16 %v3976
          %v5332 = vunpack.c.h.b16 %v3976
          %v5333 = vunpack.c.l.b16 %v3977
          %v5334 = vunpack.c.h.b16 %v3977
          %v5335 = vunpack.c.l.b16 %v3978
          %v5336 = vunpack.c.h.b16 %v3978
          %v5337 = vunpack.c.l.b16 %v3979
          %v5338 = vunpack.c.h.b16 %v3979
          %v5339 = vunpack.c.l.b16 %v3980
          %v5340 = vunpack.c.h.b16 %v3980
          %v5341 = vunpack.c.l.b16 %v3981
          %v5342 = vunpack.c.h.b16 %v3981
          %v5343 = vunpack.c.l.b16 %v3982
          %v5344 = vunpack.c.h.b16 %v3982
          %v5345 = vunpack.c.l.b16 %v3983
          %v5346 = vunpack.c.h.b16 %v3983
          %v5347 = vunpack.c.l.b16 %v3984
          %v5348 = vunpack.c.h.b16 %v3984
          %v5349 = vunpack.c.l.b16 %v3985
          %v5350 = vunpack.c.h.b16 %v3985
          %v5351 = vunpack.c.l.b16 %v3986
          %v5352 = vunpack.c.h.b16 %v3986
          %v5353 = vunpack.c.l.b16 %v3987
          %v5354 = vunpack.c.h.b16 %v3987
          %v5355 = vunpack.c.l.b16 %v3988
          %v5356 = vunpack.c.h.b16 %v3988
          %v5357 = vunpack.c.l.b16 %v3989
          %v5358 = vunpack.c.h.b16 %v3989
          %v5359 = vunpack.c.l.b16 %v3990
          %v5360 = vunpack.c.h.b16 %v3990
          %v5361 = vunpack.c.l.b16 %v3991
          %v5362 = vunpack.c.h.b16 %v3991
          %v5363 = vunpack.c.l.b16 %v3992
          %v5364 = vunpack.c.h.b16 %v3992
          %v5365 = vunpack.c.l.b16 %v3993
          %v5366 = vunpack.c.h.b16 %v3993
          %v5367 = vunpack.c.l.b16 %v3994
          %v5368 = vunpack.c.h.b16 %v3994
          %v5369 = vunpack.c.l.b16 %v3995
          %v5370 = vunpack.c.h.b16 %v3995
          %v5371 = vunpack.c.l.b16 %v3996
          %v5372 = vunpack.c.h.b16 %v3996
          %v5373 = vunpack.c.l.b16 %v3997
          %v5374 = vunpack.c.h.b16 %v3997
          %v5375 = vunpack.c.l.b16 %v3998
          %v5376 = vunpack.c.h.b16 %v3998
          %v5377 = vunpack.c.l.b16 %v3999
          %v5378 = vunpack.c.h.b16 %v3999
          %v5379 = vunpack.c.l.b16 %v4000
          %v5380 = vunpack.c.h.b16 %v4000
          %v5381 = vunpack.c.l.b16 %v4001
          %v5382 = vunpack.c.h.b16 %v4001
          %v5383 = vunpack.c.l.b16 %v4002
          %v5384 = vunpack.c.h.b16 %v4002
          %v5385 = vunpack.c.l.b16 %v4003
          %v5386 = vunpack.c.h.b16 %v4003
          %v5387 = vunpack.c.l.b16 %v4004
          %v5388 = vunpack.c.h.b16 %v4004
          %v5389 = vunpack.c.l.b16 %v4005
          %v5390 = vunpack.c.h.b16 %v4005
          %v5391 = vunpack.c.l.b16 %v4006
          %v5392 = vunpack.c.h.b16 %v4006
          %v5393 = vunpack.c.l.b16 %v4007
          %v5394 = vunpack.c.h.b16 %v4007
          %v5395 = vunpack.c.l.b16 %v4008
          %v5396 = vunpack.c.h.b16 %v4008
          %v5397 = vunpack.c.l.b16 %v4009
          %v5398 = vunpack.c.h.b16 %v4009
          %v5399 = vunpack.c.l.b16 %v4010
          %v5400 = vunpack.c.h.b16 %v4010
          %v5401 = vunpack.c.l.b16 %v4011
          %v5402 = vunpack.c.h.b16 %v4011
          %v5403 = vunpack.c.l.b16 %v4012
          %v5404 = vunpack.c.h.b16 %v4012
          %v5405 = vunpack.c.l.b16 %v4013
          %v5406 = vunpack.c.h.b16 %v4013
          %v5407 = vunpack.c.l.b16 %v4014
          %v5408 = vunpack.c.h.b16 %v4014
          %v5409 = vunpack.c.l.b16 %v4015
          %v5410 = vunpack.c.h.b16 %v4015
          %v5411 = vunpack.c.l.b16 %v4016
          %v5412 = vunpack.c.h.b16 %v4016
          %v5413 = vunpack.c.l.b16 %v4017
          %v5414 = vunpack.c.h.b16 %v4017
          %v5415 = vunpack.c.l.b16 %v4018
          %v5416 = vunpack.c.h.b16 %v4018
          %v5417 = vunpack.c.l.b16 %v4019
          %v5418 = vunpack.c.h.b16 %v4019
          %v5419 = vunpack.c.l.b16 %v4020
          %v5420 = vunpack.c.h.b16 %v4020
          %v5421 = vunpack.c.l.b16 %v4021
          %v5422 = vunpack.c.h.b16 %v4021
          %v5423 = vunpack.c.l.b16 %v4022
          %v5424 = vunpack.c.h.b16 %v4022
          %v5425 = vunpack.c.l.b16 %v4023
          %v5426 = vunpack.c.h.b16 %v4023
          %v5427 = vunpack.c.l.b16 %v4024
          %v5428 = vunpack.c.h.b16 %v4024
          %v5429 = vunpack.c.l.b16 %v4025
          %v5430 = vunpack.c.h.b16 %v4025
          %v5431 = vunpack.c.l.b16 %v4026
          %v5432 = vunpack.c.h.b16 %v4026
          %v5433 = vunpack.c.l.b16 %v4027
          %v5434 = vunpack.c.h.b16 %v4027
          %v5435 = vunpack.c.l.b16 %v4028
          %v5436 = vunpack.c.h.b16 %v4028
          %v5437 = vunpack.c.l.b16 %v4029
          %v5438 = vunpack.c.h.b16 %v4029
          %v5439 = vunpack.c.l.b16 %v4030
          %v5440 = vunpack.c.h.b16 %v4030
          %v5441 = vunpack.c.l.b16 %v4031
          %v5442 = vunpack.c.h.b16 %v4031
          %v5443 = vunpack.c.l.b16 %v4032
          %v5444 = vunpack.c.h.b16 %v4032
          %v5445 = vunpack.c.l.b16 %v4033
          %v5446 = vunpack.c.h.b16 %v4033
          %v5447 = vunpack.c.l.b16 %v4034
          %v5448 = vunpack.c.h.b16 %v4034
          %v5449 = vunpack.c.l.b16 %v4035
          %v5450 = vunpack.c.h.b16 %v4035
          %v5451 = vunpack.c.l.b16 %v4036
          %v5452 = vunpack.c.h.b16 %v4036
          %v5453 = vunpack.c.l.b16 %v4037
          %v5454 = vunpack.c.h.b16 %v4037
          %v5455 = vunpack.c.l.b16 %v4038
          %v5456 = vunpack.c.h.b16 %v4038
          %v5457 = vunpack.c.l.b16 %v4039
          %v5458 = vunpack.c.h.b16 %v4039
          %v5459 = vunpack.c.l.b16 %v4040
          %v5460 = vunpack.c.h.b16 %v4040
          %v5461 = vunpack.c.l.b16 %v4041
          %v5462 = vunpack.c.h.b16 %v4041
          %v5463 = vunpack.c.l.b16 %v4042
          %v5464 = vunpack.c.h.b16 %v4042
          %v5465 = vunpack.c.l.b16 %v4043
          %v5466 = vunpack.c.h.b16 %v4043
          %v5467 = vunpack.c.l.b16 %v4044
          %v5468 = vunpack.c.h.b16 %v4044
          %v5469 = vunpack.c.l.b16 %v4045
          %v5470 = vunpack.c.h.b16 %v4045
          %v5471 = vunpack.c.l.b16 %v4046
          %v5472 = vunpack.c.h.b16 %v4046
          %v5473 = vunpack.c.l.b16 %v4047
          %v5474 = vunpack.c.h.b16 %v4047
          %v5475 = vunpack.c.l.b16 %v4048
          %v5476 = vunpack.c.h.b16 %v4048
          %v5477 = vunpack.c.l.b16 %v4049
          %v5478 = vunpack.c.h.b16 %v4049
          %v5479 = vunpack.c.l.b16 %v4050
          %v5480 = vunpack.c.h.b16 %v4050
          %v5481 = vunpack.c.l.b16 %v4051
          %v5482 = vunpack.c.h.b16 %v4051
          %v5483 = vunpack.c.l.b16 %v4052
          %v5484 = vunpack.c.h.b16 %v4052
          %v5485 = vunpack.c.l.b16 %v4053
          %v5486 = vunpack.c.h.b16 %v4053
          %v5487 = vunpack.c.l.b16 %v4054
          %v5488 = vunpack.c.h.b16 %v4054
          %v5489 = vunpack.c.l.b16 %v4055
          %v5490 = vunpack.c.h.b16 %v4055
          %v5491 = vunpack.c.l.b16 %v4056
          %v5492 = vunpack.c.h.b16 %v4056
          %v5493 = vunpack.c.l.b16 %v4057
          %v5494 = vunpack.c.h.b16 %v4057
          %v5495 = vunpack.c.l.b16 %v4058
          %v5496 = vunpack.c.h.b16 %v4058
          %v5497 = vunpack.c.l.b16 %v4059
          %v5498 = vunpack.c.h.b16 %v4059
          %v5499 = vunpack.c.l.b16 %v4060
          %v5500 = vunpack.c.h.b16 %v4060
          %v5501 = vunpack.c.l.b16 %v4061
          %v5502 = vunpack.c.h.b16 %v4061
          %v5503 = vunpack.c.l.b16 %v4062
          %v5504 = vunpack.c.h.b16 %v4062
          %v5505 = vunpack.c.l.b16 %v4063
          %v5506 = vunpack.c.h.b16 %v4063
          %v5507 = vunpack.c.l.b16 %v4064
          %v5508 = vunpack.c.h.b16 %v4064
          %v5509 = vunpack.c.l.b16 %v4065
          %v5510 = vunpack.c.h.b16 %v4065
          %v5511 = vunpack.c.l.b16 %v4066
          %v5512 = vunpack.c.h.b16 %v4066
          %v5513 = vunpack.c.l.b16 %v4067
          %v5514 = vunpack.c.h.b16 %v4067
          %v5515 = vunpack.c.l.b16 %v4068
          %v5516 = vunpack.c.h.b16 %v4068
          %v5517 = vunpack.c.l.b16 %v4069
          %v5518 = vunpack.c.h.b16 %v4069
          %v5519 = vunpack.c.l.b16 %v4070
          %v5520 = vunpack.c.h.b16 %v4070
          %v5521 = vunpack.c.l.b16 %v4071
          %v5522 = vunpack.c.h.b16 %v4071
          %v5523 = vunpack.c.l.b16 %v4072
          %v5524 = vunpack.c.h.b16 %v4072
          %v5525 = vunpack.c.l.b16 %v4073
          %v5526 = vunpack.c.h.b16 %v4073
          %v5527 = vunpack.c.l.b16 %v4074
          %v5528 = vunpack.c.h.b16 %v4074
          %v5529 = vunpack.c.l.b16 %v4075
          %v5530 = vunpack.c.h.b16 %v4075
          %v5531 = vunpack.c.l.b16 %v4076
          %v5532 = vunpack.c.h.b16 %v4076
          %v5533 = vunpack.c.l.b16 %v4077
          %v5534 = vunpack.c.h.b16 %v4077
          %v5535 = vunpack.c.l.b16 %v4078
          %v5536 = vunpack.c.h.b16 %v4078
          %v5537 = vunpack.c.l.b16 %v4079
          %v5538 = vunpack.c.h.b16 %v4079
          %v5539 = vunpack.c.l.b16 %v4080
          %v5540 = vunpack.c.h.b16 %v4080
          %v5541 = vunpack.c.l.b16 %v4081
          %v5542 = vunpack.c.h.b16 %v4081
          %v5543 = vunpack.c.l.b16 %v4082
          %v5544 = vunpack.c.h.b16 %v4082
          %v5545 = vunpack.c.l.b16 %v4083
          %v5546 = vunpack.c.h.b16 %v4083
          %v5547 = vunpack.c.l.b16 %v4084
          %v5548 = vunpack.c.h.b16 %v4084
          %v5549 = vunpack.c.l.b16 %v4085
          %v5550 = vunpack.c.h.b16 %v4085
          %v5551 = vunpack.c.l.b16 %v4086
          %v5552 = vunpack.c.h.b16 %v4086
          %v5553 = vunpack.c.l.b16 %v4087
          %v5554 = vunpack.c.h.b16 %v4087
          %v5555 = vunpack.c.l.b16 %v4088
          %v5556 = vunpack.c.h.b16 %v4088
          %v5557 = vunpack.c.l.b16 %v4089
          %v5558 = vunpack.c.h.b16 %v4089
          %v5559 = vunpack.c.l.b16 %v4090
          %v5560 = vunpack.c.h.b16 %v4090
          %v5561 = vunpack.c.l.b16 %v4091
          %v5562 = vunpack.c.h.b16 %v4091
          %v5563 = vunpack.c.l.b16 %v4092
          %v5564 = vunpack.c.h.b16 %v4092
          %v5565 = vunpack.c.l.b16 %v4093
          %v5566 = vunpack.c.h.b16 %v4093
          %v5567 = vunpack.c.l.b16 %v4094
          %v5568 = vunpack.c.h.b16 %v4094
          %v5569 = vunpack.c.l.b16 %v4095
          %v5570 = vunpack.c.h.b16 %v4095
          %v5571 = vunpack.c.l.b16 %v4096
          %v5572 = vunpack.c.h.b16 %v4096
          %v5573 = vunpack.c.l.b16 %v4097
          %v5574 = vunpack.c.h.b16 %v4097
          %v5575 = vunpack.c.l.b16 %v4098
          %v5576 = vunpack.c.h.b16 %v4098
          %v5577 = vunpack.c.l.b16 %v4099
          %v5578 = vunpack.c.h.b16 %v4099
          %v5579 = vunpack.c.l.b16 %v4100
          %v5580 = vunpack.c.h.b16 %v4100
          %v5581 = vunpack.c.l.b16 %v4101
          %v5582 = vunpack.c.h.b16 %v4101
          %v5583 = vunpack.c.l.b16 %v4102
          %v5584 = vunpack.c.h.b16 %v4102
          %v5585 = vunpack.c.l.b16 %v4103
          %v5586 = vunpack.c.h.b16 %v4103
          %v5587 = vunpack.c.l.b16 %v4104
          %v5588 = vunpack.c.h.b16 %v4104
          %v5589 = vunpack.c.l.b16 %v4105
          %v5590 = vunpack.c.h.b16 %v4105
          %v5591 = vunpack.c.l.b16 %v4106
          %v5592 = vunpack.c.h.b16 %v4106
          %v5593 = vunpack.c.l.b16 %v4107
          %v5594 = vunpack.c.h.b16 %v4107
          %v5595 = vunpack.c.l.b16 %v4108
          %v5596 = vunpack.c.h.b16 %v4108
          %v5597 = vunpack.c.l.b16 %v4109
          %v5598 = vunpack.c.h.b16 %v4109
          %v5599 = vunpack.c.l.b16 %v4110
          %v5600 = vunpack.c.h.b16 %v4110
          %v5601 = vunpack.c.l.b16 %v4111
          %v5602 = vunpack.c.h.b16 %v4111
          %v5603 = vunpack.c.l.b16 %v4112
          %v5604 = vunpack.c.h.b16 %v4112
          %v5605 = vunpack.c.l.b16 %v4113
          %v5606 = vunpack.c.h.b16 %v4113
          %v5607 = vunpack.c.l.b16 %v4114
          %v5608 = vunpack.c.h.b16 %v4114
          %v5609 = vunpack.c.l.b16 %v4115
          %v5610 = vunpack.c.h.b16 %v4115
          %v5611 = vunpack.c.l.b16 %v4116
          %v5612 = vunpack.c.h.b16 %v4116
          %v5613 = vunpack.c.l.b16 %v4117
          %v5614 = vunpack.c.h.b16 %v4117
          %v5615 = vunpack.c.l.b16 %v4118
          %v5616 = vunpack.c.h.b16 %v4118
          %v5617 = vunpack.c.l.b16 %v4119
          %v5618 = vunpack.c.h.b16 %v4119
          %v5619 = vunpack.c.l.b16 %v4120
          %v5620 = vunpack.c.h.b16 %v4120
          %v5621 = vunpack.c.l.b16 %v4121
          %v5622 = vunpack.c.h.b16 %v4121
          %v5623 = vunpack.c.l.b16 %v4122
          %v5624 = vunpack.c.h.b16 %v4122
          %v5625 = vunpack.c.l.b16 %v4123
          %v5626 = vunpack.c.h.b16 %v4123
          %v5627 = vunpack.c.l.b16 %v4124
          %v5628 = vunpack.c.h.b16 %v4124
          %v5629 = vunpack.c.l.b16 %v4125
          %v5630 = vunpack.c.h.b16 %v4125
          %v5631 = vunpack.c.l.b16 %v4126
          %v5632 = vunpack.c.h.b16 %v4126
          %v5633 = vunpack.c.l.b16 %v4127
          %v5634 = vunpack.c.h.b16 %v4127
          %v5635 = vunpack.c.l.b16 %v4128
          %v5636 = vunpack.c.h.b16 %v4128
          %v5637 = vunpack.c.l.b16 %v4129
          %v5638 = vunpack.c.h.b16 %v4129
          %v5639 = vunpack.c.l.b16 %v4130
          %v5640 = vunpack.c.h.b16 %v4130
          %v5641 = vunpack.c.l.b16 %v4131
          %v5642 = vunpack.c.h.b16 %v4131
          %v5643 = vunpack.c.l.b16 %v4132
          %v5644 = vunpack.c.h.b16 %v4132
          %v5645 = vunpack.c.l.b16 %v4133
          %v5646 = vunpack.c.h.b16 %v4133
          %v5647 = vunpack.c.l.b16 %v4134
          %v5648 = vunpack.c.h.b16 %v4134
          %v5649 = vunpack.c.l.b16 %v4135
          %v5650 = vunpack.c.h.b16 %v4135
          %v5651 = vunpack.c.l.b16 %v4136
          %v5652 = vunpack.c.h.b16 %v4136
          %v5653 = vunpack.c.l.b16 %v4137
          %v5654 = vunpack.c.h.b16 %v4137
          %v5655 = vunpack.c.l.b16 %v4138
          %v5656 = vunpack.c.h.b16 %v4138
          %v5657 = vunpack.c.l.b16 %v4139
          %v5658 = vunpack.c.h.b16 %v4139
          %v5659 = vunpack.c.l.b16 %v4140
          %v5660 = vunpack.c.h.b16 %v4140
          %v5661 = vunpack.c.l.b16 %v4141
          %v5662 = vunpack.c.h.b16 %v4141
          %v5663 = vunpack.c.l.b16 %v4142
          %v5664 = vunpack.c.h.b16 %v4142
          %v5665 = vunpack.c.l.b16 %v4143
          %v5666 = vunpack.c.h.b16 %v4143
          %v5667 = vunpack.c.l.b16 %v4144
          %v5668 = vunpack.c.h.b16 %v4144
          %v5669 = vunpack.c.l.b16 %v4145
          %v5670 = vunpack.c.h.b16 %v4145
          %v5671 = vunpack.c.l.b16 %v4146
          %v5672 = vunpack.c.h.b16 %v4146
          %v5673 = vunpack.c.l.b16 %v4147
          %v5674 = vunpack.c.h.b16 %v4147
          %v5675 = vunpack.c.l.b16 %v4148
          %v5676 = vunpack.c.h.b16 %v4148
          %v5677 = vunpack.c.l.b16 %v4149
          %v5678 = vunpack.c.h.b16 %v4149
          %v5679 = vunpack.c.l.b16 %v4150
          %v5680 = vunpack.c.h.b16 %v4150
          %v5681 = vunpack.c.l.b16 %v4151
          %v5682 = vunpack.c.h.b16 %v4151
          %v5683 = vunpack.c.l.b16 %v4152
          %v5684 = vunpack.c.h.b16 %v4152
          %v5685 = vunpack.c.l.b16 %v4153
          %v5686 = vunpack.c.h.b16 %v4153
          %v5687 = vunpack.c.l.b16 %v4154
          %v5688 = vunpack.c.h.b16 %v4154
          %v5689 = vunpack.c.l.b16 %v4155
          %v5690 = vunpack.c.h.b16 %v4155
          %v5691 = vunpack.c.l.b16 %v4156
          %v5692 = vunpack.c.h.b16 %v4156
          %v5693 = vunpack.c.l.b16 %v4157
          %v5694 = vunpack.c.h.b16 %v4157
          %v5695 = vunpack.c.l.b16 %v4158
          %v5696 = vunpack.c.h.b16 %v4158
          %v5697 = vunpack.c.l.b16 %v4159
          %v5698 = vunpack.c.h.b16 %v4159
          %v5699 = vunpack.c.l.b16 %v4160
          %v5700 = vunpack.c.h.b16 %v4160
          %v5701 = vunpack.c.l.b16 %v4161
          %v5702 = vunpack.c.h.b16 %v4161
          %v5703 = vunpack.c.l.b16 %v4162
          %v5704 = vunpack.c.h.b16 %v4162
          %v5705 = vunpack.c.l.b16 %v4163
          %v5706 = vunpack.c.h.b16 %v4163
          %v5707 = vunpack.c.l.b16 %v4164
          %v5708 = vunpack.c.h.b16 %v4164
          %v5709 = vunpack.c.l.b16 %v4165
          %v5710 = vunpack.c.h.b16 %v4165
          %v5711 = vunpack.c.l.b16 %v4166
          %v5712 = vunpack.c.h.b16 %v4166
          %v5713 = vunpack.c.l.b16 %v4167
          %v5714 = vunpack.c.h.b16 %v4167
          %v5715 = vunpack.c.l.b16 %v4168
          %v5716 = vunpack.c.h.b16 %v4168
          %v5717 = vunpack.c.l.b16 %v4169
          %v5718 = vunpack.c.h.b16 %v4169
          %v5719 = vunpack.c.l.b16 %v4170
          %v5720 = vunpack.c.h.b16 %v4170
          %v5721 = vunpack.c.l.b16 %v4171
          %v5722 = vunpack.c.h.b16 %v4171
          %v5723 = vunpack.c.l.b16 %v4172
          %v5724 = vunpack.c.h.b16 %v4172
          %v5725 = vunpack.c.l.b16 %v4173
          %v5726 = vunpack.c.h.b16 %v4173
          %v5727 = vunpack.c.l.b16 %v4174
          %v5728 = vunpack.c.h.b16 %v4174
          %v5729 = vpack.c.b16 %v4713, %v4705
          %v5730 = vpack.c.b16 %v4714, %v4706
          %v5731 = vpack.c.b16 %v4715, %v4707
          %v5732 = vpack.c.b16 %v4716, %v4708
          %v5733 = vpack.c.b16 %v4717, %v4709
          %v5734 = vpack.c.b16 %v4718, %v4710
          %v5735 = vpack.c.b16 %v4719, %v4711
          %v5736 = vpack.c.b16 %v4720, %v4712
          %v5737 = vpack.c.b16 %v4729, %v4721
          %v5738 = vpack.c.b16 %v4730, %v4722
          %v5739 = vpack.c.b16 %v4731, %v4723
          %v5740 = vpack.c.b16 %v4732, %v4724
          %v5741 = vpack.c.b16 %v4733, %v4725
          %v5742 = vpack.c.b16 %v4734, %v4726
          %v5743 = vpack.c.b16 %v4735, %v4727
          %v5744 = vpack.c.b16 %v4736, %v4728
          %v5745 = vpack.c.b16 %v4745, %v4737
          %v5746 = vpack.c.b16 %v4746, %v4738
          %v5747 = vpack.c.b16 %v4747, %v4739
          %v5748 = vpack.c.b16 %v4748, %v4740
          %v5749 = vpack.c.b16 %v4749, %v4741
          %v5750 = vpack.c.b16 %v4750, %v4742
          %v5751 = vpack.c.b16 %v4751, %v4743
          %v5752 = vpack.c.b16 %v4752, %v4744
          %v5753 = vpack.c.b16 %v4761, %v4753
          %v5754 = vpack.c.b16 %v4762, %v4754
          %v5755 = vpack.c.b16 %v4763, %v4755
          %v5756 = vpack.c.b16 %v4764, %v4756
          %v5757 = vpack.c.b16 %v4765, %v4757
          %v5758 = vpack.c.b16 %v4766, %v4758
          %v5759 = vpack.c.b16 %v4767, %v4759
          %v5760 = vpack.c.b16 %v4768, %v4760
          %v5761 = vpack.c.b16 %v4777, %v4769
          %v5762 = vpack.c.b16 %v4778, %v4770
          %v5763 = vpack.c.b16 %v4779, %v4771
          %v5764 = vpack.c.b16 %v4780, %v4772
          %v5765 = vpack.c.b16 %v4781, %v4773
          %v5766 = vpack.c.b16 %v4782, %v4774
          %v5767 = vpack.c.b16 %v4783, %v4775
          %v5768 = vpack.c.b16 %v4784, %v4776
          %v5769 = vpack.c.b16 %v4793, %v4785
          %v5770 = vpack.c.b16 %v4794, %v4786
          %v5771 = vpack.c.b16 %v4795, %v4787
          %v5772 = vpack.c.b16 %v4796, %v4788
          %v5773 = vpack.c.b16 %v4797, %v4789
          %v5774 = vpack.c.b16 %v4798, %v4790
          %v5775 = vpack.c.b16 %v4799, %v4791
          %v5776 = vpack.c.b16 %v4800, %v4792
          %v5777 = vpack.c.b16 %v4809, %v4801
          %v5778 = vpack.c.b16 %v4810, %v4802
          %v5779 = vpack.c.b16 %v4811, %v4803
          %v5780 = vpack.c.b16 %v4812, %v4804
          %v5781 = vpack.c.b16 %v4813, %v4805
          %v5782 = vpack.c.b16 %v4814, %v4806
          %v5783 = vpack.c.b16 %v4815, %v4807
          %v5784 = vpack.c.b16 %v4816, %v4808
          %v5785 = vpack.c.b16 %v4825, %v4817
          %v5786 = vpack.c.b16 %v4826, %v4818
          %v5787 = vpack.c.b16 %v4827, %v4819
          %v5788 = vpack.c.b16 %v4828, %v4820
          %v5789 = vpack.c.b16 %v4829, %v4821
          %v5790 = vpack.c.b16 %v4830, %v4822
          %v5791 = vpack.c.b16 %v4831, %v4823
          %v5792 = vpack.c.b16 %v4832, %v4824
          %v5793 = vpack.c.b16 %v4841, %v4833
          %v5794 = vpack.c.b16 %v4842, %v4834
          %v5795 = vpack.c.b16 %v4843, %v4835
          %v5796 = vpack.c.b16 %v4844, %v4836
          %v5797 = vpack.c.b16 %v4845, %v4837
          %v5798 = vpack.c.b16 %v4846, %v4838
          %v5799 = vpack.c.b16 %v4847, %v4839
          %v5800 = vpack.c.b16 %v4848, %v4840
          %v5801 = vpack.c.b16 %v4857, %v4849
          %v5802 = vpack.c.b16 %v4858, %v4850
          %v5803 = vpack.c.b16 %v4859, %v4851
          %v5804 = vpack.c.b16 %v4860, %v4852
          %v5805 = vpack.c.b16 %v4861, %v4853
          %v5806 = vpack.c.b16 %v4862, %v4854
          %v5807 = vpack.c.b16 %v4863, %v4855
          %v5808 = vpack.c.b16 %v4864, %v4856
          %v5809 = vpack.c.b16 %v4873, %v4865
          %v5810 = vpack.c.b16 %v4874, %v4866
          %v5811 = vpack.c.b16 %v4875, %v4867
          %v5812 = vpack.c.b16 %v4876, %v4868
          %v5813 = vpack.c.b16 %v4877, %v4869
          %v5814 = vpack.c.b16 %v4878, %v4870
          %v5815 = vpack.c.b16 %v4879, %v4871
          %v5816 = vpack.c.b16 %v4880, %v4872
          %v5817 = vpack.c.b16 %v4889, %v4881
          %v5818 = vpack.c.b16 %v4890, %v4882
          %v5819 = vpack.c.b16 %v4891, %v4883
          %v5820 = vpack.c.b16 %v4892, %v4884
          %v5821 = vpack.c.b16 %v4893, %v4885
          %v5822 = vpack.c.b16 %v4894, %v4886
          %v5823 = vpack.c.b16 %v4895, %v4887
          %v5824 = vpack.c.b16 %v4896, %v4888
          %v5825 = vpack.c.b16 %v4905, %v4897
          %v5826 = vpack.c.b16 %v4906, %v4898
          %v5827 = vpack.c.b16 %v4907, %v4899
          %v5828 = vpack.c.b16 %v4908, %v4900
          %v5829 = vpack.c.b16 %v4909, %v4901
          %v5830 = vpack.c.b16 %v4910, %v4902
          %v5831 = vpack.c.b16 %v4911, %v4903
          %v5832 = vpack.c.b16 %v4912, %v4904
          %v5833 = vpack.c.b16 %v4921, %v4913
          %v5834 = vpack.c.b16 %v4922, %v4914
          %v5835 = vpack.c.b16 %v4923, %v4915
          %v5836 = vpack.c.b16 %v4924, %v4916
          %v5837 = vpack.c.b16 %v4925, %v4917
          %v5838 = vpack.c.b16 %v4926, %v4918
          %v5839 = vpack.c.b16 %v4927, %v4919
          %v5840 = vpack.c.b16 %v4928, %v4920
          %v5841 = vpack.c.b16 %v4937, %v4929
          %v5842 = vpack.c.b16 %v4938, %v4930
          %v5843 = vpack.c.b16 %v4939, %v4931
          %v5844 = vpack.c.b16 %v4940, %v4932
          %v5845 = vpack.c.b16 %v4941, %v4933
          %v5846 = vpack.c.b16 %v4942, %v4934
          %v5847 = vpack.c.b16 %v4943, %v4935
          %v5848 = vpack.c.b16 %v4944, %v4936
          %v5849 = vpack.c.b16 %v4953, %v4945
          %v5850 = vpack.c.b16 %v4954, %v4946
          %v5851 = vpack.c.b16 %v4955, %v4947
          %v5852 = vpack.c.b16 %v4956, %v4948
          %v5853 = vpack.c.b16 %v4957, %v4949
          %v5854 = vpack.c.b16 %v4958, %v4950
          %v5855 = vpack.c.b16 %v4959, %v4951
          %v5856 = vpack.c.b16 %v4960, %v4952
          %v5857 = vpack.c.b16 %v4969, %v4961
          %v5858 = vpack.c.b16 %v4970, %v4962
          %v5859 = vpack.c.b16 %v4971, %v4963
          %v5860 = vpack.c.b16 %v4972, %v4964
          %v5861 = vpack.c.b16 %v4973, %v4965
          %v5862 = vpack.c.b16 %v4974, %v4966
          %v5863 = vpack.c.b16 %v4975, %v4967
          %v5864 = vpack.c.b16 %v4976, %v4968
          %v5865 = vpack.c.b16 %v4985, %v4977
          %v5866 = vpack.c.b16 %v4986, %v4978
          %v5867 = vpack.c.b16 %v4987, %v4979
          %v5868 = vpack.c.b16 %v4988, %v4980
          %v5869 = vpack.c.b16 %v4989, %v4981
          %v5870 = vpack.c.b16 %v4990, %v4982
          %v5871 = vpack.c.b16 %v4991, %v4983
          %v5872 = vpack.c.b16 %v4992, %v4984
          %v5873 = vpack.c.b16 %v5001, %v4993
          %v5874 = vpack.c.b16 %v5002, %v4994
          %v5875 = vpack.c.b16 %v5003, %v4995
          %v5876 = vpack.c.b16 %v5004, %v4996
          %v5877 = vpack.c.b16 %v5005, %v4997
          %v5878 = vpack.c.b16 %v5006, %v4998
          %v5879 = vpack.c.b16 %v5007, %v4999
          %v5880 = vpack.c.b16 %v5008, %v5000
          %v5881 = vpack.c.b16 %v5017, %v5009
          %v5882 = vpack.c.b16 %v5018, %v5010
          %v5883 = vpack.c.b16 %v5019, %v5011
          %v5884 = vpack.c.b16 %v5020, %v5012
          %v5885 = vpack.c.b16 %v5021, %v5013
          %v5886 = vpack.c.b16 %v5022, %v5014
          %v5887 = vpack.c.b16 %v5023, %v5015
          %v5888 = vpack.c.b16 %v5024, %v5016
          %v5889 = vpack.c.b16 %v5033, %v5025
          %v5890 = vpack.c.b16 %v5034, %v5026
          %v5891 = vpack.c.b16 %v5035, %v5027
          %v5892 = vpack.c.b16 %v5036, %v5028
          %v5893 = vpack.c.b16 %v5037, %v5029
          %v5894 = vpack.c.b16 %v5038, %v5030
          %v5895 = vpack.c.b16 %v5039, %v5031
          %v5896 = vpack.c.b16 %v5040, %v5032
          %v5897 = vpack.c.b16 %v5049, %v5041
          %v5898 = vpack.c.b16 %v5050, %v5042
          %v5899 = vpack.c.b16 %v5051, %v5043
          %v5900 = vpack.c.b16 %v5052, %v5044
          %v5901 = vpack.c.b16 %v5053, %v5045
          %v5902 = vpack.c.b16 %v5054, %v5046
          %v5903 = vpack.c.b16 %v5055, %v5047
          %v5904 = vpack.c.b16 %v5056, %v5048
          %v5905 = vpack.c.b16 %v5065, %v5057
          %v5906 = vpack.c.b16 %v5066, %v5058
          %v5907 = vpack.c.b16 %v5067, %v5059
          %v5908 = vpack.c.b16 %v5068, %v5060
          %v5909 = vpack.c.b16 %v5069, %v5061
          %v5910 = vpack.c.b16 %v5070, %v5062
          %v5911 = vpack.c.b16 %v5071, %v5063
          %v5912 = vpack.c.b16 %v5072, %v5064
          %v5913 = vpack.c.b16 %v5081, %v5073
          %v5914 = vpack.c.b16 %v5082, %v5074
          %v5915 = vpack.c.b16 %v5083, %v5075
          %v5916 = vpack.c.b16 %v5084, %v5076
          %v5917 = vpack.c.b16 %v5085, %v5077
          %v5918 = vpack.c.b16 %v5086, %v5078
          %v5919 = vpack.c.b16 %v5087, %v5079
          %v5920 = vpack.c.b16 %v5088, %v5080
          %v5921 = vpack.c.b16 %v5097, %v5089
          %v5922 = vpack.c.b16 %v5098, %v5090
          %v5923 = vpack.c.b16 %v5099, %v5091
          %v5924 = vpack.c.b16 %v5100, %v5092
          %v5925 = vpack.c.b16 %v5101, %v5093
          %v5926 = vpack.c.b16 %v5102, %v5094
          %v5927 = vpack.c.b16 %v5103, %v5095
          %v5928 = vpack.c.b16 %v5104, %v5096
          %v5929 = vpack.c.b16 %v5113, %v5105
          %v5930 = vpack.c.b16 %v5114, %v5106
          %v5931 = vpack.c.b16 %v5115, %v5107
          %v5932 = vpack.c.b16 %v5116, %v5108
          %v5933 = vpack.c.b16 %v5117, %v5109
          %v5934 = vpack.c.b16 %v5118, %v5110
          %v5935 = vpack.c.b16 %v5119, %v5111
          %v5936 = vpack.c.b16 %v5120, %v5112
          %v5937 = vpack.c.b16 %v5129, %v5121
          %v5938 = vpack.c.b16 %v5130, %v5122
          %v5939 = vpack.c.b16 %v5131, %v5123
          %v5940 = vpack.c.b16 %v5132, %v5124
          %v5941 = vpack.c.b16 %v5133, %v5125
          %v5942 = vpack.c.b16 %v5134, %v5126
          %v5943 = vpack.c.b16 %v5135, %v5127
          %v5944 = vpack.c.b16 %v5136, %v5128
          %v5945 = vpack.c.b16 %v5145, %v5137
          %v5946 = vpack.c.b16 %v5146, %v5138
          %v5947 = vpack.c.b16 %v5147, %v5139
          %v5948 = vpack.c.b16 %v5148, %v5140
          %v5949 = vpack.c.b16 %v5149, %v5141
          %v5950 = vpack.c.b16 %v5150, %v5142
          %v5951 = vpack.c.b16 %v5151, %v5143
          %v5952 = vpack.c.b16 %v5152, %v5144
          %v5953 = vpack.c.b16 %v5161, %v5153
          %v5954 = vpack.c.b16 %v5162, %v5154
          %v5955 = vpack.c.b16 %v5163, %v5155
          %v5956 = vpack.c.b16 %v5164, %v5156
          %v5957 = vpack.c.b16 %v5165, %v5157
          %v5958 = vpack.c.b16 %v5166, %v5158
          %v5959 = vpack.c.b16 %v5167, %v5159
          %v5960 = vpack.c.b16 %v5168, %v5160
          %v5961 = vpack.c.b16 %v5177, %v5169
          %v5962 = vpack.c.b16 %v5178, %v5170
          %v5963 = vpack.c.b16 %v5179, %v5171
          %v5964 = vpack.c.b16 %v5180, %v5172
          %v5965 = vpack.c.b16 %v5181, %v5173
          %v5966 = vpack.c.b16 %v5182, %v5174
          %v5967 = vpack.c.b16 %v5183, %v5175
          %v5968 = vpack.c.b16 %v5184, %v5176
          %v5969 = vpack.c.b16 %v5193, %v5185
          %v5970 = vpack.c.b16 %v5194, %v5186
          %v5971 = vpack.c.b16 %v5195, %v5187
          %v5972 = vpack.c.b16 %v5196, %v5188
          %v5973 = vpack.c.b16 %v5197, %v5189
          %v5974 = vpack.c.b16 %v5198, %v5190
          %v5975 = vpack.c.b16 %v5199, %v5191
          %v5976 = vpack.c.b16 %v5200, %v5192
          %v5977 = vpack.c.b16 %v5209, %v5201
          %v5978 = vpack.c.b16 %v5210, %v5202
          %v5979 = vpack.c.b16 %v5211, %v5203
          %v5980 = vpack.c.b16 %v5212, %v5204
          %v5981 = vpack.c.b16 %v5213, %v5205
          %v5982 = vpack.c.b16 %v5214, %v5206
          %v5983 = vpack.c.b16 %v5215, %v5207
          %v5984 = vpack.c.b16 %v5216, %v5208
          %v5985 = vpack.c.b16 %v5225, %v5217
          %v5986 = vpack.c.b16 %v5226, %v5218
          %v5987 = vpack.c.b16 %v5227, %v5219
          %v5988 = vpack.c.b16 %v5228, %v5220
          %v5989 = vpack.c.b16 %v5229, %v5221
          %v5990 = vpack.c.b16 %v5230, %v5222
          %v5991 = vpack.c.b16 %v5231, %v5223
          %v5992 = vpack.c.b16 %v5232, %v5224
          %v5993 = vpack.c.b16 %v5241, %v5233
          %v5994 = vpack.c.b16 %v5242, %v5234
          %v5995 = vpack.c.b16 %v5243, %v5235
          %v5996 = vpack.c.b16 %v5244, %v5236
          %v5997 = vpack.c.b16 %v5245, %v5237
          %v5998 = vpack.c.b16 %v5246, %v5238
          %v5999 = vpack.c.b16 %v5247, %v5239
          %v6000 = vpack.c.b16 %v5248, %v5240
          %v6001 = vpack.c.b16 %v5257, %v5249
          %v6002 = vpack.c.b16 %v5258, %v5250
          %v6003 = vpack.c.b16 %v5259, %v5251
          %v6004 = vpack.c.b16 %v5260, %v5252
          %v6005 = vpack.c.b16 %v5261, %v5253
          %v6006 = vpack.c.b16 %v5262, %v5254
          %v6007 = vpack.c.b16 %v5263, %v5255
          %v6008 = vpack.c.b16 %v5264, %v5256
          %v6009 = vpack.c.b16 %v5273, %v5265
          %v6010 = vpack.c.b16 %v5274, %v5266
          %v6011 = vpack.c.b16 %v5275, %v5267
          %v6012 = vpack.c.b16 %v5276, %v5268
          %v6013 = vpack.c.b16 %v5277, %v5269
          %v6014 = vpack.c.b16 %v5278, %v5270
          %v6015 = vpack.c.b16 %v5279, %v5271
          %v6016 = vpack.c.b16 %v5280, %v5272
          %v6017 = vpack.c.b16 %v5289, %v5281
          %v6018 = vpack.c.b16 %v5290, %v5282
          %v6019 = vpack.c.b16 %v5291, %v5283
          %v6020 = vpack.c.b16 %v5292, %v5284
          %v6021 = vpack.c.b16 %v5293, %v5285
          %v6022 = vpack.c.b16 %v5294, %v5286
          %v6023 = vpack.c.b16 %v5295, %v5287
          %v6024 = vpack.c.b16 %v5296, %v5288
          %v6025 = vpack.c.b16 %v5305, %v5297
          %v6026 = vpack.c.b16 %v5306, %v5298
          %v6027 = vpack.c.b16 %v5307, %v5299
          %v6028 = vpack.c.b16 %v5308, %v5300
          %v6029 = vpack.c.b16 %v5309, %v5301
          %v6030 = vpack.c.b16 %v5310, %v5302
          %v6031 = vpack.c.b16 %v5311, %v5303
          %v6032 = vpack.c.b16 %v5312, %v5304
          %v6033 = vpack.c.b16 %v5321, %v5313
          %v6034 = vpack.c.b16 %v5322, %v5314
          %v6035 = vpack.c.b16 %v5323, %v5315
          %v6036 = vpack.c.b16 %v5324, %v5316
          %v6037 = vpack.c.b16 %v5325, %v5317
          %v6038 = vpack.c.b16 %v5326, %v5318
          %v6039 = vpack.c.b16 %v5327, %v5319
          %v6040 = vpack.c.b16 %v5328, %v5320
          %v6041 = vpack.c.b16 %v5337, %v5329
          %v6042 = vpack.c.b16 %v5338, %v5330
          %v6043 = vpack.c.b16 %v5339, %v5331
          %v6044 = vpack.c.b16 %v5340, %v5332
          %v6045 = vpack.c.b16 %v5341, %v5333
          %v6046 = vpack.c.b16 %v5342, %v5334
          %v6047 = vpack.c.b16 %v5343, %v5335
          %v6048 = vpack.c.b16 %v5344, %v5336
          %v6049 = vpack.c.b16 %v5353, %v5345
          %v6050 = vpack.c.b16 %v5354, %v5346
          %v6051 = vpack.c.b16 %v5355, %v5347
          %v6052 = vpack.c.b16 %v5356, %v5348
          %v6053 = vpack.c.b16 %v5357, %v5349
          %v6054 = vpack.c.b16 %v5358, %v5350
          %v6055 = vpack.c.b16 %v5359, %v5351
          %v6056 = vpack.c.b16 %v5360, %v5352
          %v6057 = vpack.c.b16 %v5369, %v5361
          %v6058 = vpack.c.b16 %v5370, %v5362
          %v6059 = vpack.c.b16 %v5371, %v5363
          %v6060 = vpack.c.b16 %v5372, %v5364
          %v6061 = vpack.c.b16 %v5373, %v5365
          %v6062 = vpack.c.b16 %v5374, %v5366
          %v6063 = vpack.c.b16 %v5375, %v5367
          %v6064 = vpack.c.b16 %v5376, %v5368
          %v6065 = vpack.c.b16 %v5385, %v5377
          %v6066 = vpack.c.b16 %v5386, %v5378
          %v6067 = vpack.c.b16 %v5387, %v5379
          %v6068 = vpack.c.b16 %v5388, %v5380
          %v6069 = vpack.c.b16 %v5389, %v5381
          %v6070 = vpack.c.b16 %v5390, %v5382
          %v6071 = vpack.c.b16 %v5391, %v5383
          %v6072 = vpack.c.b16 %v5392, %v5384
          %v6073 = vpack.c.b16 %v5401, %v5393
          %v6074 = vpack.c.b16 %v5402, %v5394
          %v6075 = vpack.c.b16 %v5403, %v5395
          %v6076 = vpack.c.b16 %v5404, %v5396
          %v6077 = vpack.c.b16 %v5405, %v5397
          %v6078 = vpack.c.b16 %v5406, %v5398
          %v6079 = vpack.c.b16 %v5407, %v5399
          %v6080 = vpack.c.b16 %v5408, %v5400
          %v6081 = vpack.c.b16 %v5417, %v5409
          %v6082 = vpack.c.b16 %v5418, %v5410
          %v6083 = vpack.c.b16 %v5419, %v5411
          %v6084 = vpack.c.b16 %v5420, %v5412
          %v6085 = vpack.c.b16 %v5421, %v5413
          %v6086 = vpack.c.b16 %v5422, %v5414
          %v6087 = vpack.c.b16 %v5423, %v5415
          %v6088 = vpack.c.b16 %v5424, %v5416
          %v6089 = vpack.c.b16 %v5433, %v5425
          %v6090 = vpack.c.b16 %v5434, %v5426
          %v6091 = vpack.c.b16 %v5435, %v5427
          %v6092 = vpack.c.b16 %v5436, %v5428
          %v6093 = vpack.c.b16 %v5437, %v5429
          %v6094 = vpack.c.b16 %v5438, %v5430
          %v6095 = vpack.c.b16 %v5439, %v5431
          %v6096 = vpack.c.b16 %v5440, %v5432
          %v6097 = vpack.c.b16 %v5449, %v5441
          %v6098 = vpack.c.b16 %v5450, %v5442
          %v6099 = vpack.c.b16 %v5451, %v5443
          %v6100 = vpack.c.b16 %v5452, %v5444
          %v6101 = vpack.c.b16 %v5453, %v5445
          %v6102 = vpack.c.b16 %v5454, %v5446
          %v6103 = vpack.c.b16 %v5455, %v5447
          %v6104 = vpack.c.b16 %v5456, %v5448
          %v6105 = vpack.c.b16 %v5465, %v5457
          %v6106 = vpack.c.b16 %v5466, %v5458
          %v6107 = vpack.c.b16 %v5467, %v5459
          %v6108 = vpack.c.b16 %v5468, %v5460
          %v6109 = vpack.c.b16 %v5469, %v5461
          %v6110 = vpack.c.b16 %v5470, %v5462
          %v6111 = vpack.c.b16 %v5471, %v5463
          %v6112 = vpack.c.b16 %v5472, %v5464
          %v6113 = vpack.c.b16 %v5481, %v5473
          %v6114 = vpack.c.b16 %v5482, %v5474
          %v6115 = vpack.c.b16 %v5483, %v5475
          %v6116 = vpack.c.b16 %v5484, %v5476
          %v6117 = vpack.c.b16 %v5485, %v5477
          %v6118 = vpack.c.b16 %v5486, %v5478
          %v6119 = vpack.c.b16 %v5487, %v5479
          %v6120 = vpack.c.b16 %v5488, %v5480
          %v6121 = vpack.c.b16 %v5497, %v5489
          %v6122 = vpack.c.b16 %v5498, %v5490
          %v6123 = vpack.c.b16 %v5499, %v5491
          %v6124 = vpack.c.b16 %v5500, %v5492
          %v6125 = vpack.c.b16 %v5501, %v5493
          %v6126 = vpack.c.b16 %v5502, %v5494
          %v6127 = vpack.c.b16 %v5503, %v5495
          %v6128 = vpack.c.b16 %v5504, %v5496
          %v6129 = vpack.c.b16 %v5513, %v5505
          %v6130 = vpack.c.b16 %v5514, %v5506
          %v6131 = vpack.c.b16 %v5515, %v5507
          %v6132 = vpack.c.b16 %v5516, %v5508
          %v6133 = vpack.c.b16 %v5517, %v5509
          %v6134 = vpack.c.b16 %v5518, %v5510
          %v6135 = vpack.c.b16 %v5519, %v5511
          %v6136 = vpack.c.b16 %v5520, %v5512
          %v6137 = vpack.c.b16 %v5529, %v5521
          %v6138 = vpack.c.b16 %v5530, %v5522
          %v6139 = vpack.c.b16 %v5531, %v5523
          %v6140 = vpack.c.b16 %v5532, %v5524
          %v6141 = vpack.c.b16 %v5533, %v5525
          %v6142 = vpack.c.b16 %v5534, %v5526
          %v6143 = vpack.c.b16 %v5535, %v5527
          %v6144 = vpack.c.b16 %v5536, %v5528
          %v6145 = vpack.c.b16 %v5545, %v5537
          %v6146 = vpack.c.b16 %v5546, %v5538
          %v6147 = vpack.c.b16 %v5547, %v5539
          %v6148 = vpack.c.b16 %v5548, %v5540
          %v6149 = vpack.c.b16 %v5549, %v5541
          %v6150 = vpack.c.b16 %v5550, %v5542
          %v6151 = vpack.c.b16 %v5551, %v5543
          %v6152 = vpack.c.b16 %v5552, %v5544
          %v6153 = vpack.c.b16 %v5561, %v5553
          %v6154 = vpack.c.b16 %v5562, %v5554
          %v6155 = vpack.c.b16 %v5563, %v5555
          %v6156 = vpack.c.b16 %v5564, %v5556
          %v6157 = vpack.c.b16 %v5565, %v5557
          %v6158 = vpack.c.b16 %v5566, %v5558
          %v6159 = vpack.c.b16 %v5567, %v5559
          %v6160 = vpack.c.b16 %v5568, %v5560
          %v6161 = vpack.c.b16 %v5577, %v5569
          %v6162 = vpack.c.b16 %v5578, %v5570
          %v6163 = vpack.c.b16 %v5579, %v5571
          %v6164 = vpack.c.b16 %v5580, %v5572
          %v6165 = vpack.c.b16 %v5581, %v5573
          %v6166 = vpack.c.b16 %v5582, %v5574
          %v6167 = vpack.c.b16 %v5583, %v5575
          %v6168 = vpack.c.b16 %v5584, %v5576
          %v6169 = vpack.c.b16 %v5593, %v5585
          %v6170 = vpack.c.b16 %v5594, %v5586
          %v6171 = vpack.c.b16 %v5595, %v5587
          %v6172 = vpack.c.b16 %v5596, %v5588
          %v6173 = vpack.c.b16 %v5597, %v5589
          %v6174 = vpack.c.b16 %v5598, %v5590
          %v6175 = vpack.c.b16 %v5599, %v5591
          %v6176 = vpack.c.b16 %v5600, %v5592
          %v6177 = vpack.c.b16 %v5609, %v5601
          %v6178 = vpack.c.b16 %v5610, %v5602
          %v6179 = vpack.c.b16 %v5611, %v5603
          %v6180 = vpack.c.b16 %v5612, %v5604
          %v6181 = vpack.c.b16 %v5613, %v5605
          %v6182 = vpack.c.b16 %v5614, %v5606
          %v6183 = vpack.c.b16 %v5615, %v5607
          %v6184 = vpack.c.b16 %v5616, %v5608
          %v6185 = vpack.c.b16 %v5625, %v5617
          %v6186 = vpack.c.b16 %v5626, %v5618
          %v6187 = vpack.c.b16 %v5627, %v5619
          %v6188 = vpack.c.b16 %v5628, %v5620
          %v6189 = vpack.c.b16 %v5629, %v5621
          %v6190 = vpack.c.b16 %v5630, %v5622
          %v6191 = vpack.c.b16 %v5631, %v5623
          %v6192 = vpack.c.b16 %v5632, %v5624
          %v6193 = vpack.c.b16 %v5641, %v5633
          %v6194 = vpack.c.b16 %v5642, %v5634
          %v6195 = vpack.c.b16 %v5643, %v5635
          %v6196 = vpack.c.b16 %v5644, %v5636
          %v6197 = vpack.c.b16 %v5645, %v5637
          %v6198 = vpack.c.b16 %v5646, %v5638
          %v6199 = vpack.c.b16 %v5647, %v5639
          %v6200 = vpack.c.b16 %v5648, %v5640
          %v6201 = vpack.c.b16 %v5657, %v5649
          %v6202 = vpack.c.b16 %v5658, %v5650
          %v6203 = vpack.c.b16 %v5659, %v5651
          %v6204 = vpack.c.b16 %v5660, %v5652
          %v6205 = vpack.c.b16 %v5661, %v5653
          %v6206 = vpack.c.b16 %v5662, %v5654
          %v6207 = vpack.c.b16 %v5663, %v5655
          %v6208 = vpack.c.b16 %v5664, %v5656
          %v6209 = vpack.c.b16 %v5673, %v5665
          %v6210 = vpack.c.b16 %v5674, %v5666
          %v6211 = vpack.c.b16 %v5675, %v5667
          %v6212 = vpack.c.b16 %v5676, %v5668
          %v6213 = vpack.c.b16 %v5677, %v5669
          %v6214 = vpack.c.b16 %v5678, %v5670
          %v6215 = vpack.c.b16 %v5679, %v5671
          %v6216 = vpack.c.b16 %v5680, %v5672
          %v6217 = vpack.c.b16 %v5689, %v5681
          %v6218 = vpack.c.b16 %v5690, %v5682
          %v6219 = vpack.c.b16 %v5691, %v5683
          %v6220 = vpack.c.b16 %v5692, %v5684
          %v6221 = vpack.c.b16 %v5693, %v5685
          %v6222 = vpack.c.b16 %v5694, %v5686
          %v6223 = vpack.c.b16 %v5695, %v5687
          %v6224 = vpack.c.b16 %v5696, %v5688
          %v6225 = vpack.c.b16 %v5705, %v5697
          %v6226 = vpack.c.b16 %v5706, %v5698
          %v6227 = vpack.c.b16 %v5707, %v5699
          %v6228 = vpack.c.b16 %v5708, %v5700
          %v6229 = vpack.c.b16 %v5709, %v5701
          %v6230 = vpack.c.b16 %v5710, %v5702
          %v6231 = vpack.c.b16 %v5711, %v5703
          %v6232 = vpack.c.b16 %v5712, %v5704
          %v6233 = vpack.c.b16 %v5721, %v5713
          %v6234 = vpack.c.b16 %v5722, %v5714
          %v6235 = vpack.c.b16 %v5723, %v5715
          %v6236 = vpack.c.b16 %v5724, %v5716
          %v6237 = vpack.c.b16 %v5725, %v5717
          %v6238 = vpack.c.b16 %v5726, %v5718
          %v6239 = vpack.c.b16 %v5727, %v5719
          %v6240 = vpack.c.b16 %v5728, %v5720
          %6753 = vmatpush.bf16.msra.mxu0 %v5785
          %6754 = vmatpush.bf16.msra.mxu0 %v5777
          %6755 = vmatpush.bf16.msra.mxu0 %v5769
          %6756 = vmatpush.bf16.msra.mxu0 %v5761
          %6757 = vmatpush.bf16.msra.mxu0 %v5753
          %6758 = vmatpush.bf16.msra.mxu0 %v5745
          %6759 = vmatpush.bf16.msra.mxu0 %v5737
          %6760 = vmatpush.bf16.msra.mxu0 %v5729
          %6761 = vmatmul.bf16.gmra.mxu0 %v3655
          %v6762 = vpop.f32.mrf.mxu0
          %v6763 = vadd.f32 %v4177, %v6762
          %v6764 = vpop.f32.mrf.mxu0
          %6765 = vdwg.mxu0
          %6766 = vmatpush.bf16.msra.mxu0 %v5849
          %6767 = vmatpush.bf16.msra.mxu0 %v5841
          %6768 = vmatpush.bf16.msra.mxu0 %v5833
          %6769 = vmatpush.bf16.msra.mxu0 %v5825
          %6770 = vmatpush.bf16.msra.mxu0 %v5817
          %6771 = vmatpush.bf16.msra.mxu0 %v5809
          %6772 = vmatpush.bf16.msra.mxu0 %v5801
          %6773 = vmatpush.bf16.msra.mxu0 %v5793
          %6774 = vmatmul.bf16.gmra.mxu0 %v3656
          %v6775 = vpop.f32.mrf.mxu0
          %v6776 = vadd.f32 %v6763, %v6775
          %v6777 = vpop.f32.mrf.mxu0
          %6778 = vdwg.mxu0
          %6779 = vmatpush.bf16.msra.mxu0 %v5913
          %6780 = vmatpush.bf16.msra.mxu0 %v5905
          %6781 = vmatpush.bf16.msra.mxu0 %v5897
          %6782 = vmatpush.bf16.msra.mxu0 %v5889
          %6783 = vmatpush.bf16.msra.mxu0 %v5881
          %6784 = vmatpush.bf16.msra.mxu0 %v5873
          %6785 = vmatpush.bf16.msra.mxu0 %v5865
          %6786 = vmatpush.bf16.msra.mxu0 %v5857
          %6787 = vmatmul.bf16.gmra.mxu0 %v3657
          %v6788 = vpop.f32.mrf.mxu0
          %v6789 = vadd.f32 %v6776, %v6788
          %v6790 = vpop.f32.mrf.mxu0
          %6791 = vdwg.mxu0
          %6792 = vmatpush.bf16.msra.mxu0 %v5977
          %6793 = vmatpush.bf16.msra.mxu0 %v5969
          %6794 = vmatpush.bf16.msra.mxu0 %v5961
          %6795 = vmatpush.bf16.msra.mxu0 %v5953
          %6796 = vmatpush.bf16.msra.mxu0 %v5945
          %6797 = vmatpush.bf16.msra.mxu0 %v5937
          %6798 = vmatpush.bf16.msra.mxu0 %v5929
          %6799 = vmatpush.bf16.msra.mxu0 %v5921
          %6800 = vmatmul.bf16.gmra.mxu0 %v3658
          %v6801 = vpop.f32.mrf.mxu0
          %v6802 = vadd.f32 %v6789, %v6801
          %v6803 = vpop.f32.mrf.mxu0
          %6804 = vdwg.mxu0
          %6805 = vmatpush.bf16.msra.mxu0 %v6041
          %6806 = vmatpush.bf16.msra.mxu0 %v6033
          %6807 = vmatpush.bf16.msra.mxu0 %v6025
          %6808 = vmatpush.bf16.msra.mxu0 %v6017
          %6809 = vmatpush.bf16.msra.mxu0 %v6009
          %6810 = vmatpush.bf16.msra.mxu0 %v6001
          %6811 = vmatpush.bf16.msra.mxu0 %v5993
          %6812 = vmatpush.bf16.msra.mxu0 %v5985
          %6813 = vmatmul.bf16.gmra.mxu0 %v3659
          %v6814 = vpop.f32.mrf.mxu0
          %v6815 = vadd.f32 %v6802, %v6814
          %v6816 = vpop.f32.mrf.mxu0
          %6817 = vdwg.mxu0
          %6818 = vmatpush.bf16.msra.mxu0 %v6105
          %6819 = vmatpush.bf16.msra.mxu0 %v6097
          %6820 = vmatpush.bf16.msra.mxu0 %v6089
          %6821 = vmatpush.bf16.msra.mxu0 %v6081
          %6822 = vmatpush.bf16.msra.mxu0 %v6073
          %6823 = vmatpush.bf16.msra.mxu0 %v6065
          %6824 = vmatpush.bf16.msra.mxu0 %v6057
          %6825 = vmatpush.bf16.msra.mxu0 %v6049
          %6826 = vmatmul.bf16.gmra.mxu0 %v3660
          %v6827 = vpop.f32.mrf.mxu0
          %v6828 = vadd.f32 %v6815, %v6827
          %v6829 = vpop.f32.mrf.mxu0
          %6830 = vdwg.mxu0
          %6831 = vmatpush.bf16.msra.mxu0 %v6169
          %6832 = vmatpush.bf16.msra.mxu0 %v6161
          %6833 = vmatpush.bf16.msra.mxu0 %v6153
          %6834 = vmatpush.bf16.msra.mxu0 %v6145
          %6835 = vmatpush.bf16.msra.mxu0 %v6137
          %6836 = vmatpush.bf16.msra.mxu0 %v6129
          %6837 = vmatpush.bf16.msra.mxu0 %v6121
          %6838 = vmatpush.bf16.msra.mxu0 %v6113
          %6839 = vmatmul.bf16.gmra.mxu0 %v3661
          %v6840 = vpop.f32.mrf.mxu0
          %v6841 = vadd.f32 %v6828, %v6840
          %v6842 = vpop.f32.mrf.mxu0
          %6843 = vdwg.mxu0
          %6844 = vmatpush.bf16.msra.mxu0 %v6233
          %6845 = vmatpush.bf16.msra.mxu0 %v6225
          %6846 = vmatpush.bf16.msra.mxu0 %v6217
          %6847 = vmatpush.bf16.msra.mxu0 %v6209
          %6848 = vmatpush.bf16.msra.mxu0 %v6201
          %6849 = vmatpush.bf16.msra.mxu0 %v6193
          %6850 = vmatpush.bf16.msra.mxu0 %v6185
          %6851 = vmatpush.bf16.msra.mxu0 %v6177
          %6852 = vmatmul.bf16.gmra.mxu0 %v3662
          %v6853 = vpop.f32.mrf.mxu0
          %v6854 = vadd.f32 %v6841, %v6853
          %v6855 = vpop.f32.mrf.mxu0
          %6856 = vdwg.mxu0
          %6857 = vmatpush.bf16.msra.mxu0 %v5786
          %6858 = vmatpush.bf16.msra.mxu0 %v5778
          %6859 = vmatpush.bf16.msra.mxu0 %v5770
          %6860 = vmatpush.bf16.msra.mxu0 %v5762
          %6861 = vmatpush.bf16.msra.mxu0 %v5754
          %6862 = vmatpush.bf16.msra.mxu0 %v5746
          %6863 = vmatpush.bf16.msra.mxu0 %v5738
          %6864 = vmatpush.bf16.msra.mxu0 %v5730
          %6865 = vmatmul.bf16.gmra.mxu0 %v3655
          %v6866 = vpop.f32.mrf.mxu0
          %v6867 = vadd.f32 %v4178, %v6866
          %v6868 = vpop.f32.mrf.mxu0
          %6869 = vdwg.mxu0
          %6870 = vmatpush.bf16.msra.mxu0 %v5850
          %6871 = vmatpush.bf16.msra.mxu0 %v5842
          %6872 = vmatpush.bf16.msra.mxu0 %v5834
          %6873 = vmatpush.bf16.msra.mxu0 %v5826
          %6874 = vmatpush.bf16.msra.mxu0 %v5818
          %6875 = vmatpush.bf16.msra.mxu0 %v5810
          %6876 = vmatpush.bf16.msra.mxu0 %v5802
          %6877 = vmatpush.bf16.msra.mxu0 %v5794
          %6878 = vmatmul.bf16.gmra.mxu0 %v3656
          %v6879 = vpop.f32.mrf.mxu0
          %v6880 = vadd.f32 %v6867, %v6879
          %v6881 = vpop.f32.mrf.mxu0
          %6882 = vdwg.mxu0
          %6883 = vmatpush.bf16.msra.mxu0 %v5914
          %6884 = vmatpush.bf16.msra.mxu0 %v5906
          %6885 = vmatpush.bf16.msra.mxu0 %v5898
          %6886 = vmatpush.bf16.msra.mxu0 %v5890
          %6887 = vmatpush.bf16.msra.mxu0 %v5882
          %6888 = vmatpush.bf16.msra.mxu0 %v5874
          %6889 = vmatpush.bf16.msra.mxu0 %v5866
          %6890 = vmatpush.bf16.msra.mxu0 %v5858
          %6891 = vmatmul.bf16.gmra.mxu0 %v3657
          %v6892 = vpop.f32.mrf.mxu0
          %v6893 = vadd.f32 %v6880, %v6892
          %v6894 = vpop.f32.mrf.mxu0
          %6895 = vdwg.mxu0
          %6896 = vmatpush.bf16.msra.mxu0 %v5978
          %6897 = vmatpush.bf16.msra.mxu0 %v5970
          %6898 = vmatpush.bf16.msra.mxu0 %v5962
          %6899 = vmatpush.bf16.msra.mxu0 %v5954
          %6900 = vmatpush.bf16.msra.mxu0 %v5946
          %6901 = vmatpush.bf16.msra.mxu0 %v5938
          %6902 = vmatpush.bf16.msra.mxu0 %v5930
          %6903 = vmatpush.bf16.msra.mxu0 %v5922
          %6904 = vmatmul.bf16.gmra.mxu0 %v3658
          %v6905 = vpop.f32.mrf.mxu0
          %v6906 = vadd.f32 %v6893, %v6905
          %v6907 = vpop.f32.mrf.mxu0
          %6908 = vdwg.mxu0
          %6909 = vmatpush.bf16.msra.mxu0 %v6042
          %6910 = vmatpush.bf16.msra.mxu0 %v6034
          %6911 = vmatpush.bf16.msra.mxu0 %v6026
          %6912 = vmatpush.bf16.msra.mxu0 %v6018
          %6913 = vmatpush.bf16.msra.mxu0 %v6010
          %6914 = vmatpush.bf16.msra.mxu0 %v6002
          %6915 = vmatpush.bf16.msra.mxu0 %v5994
          %6916 = vmatpush.bf16.msra.mxu0 %v5986
          %6917 = vmatmul.bf16.gmra.mxu0 %v3659
          %v6918 = vpop.f32.mrf.mxu0
          %v6919 = vadd.f32 %v6906, %v6918
          %v6920 = vpop.f32.mrf.mxu0
          %6921 = vdwg.mxu0
          %6922 = vmatpush.bf16.msra.mxu0 %v6106
          %6923 = vmatpush.bf16.msra.mxu0 %v6098
          %6924 = vmatpush.bf16.msra.mxu0 %v6090
          %6925 = vmatpush.bf16.msra.mxu0 %v6082
          %6926 = vmatpush.bf16.msra.mxu0 %v6074
          %6927 = vmatpush.bf16.msra.mxu0 %v6066
          %6928 = vmatpush.bf16.msra.mxu0 %v6058
          %6929 = vmatpush.bf16.msra.mxu0 %v6050
          %6930 = vmatmul.bf16.gmra.mxu0 %v3660
          %v6931 = vpop.f32.mrf.mxu0
          %v6932 = vadd.f32 %v6919, %v6931
          %v6933 = vpop.f32.mrf.mxu0
          %6934 = vdwg.mxu0
          %6935 = vmatpush.bf16.msra.mxu0 %v6170
          %6936 = vmatpush.bf16.msra.mxu0 %v6162
          %6937 = vmatpush.bf16.msra.mxu0 %v6154
          %6938 = vmatpush.bf16.msra.mxu0 %v6146
          %6939 = vmatpush.bf16.msra.mxu0 %v6138
          %6940 = vmatpush.bf16.msra.mxu0 %v6130
          %6941 = vmatpush.bf16.msra.mxu0 %v6122
          %6942 = vmatpush.bf16.msra.mxu0 %v6114
          %6943 = vmatmul.bf16.gmra.mxu0 %v3661
          %v6944 = vpop.f32.mrf.mxu0
          %v6945 = vadd.f32 %v6932, %v6944
          %v6946 = vpop.f32.mrf.mxu0
          %6947 = vdwg.mxu0
          %6948 = vmatpush.bf16.msra.mxu0 %v6234
          %6949 = vmatpush.bf16.msra.mxu0 %v6226
          %6950 = vmatpush.bf16.msra.mxu0 %v6218
          %6951 = vmatpush.bf16.msra.mxu0 %v6210
          %6952 = vmatpush.bf16.msra.mxu0 %v6202
          %6953 = vmatpush.bf16.msra.mxu0 %v6194
          %6954 = vmatpush.bf16.msra.mxu0 %v6186
          %6955 = vmatpush.bf16.msra.mxu0 %v6178
          %6956 = vmatmul.bf16.gmra.mxu0 %v3662
          %v6957 = vpop.f32.mrf.mxu0
          %v6958 = vadd.f32 %v6945, %v6957
          %v6959 = vpop.f32.mrf.mxu0
          %6960 = vdwg.mxu0
          %6961 = vmatpush.bf16.msra.mxu0 %v5787
          %6962 = vmatpush.bf16.msra.mxu0 %v5779
          %6963 = vmatpush.bf16.msra.mxu0 %v5771
          %6964 = vmatpush.bf16.msra.mxu0 %v5763
          %6965 = vmatpush.bf16.msra.mxu0 %v5755
          %6966 = vmatpush.bf16.msra.mxu0 %v5747
          %6967 = vmatpush.bf16.msra.mxu0 %v5739
          %6968 = vmatpush.bf16.msra.mxu0 %v5731
          %6969 = vmatmul.bf16.gmra.mxu0 %v3655
          %v6970 = vpop.f32.mrf.mxu0
          %v6971 = vadd.f32 %v4179, %v6970
          %v6972 = vpop.f32.mrf.mxu0
          %6973 = vdwg.mxu0
          %6974 = vmatpush.bf16.msra.mxu0 %v5851
          %6975 = vmatpush.bf16.msra.mxu0 %v5843
          %6976 = vmatpush.bf16.msra.mxu0 %v5835
          %6977 = vmatpush.bf16.msra.mxu0 %v5827
          %6978 = vmatpush.bf16.msra.mxu0 %v5819
          %6979 = vmatpush.bf16.msra.mxu0 %v5811
          %6980 = vmatpush.bf16.msra.mxu0 %v5803
          %6981 = vmatpush.bf16.msra.mxu0 %v5795
          %6982 = vmatmul.bf16.gmra.mxu0 %v3656
          %v6983 = vpop.f32.mrf.mxu0
          %v6984 = vadd.f32 %v6971, %v6983
          %v6985 = vpop.f32.mrf.mxu0
          %6986 = vdwg.mxu0
          %6987 = vmatpush.bf16.msra.mxu0 %v5915
          %6988 = vmatpush.bf16.msra.mxu0 %v5907
          %6989 = vmatpush.bf16.msra.mxu0 %v5899
          %6990 = vmatpush.bf16.msra.mxu0 %v5891
          %6991 = vmatpush.bf16.msra.mxu0 %v5883
          %6992 = vmatpush.bf16.msra.mxu0 %v5875
          %6993 = vmatpush.bf16.msra.mxu0 %v5867
          %6994 = vmatpush.bf16.msra.mxu0 %v5859
          %6995 = vmatmul.bf16.gmra.mxu0 %v3657
          %v6996 = vpop.f32.mrf.mxu0
          %v6997 = vadd.f32 %v6984, %v6996
          %v6998 = vpop.f32.mrf.mxu0
          %6999 = vdwg.mxu0
          %7000 = vmatpush.bf16.msra.mxu0 %v5979
          %7001 = vmatpush.bf16.msra.mxu0 %v5971
          %7002 = vmatpush.bf16.msra.mxu0 %v5963
          %7003 = vmatpush.bf16.msra.mxu0 %v5955
          %7004 = vmatpush.bf16.msra.mxu0 %v5947
          %7005 = vmatpush.bf16.msra.mxu0 %v5939
          %7006 = vmatpush.bf16.msra.mxu0 %v5931
          %7007 = vmatpush.bf16.msra.mxu0 %v5923
          %7008 = vmatmul.bf16.gmra.mxu0 %v3658
          %v7009 = vpop.f32.mrf.mxu0
          %v7010 = vadd.f32 %v6997, %v7009
          %v7011 = vpop.f32.mrf.mxu0
          %7012 = vdwg.mxu0
          %7013 = vmatpush.bf16.msra.mxu0 %v6043
          %7014 = vmatpush.bf16.msra.mxu0 %v6035
          %7015 = vmatpush.bf16.msra.mxu0 %v6027
          %7016 = vmatpush.bf16.msra.mxu0 %v6019
          %7017 = vmatpush.bf16.msra.mxu0 %v6011
          %7018 = vmatpush.bf16.msra.mxu0 %v6003
          %7019 = vmatpush.bf16.msra.mxu0 %v5995
          %7020 = vmatpush.bf16.msra.mxu0 %v5987
          %7021 = vmatmul.bf16.gmra.mxu0 %v3659
          %v7022 = vpop.f32.mrf.mxu0
          %v7023 = vadd.f32 %v7010, %v7022
          %v7024 = vpop.f32.mrf.mxu0
          %7025 = vdwg.mxu0
          %7026 = vmatpush.bf16.msra.mxu0 %v6107
          %7027 = vmatpush.bf16.msra.mxu0 %v6099
          %7028 = vmatpush.bf16.msra.mxu0 %v6091
          %7029 = vmatpush.bf16.msra.mxu0 %v6083
          %7030 = vmatpush.bf16.msra.mxu0 %v6075
          %7031 = vmatpush.bf16.msra.mxu0 %v6067
          %7032 = vmatpush.bf16.msra.mxu0 %v6059
          %7033 = vmatpush.bf16.msra.mxu0 %v6051
          %7034 = vmatmul.bf16.gmra.mxu0 %v3660
          %v7035 = vpop.f32.mrf.mxu0
          %v7036 = vadd.f32 %v7023, %v7035
          %v7037 = vpop.f32.mrf.mxu0
          %7038 = vdwg.mxu0
          %7039 = vmatpush.bf16.msra.mxu0 %v6171
          %7040 = vmatpush.bf16.msra.mxu0 %v6163
          %7041 = vmatpush.bf16.msra.mxu0 %v6155
          %7042 = vmatpush.bf16.msra.mxu0 %v6147
          %7043 = vmatpush.bf16.msra.mxu0 %v6139
          %7044 = vmatpush.bf16.msra.mxu0 %v6131
          %7045 = vmatpush.bf16.msra.mxu0 %v6123
          %7046 = vmatpush.bf16.msra.mxu0 %v6115
          %7047 = vmatmul.bf16.gmra.mxu0 %v3661
          %v7048 = vpop.f32.mrf.mxu0
          %v7049 = vadd.f32 %v7036, %v7048
          %v7050 = vpop.f32.mrf.mxu0
          %7051 = vdwg.mxu0
          %7052 = vmatpush.bf16.msra.mxu0 %v6235
          %7053 = vmatpush.bf16.msra.mxu0 %v6227
          %7054 = vmatpush.bf16.msra.mxu0 %v6219
          %7055 = vmatpush.bf16.msra.mxu0 %v6211
          %7056 = vmatpush.bf16.msra.mxu0 %v6203
          %7057 = vmatpush.bf16.msra.mxu0 %v6195
          %7058 = vmatpush.bf16.msra.mxu0 %v6187
          %7059 = vmatpush.bf16.msra.mxu0 %v6179
          %7060 = vmatmul.bf16.gmra.mxu0 %v3662
          %v7061 = vpop.f32.mrf.mxu0
          %v7062 = vadd.f32 %v7049, %v7061
          %v7063 = vpop.f32.mrf.mxu0
          %7064 = vdwg.mxu0
          %7065 = vmatpush.bf16.msra.mxu0 %v5788
          %7066 = vmatpush.bf16.msra.mxu0 %v5780
          %7067 = vmatpush.bf16.msra.mxu0 %v5772
          %7068 = vmatpush.bf16.msra.mxu0 %v5764
          %7069 = vmatpush.bf16.msra.mxu0 %v5756
          %7070 = vmatpush.bf16.msra.mxu0 %v5748
          %7071 = vmatpush.bf16.msra.mxu0 %v5740
          %7072 = vmatpush.bf16.msra.mxu0 %v5732
          %7073 = vmatmul.bf16.gmra.mxu0 %v3655
          %v7074 = vpop.f32.mrf.mxu0
          %v7075 = vadd.f32 %v4180, %v7074
          %v7076 = vpop.f32.mrf.mxu0
          %7077 = vdwg.mxu0
          %7078 = vmatpush.bf16.msra.mxu0 %v5852
          %7079 = vmatpush.bf16.msra.mxu0 %v5844
          %7080 = vmatpush.bf16.msra.mxu0 %v5836
          %7081 = vmatpush.bf16.msra.mxu0 %v5828
          %7082 = vmatpush.bf16.msra.mxu0 %v5820
          %7083 = vmatpush.bf16.msra.mxu0 %v5812
          %7084 = vmatpush.bf16.msra.mxu0 %v5804
          %7085 = vmatpush.bf16.msra.mxu0 %v5796
          %7086 = vmatmul.bf16.gmra.mxu0 %v3656
          %v7087 = vpop.f32.mrf.mxu0
          %v7088 = vadd.f32 %v7075, %v7087
          %v7089 = vpop.f32.mrf.mxu0
          %7090 = vdwg.mxu0
          %7091 = vmatpush.bf16.msra.mxu0 %v5916
          %7092 = vmatpush.bf16.msra.mxu0 %v5908
          %7093 = vmatpush.bf16.msra.mxu0 %v5900
          %7094 = vmatpush.bf16.msra.mxu0 %v5892
          %7095 = vmatpush.bf16.msra.mxu0 %v5884
          %7096 = vmatpush.bf16.msra.mxu0 %v5876
          %7097 = vmatpush.bf16.msra.mxu0 %v5868
          %7098 = vmatpush.bf16.msra.mxu0 %v5860
          %7099 = vmatmul.bf16.gmra.mxu0 %v3657
          %v7100 = vpop.f32.mrf.mxu0
          %v7101 = vadd.f32 %v7088, %v7100
          %v7102 = vpop.f32.mrf.mxu0
          %7103 = vdwg.mxu0
          %7104 = vmatpush.bf16.msra.mxu0 %v5980
          %7105 = vmatpush.bf16.msra.mxu0 %v5972
          %7106 = vmatpush.bf16.msra.mxu0 %v5964
          %7107 = vmatpush.bf16.msra.mxu0 %v5956
          %7108 = vmatpush.bf16.msra.mxu0 %v5948
          %7109 = vmatpush.bf16.msra.mxu0 %v5940
          %7110 = vmatpush.bf16.msra.mxu0 %v5932
          %7111 = vmatpush.bf16.msra.mxu0 %v5924
          %7112 = vmatmul.bf16.gmra.mxu0 %v3658
          %v7113 = vpop.f32.mrf.mxu0
          %v7114 = vadd.f32 %v7101, %v7113
          %v7115 = vpop.f32.mrf.mxu0
          %7116 = vdwg.mxu0
          %7117 = vmatpush.bf16.msra.mxu0 %v6044
          %7118 = vmatpush.bf16.msra.mxu0 %v6036
          %7119 = vmatpush.bf16.msra.mxu0 %v6028
          %7120 = vmatpush.bf16.msra.mxu0 %v6020
          %7121 = vmatpush.bf16.msra.mxu0 %v6012
          %7122 = vmatpush.bf16.msra.mxu0 %v6004
          %7123 = vmatpush.bf16.msra.mxu0 %v5996
          %7124 = vmatpush.bf16.msra.mxu0 %v5988
          %7125 = vmatmul.bf16.gmra.mxu0 %v3659
          %v7126 = vpop.f32.mrf.mxu0
          %v7127 = vadd.f32 %v7114, %v7126
          %v7128 = vpop.f32.mrf.mxu0
          %7129 = vdwg.mxu0
          %7130 = vmatpush.bf16.msra.mxu0 %v6108
          %7131 = vmatpush.bf16.msra.mxu0 %v6100
          %7132 = vmatpush.bf16.msra.mxu0 %v6092
          %7133 = vmatpush.bf16.msra.mxu0 %v6084
          %7134 = vmatpush.bf16.msra.mxu0 %v6076
          %7135 = vmatpush.bf16.msra.mxu0 %v6068
          %7136 = vmatpush.bf16.msra.mxu0 %v6060
          %7137 = vmatpush.bf16.msra.mxu0 %v6052
          %7138 = vmatmul.bf16.gmra.mxu0 %v3660
          %v7139 = vpop.f32.mrf.mxu0
          %v7140 = vadd.f32 %v7127, %v7139
          %v7141 = vpop.f32.mrf.mxu0
          %7142 = vdwg.mxu0
          %7143 = vmatpush.bf16.msra.mxu0 %v6172
          %7144 = vmatpush.bf16.msra.mxu0 %v6164
          %7145 = vmatpush.bf16.msra.mxu0 %v6156
          %7146 = vmatpush.bf16.msra.mxu0 %v6148
          %7147 = vmatpush.bf16.msra.mxu0 %v6140
          %7148 = vmatpush.bf16.msra.mxu0 %v6132
          %7149 = vmatpush.bf16.msra.mxu0 %v6124
          %7150 = vmatpush.bf16.msra.mxu0 %v6116
          %7151 = vmatmul.bf16.gmra.mxu0 %v3661
          %v7152 = vpop.f32.mrf.mxu0
          %v7153 = vadd.f32 %v7140, %v7152
          %v7154 = vpop.f32.mrf.mxu0
          %7155 = vdwg.mxu0
          %7156 = vmatpush.bf16.msra.mxu0 %v6236
          %7157 = vmatpush.bf16.msra.mxu0 %v6228
          %7158 = vmatpush.bf16.msra.mxu0 %v6220
          %7159 = vmatpush.bf16.msra.mxu0 %v6212
          %7160 = vmatpush.bf16.msra.mxu0 %v6204
          %7161 = vmatpush.bf16.msra.mxu0 %v6196
          %7162 = vmatpush.bf16.msra.mxu0 %v6188
          %7163 = vmatpush.bf16.msra.mxu0 %v6180
          %7164 = vmatmul.bf16.gmra.mxu0 %v3662
          %v7165 = vpop.f32.mrf.mxu0
          %v7166 = vadd.f32 %v7153, %v7165
          %v7167 = vpop.f32.mrf.mxu0
          %7168 = vdwg.mxu0
          %7169 = vmatpush.bf16.msra.mxu0 %v5789
          %7170 = vmatpush.bf16.msra.mxu0 %v5781
          %7171 = vmatpush.bf16.msra.mxu0 %v5773
          %7172 = vmatpush.bf16.msra.mxu0 %v5765
          %7173 = vmatpush.bf16.msra.mxu0 %v5757
          %7174 = vmatpush.bf16.msra.mxu0 %v5749
          %7175 = vmatpush.bf16.msra.mxu0 %v5741
          %7176 = vmatpush.bf16.msra.mxu0 %v5733
          %7177 = vmatmul.bf16.gmra.mxu0 %v3655
          %v7178 = vpop.f32.mrf.mxu0
          %v7179 = vadd.f32 %v4181, %v7178
          %v7180 = vpop.f32.mrf.mxu0
          %7181 = vdwg.mxu0
          %7182 = vmatpush.bf16.msra.mxu0 %v5853
          %7183 = vmatpush.bf16.msra.mxu0 %v5845
          %7184 = vmatpush.bf16.msra.mxu0 %v5837
          %7185 = vmatpush.bf16.msra.mxu0 %v5829
          %7186 = vmatpush.bf16.msra.mxu0 %v5821
          %7187 = vmatpush.bf16.msra.mxu0 %v5813
          %7188 = vmatpush.bf16.msra.mxu0 %v5805
          %7189 = vmatpush.bf16.msra.mxu0 %v5797
          %7190 = vmatmul.bf16.gmra.mxu0 %v3656
          %v7191 = vpop.f32.mrf.mxu0
          %v7192 = vadd.f32 %v7179, %v7191
          %v7193 = vpop.f32.mrf.mxu0
          %7194 = vdwg.mxu0
          %7195 = vmatpush.bf16.msra.mxu0 %v5917
          %7196 = vmatpush.bf16.msra.mxu0 %v5909
          %7197 = vmatpush.bf16.msra.mxu0 %v5901
          %7198 = vmatpush.bf16.msra.mxu0 %v5893
          %7199 = vmatpush.bf16.msra.mxu0 %v5885
          %7200 = vmatpush.bf16.msra.mxu0 %v5877
          %7201 = vmatpush.bf16.msra.mxu0 %v5869
          %7202 = vmatpush.bf16.msra.mxu0 %v5861
          %7203 = vmatmul.bf16.gmra.mxu0 %v3657
          %v7204 = vpop.f32.mrf.mxu0
          %v7205 = vadd.f32 %v7192, %v7204
          %v7206 = vpop.f32.mrf.mxu0
          %7207 = vdwg.mxu0
          %7208 = vmatpush.bf16.msra.mxu0 %v5981
          %7209 = vmatpush.bf16.msra.mxu0 %v5973
          %7210 = vmatpush.bf16.msra.mxu0 %v5965
          %7211 = vmatpush.bf16.msra.mxu0 %v5957
          %7212 = vmatpush.bf16.msra.mxu0 %v5949
          %7213 = vmatpush.bf16.msra.mxu0 %v5941
          %7214 = vmatpush.bf16.msra.mxu0 %v5933
          %7215 = vmatpush.bf16.msra.mxu0 %v5925
          %7216 = vmatmul.bf16.gmra.mxu0 %v3658
          %v7217 = vpop.f32.mrf.mxu0
          %v7218 = vadd.f32 %v7205, %v7217
          %v7219 = vpop.f32.mrf.mxu0
          %7220 = vdwg.mxu0
          %7221 = vmatpush.bf16.msra.mxu0 %v6045
          %7222 = vmatpush.bf16.msra.mxu0 %v6037
          %7223 = vmatpush.bf16.msra.mxu0 %v6029
          %7224 = vmatpush.bf16.msra.mxu0 %v6021
          %7225 = vmatpush.bf16.msra.mxu0 %v6013
          %7226 = vmatpush.bf16.msra.mxu0 %v6005
          %7227 = vmatpush.bf16.msra.mxu0 %v5997
          %7228 = vmatpush.bf16.msra.mxu0 %v5989
          %7229 = vmatmul.bf16.gmra.mxu0 %v3659
          %v7230 = vpop.f32.mrf.mxu0
          %v7231 = vadd.f32 %v7218, %v7230
          %v7232 = vpop.f32.mrf.mxu0
          %7233 = vdwg.mxu0
          %7234 = vmatpush.bf16.msra.mxu0 %v6109
          %7235 = vmatpush.bf16.msra.mxu0 %v6101
          %7236 = vmatpush.bf16.msra.mxu0 %v6093
          %7237 = vmatpush.bf16.msra.mxu0 %v6085
          %7238 = vmatpush.bf16.msra.mxu0 %v6077
          %7239 = vmatpush.bf16.msra.mxu0 %v6069
          %7240 = vmatpush.bf16.msra.mxu0 %v6061
          %7241 = vmatpush.bf16.msra.mxu0 %v6053
          %7242 = vmatmul.bf16.gmra.mxu0 %v3660
          %v7243 = vpop.f32.mrf.mxu0
          %v7244 = vadd.f32 %v7231, %v7243
          %v7245 = vpop.f32.mrf.mxu0
          %7246 = vdwg.mxu0
          %7247 = vmatpush.bf16.msra.mxu0 %v6173
          %7248 = vmatpush.bf16.msra.mxu0 %v6165
          %7249 = vmatpush.bf16.msra.mxu0 %v6157
          %7250 = vmatpush.bf16.msra.mxu0 %v6149
          %7251 = vmatpush.bf16.msra.mxu0 %v6141
          %7252 = vmatpush.bf16.msra.mxu0 %v6133
          %7253 = vmatpush.bf16.msra.mxu0 %v6125
          %7254 = vmatpush.bf16.msra.mxu0 %v6117
          %7255 = vmatmul.bf16.gmra.mxu0 %v3661
          %v7256 = vpop.f32.mrf.mxu0
          %v7257 = vadd.f32 %v7244, %v7256
          %v7258 = vpop.f32.mrf.mxu0
          %7259 = vdwg.mxu0
          %7260 = vmatpush.bf16.msra.mxu0 %v6237
          %7261 = vmatpush.bf16.msra.mxu0 %v6229
          %7262 = vmatpush.bf16.msra.mxu0 %v6221
          %7263 = vmatpush.bf16.msra.mxu0 %v6213
          %7264 = vmatpush.bf16.msra.mxu0 %v6205
          %7265 = vmatpush.bf16.msra.mxu0 %v6197
          %7266 = vmatpush.bf16.msra.mxu0 %v6189
          %7267 = vmatpush.bf16.msra.mxu0 %v6181
          %7268 = vmatmul.bf16.gmra.mxu0 %v3662
          %v7269 = vpop.f32.mrf.mxu0
          %v7270 = vadd.f32 %v7257, %v7269
          %v7271 = vpop.f32.mrf.mxu0
          %7272 = vdwg.mxu0
          %7273 = vmatpush.bf16.msra.mxu0 %v5790
          %7274 = vmatpush.bf16.msra.mxu0 %v5782
          %7275 = vmatpush.bf16.msra.mxu0 %v5774
          %7276 = vmatpush.bf16.msra.mxu0 %v5766
          %7277 = vmatpush.bf16.msra.mxu0 %v5758
          %7278 = vmatpush.bf16.msra.mxu0 %v5750
          %7279 = vmatpush.bf16.msra.mxu0 %v5742
          %7280 = vmatpush.bf16.msra.mxu0 %v5734
          %7281 = vmatmul.bf16.gmra.mxu0 %v3655
          %v7282 = vpop.f32.mrf.mxu0
          %v7283 = vadd.f32 %v4182, %v7282
          %v7284 = vpop.f32.mrf.mxu0
          %7285 = vdwg.mxu0
          %7286 = vmatpush.bf16.msra.mxu0 %v5854
          %7287 = vmatpush.bf16.msra.mxu0 %v5846
          %7288 = vmatpush.bf16.msra.mxu0 %v5838
          %7289 = vmatpush.bf16.msra.mxu0 %v5830
          %7290 = vmatpush.bf16.msra.mxu0 %v5822
          %7291 = vmatpush.bf16.msra.mxu0 %v5814
          %7292 = vmatpush.bf16.msra.mxu0 %v5806
          %7293 = vmatpush.bf16.msra.mxu0 %v5798
          %7294 = vmatmul.bf16.gmra.mxu0 %v3656
          %v7295 = vpop.f32.mrf.mxu0
          %v7296 = vadd.f32 %v7283, %v7295
          %v7297 = vpop.f32.mrf.mxu0
          %7298 = vdwg.mxu0
          %7299 = vmatpush.bf16.msra.mxu0 %v5918
          %7300 = vmatpush.bf16.msra.mxu0 %v5910
          %7301 = vmatpush.bf16.msra.mxu0 %v5902
          %7302 = vmatpush.bf16.msra.mxu0 %v5894
          %7303 = vmatpush.bf16.msra.mxu0 %v5886
          %7304 = vmatpush.bf16.msra.mxu0 %v5878
          %7305 = vmatpush.bf16.msra.mxu0 %v5870
          %7306 = vmatpush.bf16.msra.mxu0 %v5862
          %7307 = vmatmul.bf16.gmra.mxu0 %v3657
          %v7308 = vpop.f32.mrf.mxu0
          %v7309 = vadd.f32 %v7296, %v7308
          %v7310 = vpop.f32.mrf.mxu0
          %7311 = vdwg.mxu0
          %7312 = vmatpush.bf16.msra.mxu0 %v5982
          %7313 = vmatpush.bf16.msra.mxu0 %v5974
          %7314 = vmatpush.bf16.msra.mxu0 %v5966
          %7315 = vmatpush.bf16.msra.mxu0 %v5958
          %7316 = vmatpush.bf16.msra.mxu0 %v5950
          %7317 = vmatpush.bf16.msra.mxu0 %v5942
          %7318 = vmatpush.bf16.msra.mxu0 %v5934
          %7319 = vmatpush.bf16.msra.mxu0 %v5926
          %7320 = vmatmul.bf16.gmra.mxu0 %v3658
          %v7321 = vpop.f32.mrf.mxu0
          %v7322 = vadd.f32 %v7309, %v7321
          %v7323 = vpop.f32.mrf.mxu0
          %7324 = vdwg.mxu0
          %7325 = vmatpush.bf16.msra.mxu0 %v6046
          %7326 = vmatpush.bf16.msra.mxu0 %v6038
          %7327 = vmatpush.bf16.msra.mxu0 %v6030
          %7328 = vmatpush.bf16.msra.mxu0 %v6022
          %7329 = vmatpush.bf16.msra.mxu0 %v6014
          %7330 = vmatpush.bf16.msra.mxu0 %v6006
          %7331 = vmatpush.bf16.msra.mxu0 %v5998
          %7332 = vmatpush.bf16.msra.mxu0 %v5990
          %7333 = vmatmul.bf16.gmra.mxu0 %v3659
          %v7334 = vpop.f32.mrf.mxu0
          %v7335 = vadd.f32 %v7322, %v7334
          %v7336 = vpop.f32.mrf.mxu0
          %7337 = vdwg.mxu0
          %7338 = vmatpush.bf16.msra.mxu0 %v6110
          %7339 = vmatpush.bf16.msra.mxu0 %v6102
          %7340 = vmatpush.bf16.msra.mxu0 %v6094
          %7341 = vmatpush.bf16.msra.mxu0 %v6086
          %7342 = vmatpush.bf16.msra.mxu0 %v6078
          %7343 = vmatpush.bf16.msra.mxu0 %v6070
          %7344 = vmatpush.bf16.msra.mxu0 %v6062
          %7345 = vmatpush.bf16.msra.mxu0 %v6054
          %7346 = vmatmul.bf16.gmra.mxu0 %v3660
          %v7347 = vpop.f32.mrf.mxu0
          %v7348 = vadd.f32 %v7335, %v7347
          %v7349 = vpop.f32.mrf.mxu0
          %7350 = vdwg.mxu0
          %7351 = vmatpush.bf16.msra.mxu0 %v6174
          %7352 = vmatpush.bf16.msra.mxu0 %v6166
          %7353 = vmatpush.bf16.msra.mxu0 %v6158
          %7354 = vmatpush.bf16.msra.mxu0 %v6150
          %7355 = vmatpush.bf16.msra.mxu0 %v6142
          %7356 = vmatpush.bf16.msra.mxu0 %v6134
          %7357 = vmatpush.bf16.msra.mxu0 %v6126
          %7358 = vmatpush.bf16.msra.mxu0 %v6118
          %7359 = vmatmul.bf16.gmra.mxu0 %v3661
          %v7360 = vpop.f32.mrf.mxu0
          %v7361 = vadd.f32 %v7348, %v7360
          %v7362 = vpop.f32.mrf.mxu0
          %7363 = vdwg.mxu0
          %7364 = vmatpush.bf16.msra.mxu0 %v6238
          %7365 = vmatpush.bf16.msra.mxu0 %v6230
          %7366 = vmatpush.bf16.msra.mxu0 %v6222
          %7367 = vmatpush.bf16.msra.mxu0 %v6214
          %7368 = vmatpush.bf16.msra.mxu0 %v6206
          %7369 = vmatpush.bf16.msra.mxu0 %v6198
          %7370 = vmatpush.bf16.msra.mxu0 %v6190
          %7371 = vmatpush.bf16.msra.mxu0 %v6182
          %7372 = vmatmul.bf16.gmra.mxu0 %v3662
          %v7373 = vpop.f32.mrf.mxu0
          %v7374 = vadd.f32 %v7361, %v7373
          %v7375 = vpop.f32.mrf.mxu0
          %7376 = vdwg.mxu0
          %7377 = vmatpush.bf16.msra.mxu0 %v5791
          %7378 = vmatpush.bf16.msra.mxu0 %v5783
          %7379 = vmatpush.bf16.msra.mxu0 %v5775
          %7380 = vmatpush.bf16.msra.mxu0 %v5767
          %7381 = vmatpush.bf16.msra.mxu0 %v5759
          %7382 = vmatpush.bf16.msra.mxu0 %v5751
          %7383 = vmatpush.bf16.msra.mxu0 %v5743
          %7384 = vmatpush.bf16.msra.mxu0 %v5735
          %7385 = vmatmul.bf16.gmra.mxu0 %v3655
          %v7386 = vpop.f32.mrf.mxu0
          %v7387 = vadd.f32 %v4183, %v7386
          %v7388 = vpop.f32.mrf.mxu0
          %7389 = vdwg.mxu0
          %7390 = vmatpush.bf16.msra.mxu0 %v5855
          %7391 = vmatpush.bf16.msra.mxu0 %v5847
          %7392 = vmatpush.bf16.msra.mxu0 %v5839
          %7393 = vmatpush.bf16.msra.mxu0 %v5831
          %7394 = vmatpush.bf16.msra.mxu0 %v5823
          %7395 = vmatpush.bf16.msra.mxu0 %v5815
          %7396 = vmatpush.bf16.msra.mxu0 %v5807
          %7397 = vmatpush.bf16.msra.mxu0 %v5799
          %7398 = vmatmul.bf16.gmra.mxu0 %v3656
          %v7399 = vpop.f32.mrf.mxu0
          %v7400 = vadd.f32 %v7387, %v7399
          %v7401 = vpop.f32.mrf.mxu0
          %7402 = vdwg.mxu0
          %7403 = vmatpush.bf16.msra.mxu0 %v5919
          %7404 = vmatpush.bf16.msra.mxu0 %v5911
          %7405 = vmatpush.bf16.msra.mxu0 %v5903
          %7406 = vmatpush.bf16.msra.mxu0 %v5895
          %7407 = vmatpush.bf16.msra.mxu0 %v5887
          %7408 = vmatpush.bf16.msra.mxu0 %v5879
          %7409 = vmatpush.bf16.msra.mxu0 %v5871
          %7410 = vmatpush.bf16.msra.mxu0 %v5863
          %7411 = vmatmul.bf16.gmra.mxu0 %v3657
          %v7412 = vpop.f32.mrf.mxu0
          %v7413 = vadd.f32 %v7400, %v7412
          %v7414 = vpop.f32.mrf.mxu0
          %7415 = vdwg.mxu0
          %7416 = vmatpush.bf16.msra.mxu0 %v5983
          %7417 = vmatpush.bf16.msra.mxu0 %v5975
          %7418 = vmatpush.bf16.msra.mxu0 %v5967
          %7419 = vmatpush.bf16.msra.mxu0 %v5959
          %7420 = vmatpush.bf16.msra.mxu0 %v5951
          %7421 = vmatpush.bf16.msra.mxu0 %v5943
          %7422 = vmatpush.bf16.msra.mxu0 %v5935
          %7423 = vmatpush.bf16.msra.mxu0 %v5927
          %7424 = vmatmul.bf16.gmra.mxu0 %v3658
          %v7425 = vpop.f32.mrf.mxu0
          %v7426 = vadd.f32 %v7413, %v7425
          %v7427 = vpop.f32.mrf.mxu0
          %7428 = vdwg.mxu0
          %7429 = vmatpush.bf16.msra.mxu0 %v6047
          %7430 = vmatpush.bf16.msra.mxu0 %v6039
          %7431 = vmatpush.bf16.msra.mxu0 %v6031
          %7432 = vmatpush.bf16.msra.mxu0 %v6023
          %7433 = vmatpush.bf16.msra.mxu0 %v6015
          %7434 = vmatpush.bf16.msra.mxu0 %v6007
          %7435 = vmatpush.bf16.msra.mxu0 %v5999
          %7436 = vmatpush.bf16.msra.mxu0 %v5991
          %7437 = vmatmul.bf16.gmra.mxu0 %v3659
          %v7438 = vpop.f32.mrf.mxu0
          %v7439 = vadd.f32 %v7426, %v7438
          %v7440 = vpop.f32.mrf.mxu0
          %7441 = vdwg.mxu0
          %7442 = vmatpush.bf16.msra.mxu0 %v6111
          %7443 = vmatpush.bf16.msra.mxu0 %v6103
          %7444 = vmatpush.bf16.msra.mxu0 %v6095
          %7445 = vmatpush.bf16.msra.mxu0 %v6087
          %7446 = vmatpush.bf16.msra.mxu0 %v6079
          %7447 = vmatpush.bf16.msra.mxu0 %v6071
          %7448 = vmatpush.bf16.msra.mxu0 %v6063
          %7449 = vmatpush.bf16.msra.mxu0 %v6055
          %7450 = vmatmul.bf16.gmra.mxu0 %v3660
          %v7451 = vpop.f32.mrf.mxu0
          %v7452 = vadd.f32 %v7439, %v7451
          %v7453 = vpop.f32.mrf.mxu0
          %7454 = vdwg.mxu0
          %7455 = vmatpush.bf16.msra.mxu0 %v6175
          %7456 = vmatpush.bf16.msra.mxu0 %v6167
          %7457 = vmatpush.bf16.msra.mxu0 %v6159
          %7458 = vmatpush.bf16.msra.mxu0 %v6151
          %7459 = vmatpush.bf16.msra.mxu0 %v6143
          %7460 = vmatpush.bf16.msra.mxu0 %v6135
          %7461 = vmatpush.bf16.msra.mxu0 %v6127
          %7462 = vmatpush.bf16.msra.mxu0 %v6119
          %7463 = vmatmul.bf16.gmra.mxu0 %v3661
          %v7464 = vpop.f32.mrf.mxu0
          %v7465 = vadd.f32 %v7452, %v7464
          %v7466 = vpop.f32.mrf.mxu0
          %7467 = vdwg.mxu0
          %7468 = vmatpush.bf16.msra.mxu0 %v6239
          %7469 = vmatpush.bf16.msra.mxu0 %v6231
          %7470 = vmatpush.bf16.msra.mxu0 %v6223
          %7471 = vmatpush.bf16.msra.mxu0 %v6215
          %7472 = vmatpush.bf16.msra.mxu0 %v6207
          %7473 = vmatpush.bf16.msra.mxu0 %v6199
          %7474 = vmatpush.bf16.msra.mxu0 %v6191
          %7475 = vmatpush.bf16.msra.mxu0 %v6183
          %7476 = vmatmul.bf16.gmra.mxu0 %v3662
          %v7477 = vpop.f32.mrf.mxu0
          %v7478 = vadd.f32 %v7465, %v7477
          %v7479 = vpop.f32.mrf.mxu0
          %7480 = vdwg.mxu0
          %7481 = vmatpush.bf16.msra.mxu0 %v5792
          %7482 = vmatpush.bf16.msra.mxu0 %v5784
          %7483 = vmatpush.bf16.msra.mxu0 %v5776
          %7484 = vmatpush.bf16.msra.mxu0 %v5768
          %7485 = vmatpush.bf16.msra.mxu0 %v5760
          %7486 = vmatpush.bf16.msra.mxu0 %v5752
          %7487 = vmatpush.bf16.msra.mxu0 %v5744
          %7488 = vmatpush.bf16.msra.mxu0 %v5736
          %7489 = vmatmul.bf16.gmra.mxu0 %v3655
          %v7490 = vpop.f32.mrf.mxu0
          %v7491 = vadd.f32 %v4184, %v7490
          %v7492 = vpop.f32.mrf.mxu0
          %7493 = vdwg.mxu0
          %7494 = vmatpush.bf16.msra.mxu0 %v5856
          %7495 = vmatpush.bf16.msra.mxu0 %v5848
          %7496 = vmatpush.bf16.msra.mxu0 %v5840
          %7497 = vmatpush.bf16.msra.mxu0 %v5832
          %7498 = vmatpush.bf16.msra.mxu0 %v5824
          %7499 = vmatpush.bf16.msra.mxu0 %v5816
          %7500 = vmatpush.bf16.msra.mxu0 %v5808
          %7501 = vmatpush.bf16.msra.mxu0 %v5800
          %7502 = vmatmul.bf16.gmra.mxu0 %v3656
          %v7503 = vpop.f32.mrf.mxu0
          %v7504 = vadd.f32 %v7491, %v7503
          %v7505 = vpop.f32.mrf.mxu0
          %7506 = vdwg.mxu0
          %7507 = vmatpush.bf16.msra.mxu0 %v5920
          %7508 = vmatpush.bf16.msra.mxu0 %v5912
          %7509 = vmatpush.bf16.msra.mxu0 %v5904
          %7510 = vmatpush.bf16.msra.mxu0 %v5896
          %7511 = vmatpush.bf16.msra.mxu0 %v5888
          %7512 = vmatpush.bf16.msra.mxu0 %v5880
          %7513 = vmatpush.bf16.msra.mxu0 %v5872
          %7514 = vmatpush.bf16.msra.mxu0 %v5864
          %7515 = vmatmul.bf16.gmra.mxu0 %v3657
          %v7516 = vpop.f32.mrf.mxu0
          %v7517 = vadd.f32 %v7504, %v7516
          %v7518 = vpop.f32.mrf.mxu0
          %7519 = vdwg.mxu0
          %7520 = vmatpush.bf16.msra.mxu0 %v5984
          %7521 = vmatpush.bf16.msra.mxu0 %v5976
          %7522 = vmatpush.bf16.msra.mxu0 %v5968
          %7523 = vmatpush.bf16.msra.mxu0 %v5960
          %7524 = vmatpush.bf16.msra.mxu0 %v5952
          %7525 = vmatpush.bf16.msra.mxu0 %v5944
          %7526 = vmatpush.bf16.msra.mxu0 %v5936
          %7527 = vmatpush.bf16.msra.mxu0 %v5928
          %7528 = vmatmul.bf16.gmra.mxu0 %v3658
          %v7529 = vpop.f32.mrf.mxu0
          %v7530 = vadd.f32 %v7517, %v7529
          %v7531 = vpop.f32.mrf.mxu0
          %7532 = vdwg.mxu0
          %7533 = vmatpush.bf16.msra.mxu0 %v6048
          %7534 = vmatpush.bf16.msra.mxu0 %v6040
          %7535 = vmatpush.bf16.msra.mxu0 %v6032
          %7536 = vmatpush.bf16.msra.mxu0 %v6024
          %7537 = vmatpush.bf16.msra.mxu0 %v6016
          %7538 = vmatpush.bf16.msra.mxu0 %v6008
          %7539 = vmatpush.bf16.msra.mxu0 %v6000
          %7540 = vmatpush.bf16.msra.mxu0 %v5992
          %7541 = vmatmul.bf16.gmra.mxu0 %v3659
          %v7542 = vpop.f32.mrf.mxu0
          %v7543 = vadd.f32 %v7530, %v7542
          %v7544 = vpop.f32.mrf.mxu0
          %7545 = vdwg.mxu0
          %7546 = vmatpush.bf16.msra.mxu0 %v6112
          %7547 = vmatpush.bf16.msra.mxu0 %v6104
          %7548 = vmatpush.bf16.msra.mxu0 %v6096
          %7549 = vmatpush.bf16.msra.mxu0 %v6088
          %7550 = vmatpush.bf16.msra.mxu0 %v6080
          %7551 = vmatpush.bf16.msra.mxu0 %v6072
          %7552 = vmatpush.bf16.msra.mxu0 %v6064
          %7553 = vmatpush.bf16.msra.mxu0 %v6056
          %7554 = vmatmul.bf16.gmra.mxu0 %v3660
          %v7555 = vpop.f32.mrf.mxu0
          %v7556 = vadd.f32 %v7543, %v7555
          %v7557 = vpop.f32.mrf.mxu0
          %7558 = vdwg.mxu0
          %7559 = vmatpush.bf16.msra.mxu0 %v6176
          %7560 = vmatpush.bf16.msra.mxu0 %v6168
          %7561 = vmatpush.bf16.msra.mxu0 %v6160
          %7562 = vmatpush.bf16.msra.mxu0 %v6152
          %7563 = vmatpush.bf16.msra.mxu0 %v6144
          %7564 = vmatpush.bf16.msra.mxu0 %v6136
          %7565 = vmatpush.bf16.msra.mxu0 %v6128
          %7566 = vmatpush.bf16.msra.mxu0 %v6120
          %7567 = vmatmul.bf16.gmra.mxu0 %v3661
          %v7568 = vpop.f32.mrf.mxu0
          %v7569 = vadd.f32 %v7556, %v7568
          %v7570 = vpop.f32.mrf.mxu0
          %7571 = vdwg.mxu0
          %7572 = vmatpush.bf16.msra.mxu0 %v6240
          %7573 = vmatpush.bf16.msra.mxu0 %v6232
          %7574 = vmatpush.bf16.msra.mxu0 %v6224
          %7575 = vmatpush.bf16.msra.mxu0 %v6216
          %7576 = vmatpush.bf16.msra.mxu0 %v6208
          %7577 = vmatpush.bf16.msra.mxu0 %v6200
          %7578 = vmatpush.bf16.msra.mxu0 %v6192
          %7579 = vmatpush.bf16.msra.mxu0 %v6184
          %7580 = vmatmul.bf16.gmra.mxu0 %v3662
          %v7581 = vpop.f32.mrf.mxu0
          %v7582 = vadd.f32 %v7569, %v7581
          %v7583 = vpop.f32.mrf.mxu0
          %7584 = vdwg.mxu0
          %v7585 = vpack.c.bf16 %v6958, %v6854
          %v7586 = vpack.c.bf16 %v7166, %v7062
          %v7587 = vpack.c.bf16 %v7374, %v7270
          %v7588 = vpack.c.bf16 %v7582, %v7478
          %s7589 = smul.u32 %s35, 8
          %s7590 = smul.addr %s7589, 4
          %s7591 = scalar_lea.vmem [#allocation2], %s7590
          %7592 = vst [vmem:[%s7591] sm:$0xff] %v7585
          %7593 = vst [vmem:[%s7591 + $0x8] sm:$0xff] %v7586
          %7594 = vst [vmem:[%s7591 + $0x10] sm:$0xff] %v7587
          %7595 = vst [vmem:[%s7591 + $0x18] sm:$0xff] %v7588
          %p7596 = scmp.eq.s32.totalorder %s35, 0
          // Predicated region
          $region97: #{tpu_custom_call.1} parent=95 // pred_check
            %p7597 = pneg %p7596
          $region98: #{tpu_custom_call.1} parent=95 // pred_check_branch
            %7599 = sbr.rel (%p7597) target = $region100
          $region99: #{tpu_custom_call.1} parent=95 // pred_region
            %7600 = vst [vmem:[#allocation3] sm:$0xff] 0.0
            %7601 = vst [vmem:[#allocation4] sm:$0xff] 0.0
          $region100: #{tpu_custom_call.1} parent=95 // pred_fallthru
            _
          %v7602 = vld [vmem:[#allocation3] sm:$0xff]
          %v7603 = vrot.slane %v6854, 4
          %v7604 = vadd.f32 %v6854, %v7603
          %v7605 = vrot.slane %v7604, 2
          %v7606 = vadd.f32 %v7604, %v7605
          %v7607 = vrot.slane %v7606, 1
          %v7608 = vadd.f32 %v7606, %v7607
          %v7609 = vrot.slane %v6958, 4
          %v7610 = vadd.f32 %v6958, %v7609
          %v7611 = vrot.slane %v7610, 2
          %v7612 = vadd.f32 %v7610, %v7611
          %v7613 = vrot.slane %v7612, 1
          %v7614 = vadd.f32 %v7612, %v7613
          %v7615 = vrot.slane %v7062, 4
          %v7616 = vadd.f32 %v7062, %v7615
          %v7617 = vrot.slane %v7616, 2
          %v7618 = vadd.f32 %v7616, %v7617
          %v7619 = vrot.slane %v7618, 1
          %v7620 = vadd.f32 %v7618, %v7619
          %v7621 = vrot.slane %v7166, 4
          %v7622 = vadd.f32 %v7166, %v7621
          %v7623 = vrot.slane %v7622, 2
          %v7624 = vadd.f32 %v7622, %v7623
          %v7625 = vrot.slane %v7624, 1
          %v7626 = vadd.f32 %v7624, %v7625
          %v7627 = vrot.slane %v7270, 4
          %v7628 = vadd.f32 %v7270, %v7627
          %v7629 = vrot.slane %v7628, 2
          %v7630 = vadd.f32 %v7628, %v7629
          %v7631 = vrot.slane %v7630, 1
          %v7632 = vadd.f32 %v7630, %v7631
          %v7633 = vrot.slane %v7374, 4
          %v7634 = vadd.f32 %v7374, %v7633
          %v7635 = vrot.slane %v7634, 2
          %v7636 = vadd.f32 %v7634, %v7635
          %v7637 = vrot.slane %v7636, 1
          %v7638 = vadd.f32 %v7636, %v7637
          %v7639 = vrot.slane %v7478, 4
          %v7640 = vadd.f32 %v7478, %v7639
          %v7641 = vrot.slane %v7640, 2
          %v7642 = vadd.f32 %v7640, %v7641
          %v7643 = vrot.slane %v7642, 1
          %v7644 = vadd.f32 %v7642, %v7643
          %v7645 = vrot.slane %v7582, 4
          %v7646 = vadd.f32 %v7582, %v7645
          %v7647 = vrot.slane %v7646, 2
          %v7648 = vadd.f32 %v7646, %v7647
          %v7649 = vrot.slane %v7648, 1
          %v7650 = vadd.f32 %v7648, %v7649
          %v7659 = vrot.slane %v7614, 7
          %v7660 = vrot.slane %v7620, 6
          %v7661 = vrot.slane %v7626, 5
          %v7662 = vrot.slane %v7632, 4
          %v7663 = vrot.slane %v7638, 3
          %v7664 = vrot.slane %v7644, 2
          %v7665 = vrot.slane %v7650, 1
          %vm7666 = vcmask 1040384
          %v7667 = vsel %vm7666, %v7608, %v7659
          %vm7668 = vcmask 1042434
          %v7669 = vsel %vm7668, %v7660, %v7661
          %vm7670 = vcmask 1041408
          %v7671 = vsel %vm7670, %v7667, %v7669
          %vm7672 = vcmask 1044484
          %v7673 = vsel %vm7672, %v7662, %v7663
          %vm7674 = vcmask 1046534
          %v7675 = vsel %vm7674, %v7664, %v7665
          %vm7676 = vcmask 1045508
          %v7677 = vsel %vm7676, %v7673, %v7675
          %vm7678 = vcmask 1043456
          %v7679 = vsel %vm7678, %v7671, %v7677
          %v7681 = vadd.f32 %v7602, %v7679
          %7682 = vst [vmem:[#allocation3] sm:$0xff] %v7681
          %v7683 = vld [vmem:[#allocation4] sm:$0xff]
          %v7684 = vmul.f32 %v6854, %v6854
          %v7685 = vmul.f32 %v6958, %v6958
          %v7686 = vmul.f32 %v7062, %v7062
          %v7687 = vmul.f32 %v7166, %v7166
          %v7688 = vmul.f32 %v7270, %v7270
          %v7689 = vmul.f32 %v7374, %v7374
          %v7690 = vmul.f32 %v7478, %v7478
          %v7691 = vmul.f32 %v7582, %v7582
          %v7692 = vrot.slane %v7684, 4
          %v7693 = vadd.f32 %v7684, %v7692
          %v7694 = vrot.slane %v7693, 2
          %v7695 = vadd.f32 %v7693, %v7694
          %v7696 = vrot.slane %v7695, 1
          %v7697 = vadd.f32 %v7695, %v7696
          %v7698 = vrot.slane %v7685, 4
          %v7699 = vadd.f32 %v7685, %v7698
          %v7700 = vrot.slane %v7699, 2
          %v7701 = vadd.f32 %v7699, %v7700
          %v7702 = vrot.slane %v7701, 1
          %v7703 = vadd.f32 %v7701, %v7702
          %v7704 = vrot.slane %v7686, 4
          %v7705 = vadd.f32 %v7686, %v7704
          %v7706 = vrot.slane %v7705, 2
          %v7707 = vadd.f32 %v7705, %v7706
          %v7708 = vrot.slane %v7707, 1
          %v7709 = vadd.f32 %v7707, %v7708
          %v7710 = vrot.slane %v7687, 4
          %v7711 = vadd.f32 %v7687, %v7710
          %v7712 = vrot.slane %v7711, 2
          %v7713 = vadd.f32 %v7711, %v7712
          %v7714 = vrot.slane %v7713, 1
          %v7715 = vadd.f32 %v7713, %v7714
          %v7716 = vrot.slane %v7688, 4
          %v7717 = vadd.f32 %v7688, %v7716
          %v7718 = vrot.slane %v7717, 2
          %v7719 = vadd.f32 %v7717, %v7718
          %v7720 = vrot.slane %v7719, 1
          %v7721 = vadd.f32 %v7719, %v7720
          %v7722 = vrot.slane %v7689, 4
          %v7723 = vadd.f32 %v7689, %v7722
          %v7724 = vrot.slane %v7723, 2
          %v7725 = vadd.f32 %v7723, %v7724
          %v7726 = vrot.slane %v7725, 1
          %v7727 = vadd.f32 %v7725, %v7726
          %v7728 = vrot.slane %v7690, 4
          %v7729 = vadd.f32 %v7690, %v7728
          %v7730 = vrot.slane %v7729, 2
          %v7731 = vadd.f32 %v7729, %v7730
          %v7732 = vrot.slane %v7731, 1
          %v7733 = vadd.f32 %v7731, %v7732
          %v7734 = vrot.slane %v7691, 4
          %v7735 = vadd.f32 %v7691, %v7734
          %v7736 = vrot.slane %v7735, 2
          %v7737 = vadd.f32 %v7735, %v7736
          %v7738 = vrot.slane %v7737, 1
          %v7739 = vadd.f32 %v7737, %v7738
          %v7748 = vrot.slane %v7703, 7
          %v7749 = vrot.slane %v7709, 6
          %v7750 = vrot.slane %v7715, 5
          %v7751 = vrot.slane %v7721, 4
          %v7752 = vrot.slane %v7727, 3
          %v7753 = vrot.slane %v7733, 2
          %v7754 = vrot.slane %v7739, 1
          %v7755 = vsel %vm7666, %v7697, %v7748
          %v7756 = vsel %vm7668, %v7749, %v7750
          %v7757 = vsel %vm7670, %v7755, %v7756
          %v7758 = vsel %vm7672, %v7751, %v7752
          %v7759 = vsel %vm7674, %v7753, %v7754
          %v7760 = vsel %vm7676, %v7758, %v7759
          %v7761 = vsel %vm7678, %v7757, %v7760
          %v7763 = vadd.f32 %v7683, %v7761
          %7764 = vst [vmem:[#allocation4] sm:$0xff] %v7763
        $region96: #{tpu_custom_call.1} parent=55 // pred_fallthru
          _
        %p7765 = scmp.eq.s32.totalorder %s34, 1
        // Predicated region
        $region101: #{tpu_custom_call.1} parent=55 // pred_check
          %p7766 = pneg %p7765
        $region102: #{tpu_custom_call.1} parent=55 // pred_check_branch
          %7768 = sbr.rel (%p7766) target = $region104
        $region103: #{tpu_custom_call.1} parent=55 // pred_region
          %v7769 = vld [vmem:[#allocation3] sm:$0xff]
          %v7770 = vmul.f32 %v7769, 0.125
          %v7771 = vld [vmem:[#allocation4] sm:$0xff]
          %v7772 = vmul.f32 %v7771, 0.125
          %v7773 = vmul.f32 %v7770, %v7770
          %v7774 = vsub.f32 %v7772, %v7773
          %v7775 = vmax.f32 %v7774, 0.0
          %v7776 = vld [vmem:[#allocation14] sm:$0xff]
          %v7777 = vadd.f32 %v7775, 1e-05
          %v7778 = vrsqrt.pop %v7777
          %v7779 = vmul.f32 %v7778, %v7777
          %v7780 = vmul.f32 %v7779, %v7778
          %v7781 = vmul.f32 0.5, %v7780
          %v7782 = vsub.f32 1.5, %v7781
          %v7783 = vmul.f32 %v7778, %v7782
          %vm7784 = vweird.f32 %v7777
          %vm7785 = vweird.f32 %v7778
          %vm7786 = vmor %vm7784, %vm7785
          %v7787 = vsel %vm7786, %v7778, %v7783
          %v7788 = vmul.f32 %v7776, %v7787
          %v7789 = vld [vmem:[#allocation16] sm:$0xff]
          %v7790 = vmul.f32 %v7770, %v7788
          %v7791 = vsub.f32 %v7789, %v7790
          %s7792 = smul.u32 %s35, 8
          %s7793 = smul.addr %s7792, 4
          %s7794 = scalar_lea.vmem [#allocation2], %s7793
          %v7795 = vld [vmem:[%s7794] sm:$0xff]
          %v7796 = vld [vmem:[%s7794 + $0x8] sm:$0xff]
          %v7797 = vld [vmem:[%s7794 + $0x10] sm:$0xff]
          %v7798 = vld [vmem:[%s7794 + $0x18] sm:$0xff]
          %v7799 = vunpack.c.l.bf16 %v7795
          %v7800 = vunpack.c.h.bf16 %v7795
          %v7801 = vunpack.c.l.bf16 %v7796
          %v7802 = vunpack.c.h.bf16 %v7796
          %v7803 = vunpack.c.l.bf16 %v7797
          %v7804 = vunpack.c.h.bf16 %v7797
          %v7805 = vunpack.c.l.bf16 %v7798
          %v7806 = vunpack.c.h.bf16 %v7798
          %v7808 = vperm.slane %v7788, 0
          %v7809 = vperm.slane %v7788, 1
          %v7810 = vperm.slane %v7788, 2
          %v7811 = vperm.slane %v7788, 3
          %v7812 = vperm.slane %v7788, 4
          %v7813 = vperm.slane %v7788, 5
          %v7814 = vperm.slane %v7788, 6
          %v7815 = vperm.slane %v7788, 7
          %v7824 = vmul.f32 %v7799, %v7808
          %v7825 = vmul.f32 %v7800, %v7809
          %v7826 = vmul.f32 %v7801, %v7810
          %v7827 = vmul.f32 %v7802, %v7811
          %v7828 = vmul.f32 %v7803, %v7812
          %v7829 = vmul.f32 %v7804, %v7813
          %v7830 = vmul.f32 %v7805, %v7814
          %v7831 = vmul.f32 %v7806, %v7815
          %v7833 = vperm.slane %v7791, 0
          %v7834 = vperm.slane %v7791, 1
          %v7835 = vperm.slane %v7791, 2
          %v7836 = vperm.slane %v7791, 3
          %v7837 = vperm.slane %v7791, 4
          %v7838 = vperm.slane %v7791, 5
          %v7839 = vperm.slane %v7791, 6
          %v7840 = vperm.slane %v7791, 7
          %v7849 = vadd.f32 %v7824, %v7833
          %v7850 = vadd.f32 %v7825, %v7834
          %v7851 = vadd.f32 %v7826, %v7835
          %v7852 = vadd.f32 %v7827, %v7836
          %v7853 = vadd.f32 %v7828, %v7837
          %v7854 = vadd.f32 %v7829, %v7838
          %v7855 = vadd.f32 %v7830, %v7839
          %v7856 = vadd.f32 %v7831, %v7840
          %vm7857 = vcmp.gt.f32.partialorder %v7849, 0.0
          %vm7858 = vcmp.gt.f32.partialorder %v7850, 0.0
          %vm7859 = vcmp.gt.f32.partialorder %v7851, 0.0
          %vm7860 = vcmp.gt.f32.partialorder %v7852, 0.0
          %vm7861 = vcmp.gt.f32.partialorder %v7853, 0.0
          %vm7862 = vcmp.gt.f32.partialorder %v7854, 0.0
          %vm7863 = vcmp.gt.f32.partialorder %v7855, 0.0
          %vm7864 = vcmp.gt.f32.partialorder %v7856, 0.0
          %v7865 = vmul.f32 %v7849, 0.2
          %v7866 = vmul.f32 %v7850, 0.2
          %v7867 = vmul.f32 %v7851, 0.2
          %v7868 = vmul.f32 %v7852, 0.2
          %v7869 = vmul.f32 %v7853, 0.2
          %v7870 = vmul.f32 %v7854, 0.2
          %v7871 = vmul.f32 %v7855, 0.2
          %v7872 = vmul.f32 %v7856, 0.2
          %v7873 = vsel %vm7857, %v7849, %v7865
          %v7874 = vsel %vm7858, %v7850, %v7866
          %v7875 = vsel %vm7859, %v7851, %v7867
          %v7876 = vsel %vm7860, %v7852, %v7868
          %v7877 = vsel %vm7861, %v7853, %v7869
          %v7878 = vsel %vm7862, %v7854, %v7870
          %v7879 = vsel %vm7863, %v7855, %v7871
          %v7880 = vsel %vm7864, %v7856, %v7872
          %v7881 = vpack.c.bf16 %v7873, %v7873
          %v7882 = vpack.c.bf16 %v7874, %v7874
          %v7883 = vpack.c.bf16 %v7875, %v7875
          %v7884 = vpack.c.bf16 %v7876, %v7876
          %v7885 = vpack.c.bf16 %v7877, %v7877
          %v7886 = vpack.c.bf16 %v7878, %v7878
          %v7887 = vpack.c.bf16 %v7879, %v7879
          %v7888 = vpack.c.bf16 %v7880, %v7880
          %v7889 = vld [vmem:[#allocation17] sm:$0xf]
          %v7890 = vld [vmem:[#allocation17 + $0x4] sm:$0xf]
          %v7891 = vld [vmem:[#allocation17 + $0x8] sm:$0xf]
          %v7892 = vld [vmem:[#allocation17 + $0xc] sm:$0xf]
          %v7893 = vld [vmem:[#allocation17 + $0x10] sm:$0xf]
          %v7894 = vld [vmem:[#allocation17 + $0x14] sm:$0xf]
          %v7895 = vld [vmem:[#allocation17 + $0x18] sm:$0xf]
          %v7896 = vld [vmem:[#allocation17 + $0x1c] sm:$0xf]
          %v7897 = vld [vmem:[#allocation17 + $0x20] sm:$0xf]
          %v7898 = vld [vmem:[#allocation17 + $0x24] sm:$0xf]
          %v7899 = vld [vmem:[#allocation17 + $0x28] sm:$0xf]
          %v7900 = vld [vmem:[#allocation17 + $0x2c] sm:$0xf]
          %v7901 = vld [vmem:[#allocation17 + $0x30] sm:$0xf]
          %v7902 = vld [vmem:[#allocation17 + $0x34] sm:$0xf]
          %v7903 = vld [vmem:[#allocation17 + $0x38] sm:$0xf]
          %v7904 = vld [vmem:[#allocation17 + $0x3c] sm:$0xf]
          %v7905 = vld [vmem:[#allocation17 + $0x40] sm:$0xf]
          %v7906 = vld [vmem:[#allocation17 + $0x44] sm:$0xf]
          %v7907 = vld [vmem:[#allocation17 + $0x48] sm:$0xf]
          %v7908 = vld [vmem:[#allocation17 + $0x4c] sm:$0xf]
          %v7909 = vld [vmem:[#allocation17 + $0x50] sm:$0xf]
          %v7910 = vld [vmem:[#allocation17 + $0x54] sm:$0xf]
          %v7911 = vld [vmem:[#allocation17 + $0x58] sm:$0xf]
          %v7912 = vld [vmem:[#allocation17 + $0x5c] sm:$0xf]
          %v7913 = vld [vmem:[#allocation17 + $0x60] sm:$0xf]
          %v7914 = vld [vmem:[#allocation17 + $0x64] sm:$0xf]
          %v7915 = vld [vmem:[#allocation17 + $0x68] sm:$0xf]
          %v7916 = vld [vmem:[#allocation17 + $0x6c] sm:$0xf]
          %v7917 = vld [vmem:[#allocation17 + $0x70] sm:$0xf]
          %v7918 = vld [vmem:[#allocation17 + $0x74] sm:$0xf]
          %v7919 = vld [vmem:[#allocation17 + $0x78] sm:$0xf]
          %v7920 = vld [vmem:[#allocation17 + $0x7c] sm:$0xf]
          %v7921 = vld [vmem:[#allocation17 + $0x80] sm:$0xf]
          %v7922 = vld [vmem:[#allocation17 + $0x84] sm:$0xf]
          %v7923 = vld [vmem:[#allocation17 + $0x88] sm:$0xf]
          %v7924 = vld [vmem:[#allocation17 + $0x8c] sm:$0xf]
          %v7925 = vld [vmem:[#allocation17 + $0x90] sm:$0xf]
          %v7926 = vld [vmem:[#allocation17 + $0x94] sm:$0xf]
          %v7927 = vld [vmem:[#allocation17 + $0x98] sm:$0xf]
          %v7928 = vld [vmem:[#allocation17 + $0x9c] sm:$0xf]
          %v7929 = vld [vmem:[#allocation17 + $0xa0] sm:$0xf]
          %v7930 = vld [vmem:[#allocation17 + $0xa4] sm:$0xf]
          %v7931 = vld [vmem:[#allocation17 + $0xa8] sm:$0xf]
          %v7932 = vld [vmem:[#allocation17 + $0xac] sm:$0xf]
          %v7933 = vld [vmem:[#allocation17 + $0xb0] sm:$0xf]
          %v7934 = vld [vmem:[#allocation17 + $0xb4] sm:$0xf]
          %v7935 = vld [vmem:[#allocation17 + $0xb8] sm:$0xf]
          %v7936 = vld [vmem:[#allocation17 + $0xbc] sm:$0xf]
          %v7937 = vld [vmem:[#allocation17 + $0xc0] sm:$0xf]
          %v7938 = vld [vmem:[#allocation17 + $0xc4] sm:$0xf]
          %v7939 = vld [vmem:[#allocation17 + $0xc8] sm:$0xf]
          %v7940 = vld [vmem:[#allocation17 + $0xcc] sm:$0xf]
          %v7941 = vld [vmem:[#allocation17 + $0xd0] sm:$0xf]
          %v7942 = vld [vmem:[#allocation17 + $0xd4] sm:$0xf]
          %v7943 = vld [vmem:[#allocation17 + $0xd8] sm:$0xf]
          %v7944 = vld [vmem:[#allocation17 + $0xdc] sm:$0xf]
          %v7945 = vld [vmem:[#allocation17 + $0xe0] sm:$0xf]
          %v7946 = vld [vmem:[#allocation17 + $0xe4] sm:$0xf]
          %v7947 = vld [vmem:[#allocation17 + $0xe8] sm:$0xf]
          %v7948 = vld [vmem:[#allocation17 + $0xec] sm:$0xf]
          %v7949 = vld [vmem:[#allocation17 + $0xf0] sm:$0xf]
          %v7950 = vld [vmem:[#allocation17 + $0xf4] sm:$0xf]
          %v7951 = vld [vmem:[#allocation17 + $0xf8] sm:$0xf]
          %v7952 = vld [vmem:[#allocation17 + $0xfc] sm:$0xf]
          %v7953 = vld [vmem:[#allocation17 + $0x100] sm:$0xf]
          %v7954 = vld [vmem:[#allocation17 + $0x104] sm:$0xf]
          %v7955 = vld [vmem:[#allocation17 + $0x108] sm:$0xf]
          %v7956 = vld [vmem:[#allocation17 + $0x10c] sm:$0xf]
          %v7957 = vld [vmem:[#allocation17 + $0x110] sm:$0xf]
          %v7958 = vld [vmem:[#allocation17 + $0x114] sm:$0xf]
          %v7959 = vld [vmem:[#allocation17 + $0x118] sm:$0xf]
          %v7960 = vld [vmem:[#allocation17 + $0x11c] sm:$0xf]
          %v7961 = vld [vmem:[#allocation17 + $0x120] sm:$0xf]
          %v7962 = vld [vmem:[#allocation17 + $0x124] sm:$0xf]
          %v7963 = vld [vmem:[#allocation17 + $0x128] sm:$0xf]
          %v7964 = vld [vmem:[#allocation17 + $0x12c] sm:$0xf]
          %v7965 = vld [vmem:[#allocation17 + $0x130] sm:$0xf]
          %v7966 = vld [vmem:[#allocation17 + $0x134] sm:$0xf]
          %v7967 = vld [vmem:[#allocation17 + $0x138] sm:$0xf]
          %v7968 = vld [vmem:[#allocation17 + $0x13c] sm:$0xf]
          %v7969 = vld [vmem:[#allocation17 + $0x140] sm:$0xf]
          %v7970 = vld [vmem:[#allocation17 + $0x144] sm:$0xf]
          %v7971 = vld [vmem:[#allocation17 + $0x148] sm:$0xf]
          %v7972 = vld [vmem:[#allocation17 + $0x14c] sm:$0xf]
          %v7973 = vld [vmem:[#allocation17 + $0x150] sm:$0xf]
          %v7974 = vld [vmem:[#allocation17 + $0x154] sm:$0xf]
          %v7975 = vld [vmem:[#allocation17 + $0x158] sm:$0xf]
          %v7976 = vld [vmem:[#allocation17 + $0x15c] sm:$0xf]
          %v7977 = vld [vmem:[#allocation17 + $0x160] sm:$0xf]
          %v7978 = vld [vmem:[#allocation17 + $0x164] sm:$0xf]
          %v7979 = vld [vmem:[#allocation17 + $0x168] sm:$0xf]
          %v7980 = vld [vmem:[#allocation17 + $0x16c] sm:$0xf]
          %v7981 = vld [vmem:[#allocation17 + $0x170] sm:$0xf]
          %v7982 = vld [vmem:[#allocation17 + $0x174] sm:$0xf]
          %v7983 = vld [vmem:[#allocation17 + $0x178] sm:$0xf]
          %v7984 = vld [vmem:[#allocation17 + $0x17c] sm:$0xf]
          %v7985 = vld [vmem:[#allocation17 + $0x180] sm:$0xf]
          %v7986 = vld [vmem:[#allocation17 + $0x184] sm:$0xf]
          %v7987 = vld [vmem:[#allocation17 + $0x188] sm:$0xf]
          %v7988 = vld [vmem:[#allocation17 + $0x18c] sm:$0xf]
          %v7989 = vld [vmem:[#allocation17 + $0x190] sm:$0xf]
          %v7990 = vld [vmem:[#allocation17 + $0x194] sm:$0xf]
          %v7991 = vld [vmem:[#allocation17 + $0x198] sm:$0xf]
          %v7992 = vld [vmem:[#allocation17 + $0x19c] sm:$0xf]
          %v7993 = vld [vmem:[#allocation17 + $0x1a0] sm:$0xf]
          %v7994 = vld [vmem:[#allocation17 + $0x1a4] sm:$0xf]
          %v7995 = vld [vmem:[#allocation17 + $0x1a8] sm:$0xf]
          %v7996 = vld [vmem:[#allocation17 + $0x1ac] sm:$0xf]
          %v7997 = vld [vmem:[#allocation17 + $0x1b0] sm:$0xf]
          %v7998 = vld [vmem:[#allocation17 + $0x1b4] sm:$0xf]
          %v7999 = vld [vmem:[#allocation17 + $0x1b8] sm:$0xf]
          %v8000 = vld [vmem:[#allocation17 + $0x1bc] sm:$0xf]
          %v8001 = vld [vmem:[#allocation17 + $0x1c0] sm:$0xf]
          %v8002 = vld [vmem:[#allocation17 + $0x1c4] sm:$0xf]
          %v8003 = vld [vmem:[#allocation17 + $0x1c8] sm:$0xf]
          %v8004 = vld [vmem:[#allocation17 + $0x1cc] sm:$0xf]
          %v8005 = vld [vmem:[#allocation17 + $0x1d0] sm:$0xf]
          %v8006 = vld [vmem:[#allocation17 + $0x1d4] sm:$0xf]
          %v8007 = vld [vmem:[#allocation17 + $0x1d8] sm:$0xf]
          %v8008 = vld [vmem:[#allocation17 + $0x1dc] sm:$0xf]
          %v8009 = vld [vmem:[#allocation17 + $0x1e0] sm:$0xf]
          %v8010 = vld [vmem:[#allocation17 + $0x1e4] sm:$0xf]
          %v8011 = vld [vmem:[#allocation17 + $0x1e8] sm:$0xf]
          %v8012 = vld [vmem:[#allocation17 + $0x1ec] sm:$0xf]
          %v8013 = vld [vmem:[#allocation17 + $0x1f0] sm:$0xf]
          %v8014 = vld [vmem:[#allocation17 + $0x1f4] sm:$0xf]
          %v8015 = vld [vmem:[#allocation17 + $0x1f8] sm:$0xf]
          %v8016 = vld [vmem:[#allocation17 + $0x1fc] sm:$0xf]
          %v8017 = vld [vmem:[#allocation19] sm:$0x1]
          %v8019 = vperm.slane %v8017, 0
          %v8149 = vunpack.c.l.b16 %v7889
          %v8150 = vunpack.c.l.b16 %v7890
          %v8151 = vunpack.c.l.b16 %v7891
          %v8152 = vunpack.c.l.b16 %v7892
          %v8153 = vunpack.c.l.b16 %v7893
          %v8154 = vunpack.c.l.b16 %v7894
          %v8155 = vunpack.c.l.b16 %v7895
          %v8156 = vunpack.c.l.b16 %v7896
          %v8157 = vunpack.c.l.b16 %v7897
          %v8158 = vunpack.c.l.b16 %v7898
          %v8159 = vunpack.c.l.b16 %v7899
          %v8160 = vunpack.c.l.b16 %v7900
          %v8161 = vunpack.c.l.b16 %v7901
          %v8162 = vunpack.c.l.b16 %v7902
          %v8163 = vunpack.c.l.b16 %v7903
          %v8164 = vunpack.c.l.b16 %v7904
          %v8165 = vunpack.c.l.b16 %v7905
          %v8166 = vunpack.c.l.b16 %v7906
          %v8167 = vunpack.c.l.b16 %v7907
          %v8168 = vunpack.c.l.b16 %v7908
          %v8169 = vunpack.c.l.b16 %v7909
          %v8170 = vunpack.c.l.b16 %v7910
          %v8171 = vunpack.c.l.b16 %v7911
          %v8172 = vunpack.c.l.b16 %v7912
          %v8173 = vunpack.c.l.b16 %v7913
          %v8174 = vunpack.c.l.b16 %v7914
          %v8175 = vunpack.c.l.b16 %v7915
          %v8176 = vunpack.c.l.b16 %v7916
          %v8177 = vunpack.c.l.b16 %v7917
          %v8178 = vunpack.c.l.b16 %v7918
          %v8179 = vunpack.c.l.b16 %v7919
          %v8180 = vunpack.c.l.b16 %v7920
          %v8181 = vunpack.c.l.b16 %v7921
          %v8182 = vunpack.c.l.b16 %v7922
          %v8183 = vunpack.c.l.b16 %v7923
          %v8184 = vunpack.c.l.b16 %v7924
          %v8185 = vunpack.c.l.b16 %v7925
          %v8186 = vunpack.c.l.b16 %v7926
          %v8187 = vunpack.c.l.b16 %v7927
          %v8188 = vunpack.c.l.b16 %v7928
          %v8189 = vunpack.c.l.b16 %v7929
          %v8190 = vunpack.c.l.b16 %v7930
          %v8191 = vunpack.c.l.b16 %v7931
          %v8192 = vunpack.c.l.b16 %v7932
          %v8193 = vunpack.c.l.b16 %v7933
          %v8194 = vunpack.c.l.b16 %v7934
          %v8195 = vunpack.c.l.b16 %v7935
          %v8196 = vunpack.c.l.b16 %v7936
          %v8197 = vunpack.c.l.b16 %v7937
          %v8198 = vunpack.c.l.b16 %v7938
          %v8199 = vunpack.c.l.b16 %v7939
          %v8200 = vunpack.c.l.b16 %v7940
          %v8201 = vunpack.c.l.b16 %v7941
          %v8202 = vunpack.c.l.b16 %v7942
          %v8203 = vunpack.c.l.b16 %v7943
          %v8204 = vunpack.c.l.b16 %v7944
          %v8205 = vunpack.c.l.b16 %v7945
          %v8206 = vunpack.c.l.b16 %v7946
          %v8207 = vunpack.c.l.b16 %v7947
          %v8208 = vunpack.c.l.b16 %v7948
          %v8209 = vunpack.c.l.b16 %v7949
          %v8210 = vunpack.c.l.b16 %v7950
          %v8211 = vunpack.c.l.b16 %v7951
          %v8212 = vunpack.c.l.b16 %v7952
          %v8213 = vunpack.c.l.b16 %v7953
          %v8214 = vunpack.c.l.b16 %v7954
          %v8215 = vunpack.c.l.b16 %v7955
          %v8216 = vunpack.c.l.b16 %v7956
          %v8217 = vunpack.c.l.b16 %v7957
          %v8218 = vunpack.c.l.b16 %v7958
          %v8219 = vunpack.c.l.b16 %v7959
          %v8220 = vunpack.c.l.b16 %v7960
          %v8221 = vunpack.c.l.b16 %v7961
          %v8222 = vunpack.c.l.b16 %v7962
          %v8223 = vunpack.c.l.b16 %v7963
          %v8224 = vunpack.c.l.b16 %v7964
          %v8225 = vunpack.c.l.b16 %v7965
          %v8226 = vunpack.c.l.b16 %v7966
          %v8227 = vunpack.c.l.b16 %v7967
          %v8228 = vunpack.c.l.b16 %v7968
          %v8229 = vunpack.c.l.b16 %v7969
          %v8230 = vunpack.c.l.b16 %v7970
          %v8231 = vunpack.c.l.b16 %v7971
          %v8232 = vunpack.c.l.b16 %v7972
          %v8233 = vunpack.c.l.b16 %v7973
          %v8234 = vunpack.c.l.b16 %v7974
          %v8235 = vunpack.c.l.b16 %v7975
          %v8236 = vunpack.c.l.b16 %v7976
          %v8237 = vunpack.c.l.b16 %v7977
          %v8238 = vunpack.c.l.b16 %v7978
          %v8239 = vunpack.c.l.b16 %v7979
          %v8240 = vunpack.c.l.b16 %v7980
          %v8241 = vunpack.c.l.b16 %v7981
          %v8242 = vunpack.c.l.b16 %v7982
          %v8243 = vunpack.c.l.b16 %v7983
          %v8244 = vunpack.c.l.b16 %v7984
          %v8245 = vunpack.c.l.b16 %v7985
          %v8246 = vunpack.c.l.b16 %v7986
          %v8247 = vunpack.c.l.b16 %v7987
          %v8248 = vunpack.c.l.b16 %v7988
          %v8249 = vunpack.c.l.b16 %v7989
          %v8250 = vunpack.c.l.b16 %v7990
          %v8251 = vunpack.c.l.b16 %v7991
          %v8252 = vunpack.c.l.b16 %v7992
          %v8253 = vunpack.c.l.b16 %v7993
          %v8254 = vunpack.c.l.b16 %v7994
          %v8255 = vunpack.c.l.b16 %v7995
          %v8256 = vunpack.c.l.b16 %v7996
          %v8257 = vunpack.c.l.b16 %v7997
          %v8258 = vunpack.c.l.b16 %v7998
          %v8259 = vunpack.c.l.b16 %v7999
          %v8260 = vunpack.c.l.b16 %v8000
          %v8261 = vunpack.c.l.b16 %v8001
          %v8262 = vunpack.c.l.b16 %v8002
          %v8263 = vunpack.c.l.b16 %v8003
          %v8264 = vunpack.c.l.b16 %v8004
          %v8265 = vunpack.c.l.b16 %v8005
          %v8266 = vunpack.c.l.b16 %v8006
          %v8267 = vunpack.c.l.b16 %v8007
          %v8268 = vunpack.c.l.b16 %v8008
          %v8269 = vunpack.c.l.b16 %v8009
          %v8270 = vunpack.c.l.b16 %v8010
          %v8271 = vunpack.c.l.b16 %v8011
          %v8272 = vunpack.c.l.b16 %v8012
          %v8273 = vunpack.c.l.b16 %v8013
          %v8274 = vunpack.c.l.b16 %v8014
          %v8275 = vunpack.c.l.b16 %v8015
          %v8276 = vunpack.c.l.b16 %v8016
          %v8277 = vpack.c.b16 %v8150, %v8149
          %v8278 = vpack.c.b16 %v8152, %v8151
          %v8279 = vpack.c.b16 %v8154, %v8153
          %v8280 = vpack.c.b16 %v8156, %v8155
          %v8281 = vpack.c.b16 %v8158, %v8157
          %v8282 = vpack.c.b16 %v8160, %v8159
          %v8283 = vpack.c.b16 %v8162, %v8161
          %v8284 = vpack.c.b16 %v8164, %v8163
          %v8285 = vpack.c.b16 %v8166, %v8165
          %v8286 = vpack.c.b16 %v8168, %v8167
          %v8287 = vpack.c.b16 %v8170, %v8169
          %v8288 = vpack.c.b16 %v8172, %v8171
          %v8289 = vpack.c.b16 %v8174, %v8173
          %v8290 = vpack.c.b16 %v8176, %v8175
          %v8291 = vpack.c.b16 %v8178, %v8177
          %v8292 = vpack.c.b16 %v8180, %v8179
          %v8293 = vpack.c.b16 %v8182, %v8181
          %v8294 = vpack.c.b16 %v8184, %v8183
          %v8295 = vpack.c.b16 %v8186, %v8185
          %v8296 = vpack.c.b16 %v8188, %v8187
          %v8297 = vpack.c.b16 %v8190, %v8189
          %v8298 = vpack.c.b16 %v8192, %v8191
          %v8299 = vpack.c.b16 %v8194, %v8193
          %v8300 = vpack.c.b16 %v8196, %v8195
          %v8301 = vpack.c.b16 %v8198, %v8197
          %v8302 = vpack.c.b16 %v8200, %v8199
          %v8303 = vpack.c.b16 %v8202, %v8201
          %v8304 = vpack.c.b16 %v8204, %v8203
          %v8305 = vpack.c.b16 %v8206, %v8205
          %v8306 = vpack.c.b16 %v8208, %v8207
          %v8307 = vpack.c.b16 %v8210, %v8209
          %v8308 = vpack.c.b16 %v8212, %v8211
          %v8309 = vpack.c.b16 %v8214, %v8213
          %v8310 = vpack.c.b16 %v8216, %v8215
          %v8311 = vpack.c.b16 %v8218, %v8217
          %v8312 = vpack.c.b16 %v8220, %v8219
          %v8313 = vpack.c.b16 %v8222, %v8221
          %v8314 = vpack.c.b16 %v8224, %v8223
          %v8315 = vpack.c.b16 %v8226, %v8225
          %v8316 = vpack.c.b16 %v8228, %v8227
          %v8317 = vpack.c.b16 %v8230, %v8229
          %v8318 = vpack.c.b16 %v8232, %v8231
          %v8319 = vpack.c.b16 %v8234, %v8233
          %v8320 = vpack.c.b16 %v8236, %v8235
          %v8321 = vpack.c.b16 %v8238, %v8237
          %v8322 = vpack.c.b16 %v8240, %v8239
          %v8323 = vpack.c.b16 %v8242, %v8241
          %v8324 = vpack.c.b16 %v8244, %v8243
          %v8325 = vpack.c.b16 %v8246, %v8245
          %v8326 = vpack.c.b16 %v8248, %v8247
          %v8327 = vpack.c.b16 %v8250, %v8249
          %v8328 = vpack.c.b16 %v8252, %v8251
          %v8329 = vpack.c.b16 %v8254, %v8253
          %v8330 = vpack.c.b16 %v8256, %v8255
          %v8331 = vpack.c.b16 %v8258, %v8257
          %v8332 = vpack.c.b16 %v8260, %v8259
          %v8333 = vpack.c.b16 %v8262, %v8261
          %v8334 = vpack.c.b16 %v8264, %v8263
          %v8335 = vpack.c.b16 %v8266, %v8265
          %v8336 = vpack.c.b16 %v8268, %v8267
          %v8337 = vpack.c.b16 %v8270, %v8269
          %v8338 = vpack.c.b16 %v8272, %v8271
          %v8339 = vpack.c.b16 %v8274, %v8273
          %v8340 = vpack.c.b16 %v8276, %v8275
          %8405 = vmatpush.bf16.msra.mxu0 %v8284
          %8406 = vmatpush.bf16.msra.mxu0 %v8283
          %8407 = vmatpush.bf16.msra.mxu0 %v8282
          %8408 = vmatpush.bf16.msra.mxu0 %v8281
          %8409 = vmatpush.bf16.msra.mxu0 %v8280
          %8410 = vmatpush.bf16.msra.mxu0 %v8279
          %8411 = vmatpush.bf16.msra.mxu0 %v8278
          %8412 = vmatpush.bf16.msra.mxu0 %v8277
          %8413 = vmatmul.bf16.gmra.mxu0 %v7881
          %v8414 = vpop.f32.mrf.mxu0
          %v8415 = vadd.f32 %v8019, %v8414
          %v8416 = vpop.f32.mrf.mxu0
          %8417 = vdwg.mxu0
          %8418 = vmatpush.bf16.msra.mxu0 %v8292
          %8419 = vmatpush.bf16.msra.mxu0 %v8291
          %8420 = vmatpush.bf16.msra.mxu0 %v8290
          %8421 = vmatpush.bf16.msra.mxu0 %v8289
          %8422 = vmatpush.bf16.msra.mxu0 %v8288
          %8423 = vmatpush.bf16.msra.mxu0 %v8287
          %8424 = vmatpush.bf16.msra.mxu0 %v8286
          %8425 = vmatpush.bf16.msra.mxu0 %v8285
          %8426 = vmatmul.bf16.gmra.mxu0 %v7882
          %v8427 = vpop.f32.mrf.mxu0
          %v8428 = vadd.f32 %v8415, %v8427
          %v8429 = vpop.f32.mrf.mxu0
          %8430 = vdwg.mxu0
          %8431 = vmatpush.bf16.msra.mxu0 %v8300
          %8432 = vmatpush.bf16.msra.mxu0 %v8299
          %8433 = vmatpush.bf16.msra.mxu0 %v8298
          %8434 = vmatpush.bf16.msra.mxu0 %v8297
          %8435 = vmatpush.bf16.msra.mxu0 %v8296
          %8436 = vmatpush.bf16.msra.mxu0 %v8295
          %8437 = vmatpush.bf16.msra.mxu0 %v8294
          %8438 = vmatpush.bf16.msra.mxu0 %v8293
          %8439 = vmatmul.bf16.gmra.mxu0 %v7883
          %v8440 = vpop.f32.mrf.mxu0
          %v8441 = vadd.f32 %v8428, %v8440
          %v8442 = vpop.f32.mrf.mxu0
          %8443 = vdwg.mxu0
          %8444 = vmatpush.bf16.msra.mxu0 %v8308
          %8445 = vmatpush.bf16.msra.mxu0 %v8307
          %8446 = vmatpush.bf16.msra.mxu0 %v8306
          %8447 = vmatpush.bf16.msra.mxu0 %v8305
          %8448 = vmatpush.bf16.msra.mxu0 %v8304
          %8449 = vmatpush.bf16.msra.mxu0 %v8303
          %8450 = vmatpush.bf16.msra.mxu0 %v8302
          %8451 = vmatpush.bf16.msra.mxu0 %v8301
          %8452 = vmatmul.bf16.gmra.mxu0 %v7884
          %v8453 = vpop.f32.mrf.mxu0
          %v8454 = vadd.f32 %v8441, %v8453
          %v8455 = vpop.f32.mrf.mxu0
          %8456 = vdwg.mxu0
          %8457 = vmatpush.bf16.msra.mxu0 %v8316
          %8458 = vmatpush.bf16.msra.mxu0 %v8315
          %8459 = vmatpush.bf16.msra.mxu0 %v8314
          %8460 = vmatpush.bf16.msra.mxu0 %v8313
          %8461 = vmatpush.bf16.msra.mxu0 %v8312
          %8462 = vmatpush.bf16.msra.mxu0 %v8311
          %8463 = vmatpush.bf16.msra.mxu0 %v8310
          %8464 = vmatpush.bf16.msra.mxu0 %v8309
          %8465 = vmatmul.bf16.gmra.mxu0 %v7885
          %v8466 = vpop.f32.mrf.mxu0
          %v8467 = vadd.f32 %v8454, %v8466
          %v8468 = vpop.f32.mrf.mxu0
          %8469 = vdwg.mxu0
          %8470 = vmatpush.bf16.msra.mxu0 %v8324
          %8471 = vmatpush.bf16.msra.mxu0 %v8323
          %8472 = vmatpush.bf16.msra.mxu0 %v8322
          %8473 = vmatpush.bf16.msra.mxu0 %v8321
          %8474 = vmatpush.bf16.msra.mxu0 %v8320
          %8475 = vmatpush.bf16.msra.mxu0 %v8319
          %8476 = vmatpush.bf16.msra.mxu0 %v8318
          %8477 = vmatpush.bf16.msra.mxu0 %v8317
          %8478 = vmatmul.bf16.gmra.mxu0 %v7886
          %v8479 = vpop.f32.mrf.mxu0
          %v8480 = vadd.f32 %v8467, %v8479
          %v8481 = vpop.f32.mrf.mxu0
          %8482 = vdwg.mxu0
          %8483 = vmatpush.bf16.msra.mxu0 %v8332
          %8484 = vmatpush.bf16.msra.mxu0 %v8331
          %8485 = vmatpush.bf16.msra.mxu0 %v8330
          %8486 = vmatpush.bf16.msra.mxu0 %v8329
          %8487 = vmatpush.bf16.msra.mxu0 %v8328
          %8488 = vmatpush.bf16.msra.mxu0 %v8327
          %8489 = vmatpush.bf16.msra.mxu0 %v8326
          %8490 = vmatpush.bf16.msra.mxu0 %v8325
          %8491 = vmatmul.bf16.gmra.mxu0 %v7887
          %v8492 = vpop.f32.mrf.mxu0
          %v8493 = vadd.f32 %v8480, %v8492
          %v8494 = vpop.f32.mrf.mxu0
          %8495 = vdwg.mxu0
          %8496 = vmatpush.bf16.msra.mxu0 %v8340
          %8497 = vmatpush.bf16.msra.mxu0 %v8339
          %8498 = vmatpush.bf16.msra.mxu0 %v8338
          %8499 = vmatpush.bf16.msra.mxu0 %v8337
          %8500 = vmatpush.bf16.msra.mxu0 %v8336
          %8501 = vmatpush.bf16.msra.mxu0 %v8335
          %8502 = vmatpush.bf16.msra.mxu0 %v8334
          %8503 = vmatpush.bf16.msra.mxu0 %v8333
          %8504 = vmatmul.bf16.gmra.mxu0 %v7888
          %v8505 = vpop.f32.mrf.mxu0
          %v8506 = vadd.f32 %v8493, %v8505
          %v8507 = vpop.f32.mrf.mxu0
          %8508 = vdwg.mxu0
          %8509 = vst [vmem:[%s492] sm:$0xff] %v8506
        $region104: #{tpu_custom_call.1} parent=55 // pred_fallthru
          _
        %s8510 = sand.u32 %s250, 1
        %s8511 = scalar_lea.sflag [#allocation7], %s8510
        %s8512 = sand.u32 %s250, 1
        %s8513 = smul.addr %s8512, 8
        %s8514 = scalar_lea.vmem [#allocation20], %s8513
        // Predicated region
        $region105: #{tpu_custom_call.1} parent=55 // pred_check
          %p8515 = pneg %p260
        $region106: #{tpu_custom_call.1} parent=55 // pred_check_branch
          %8517 = sbr.rel (%p8515) target = $region108
        $region107: #{tpu_custom_call.1} parent=55 // pred_region
          %s8518 = smul.u32 %s35, %s34
          %8520 = vsyncadd %s8511, 0
          %s8521 = smul.addr %s8518, 8
          %s8522 = scalar_lea.hbm %s9, %s8521
          %s8524 = sshll.u32 %s8514, 4
          %s8525 = int_to_ptr.vmem [resolvable:$true] %s8524
          %s8526 = sshll.u32 %s8522, 4
          %s8527 = int_to_ptr.hbm [resolvable:$true] %s8526
          %8529 = dma.vmem_to_hbm [thread:$0]  %s8525, 128, %s8527, %s8511
        $region108: #{tpu_custom_call.1} parent=55 // pred_fallthru
          _
      $region56: #{tpu_custom_call.1} parent=5 // pred_fallthru
        _
      %p8530 = scmp.le.s32.totalorder 2, %s25
      // Predicated region
      $region109: #{tpu_custom_call.1} parent=5 // pred_check
        %p8531 = pneg %p8530
      $region110: #{tpu_custom_call.1} parent=5 // pred_check_branch
        %8533 = sbr.rel (%p8531) target = $region112
      $region111: #{tpu_custom_call.1} parent=5 // pred_region
        %s8534 = ssub.s32 %s25, 2
        // Predicated region
        $region113: #{tpu_custom_call.1} parent=111 // pred_check
          %p8535 = pneg %p266
        $region114: #{tpu_custom_call.1} parent=111 // pred_check_branch
          %8537 = sbr.rel (%p8535) target = $region116
        $region115: #{tpu_custom_call.1} parent=111 // pred_region
          %s8538 = sand.u32 %s251, 1
          %s8539 = scalar_lea.sflag [#allocation7], %s8538
          %s8540 = sand.u32 %s251, 1
          %s8541 = smul.addr %s8540, 8
          %s8542 = scalar_lea.vmem [#allocation20], %s8541
          %8544 = dma.done %s8539, 128
        $region116: #{tpu_custom_call.1} parent=111 // pred_fallthru
          _
      $region112: #{tpu_custom_call.1} parent=5 // pred_fallthru
        _
    $region6: #{tpu_custom_call.1} parent=1 // loop_footer
      %s29 = sadd.s32 1, %s25
    $region7: #{tpu_custom_call.1} parent=1 // loop_footer_branch
      %24 = sbr.rel target = $region3
    $region8: #{tpu_custom_call.1} parent=1 // loop_exit
      _
    %8545 = vsyncpa [#allocation6], 1
    %s8546 = scalar_lea.sflag [#allocation6], 1
    %8547 = vsyncpa %s8546, 1
    %8548 = vsyncpa [#allocation9], 1
    %8549 = vsyncpa [#allocation12], 1
    %8550 = vsyncpa [#allocation15], 1
    %8551 = vsyncpa [#allocation18], 1
    %8552 = vsyncpa [#allocation7], 1
    %s8553 = scalar_lea.sflag [#allocation7], 1
    %8554 = vsyncpa %s8553, 1

</llo_original>
